<compile_context>
chip_gen: v5e
topology: v5e:2x2
jax: 0.10.0
libtpu: 0.0.40
codegen_flags: <defaults>
</compile_context>

<pallas_src>
import jax
import jax.numpy as jnp
from jax.experimental import pallas as pl
from jax.experimental.pallas import tpu as pltpu

NEG_INF = -1e30
LEAKY_SLOPE = 0.2
NAN_EPS = 1e-5
LN_EPS = 1e-5


def _gat_layer(N, x, w_ref, att_ref, adj_bias, cfg):
    """One fused GATv2Conv (+ nan_to_num / LayerNorm / ReLU / residual) on VMEM values."""
    H, C = cfg["H"], cfg["C"]
    HC = H * C

    # --- packed projection  x @ [Wl | Wr]  (one MXU call, bf16 in / f32 acc) -----------
    g = jnp.dot(x.astype(jnp.bfloat16), w_ref[...],
                preferred_element_type=jnp.float32)                    # [N, 2*HC]
    gl = g[:, :HC]                                                     # lin_l (source j)
    gr = g[:, HC:]                                                     # lin_r (target i)
    glT = jnp.transpose(gl)                                            # [HC, N]: j on lanes

    head_outs = []
    for h in range(H):                                                 # static unroll
        # e_h[i,j] = sum_c att[h,c] * leaky_relu(gr[i,hC+c] + gl[j,hC+c]), built directly
        # in [i(sublanes), j(lanes)] layout so the softmax is a lane reduction and the
        # aggregation is a dense MXU matmul.
        e_h = None
        for c in range(C):                                             # static unroll
            k = h * C + c
            t = gr[:, k:k + 1] + glT[k:k + 1, :]                       # [N, N] bcast add
            t = jnp.maximum(t, jnp.float32(LEAKY_SLOPE) * t)           # leaky (slope < 1)
            contrib = att_ref[k] * t                                   # SMEM scalar * vreg
            e_h = contrib if e_h is None else e_h + contrib

        # --- masked softmax over source nodes j (lane reduction) -----------------------
        e_h = e_h + adj_bias                                           # 0 edge / -1e30 not
        mx = jnp.max(e_h, axis=1, keepdims=True)                       # [N, 1]
        p = jnp.exp(e_h - mx)                                          # masked -> exactly 0
        den = jnp.sum(p, axis=1, keepdims=True)
        den = jnp.maximum(den, jnp.float32(1e-20))                     # self-loops => >= 1
        alpha = p * pl.reciprocal(den, approx=True)                    # EUP divide

        # --- aggregation:  y_h[i, :] = sum_j alpha[i, j] * gl[j, hC:(h+1)C]  (MXU) ------
        y_h = jnp.dot(alpha, gl[:, h * C:(h + 1) * C],
                      preferred_element_type=jnp.float32)              # [N, C]
        head_outs.append(y_h)

    if cfg["concat"] or H == 1:
        y = head_outs[0] if H == 1 else jnp.concatenate(head_outs, axis=1)   # [N, HC]
    else:                                                              # mean over heads
        acc = head_outs[0]
        for h in range(1, H):
            acc = acc + head_outs[h]
        y = acc * jnp.float32(1.0 / H)

    if cfg["nan_guard"]:                                               # torch.nan_to_num
        y = jnp.where(y != y, jnp.float32(0.0), y)
        y = jnp.where(y == jnp.inf, jnp.float32(NAN_EPS), y)
        y = jnp.where(y == -jnp.inf, jnp.float32(-NAN_EPS), y)
    if cfg["use_norm"]:                                                # LayerNorm (w=1, b=0)
        mu = jnp.mean(y, axis=1, keepdims=True)
        d = y - mu
        var = jnp.mean(d * d, axis=1, keepdims=True)
        y = d * jax.lax.rsqrt(var + jnp.float32(LN_EPS))
    if cfg["use_act"]:                                                 # ReLU
        y = jnp.maximum(y, 0.0)
    if cfg["use_res"]:                                                 # residual (Fin == Fout)
        y = y + x
    return y


def make_backbone_kernel(N, layer_plan):
    """layer_plan: list of (static_cfg, (w_idx, att_idx, bias_idx))."""

    def kernel(*refs):
        o_ref = refs[-1]
        x = refs[0][...].astype(jnp.float32)
        adj_bias = refs[layer_plan[0][1][2]][...]                      # shared by all layers
        for cfg, (wi, ai, _) in layer_plan:
            x = _gat_layer(N, x, refs[wi], refs[ai], adj_bias, cfg)
        o_ref[...] = x.astype(o_ref.dtype)

    return kernel


def gat_backbone(x, layers, adj):
    """Run the whole GAT backbone as one fused Pallas kernel.

    layers: list of dicts with keys
      wcat [Fin, 2*H*C] bf16, att [H, C] f32,
      H, C, concat, use_norm, use_act, use_res, nan_guard
    adj:   [N, N] dense adjacency (adj[target, source] > 0 iff edge), self-loops included.
    """
    N = x.shape[0]
    adj_bias = jnp.where(adj > 0, 0.0, NEG_INF).astype(jnp.float32)    # additive mask

    vmem = pl.BlockSpec(memory_space=pltpu.MemorySpace.VMEM)
    smem = pl.BlockSpec(memory_space=pltpu.MemorySpace.SMEM)

    inputs, in_specs = [x, adj_bias], [vmem, vmem]
    bias_idx = 1
    layer_plan = []
    for lyr in layers:
        wi = len(inputs)
        inputs.append(lyr["wcat"]);               in_specs.append(vmem)
        ai = len(inputs)
        inputs.append(lyr["att"].reshape(-1));    in_specs.append(smem)   # flat SMEM scalars
        cfg = {k: lyr[k] for k in ("H", "C", "concat", "use_norm",
                                   "use_act", "use_res", "nan_guard")}
        layer_plan.append((cfg, (wi, ai, bias_idx)))

    last = layers[-1]
    fout = last["H"] * last["C"] if last["concat"] else last["C"]

    kernel = make_backbone_kernel(N, layer_plan)
    return pl.pallas_call(
        kernel,
        out_shape=jax.ShapeDtypeStruct((N, fout), jnp.float32),
        in_specs=in_specs,
        out_specs=vmem,
        compiler_params=pltpu.CompilerParams(vmem_limit_bytes=32 * 1024 * 1024),
    )(*inputs)


# ----------------------------------------------------------------------------------------
# host-side parameter construction
# ----------------------------------------------------------------------------------------
def xavier_normal(key, shape, fan_in, fan_out, gain):
    std = gain * (2.0 / (fan_in + fan_out)) ** 0.5
    return (std * jax.random.normal(key, shape)).astype(jnp.float32)


def make_conv(kw1, kw2, ka, fin, h, c, gain):
    hc = h * c
    wl = xavier_normal(kw1, (fin, hc), fin, hc, gain)
    wr = xavier_normal(kw2, (fin, hc), fin, hc, gain)
    att = xavier_normal(ka, (h, c), hc, c, gain)
    wcat = jnp.concatenate([wl, wr], axis=1).astype(jnp.bfloat16)   # [Fin, 2*H*C]
    return wcat, att.astype(jnp.float32)                            # att -> SMEM scalars


if __name__ == "__main__":
    # Small synthetic config: num_layers=3 => convs = [GATv2(16->8,h=4), GATv2(32->8,h=4)],
    # final_conv = GATv2(32->8, heads=1, concat=False).
    N = 64
    in_channels, hidden_channels, out_channels = 16, 8, 8
    heads, num_layers = 4, 3
    HC = hidden_channels * heads

    key = jax.random.PRNGKey(0)
    keys = jax.random.split(key, 16)

    w0, a0 = make_conv(keys[0], keys[1], keys[2], in_channels, heads, hidden_channels, 0.5)
    w1, a1 = make_conv(keys[3], keys[4], keys[5], HC, heads, hidden_channels, 0.5)
    wf, af = make_conv(keys[6], keys[7], keys[8], HC, 1, out_channels, 0.1)

    # node features
    x = jax.random.normal(keys[9], (N, in_channels), dtype=jnp.float32)

    # edge_index (src -> dst): ring + skip connections + random edges, densified into
    # adj[target, source]; self-loops added (add_self_loops=True).
    src = jnp.arange(N, dtype=jnp.int32)
    rsrc = jax.random.randint(keys[10], (64,), 0, N)
    rdst = jax.random.randint(keys[11], (64,), 0, N)
    srcs = jnp.concatenate([src, src, rsrc])
    dsts = jnp.concatenate([(src + 1) % N, (src + 3) % N, rdst])
    adj = jnp.zeros((N, N), jnp.float32).at[dsts, srcs].set(1.0)
    adj = jnp.maximum(adj, jnp.eye(N, dtype=jnp.float32))

    use_first_res = (in_channels == HC)   # False here

    layers = [
        dict(wcat=w0, att=a0, H=heads, C=hidden_channels, concat=True,
             use_norm=True, use_act=True, use_res=use_first_res, nan_guard=True),
        dict(wcat=w1, att=a1, H=heads, C=hidden_channels, concat=True,
             use_norm=True, use_act=True, use_res=True, nan_guard=True),
        dict(wcat=wf, att=af, H=1, C=out_channels, concat=False,
             use_norm=False, use_act=False, use_res=False, nan_guard=False),
    ]

    out = gat_backbone(x, layers, adj)
    out = jax.block_until_ready(out)
    assert out.shape == (N, out_channels), out.shape
    assert bool(jnp.all(jnp.isfinite(out)))
    print("KERNEL_OK")
</pallas_src>

<mosaic_0001>
module attributes {stable_mosaic.version = 11 : i64} {
  func.func @kernel(%arg0: memref<64x16xf32, #tpu.memory_space<vmem>>, %arg1: memref<64x64xf32, #tpu.memory_space<vmem>>, %arg2: memref<16x64xbf16, #tpu.memory_space<vmem>>, %arg3: memref<32xf32, #tpu.memory_space<smem>>, %arg4: memref<32x64xbf16, #tpu.memory_space<vmem>>, %arg5: memref<32xf32, #tpu.memory_space<smem>>, %arg6: memref<32x16xbf16, #tpu.memory_space<vmem>>, %arg7: memref<8xf32, #tpu.memory_space<smem>>, %arg8: memref<64x8xf32, #tpu.memory_space<vmem>>) attributes {dimension_semantics = [], scalar_prefetch = 0 : i64, scratch_operands = 0 : i64, tpu.core_type = #tpu.core_type<tc>} {
    %c0 = arith.constant 0 : index
    %c0_0 = arith.constant 0 : index
    %0 = vector.load %arg0[%c0, %c0_0] : memref<64x16xf32, #tpu.memory_space<vmem>>, vector<64x16xf32>
    %c0_1 = arith.constant 0 : index
    %c0_2 = arith.constant 0 : index
    %1 = vector.load %arg1[%c0_1, %c0_2] : memref<64x64xf32, #tpu.memory_space<vmem>>, vector<64x64xf32>
    %2 = arith.truncf %0 : vector<64x16xf32> to vector<64x16xbf16>
    %c0_3 = arith.constant 0 : index
    %c0_4 = arith.constant 0 : index
    %3 = vector.load %arg2[%c0_3, %c0_4] : memref<16x64xbf16, #tpu.memory_space<vmem>>, vector<16x64xbf16>
    %cst = arith.constant dense<0.000000e+00> : vector<64x64xf32>
    %4 = tpu.matmul %2, %3, %cst {dimension_numbers = #tpu.dot_dimension_numbers<[1], [0], [0], [1], [0, 0, 1, 1], [], []>} : vector<64x16xbf16>, vector<16x64xbf16>, vector<64x64xf32> -> vector<64x64xf32>
    %5 = vector.extract_strided_slice %4 {offsets = [0, 0], sizes = [64, 32], strides = [1, 1]} : vector<64x64xf32> to vector<64x32xf32>
    %6 = vector.extract_strided_slice %4 {offsets = [0, 32], sizes = [64, 32], strides = [1, 1]} : vector<64x64xf32> to vector<64x32xf32>
    %7 = tpu.transpose %5, [1, 0] : vector<64x32xf32> -> vector<32x64xf32>
    %8 = vector.extract_strided_slice %6 {offsets = [0, 0], sizes = [64, 1], strides = [1, 1]} : vector<64x32xf32> to vector<64x1xf32>
    %9 = vector.extract_strided_slice %7 {offsets = [0, 0], sizes = [1, 64], strides = [1, 1]} : vector<32x64xf32> to vector<1x64xf32>
    %10 = vector.broadcast %8 : vector<64x1xf32> to vector<64x64xf32>
    %11 = vector.broadcast %9 : vector<1x64xf32> to vector<64x64xf32>
    %12 = arith.addf %10, %11 : vector<64x64xf32>
    %cst_5 = arith.constant 2.000000e-01 : f32
    %13 = vector.broadcast %cst_5 : f32 to vector<64x64xf32>
    %14 = arith.mulf %13, %12 : vector<64x64xf32>
    %15 = arith.maximumf %12, %14 : vector<64x64xf32>
    %c0_6 = arith.constant 0 : index
    %16 = memref.load %arg3[%c0_6] : memref<32xf32, #tpu.memory_space<smem>>
    %17 = vector.broadcast %16 : f32 to vector<64x64xf32>
    %18 = arith.mulf %17, %15 : vector<64x64xf32>
    %19 = vector.extract_strided_slice %6 {offsets = [0, 1], sizes = [64, 1], strides = [1, 1]} : vector<64x32xf32> to vector<64x1xf32>
    %20 = vector.extract_strided_slice %7 {offsets = [1, 0], sizes = [1, 64], strides = [1, 1]} : vector<32x64xf32> to vector<1x64xf32>
    %21 = vector.broadcast %19 : vector<64x1xf32> to vector<64x64xf32>
    %22 = vector.broadcast %20 : vector<1x64xf32> to vector<64x64xf32>
    %23 = arith.addf %21, %22 : vector<64x64xf32>
    %cst_7 = arith.constant 2.000000e-01 : f32
    %24 = vector.broadcast %cst_7 : f32 to vector<64x64xf32>
    %25 = arith.mulf %24, %23 : vector<64x64xf32>
    %26 = arith.maximumf %23, %25 : vector<64x64xf32>
    %c1 = arith.constant 1 : index
    %27 = memref.load %arg3[%c1] : memref<32xf32, #tpu.memory_space<smem>>
    %28 = vector.broadcast %27 : f32 to vector<64x64xf32>
    %29 = arith.mulf %28, %26 : vector<64x64xf32>
    %30 = arith.addf %18, %29 : vector<64x64xf32>
    %31 = vector.extract_strided_slice %6 {offsets = [0, 2], sizes = [64, 1], strides = [1, 1]} : vector<64x32xf32> to vector<64x1xf32>
    %32 = vector.extract_strided_slice %7 {offsets = [2, 0], sizes = [1, 64], strides = [1, 1]} : vector<32x64xf32> to vector<1x64xf32>
    %33 = vector.broadcast %31 : vector<64x1xf32> to vector<64x64xf32>
    %34 = vector.broadcast %32 : vector<1x64xf32> to vector<64x64xf32>
    %35 = arith.addf %33, %34 : vector<64x64xf32>
    %cst_8 = arith.constant 2.000000e-01 : f32
    %36 = vector.broadcast %cst_8 : f32 to vector<64x64xf32>
    %37 = arith.mulf %36, %35 : vector<64x64xf32>
    %38 = arith.maximumf %35, %37 : vector<64x64xf32>
    %c2 = arith.constant 2 : index
    %39 = memref.load %arg3[%c2] : memref<32xf32, #tpu.memory_space<smem>>
    %40 = vector.broadcast %39 : f32 to vector<64x64xf32>
    %41 = arith.mulf %40, %38 : vector<64x64xf32>
    %42 = arith.addf %30, %41 : vector<64x64xf32>
    %43 = vector.extract_strided_slice %6 {offsets = [0, 3], sizes = [64, 1], strides = [1, 1]} : vector<64x32xf32> to vector<64x1xf32>
    %44 = vector.extract_strided_slice %7 {offsets = [3, 0], sizes = [1, 64], strides = [1, 1]} : vector<32x64xf32> to vector<1x64xf32>
    %45 = vector.broadcast %43 : vector<64x1xf32> to vector<64x64xf32>
    %46 = vector.broadcast %44 : vector<1x64xf32> to vector<64x64xf32>
    %47 = arith.addf %45, %46 : vector<64x64xf32>
    %cst_9 = arith.constant 2.000000e-01 : f32
    %48 = vector.broadcast %cst_9 : f32 to vector<64x64xf32>
    %49 = arith.mulf %48, %47 : vector<64x64xf32>
    %50 = arith.maximumf %47, %49 : vector<64x64xf32>
    %c3 = arith.constant 3 : index
    %51 = memref.load %arg3[%c3] : memref<32xf32, #tpu.memory_space<smem>>
    %52 = vector.broadcast %51 : f32 to vector<64x64xf32>
    %53 = arith.mulf %52, %50 : vector<64x64xf32>
    %54 = arith.addf %42, %53 : vector<64x64xf32>
    %55 = vector.extract_strided_slice %6 {offsets = [0, 4], sizes = [64, 1], strides = [1, 1]} : vector<64x32xf32> to vector<64x1xf32>
    %56 = vector.extract_strided_slice %7 {offsets = [4, 0], sizes = [1, 64], strides = [1, 1]} : vector<32x64xf32> to vector<1x64xf32>
    %57 = vector.broadcast %55 : vector<64x1xf32> to vector<64x64xf32>
    %58 = vector.broadcast %56 : vector<1x64xf32> to vector<64x64xf32>
    %59 = arith.addf %57, %58 : vector<64x64xf32>
    %cst_10 = arith.constant 2.000000e-01 : f32
    %60 = vector.broadcast %cst_10 : f32 to vector<64x64xf32>
    %61 = arith.mulf %60, %59 : vector<64x64xf32>
    %62 = arith.maximumf %59, %61 : vector<64x64xf32>
    %c4 = arith.constant 4 : index
    %63 = memref.load %arg3[%c4] : memref<32xf32, #tpu.memory_space<smem>>
    %64 = vector.broadcast %63 : f32 to vector<64x64xf32>
    %65 = arith.mulf %64, %62 : vector<64x64xf32>
    %66 = arith.addf %54, %65 : vector<64x64xf32>
    %67 = vector.extract_strided_slice %6 {offsets = [0, 5], sizes = [64, 1], strides = [1, 1]} : vector<64x32xf32> to vector<64x1xf32>
    %68 = vector.extract_strided_slice %7 {offsets = [5, 0], sizes = [1, 64], strides = [1, 1]} : vector<32x64xf32> to vector<1x64xf32>
    %69 = vector.broadcast %67 : vector<64x1xf32> to vector<64x64xf32>
    %70 = vector.broadcast %68 : vector<1x64xf32> to vector<64x64xf32>
    %71 = arith.addf %69, %70 : vector<64x64xf32>
    %cst_11 = arith.constant 2.000000e-01 : f32
    %72 = vector.broadcast %cst_11 : f32 to vector<64x64xf32>
    %73 = arith.mulf %72, %71 : vector<64x64xf32>
    %74 = arith.maximumf %71, %73 : vector<64x64xf32>
    %c5 = arith.constant 5 : index
    %75 = memref.load %arg3[%c5] : memref<32xf32, #tpu.memory_space<smem>>
    %76 = vector.broadcast %75 : f32 to vector<64x64xf32>
    %77 = arith.mulf %76, %74 : vector<64x64xf32>
    %78 = arith.addf %66, %77 : vector<64x64xf32>
    %79 = vector.extract_strided_slice %6 {offsets = [0, 6], sizes = [64, 1], strides = [1, 1]} : vector<64x32xf32> to vector<64x1xf32>
    %80 = vector.extract_strided_slice %7 {offsets = [6, 0], sizes = [1, 64], strides = [1, 1]} : vector<32x64xf32> to vector<1x64xf32>
    %81 = vector.broadcast %79 : vector<64x1xf32> to vector<64x64xf32>
    %82 = vector.broadcast %80 : vector<1x64xf32> to vector<64x64xf32>
    %83 = arith.addf %81, %82 : vector<64x64xf32>
    %cst_12 = arith.constant 2.000000e-01 : f32
    %84 = vector.broadcast %cst_12 : f32 to vector<64x64xf32>
    %85 = arith.mulf %84, %83 : vector<64x64xf32>
    %86 = arith.maximumf %83, %85 : vector<64x64xf32>
    %c6 = arith.constant 6 : index
    %87 = memref.load %arg3[%c6] : memref<32xf32, #tpu.memory_space<smem>>
    %88 = vector.broadcast %87 : f32 to vector<64x64xf32>
    %89 = arith.mulf %88, %86 : vector<64x64xf32>
    %90 = arith.addf %78, %89 : vector<64x64xf32>
    %91 = vector.extract_strided_slice %6 {offsets = [0, 7], sizes = [64, 1], strides = [1, 1]} : vector<64x32xf32> to vector<64x1xf32>
    %92 = vector.extract_strided_slice %7 {offsets = [7, 0], sizes = [1, 64], strides = [1, 1]} : vector<32x64xf32> to vector<1x64xf32>
    %93 = vector.broadcast %91 : vector<64x1xf32> to vector<64x64xf32>
    %94 = vector.broadcast %92 : vector<1x64xf32> to vector<64x64xf32>
    %95 = arith.addf %93, %94 : vector<64x64xf32>
    %cst_13 = arith.constant 2.000000e-01 : f32
    %96 = vector.broadcast %cst_13 : f32 to vector<64x64xf32>
    %97 = arith.mulf %96, %95 : vector<64x64xf32>
    %98 = arith.maximumf %95, %97 : vector<64x64xf32>
    %c7 = arith.constant 7 : index
    %99 = memref.load %arg3[%c7] : memref<32xf32, #tpu.memory_space<smem>>
    %100 = vector.broadcast %99 : f32 to vector<64x64xf32>
    %101 = arith.mulf %100, %98 : vector<64x64xf32>
    %102 = arith.addf %90, %101 : vector<64x64xf32>
    %103 = arith.addf %102, %1 : vector<64x64xf32>
    %cst_14 = arith.constant dense<0xFF800000> : vector<64xf32>
    %104 = vector.multi_reduction <maximumf>, %103, %cst_14 [1] : vector<64x64xf32> to vector<64xf32>
    %105 = vector.shape_cast %104 : vector<64xf32> to vector<64x1xf32>
    %106 = vector.broadcast %105 : vector<64x1xf32> to vector<64x64xf32>
    %107 = arith.subf %103, %106 : vector<64x64xf32>
    %108 = math.exp %107 : vector<64x64xf32>
    %cst_15 = arith.constant dense<0.000000e+00> : vector<64xf32>
    %109 = vector.multi_reduction <add>, %108, %cst_15 [1] : vector<64x64xf32> to vector<64xf32>
    %110 = vector.shape_cast %109 : vector<64xf32> to vector<64x1xf32>
    %cst_16 = arith.constant 9.99999968E-21 : f32
    %111 = vector.broadcast %cst_16 : f32 to vector<64x1xf32>
    %112 = arith.maximumf %110, %111 : vector<64x1xf32>
    %113 = tpu.reciprocal %112 {approx = true} : vector<64x1xf32> -> vector<64x1xf32>
    %114 = vector.broadcast %113 : vector<64x1xf32> to vector<64x64xf32>
    %115 = arith.mulf %108, %114 : vector<64x64xf32>
    %116 = vector.extract_strided_slice %5 {offsets = [0, 0], sizes = [64, 8], strides = [1, 1]} : vector<64x32xf32> to vector<64x8xf32>
    %cst_17 = arith.constant dense<0.000000e+00> : vector<64x8xf32>
    %117 = tpu.matmul %115, %116, %cst_17 {dimension_numbers = #tpu.dot_dimension_numbers<[1], [0], [0], [1], [0, 0, 1, 1], [], []>} : vector<64x64xf32>, vector<64x8xf32>, vector<64x8xf32> -> vector<64x8xf32>
    %118 = vector.extract_strided_slice %6 {offsets = [0, 8], sizes = [64, 1], strides = [1, 1]} : vector<64x32xf32> to vector<64x1xf32>
    %119 = vector.extract_strided_slice %7 {offsets = [8, 0], sizes = [1, 64], strides = [1, 1]} : vector<32x64xf32> to vector<1x64xf32>
    %120 = vector.broadcast %118 : vector<64x1xf32> to vector<64x64xf32>
    %121 = vector.broadcast %119 : vector<1x64xf32> to vector<64x64xf32>
    %122 = arith.addf %120, %121 : vector<64x64xf32>
    %cst_18 = arith.constant 2.000000e-01 : f32
    %123 = vector.broadcast %cst_18 : f32 to vector<64x64xf32>
    %124 = arith.mulf %123, %122 : vector<64x64xf32>
    %125 = arith.maximumf %122, %124 : vector<64x64xf32>
    %c8 = arith.constant 8 : index
    %126 = memref.load %arg3[%c8] : memref<32xf32, #tpu.memory_space<smem>>
    %127 = vector.broadcast %126 : f32 to vector<64x64xf32>
    %128 = arith.mulf %127, %125 : vector<64x64xf32>
    %129 = vector.extract_strided_slice %6 {offsets = [0, 9], sizes = [64, 1], strides = [1, 1]} : vector<64x32xf32> to vector<64x1xf32>
    %130 = vector.extract_strided_slice %7 {offsets = [9, 0], sizes = [1, 64], strides = [1, 1]} : vector<32x64xf32> to vector<1x64xf32>
    %131 = vector.broadcast %129 : vector<64x1xf32> to vector<64x64xf32>
    %132 = vector.broadcast %130 : vector<1x64xf32> to vector<64x64xf32>
    %133 = arith.addf %131, %132 : vector<64x64xf32>
    %cst_19 = arith.constant 2.000000e-01 : f32
    %134 = vector.broadcast %cst_19 : f32 to vector<64x64xf32>
    %135 = arith.mulf %134, %133 : vector<64x64xf32>
    %136 = arith.maximumf %133, %135 : vector<64x64xf32>
    %c9 = arith.constant 9 : index
    %137 = memref.load %arg3[%c9] : memref<32xf32, #tpu.memory_space<smem>>
    %138 = vector.broadcast %137 : f32 to vector<64x64xf32>
    %139 = arith.mulf %138, %136 : vector<64x64xf32>
    %140 = arith.addf %128, %139 : vector<64x64xf32>
    %141 = vector.extract_strided_slice %6 {offsets = [0, 10], sizes = [64, 1], strides = [1, 1]} : vector<64x32xf32> to vector<64x1xf32>
    %142 = vector.extract_strided_slice %7 {offsets = [10, 0], sizes = [1, 64], strides = [1, 1]} : vector<32x64xf32> to vector<1x64xf32>
    %143 = vector.broadcast %141 : vector<64x1xf32> to vector<64x64xf32>
    %144 = vector.broadcast %142 : vector<1x64xf32> to vector<64x64xf32>
    %145 = arith.addf %143, %144 : vector<64x64xf32>
    %cst_20 = arith.constant 2.000000e-01 : f32
    %146 = vector.broadcast %cst_20 : f32 to vector<64x64xf32>
    %147 = arith.mulf %146, %145 : vector<64x64xf32>
    %148 = arith.maximumf %145, %147 : vector<64x64xf32>
    %c10 = arith.constant 10 : index
    %149 = memref.load %arg3[%c10] : memref<32xf32, #tpu.memory_space<smem>>
    %150 = vector.broadcast %149 : f32 to vector<64x64xf32>
    %151 = arith.mulf %150, %148 : vector<64x64xf32>
    %152 = arith.addf %140, %151 : vector<64x64xf32>
    %153 = vector.extract_strided_slice %6 {offsets = [0, 11], sizes = [64, 1], strides = [1, 1]} : vector<64x32xf32> to vector<64x1xf32>
    %154 = vector.extract_strided_slice %7 {offsets = [11, 0], sizes = [1, 64], strides = [1, 1]} : vector<32x64xf32> to vector<1x64xf32>
    %155 = vector.broadcast %153 : vector<64x1xf32> to vector<64x64xf32>
    %156 = vector.broadcast %154 : vector<1x64xf32> to vector<64x64xf32>
    %157 = arith.addf %155, %156 : vector<64x64xf32>
    %cst_21 = arith.constant 2.000000e-01 : f32
    %158 = vector.broadcast %cst_21 : f32 to vector<64x64xf32>
    %159 = arith.mulf %158, %157 : vector<64x64xf32>
    %160 = arith.maximumf %157, %159 : vector<64x64xf32>
    %c11 = arith.constant 11 : index
    %161 = memref.load %arg3[%c11] : memref<32xf32, #tpu.memory_space<smem>>
    %162 = vector.broadcast %161 : f32 to vector<64x64xf32>
    %163 = arith.mulf %162, %160 : vector<64x64xf32>
    %164 = arith.addf %152, %163 : vector<64x64xf32>
    %165 = vector.extract_strided_slice %6 {offsets = [0, 12], sizes = [64, 1], strides = [1, 1]} : vector<64x32xf32> to vector<64x1xf32>
    %166 = vector.extract_strided_slice %7 {offsets = [12, 0], sizes = [1, 64], strides = [1, 1]} : vector<32x64xf32> to vector<1x64xf32>
    %167 = vector.broadcast %165 : vector<64x1xf32> to vector<64x64xf32>
    %168 = vector.broadcast %166 : vector<1x64xf32> to vector<64x64xf32>
    %169 = arith.addf %167, %168 : vector<64x64xf32>
    %cst_22 = arith.constant 2.000000e-01 : f32
    %170 = vector.broadcast %cst_22 : f32 to vector<64x64xf32>
    %171 = arith.mulf %170, %169 : vector<64x64xf32>
    %172 = arith.maximumf %169, %171 : vector<64x64xf32>
    %c12 = arith.constant 12 : index
    %173 = memref.load %arg3[%c12] : memref<32xf32, #tpu.memory_space<smem>>
    %174 = vector.broadcast %173 : f32 to vector<64x64xf32>
    %175 = arith.mulf %174, %172 : vector<64x64xf32>
    %176 = arith.addf %164, %175 : vector<64x64xf32>
    %177 = vector.extract_strided_slice %6 {offsets = [0, 13], sizes = [64, 1], strides = [1, 1]} : vector<64x32xf32> to vector<64x1xf32>
    %178 = vector.extract_strided_slice %7 {offsets = [13, 0], sizes = [1, 64], strides = [1, 1]} : vector<32x64xf32> to vector<1x64xf32>
    %179 = vector.broadcast %177 : vector<64x1xf32> to vector<64x64xf32>
    %180 = vector.broadcast %178 : vector<1x64xf32> to vector<64x64xf32>
    %181 = arith.addf %179, %180 : vector<64x64xf32>
    %cst_23 = arith.constant 2.000000e-01 : f32
    %182 = vector.broadcast %cst_23 : f32 to vector<64x64xf32>
    %183 = arith.mulf %182, %181 : vector<64x64xf32>
    %184 = arith.maximumf %181, %183 : vector<64x64xf32>
    %c13 = arith.constant 13 : index
    %185 = memref.load %arg3[%c13] : memref<32xf32, #tpu.memory_space<smem>>
    %186 = vector.broadcast %185 : f32 to vector<64x64xf32>
    %187 = arith.mulf %186, %184 : vector<64x64xf32>
    %188 = arith.addf %176, %187 : vector<64x64xf32>
    %189 = vector.extract_strided_slice %6 {offsets = [0, 14], sizes = [64, 1], strides = [1, 1]} : vector<64x32xf32> to vector<64x1xf32>
    %190 = vector.extract_strided_slice %7 {offsets = [14, 0], sizes = [1, 64], strides = [1, 1]} : vector<32x64xf32> to vector<1x64xf32>
    %191 = vector.broadcast %189 : vector<64x1xf32> to vector<64x64xf32>
    %192 = vector.broadcast %190 : vector<1x64xf32> to vector<64x64xf32>
    %193 = arith.addf %191, %192 : vector<64x64xf32>
    %cst_24 = arith.constant 2.000000e-01 : f32
    %194 = vector.broadcast %cst_24 : f32 to vector<64x64xf32>
    %195 = arith.mulf %194, %193 : vector<64x64xf32>
    %196 = arith.maximumf %193, %195 : vector<64x64xf32>
    %c14 = arith.constant 14 : index
    %197 = memref.load %arg3[%c14] : memref<32xf32, #tpu.memory_space<smem>>
    %198 = vector.broadcast %197 : f32 to vector<64x64xf32>
    %199 = arith.mulf %198, %196 : vector<64x64xf32>
    %200 = arith.addf %188, %199 : vector<64x64xf32>
    %201 = vector.extract_strided_slice %6 {offsets = [0, 15], sizes = [64, 1], strides = [1, 1]} : vector<64x32xf32> to vector<64x1xf32>
    %202 = vector.extract_strided_slice %7 {offsets = [15, 0], sizes = [1, 64], strides = [1, 1]} : vector<32x64xf32> to vector<1x64xf32>
    %203 = vector.broadcast %201 : vector<64x1xf32> to vector<64x64xf32>
    %204 = vector.broadcast %202 : vector<1x64xf32> to vector<64x64xf32>
    %205 = arith.addf %203, %204 : vector<64x64xf32>
    %cst_25 = arith.constant 2.000000e-01 : f32
    %206 = vector.broadcast %cst_25 : f32 to vector<64x64xf32>
    %207 = arith.mulf %206, %205 : vector<64x64xf32>
    %208 = arith.maximumf %205, %207 : vector<64x64xf32>
    %c15 = arith.constant 15 : index
    %209 = memref.load %arg3[%c15] : memref<32xf32, #tpu.memory_space<smem>>
    %210 = vector.broadcast %209 : f32 to vector<64x64xf32>
    %211 = arith.mulf %210, %208 : vector<64x64xf32>
    %212 = arith.addf %200, %211 : vector<64x64xf32>
    %213 = arith.addf %212, %1 : vector<64x64xf32>
    %cst_26 = arith.constant dense<0xFF800000> : vector<64xf32>
    %214 = vector.multi_reduction <maximumf>, %213, %cst_26 [1] : vector<64x64xf32> to vector<64xf32>
    %215 = vector.shape_cast %214 : vector<64xf32> to vector<64x1xf32>
    %216 = vector.broadcast %215 : vector<64x1xf32> to vector<64x64xf32>
    %217 = arith.subf %213, %216 : vector<64x64xf32>
    %218 = math.exp %217 : vector<64x64xf32>
    %cst_27 = arith.constant dense<0.000000e+00> : vector<64xf32>
    %219 = vector.multi_reduction <add>, %218, %cst_27 [1] : vector<64x64xf32> to vector<64xf32>
    %220 = vector.shape_cast %219 : vector<64xf32> to vector<64x1xf32>
    %cst_28 = arith.constant 9.99999968E-21 : f32
    %221 = vector.broadcast %cst_28 : f32 to vector<64x1xf32>
    %222 = arith.maximumf %220, %221 : vector<64x1xf32>
    %223 = tpu.reciprocal %222 {approx = true} : vector<64x1xf32> -> vector<64x1xf32>
    %224 = vector.broadcast %223 : vector<64x1xf32> to vector<64x64xf32>
    %225 = arith.mulf %218, %224 : vector<64x64xf32>
    %226 = vector.extract_strided_slice %5 {offsets = [0, 8], sizes = [64, 8], strides = [1, 1]} : vector<64x32xf32> to vector<64x8xf32>
    %cst_29 = arith.constant dense<0.000000e+00> : vector<64x8xf32>
    %227 = tpu.matmul %225, %226, %cst_29 {dimension_numbers = #tpu.dot_dimension_numbers<[1], [0], [0], [1], [0, 0, 1, 1], [], []>} : vector<64x64xf32>, vector<64x8xf32>, vector<64x8xf32> -> vector<64x8xf32>
    %228 = vector.extract_strided_slice %6 {offsets = [0, 16], sizes = [64, 1], strides = [1, 1]} : vector<64x32xf32> to vector<64x1xf32>
    %229 = vector.extract_strided_slice %7 {offsets = [16, 0], sizes = [1, 64], strides = [1, 1]} : vector<32x64xf32> to vector<1x64xf32>
    %230 = vector.broadcast %228 : vector<64x1xf32> to vector<64x64xf32>
    %231 = vector.broadcast %229 : vector<1x64xf32> to vector<64x64xf32>
    %232 = arith.addf %230, %231 : vector<64x64xf32>
    %cst_30 = arith.constant 2.000000e-01 : f32
    %233 = vector.broadcast %cst_30 : f32 to vector<64x64xf32>
    %234 = arith.mulf %233, %232 : vector<64x64xf32>
    %235 = arith.maximumf %232, %234 : vector<64x64xf32>
    %c16 = arith.constant 16 : index
    %236 = memref.load %arg3[%c16] : memref<32xf32, #tpu.memory_space<smem>>
    %237 = vector.broadcast %236 : f32 to vector<64x64xf32>
    %238 = arith.mulf %237, %235 : vector<64x64xf32>
    %239 = vector.extract_strided_slice %6 {offsets = [0, 17], sizes = [64, 1], strides = [1, 1]} : vector<64x32xf32> to vector<64x1xf32>
    %240 = vector.extract_strided_slice %7 {offsets = [17, 0], sizes = [1, 64], strides = [1, 1]} : vector<32x64xf32> to vector<1x64xf32>
    %241 = vector.broadcast %239 : vector<64x1xf32> to vector<64x64xf32>
    %242 = vector.broadcast %240 : vector<1x64xf32> to vector<64x64xf32>
    %243 = arith.addf %241, %242 : vector<64x64xf32>
    %cst_31 = arith.constant 2.000000e-01 : f32
    %244 = vector.broadcast %cst_31 : f32 to vector<64x64xf32>
    %245 = arith.mulf %244, %243 : vector<64x64xf32>
    %246 = arith.maximumf %243, %245 : vector<64x64xf32>
    %c17 = arith.constant 17 : index
    %247 = memref.load %arg3[%c17] : memref<32xf32, #tpu.memory_space<smem>>
    %248 = vector.broadcast %247 : f32 to vector<64x64xf32>
    %249 = arith.mulf %248, %246 : vector<64x64xf32>
    %250 = arith.addf %238, %249 : vector<64x64xf32>
    %251 = vector.extract_strided_slice %6 {offsets = [0, 18], sizes = [64, 1], strides = [1, 1]} : vector<64x32xf32> to vector<64x1xf32>
    %252 = vector.extract_strided_slice %7 {offsets = [18, 0], sizes = [1, 64], strides = [1, 1]} : vector<32x64xf32> to vector<1x64xf32>
    %253 = vector.broadcast %251 : vector<64x1xf32> to vector<64x64xf32>
    %254 = vector.broadcast %252 : vector<1x64xf32> to vector<64x64xf32>
    %255 = arith.addf %253, %254 : vector<64x64xf32>
    %cst_32 = arith.constant 2.000000e-01 : f32
    %256 = vector.broadcast %cst_32 : f32 to vector<64x64xf32>
    %257 = arith.mulf %256, %255 : vector<64x64xf32>
    %258 = arith.maximumf %255, %257 : vector<64x64xf32>
    %c18 = arith.constant 18 : index
    %259 = memref.load %arg3[%c18] : memref<32xf32, #tpu.memory_space<smem>>
    %260 = vector.broadcast %259 : f32 to vector<64x64xf32>
    %261 = arith.mulf %260, %258 : vector<64x64xf32>
    %262 = arith.addf %250, %261 : vector<64x64xf32>
    %263 = vector.extract_strided_slice %6 {offsets = [0, 19], sizes = [64, 1], strides = [1, 1]} : vector<64x32xf32> to vector<64x1xf32>
    %264 = vector.extract_strided_slice %7 {offsets = [19, 0], sizes = [1, 64], strides = [1, 1]} : vector<32x64xf32> to vector<1x64xf32>
    %265 = vector.broadcast %263 : vector<64x1xf32> to vector<64x64xf32>
    %266 = vector.broadcast %264 : vector<1x64xf32> to vector<64x64xf32>
    %267 = arith.addf %265, %266 : vector<64x64xf32>
    %cst_33 = arith.constant 2.000000e-01 : f32
    %268 = vector.broadcast %cst_33 : f32 to vector<64x64xf32>
    %269 = arith.mulf %268, %267 : vector<64x64xf32>
    %270 = arith.maximumf %267, %269 : vector<64x64xf32>
    %c19 = arith.constant 19 : index
    %271 = memref.load %arg3[%c19] : memref<32xf32, #tpu.memory_space<smem>>
    %272 = vector.broadcast %271 : f32 to vector<64x64xf32>
    %273 = arith.mulf %272, %270 : vector<64x64xf32>
    %274 = arith.addf %262, %273 : vector<64x64xf32>
    %275 = vector.extract_strided_slice %6 {offsets = [0, 20], sizes = [64, 1], strides = [1, 1]} : vector<64x32xf32> to vector<64x1xf32>
    %276 = vector.extract_strided_slice %7 {offsets = [20, 0], sizes = [1, 64], strides = [1, 1]} : vector<32x64xf32> to vector<1x64xf32>
    %277 = vector.broadcast %275 : vector<64x1xf32> to vector<64x64xf32>
    %278 = vector.broadcast %276 : vector<1x64xf32> to vector<64x64xf32>
    %279 = arith.addf %277, %278 : vector<64x64xf32>
    %cst_34 = arith.constant 2.000000e-01 : f32
    %280 = vector.broadcast %cst_34 : f32 to vector<64x64xf32>
    %281 = arith.mulf %280, %279 : vector<64x64xf32>
    %282 = arith.maximumf %279, %281 : vector<64x64xf32>
    %c20 = arith.constant 20 : index
    %283 = memref.load %arg3[%c20] : memref<32xf32, #tpu.memory_space<smem>>
    %284 = vector.broadcast %283 : f32 to vector<64x64xf32>
    %285 = arith.mulf %284, %282 : vector<64x64xf32>
    %286 = arith.addf %274, %285 : vector<64x64xf32>
    %287 = vector.extract_strided_slice %6 {offsets = [0, 21], sizes = [64, 1], strides = [1, 1]} : vector<64x32xf32> to vector<64x1xf32>
    %288 = vector.extract_strided_slice %7 {offsets = [21, 0], sizes = [1, 64], strides = [1, 1]} : vector<32x64xf32> to vector<1x64xf32>
    %289 = vector.broadcast %287 : vector<64x1xf32> to vector<64x64xf32>
    %290 = vector.broadcast %288 : vector<1x64xf32> to vector<64x64xf32>
    %291 = arith.addf %289, %290 : vector<64x64xf32>
    %cst_35 = arith.constant 2.000000e-01 : f32
    %292 = vector.broadcast %cst_35 : f32 to vector<64x64xf32>
    %293 = arith.mulf %292, %291 : vector<64x64xf32>
    %294 = arith.maximumf %291, %293 : vector<64x64xf32>
    %c21 = arith.constant 21 : index
    %295 = memref.load %arg3[%c21] : memref<32xf32, #tpu.memory_space<smem>>
    %296 = vector.broadcast %295 : f32 to vector<64x64xf32>
    %297 = arith.mulf %296, %294 : vector<64x64xf32>
    %298 = arith.addf %286, %297 : vector<64x64xf32>
    %299 = vector.extract_strided_slice %6 {offsets = [0, 22], sizes = [64, 1], strides = [1, 1]} : vector<64x32xf32> to vector<64x1xf32>
    %300 = vector.extract_strided_slice %7 {offsets = [22, 0], sizes = [1, 64], strides = [1, 1]} : vector<32x64xf32> to vector<1x64xf32>
    %301 = vector.broadcast %299 : vector<64x1xf32> to vector<64x64xf32>
    %302 = vector.broadcast %300 : vector<1x64xf32> to vector<64x64xf32>
    %303 = arith.addf %301, %302 : vector<64x64xf32>
    %cst_36 = arith.constant 2.000000e-01 : f32
    %304 = vector.broadcast %cst_36 : f32 to vector<64x64xf32>
    %305 = arith.mulf %304, %303 : vector<64x64xf32>
    %306 = arith.maximumf %303, %305 : vector<64x64xf32>
    %c22 = arith.constant 22 : index
    %307 = memref.load %arg3[%c22] : memref<32xf32, #tpu.memory_space<smem>>
    %308 = vector.broadcast %307 : f32 to vector<64x64xf32>
    %309 = arith.mulf %308, %306 : vector<64x64xf32>
    %310 = arith.addf %298, %309 : vector<64x64xf32>
    %311 = vector.extract_strided_slice %6 {offsets = [0, 23], sizes = [64, 1], strides = [1, 1]} : vector<64x32xf32> to vector<64x1xf32>
    %312 = vector.extract_strided_slice %7 {offsets = [23, 0], sizes = [1, 64], strides = [1, 1]} : vector<32x64xf32> to vector<1x64xf32>
    %313 = vector.broadcast %311 : vector<64x1xf32> to vector<64x64xf32>
    %314 = vector.broadcast %312 : vector<1x64xf32> to vector<64x64xf32>
    %315 = arith.addf %313, %314 : vector<64x64xf32>
    %cst_37 = arith.constant 2.000000e-01 : f32
    %316 = vector.broadcast %cst_37 : f32 to vector<64x64xf32>
    %317 = arith.mulf %316, %315 : vector<64x64xf32>
    %318 = arith.maximumf %315, %317 : vector<64x64xf32>
    %c23 = arith.constant 23 : index
    %319 = memref.load %arg3[%c23] : memref<32xf32, #tpu.memory_space<smem>>
    %320 = vector.broadcast %319 : f32 to vector<64x64xf32>
    %321 = arith.mulf %320, %318 : vector<64x64xf32>
    %322 = arith.addf %310, %321 : vector<64x64xf32>
    %323 = arith.addf %322, %1 : vector<64x64xf32>
    %cst_38 = arith.constant dense<0xFF800000> : vector<64xf32>
    %324 = vector.multi_reduction <maximumf>, %323, %cst_38 [1] : vector<64x64xf32> to vector<64xf32>
    %325 = vector.shape_cast %324 : vector<64xf32> to vector<64x1xf32>
    %326 = vector.broadcast %325 : vector<64x1xf32> to vector<64x64xf32>
    %327 = arith.subf %323, %326 : vector<64x64xf32>
    %328 = math.exp %327 : vector<64x64xf32>
    %cst_39 = arith.constant dense<0.000000e+00> : vector<64xf32>
    %329 = vector.multi_reduction <add>, %328, %cst_39 [1] : vector<64x64xf32> to vector<64xf32>
    %330 = vector.shape_cast %329 : vector<64xf32> to vector<64x1xf32>
    %cst_40 = arith.constant 9.99999968E-21 : f32
    %331 = vector.broadcast %cst_40 : f32 to vector<64x1xf32>
    %332 = arith.maximumf %330, %331 : vector<64x1xf32>
    %333 = tpu.reciprocal %332 {approx = true} : vector<64x1xf32> -> vector<64x1xf32>
    %334 = vector.broadcast %333 : vector<64x1xf32> to vector<64x64xf32>
    %335 = arith.mulf %328, %334 : vector<64x64xf32>
    %336 = vector.extract_strided_slice %5 {offsets = [0, 16], sizes = [64, 8], strides = [1, 1]} : vector<64x32xf32> to vector<64x8xf32>
    %cst_41 = arith.constant dense<0.000000e+00> : vector<64x8xf32>
    %337 = tpu.matmul %335, %336, %cst_41 {dimension_numbers = #tpu.dot_dimension_numbers<[1], [0], [0], [1], [0, 0, 1, 1], [], []>} : vector<64x64xf32>, vector<64x8xf32>, vector<64x8xf32> -> vector<64x8xf32>
    %338 = vector.extract_strided_slice %6 {offsets = [0, 24], sizes = [64, 1], strides = [1, 1]} : vector<64x32xf32> to vector<64x1xf32>
    %339 = vector.extract_strided_slice %7 {offsets = [24, 0], sizes = [1, 64], strides = [1, 1]} : vector<32x64xf32> to vector<1x64xf32>
    %340 = vector.broadcast %338 : vector<64x1xf32> to vector<64x64xf32>
    %341 = vector.broadcast %339 : vector<1x64xf32> to vector<64x64xf32>
    %342 = arith.addf %340, %341 : vector<64x64xf32>
    %cst_42 = arith.constant 2.000000e-01 : f32
    %343 = vector.broadcast %cst_42 : f32 to vector<64x64xf32>
    %344 = arith.mulf %343, %342 : vector<64x64xf32>
    %345 = arith.maximumf %342, %344 : vector<64x64xf32>
    %c24 = arith.constant 24 : index
    %346 = memref.load %arg3[%c24] : memref<32xf32, #tpu.memory_space<smem>>
    %347 = vector.broadcast %346 : f32 to vector<64x64xf32>
    %348 = arith.mulf %347, %345 : vector<64x64xf32>
    %349 = vector.extract_strided_slice %6 {offsets = [0, 25], sizes = [64, 1], strides = [1, 1]} : vector<64x32xf32> to vector<64x1xf32>
    %350 = vector.extract_strided_slice %7 {offsets = [25, 0], sizes = [1, 64], strides = [1, 1]} : vector<32x64xf32> to vector<1x64xf32>
    %351 = vector.broadcast %349 : vector<64x1xf32> to vector<64x64xf32>
    %352 = vector.broadcast %350 : vector<1x64xf32> to vector<64x64xf32>
    %353 = arith.addf %351, %352 : vector<64x64xf32>
    %cst_43 = arith.constant 2.000000e-01 : f32
    %354 = vector.broadcast %cst_43 : f32 to vector<64x64xf32>
    %355 = arith.mulf %354, %353 : vector<64x64xf32>
    %356 = arith.maximumf %353, %355 : vector<64x64xf32>
    %c25 = arith.constant 25 : index
    %357 = memref.load %arg3[%c25] : memref<32xf32, #tpu.memory_space<smem>>
    %358 = vector.broadcast %357 : f32 to vector<64x64xf32>
    %359 = arith.mulf %358, %356 : vector<64x64xf32>
    %360 = arith.addf %348, %359 : vector<64x64xf32>
    %361 = vector.extract_strided_slice %6 {offsets = [0, 26], sizes = [64, 1], strides = [1, 1]} : vector<64x32xf32> to vector<64x1xf32>
    %362 = vector.extract_strided_slice %7 {offsets = [26, 0], sizes = [1, 64], strides = [1, 1]} : vector<32x64xf32> to vector<1x64xf32>
    %363 = vector.broadcast %361 : vector<64x1xf32> to vector<64x64xf32>
    %364 = vector.broadcast %362 : vector<1x64xf32> to vector<64x64xf32>
    %365 = arith.addf %363, %364 : vector<64x64xf32>
    %cst_44 = arith.constant 2.000000e-01 : f32
    %366 = vector.broadcast %cst_44 : f32 to vector<64x64xf32>
    %367 = arith.mulf %366, %365 : vector<64x64xf32>
    %368 = arith.maximumf %365, %367 : vector<64x64xf32>
    %c26 = arith.constant 26 : index
    %369 = memref.load %arg3[%c26] : memref<32xf32, #tpu.memory_space<smem>>
    %370 = vector.broadcast %369 : f32 to vector<64x64xf32>
    %371 = arith.mulf %370, %368 : vector<64x64xf32>
    %372 = arith.addf %360, %371 : vector<64x64xf32>
    %373 = vector.extract_strided_slice %6 {offsets = [0, 27], sizes = [64, 1], strides = [1, 1]} : vector<64x32xf32> to vector<64x1xf32>
    %374 = vector.extract_strided_slice %7 {offsets = [27, 0], sizes = [1, 64], strides = [1, 1]} : vector<32x64xf32> to vector<1x64xf32>
    %375 = vector.broadcast %373 : vector<64x1xf32> to vector<64x64xf32>
    %376 = vector.broadcast %374 : vector<1x64xf32> to vector<64x64xf32>
    %377 = arith.addf %375, %376 : vector<64x64xf32>
    %cst_45 = arith.constant 2.000000e-01 : f32
    %378 = vector.broadcast %cst_45 : f32 to vector<64x64xf32>
    %379 = arith.mulf %378, %377 : vector<64x64xf32>
    %380 = arith.maximumf %377, %379 : vector<64x64xf32>
    %c27 = arith.constant 27 : index
    %381 = memref.load %arg3[%c27] : memref<32xf32, #tpu.memory_space<smem>>
    %382 = vector.broadcast %381 : f32 to vector<64x64xf32>
    %383 = arith.mulf %382, %380 : vector<64x64xf32>
    %384 = arith.addf %372, %383 : vector<64x64xf32>
    %385 = vector.extract_strided_slice %6 {offsets = [0, 28], sizes = [64, 1], strides = [1, 1]} : vector<64x32xf32> to vector<64x1xf32>
    %386 = vector.extract_strided_slice %7 {offsets = [28, 0], sizes = [1, 64], strides = [1, 1]} : vector<32x64xf32> to vector<1x64xf32>
    %387 = vector.broadcast %385 : vector<64x1xf32> to vector<64x64xf32>
    %388 = vector.broadcast %386 : vector<1x64xf32> to vector<64x64xf32>
    %389 = arith.addf %387, %388 : vector<64x64xf32>
    %cst_46 = arith.constant 2.000000e-01 : f32
    %390 = vector.broadcast %cst_46 : f32 to vector<64x64xf32>
    %391 = arith.mulf %390, %389 : vector<64x64xf32>
    %392 = arith.maximumf %389, %391 : vector<64x64xf32>
    %c28 = arith.constant 28 : index
    %393 = memref.load %arg3[%c28] : memref<32xf32, #tpu.memory_space<smem>>
    %394 = vector.broadcast %393 : f32 to vector<64x64xf32>
    %395 = arith.mulf %394, %392 : vector<64x64xf32>
    %396 = arith.addf %384, %395 : vector<64x64xf32>
    %397 = vector.extract_strided_slice %6 {offsets = [0, 29], sizes = [64, 1], strides = [1, 1]} : vector<64x32xf32> to vector<64x1xf32>
    %398 = vector.extract_strided_slice %7 {offsets = [29, 0], sizes = [1, 64], strides = [1, 1]} : vector<32x64xf32> to vector<1x64xf32>
    %399 = vector.broadcast %397 : vector<64x1xf32> to vector<64x64xf32>
    %400 = vector.broadcast %398 : vector<1x64xf32> to vector<64x64xf32>
    %401 = arith.addf %399, %400 : vector<64x64xf32>
    %cst_47 = arith.constant 2.000000e-01 : f32
    %402 = vector.broadcast %cst_47 : f32 to vector<64x64xf32>
    %403 = arith.mulf %402, %401 : vector<64x64xf32>
    %404 = arith.maximumf %401, %403 : vector<64x64xf32>
    %c29 = arith.constant 29 : index
    %405 = memref.load %arg3[%c29] : memref<32xf32, #tpu.memory_space<smem>>
    %406 = vector.broadcast %405 : f32 to vector<64x64xf32>
    %407 = arith.mulf %406, %404 : vector<64x64xf32>
    %408 = arith.addf %396, %407 : vector<64x64xf32>
    %409 = vector.extract_strided_slice %6 {offsets = [0, 30], sizes = [64, 1], strides = [1, 1]} : vector<64x32xf32> to vector<64x1xf32>
    %410 = vector.extract_strided_slice %7 {offsets = [30, 0], sizes = [1, 64], strides = [1, 1]} : vector<32x64xf32> to vector<1x64xf32>
    %411 = vector.broadcast %409 : vector<64x1xf32> to vector<64x64xf32>
    %412 = vector.broadcast %410 : vector<1x64xf32> to vector<64x64xf32>
    %413 = arith.addf %411, %412 : vector<64x64xf32>
    %cst_48 = arith.constant 2.000000e-01 : f32
    %414 = vector.broadcast %cst_48 : f32 to vector<64x64xf32>
    %415 = arith.mulf %414, %413 : vector<64x64xf32>
    %416 = arith.maximumf %413, %415 : vector<64x64xf32>
    %c30 = arith.constant 30 : index
    %417 = memref.load %arg3[%c30] : memref<32xf32, #tpu.memory_space<smem>>
    %418 = vector.broadcast %417 : f32 to vector<64x64xf32>
    %419 = arith.mulf %418, %416 : vector<64x64xf32>
    %420 = arith.addf %408, %419 : vector<64x64xf32>
    %421 = vector.extract_strided_slice %6 {offsets = [0, 31], sizes = [64, 1], strides = [1, 1]} : vector<64x32xf32> to vector<64x1xf32>
    %422 = vector.extract_strided_slice %7 {offsets = [31, 0], sizes = [1, 64], strides = [1, 1]} : vector<32x64xf32> to vector<1x64xf32>
    %423 = vector.broadcast %421 : vector<64x1xf32> to vector<64x64xf32>
    %424 = vector.broadcast %422 : vector<1x64xf32> to vector<64x64xf32>
    %425 = arith.addf %423, %424 : vector<64x64xf32>
    %cst_49 = arith.constant 2.000000e-01 : f32
    %426 = vector.broadcast %cst_49 : f32 to vector<64x64xf32>
    %427 = arith.mulf %426, %425 : vector<64x64xf32>
    %428 = arith.maximumf %425, %427 : vector<64x64xf32>
    %c31 = arith.constant 31 : index
    %429 = memref.load %arg3[%c31] : memref<32xf32, #tpu.memory_space<smem>>
    %430 = vector.broadcast %429 : f32 to vector<64x64xf32>
    %431 = arith.mulf %430, %428 : vector<64x64xf32>
    %432 = arith.addf %420, %431 : vector<64x64xf32>
    %433 = arith.addf %432, %1 : vector<64x64xf32>
    %cst_50 = arith.constant dense<0xFF800000> : vector<64xf32>
    %434 = vector.multi_reduction <maximumf>, %433, %cst_50 [1] : vector<64x64xf32> to vector<64xf32>
    %435 = vector.shape_cast %434 : vector<64xf32> to vector<64x1xf32>
    %436 = vector.broadcast %435 : vector<64x1xf32> to vector<64x64xf32>
    %437 = arith.subf %433, %436 : vector<64x64xf32>
    %438 = math.exp %437 : vector<64x64xf32>
    %cst_51 = arith.constant dense<0.000000e+00> : vector<64xf32>
    %439 = vector.multi_reduction <add>, %438, %cst_51 [1] : vector<64x64xf32> to vector<64xf32>
    %440 = vector.shape_cast %439 : vector<64xf32> to vector<64x1xf32>
    %cst_52 = arith.constant 9.99999968E-21 : f32
    %441 = vector.broadcast %cst_52 : f32 to vector<64x1xf32>
    %442 = arith.maximumf %440, %441 : vector<64x1xf32>
    %443 = tpu.reciprocal %442 {approx = true} : vector<64x1xf32> -> vector<64x1xf32>
    %444 = vector.broadcast %443 : vector<64x1xf32> to vector<64x64xf32>
    %445 = arith.mulf %438, %444 : vector<64x64xf32>
    %446 = vector.extract_strided_slice %5 {offsets = [0, 24], sizes = [64, 8], strides = [1, 1]} : vector<64x32xf32> to vector<64x8xf32>
    %cst_53 = arith.constant dense<0.000000e+00> : vector<64x8xf32>
    %447 = tpu.matmul %445, %446, %cst_53 {dimension_numbers = #tpu.dot_dimension_numbers<[1], [0], [0], [1], [0, 0, 1, 1], [], []>} : vector<64x64xf32>, vector<64x8xf32>, vector<64x8xf32> -> vector<64x8xf32>
    %448 = tpu.concatenate %117, %227, %337, %447 in 1 : vector<64x8xf32>, vector<64x8xf32>, vector<64x8xf32>, vector<64x8xf32> -> vector<64x32xf32>
    %449 = arith.cmpf one, %448, %448 : vector<64x32xf32>
    %cst_54 = arith.constant 0.000000e+00 : f32
    %450 = vector.broadcast %cst_54 : f32 to vector<64x32xf32>
    %451 = arith.select %449, %450, %448 : vector<64x32xi1>, vector<64x32xf32>
    %cst_55 = arith.constant 0x7F800000 : f32
    %452 = vector.broadcast %cst_55 : f32 to vector<64x32xf32>
    %453 = arith.cmpf oeq, %451, %452 : vector<64x32xf32>
    %cst_56 = arith.constant 9.99999974E-6 : f32
    %454 = vector.broadcast %cst_56 : f32 to vector<64x32xf32>
    %455 = arith.select %453, %454, %451 : vector<64x32xi1>, vector<64x32xf32>
    %cst_57 = arith.constant 0xFF800000 : f32
    %456 = vector.broadcast %cst_57 : f32 to vector<64x32xf32>
    %457 = arith.cmpf oeq, %455, %456 : vector<64x32xf32>
    %cst_58 = arith.constant -9.99999974E-6 : f32
    %458 = vector.broadcast %cst_58 : f32 to vector<64x32xf32>
    %459 = arith.select %457, %458, %455 : vector<64x32xi1>, vector<64x32xf32>
    %cst_59 = arith.constant dense<0.000000e+00> : vector<64xf32>
    %460 = vector.multi_reduction <add>, %459, %cst_59 [1] : vector<64x32xf32> to vector<64xf32>
    %461 = vector.shape_cast %460 : vector<64xf32> to vector<64x1xf32>
    %cst_60 = arith.constant 3.200000e+01 : f32
    %462 = vector.broadcast %cst_60 : f32 to vector<64x1xf32>
    %463 = arith.divf %461, %462 : vector<64x1xf32>
    %464 = vector.broadcast %463 : vector<64x1xf32> to vector<64x32xf32>
    %465 = arith.subf %459, %464 : vector<64x32xf32>
    %466 = arith.mulf %465, %465 : vector<64x32xf32>
    %cst_61 = arith.constant dense<0.000000e+00> : vector<64xf32>
    %467 = vector.multi_reduction <add>, %466, %cst_61 [1] : vector<64x32xf32> to vector<64xf32>
    %468 = vector.shape_cast %467 : vector<64xf32> to vector<64x1xf32>
    %cst_62 = arith.constant 3.200000e+01 : f32
    %469 = vector.broadcast %cst_62 : f32 to vector<64x1xf32>
    %470 = arith.divf %468, %469 : vector<64x1xf32>
    %cst_63 = arith.constant 9.99999974E-6 : f32
    %471 = vector.broadcast %cst_63 : f32 to vector<64x1xf32>
    %472 = arith.addf %470, %471 : vector<64x1xf32>
    %473 = math.rsqrt %472 : vector<64x1xf32>
    %474 = vector.broadcast %473 : vector<64x1xf32> to vector<64x32xf32>
    %475 = arith.mulf %465, %474 : vector<64x32xf32>
    %cst_64 = arith.constant 0.000000e+00 : f32
    %476 = vector.broadcast %cst_64 : f32 to vector<64x32xf32>
    %477 = arith.maximumf %475, %476 : vector<64x32xf32>
    %478 = arith.truncf %477 : vector<64x32xf32> to vector<64x32xbf16>
    %c0_65 = arith.constant 0 : index
    %c0_66 = arith.constant 0 : index
    %479 = vector.load %arg4[%c0_65, %c0_66] : memref<32x64xbf16, #tpu.memory_space<vmem>>, vector<32x64xbf16>
    %cst_67 = arith.constant dense<0.000000e+00> : vector<64x64xf32>
    %480 = tpu.matmul %478, %479, %cst_67 {dimension_numbers = #tpu.dot_dimension_numbers<[1], [0], [0], [1], [0, 0, 1, 1], [], []>} : vector<64x32xbf16>, vector<32x64xbf16>, vector<64x64xf32> -> vector<64x64xf32>
    %481 = vector.extract_strided_slice %480 {offsets = [0, 0], sizes = [64, 32], strides = [1, 1]} : vector<64x64xf32> to vector<64x32xf32>
    %482 = vector.extract_strided_slice %480 {offsets = [0, 32], sizes = [64, 32], strides = [1, 1]} : vector<64x64xf32> to vector<64x32xf32>
    %483 = tpu.transpose %481, [1, 0] : vector<64x32xf32> -> vector<32x64xf32>
    %484 = vector.extract_strided_slice %482 {offsets = [0, 0], sizes = [64, 1], strides = [1, 1]} : vector<64x32xf32> to vector<64x1xf32>
    %485 = vector.extract_strided_slice %483 {offsets = [0, 0], sizes = [1, 64], strides = [1, 1]} : vector<32x64xf32> to vector<1x64xf32>
    %486 = vector.broadcast %484 : vector<64x1xf32> to vector<64x64xf32>
    %487 = vector.broadcast %485 : vector<1x64xf32> to vector<64x64xf32>
    %488 = arith.addf %486, %487 : vector<64x64xf32>
    %cst_68 = arith.constant 2.000000e-01 : f32
    %489 = vector.broadcast %cst_68 : f32 to vector<64x64xf32>
    %490 = arith.mulf %489, %488 : vector<64x64xf32>
    %491 = arith.maximumf %488, %490 : vector<64x64xf32>
    %c0_69 = arith.constant 0 : index
    %492 = memref.load %arg5[%c0_69] : memref<32xf32, #tpu.memory_space<smem>>
    %493 = vector.broadcast %492 : f32 to vector<64x64xf32>
    %494 = arith.mulf %493, %491 : vector<64x64xf32>
    %495 = vector.extract_strided_slice %482 {offsets = [0, 1], sizes = [64, 1], strides = [1, 1]} : vector<64x32xf32> to vector<64x1xf32>
    %496 = vector.extract_strided_slice %483 {offsets = [1, 0], sizes = [1, 64], strides = [1, 1]} : vector<32x64xf32> to vector<1x64xf32>
    %497 = vector.broadcast %495 : vector<64x1xf32> to vector<64x64xf32>
    %498 = vector.broadcast %496 : vector<1x64xf32> to vector<64x64xf32>
    %499 = arith.addf %497, %498 : vector<64x64xf32>
    %cst_70 = arith.constant 2.000000e-01 : f32
    %500 = vector.broadcast %cst_70 : f32 to vector<64x64xf32>
    %501 = arith.mulf %500, %499 : vector<64x64xf32>
    %502 = arith.maximumf %499, %501 : vector<64x64xf32>
    %c1_71 = arith.constant 1 : index
    %503 = memref.load %arg5[%c1_71] : memref<32xf32, #tpu.memory_space<smem>>
    %504 = vector.broadcast %503 : f32 to vector<64x64xf32>
    %505 = arith.mulf %504, %502 : vector<64x64xf32>
    %506 = arith.addf %494, %505 : vector<64x64xf32>
    %507 = vector.extract_strided_slice %482 {offsets = [0, 2], sizes = [64, 1], strides = [1, 1]} : vector<64x32xf32> to vector<64x1xf32>
    %508 = vector.extract_strided_slice %483 {offsets = [2, 0], sizes = [1, 64], strides = [1, 1]} : vector<32x64xf32> to vector<1x64xf32>
    %509 = vector.broadcast %507 : vector<64x1xf32> to vector<64x64xf32>
    %510 = vector.broadcast %508 : vector<1x64xf32> to vector<64x64xf32>
    %511 = arith.addf %509, %510 : vector<64x64xf32>
    %cst_72 = arith.constant 2.000000e-01 : f32
    %512 = vector.broadcast %cst_72 : f32 to vector<64x64xf32>
    %513 = arith.mulf %512, %511 : vector<64x64xf32>
    %514 = arith.maximumf %511, %513 : vector<64x64xf32>
    %c2_73 = arith.constant 2 : index
    %515 = memref.load %arg5[%c2_73] : memref<32xf32, #tpu.memory_space<smem>>
    %516 = vector.broadcast %515 : f32 to vector<64x64xf32>
    %517 = arith.mulf %516, %514 : vector<64x64xf32>
    %518 = arith.addf %506, %517 : vector<64x64xf32>
    %519 = vector.extract_strided_slice %482 {offsets = [0, 3], sizes = [64, 1], strides = [1, 1]} : vector<64x32xf32> to vector<64x1xf32>
    %520 = vector.extract_strided_slice %483 {offsets = [3, 0], sizes = [1, 64], strides = [1, 1]} : vector<32x64xf32> to vector<1x64xf32>
    %521 = vector.broadcast %519 : vector<64x1xf32> to vector<64x64xf32>
    %522 = vector.broadcast %520 : vector<1x64xf32> to vector<64x64xf32>
    %523 = arith.addf %521, %522 : vector<64x64xf32>
    %cst_74 = arith.constant 2.000000e-01 : f32
    %524 = vector.broadcast %cst_74 : f32 to vector<64x64xf32>
    %525 = arith.mulf %524, %523 : vector<64x64xf32>
    %526 = arith.maximumf %523, %525 : vector<64x64xf32>
    %c3_75 = arith.constant 3 : index
    %527 = memref.load %arg5[%c3_75] : memref<32xf32, #tpu.memory_space<smem>>
    %528 = vector.broadcast %527 : f32 to vector<64x64xf32>
    %529 = arith.mulf %528, %526 : vector<64x64xf32>
    %530 = arith.addf %518, %529 : vector<64x64xf32>
    %531 = vector.extract_strided_slice %482 {offsets = [0, 4], sizes = [64, 1], strides = [1, 1]} : vector<64x32xf32> to vector<64x1xf32>
    %532 = vector.extract_strided_slice %483 {offsets = [4, 0], sizes = [1, 64], strides = [1, 1]} : vector<32x64xf32> to vector<1x64xf32>
    %533 = vector.broadcast %531 : vector<64x1xf32> to vector<64x64xf32>
    %534 = vector.broadcast %532 : vector<1x64xf32> to vector<64x64xf32>
    %535 = arith.addf %533, %534 : vector<64x64xf32>
    %cst_76 = arith.constant 2.000000e-01 : f32
    %536 = vector.broadcast %cst_76 : f32 to vector<64x64xf32>
    %537 = arith.mulf %536, %535 : vector<64x64xf32>
    %538 = arith.maximumf %535, %537 : vector<64x64xf32>
    %c4_77 = arith.constant 4 : index
    %539 = memref.load %arg5[%c4_77] : memref<32xf32, #tpu.memory_space<smem>>
    %540 = vector.broadcast %539 : f32 to vector<64x64xf32>
    %541 = arith.mulf %540, %538 : vector<64x64xf32>
    %542 = arith.addf %530, %541 : vector<64x64xf32>
    %543 = vector.extract_strided_slice %482 {offsets = [0, 5], sizes = [64, 1], strides = [1, 1]} : vector<64x32xf32> to vector<64x1xf32>
    %544 = vector.extract_strided_slice %483 {offsets = [5, 0], sizes = [1, 64], strides = [1, 1]} : vector<32x64xf32> to vector<1x64xf32>
    %545 = vector.broadcast %543 : vector<64x1xf32> to vector<64x64xf32>
    %546 = vector.broadcast %544 : vector<1x64xf32> to vector<64x64xf32>
    %547 = arith.addf %545, %546 : vector<64x64xf32>
    %cst_78 = arith.constant 2.000000e-01 : f32
    %548 = vector.broadcast %cst_78 : f32 to vector<64x64xf32>
    %549 = arith.mulf %548, %547 : vector<64x64xf32>
    %550 = arith.maximumf %547, %549 : vector<64x64xf32>
    %c5_79 = arith.constant 5 : index
    %551 = memref.load %arg5[%c5_79] : memref<32xf32, #tpu.memory_space<smem>>
    %552 = vector.broadcast %551 : f32 to vector<64x64xf32>
    %553 = arith.mulf %552, %550 : vector<64x64xf32>
    %554 = arith.addf %542, %553 : vector<64x64xf32>
    %555 = vector.extract_strided_slice %482 {offsets = [0, 6], sizes = [64, 1], strides = [1, 1]} : vector<64x32xf32> to vector<64x1xf32>
    %556 = vector.extract_strided_slice %483 {offsets = [6, 0], sizes = [1, 64], strides = [1, 1]} : vector<32x64xf32> to vector<1x64xf32>
    %557 = vector.broadcast %555 : vector<64x1xf32> to vector<64x64xf32>
    %558 = vector.broadcast %556 : vector<1x64xf32> to vector<64x64xf32>
    %559 = arith.addf %557, %558 : vector<64x64xf32>
    %cst_80 = arith.constant 2.000000e-01 : f32
    %560 = vector.broadcast %cst_80 : f32 to vector<64x64xf32>
    %561 = arith.mulf %560, %559 : vector<64x64xf32>
    %562 = arith.maximumf %559, %561 : vector<64x64xf32>
    %c6_81 = arith.constant 6 : index
    %563 = memref.load %arg5[%c6_81] : memref<32xf32, #tpu.memory_space<smem>>
    %564 = vector.broadcast %563 : f32 to vector<64x64xf32>
    %565 = arith.mulf %564, %562 : vector<64x64xf32>
    %566 = arith.addf %554, %565 : vector<64x64xf32>
    %567 = vector.extract_strided_slice %482 {offsets = [0, 7], sizes = [64, 1], strides = [1, 1]} : vector<64x32xf32> to vector<64x1xf32>
    %568 = vector.extract_strided_slice %483 {offsets = [7, 0], sizes = [1, 64], strides = [1, 1]} : vector<32x64xf32> to vector<1x64xf32>
    %569 = vector.broadcast %567 : vector<64x1xf32> to vector<64x64xf32>
    %570 = vector.broadcast %568 : vector<1x64xf32> to vector<64x64xf32>
    %571 = arith.addf %569, %570 : vector<64x64xf32>
    %cst_82 = arith.constant 2.000000e-01 : f32
    %572 = vector.broadcast %cst_82 : f32 to vector<64x64xf32>
    %573 = arith.mulf %572, %571 : vector<64x64xf32>
    %574 = arith.maximumf %571, %573 : vector<64x64xf32>
    %c7_83 = arith.constant 7 : index
    %575 = memref.load %arg5[%c7_83] : memref<32xf32, #tpu.memory_space<smem>>
    %576 = vector.broadcast %575 : f32 to vector<64x64xf32>
    %577 = arith.mulf %576, %574 : vector<64x64xf32>
    %578 = arith.addf %566, %577 : vector<64x64xf32>
    %579 = arith.addf %578, %1 : vector<64x64xf32>
    %cst_84 = arith.constant dense<0xFF800000> : vector<64xf32>
    %580 = vector.multi_reduction <maximumf>, %579, %cst_84 [1] : vector<64x64xf32> to vector<64xf32>
    %581 = vector.shape_cast %580 : vector<64xf32> to vector<64x1xf32>
    %582 = vector.broadcast %581 : vector<64x1xf32> to vector<64x64xf32>
    %583 = arith.subf %579, %582 : vector<64x64xf32>
    %584 = math.exp %583 : vector<64x64xf32>
    %cst_85 = arith.constant dense<0.000000e+00> : vector<64xf32>
    %585 = vector.multi_reduction <add>, %584, %cst_85 [1] : vector<64x64xf32> to vector<64xf32>
    %586 = vector.shape_cast %585 : vector<64xf32> to vector<64x1xf32>
    %cst_86 = arith.constant 9.99999968E-21 : f32
    %587 = vector.broadcast %cst_86 : f32 to vector<64x1xf32>
    %588 = arith.maximumf %586, %587 : vector<64x1xf32>
    %589 = tpu.reciprocal %588 {approx = true} : vector<64x1xf32> -> vector<64x1xf32>
    %590 = vector.broadcast %589 : vector<64x1xf32> to vector<64x64xf32>
    %591 = arith.mulf %584, %590 : vector<64x64xf32>
    %592 = vector.extract_strided_slice %481 {offsets = [0, 0], sizes = [64, 8], strides = [1, 1]} : vector<64x32xf32> to vector<64x8xf32>
    %cst_87 = arith.constant dense<0.000000e+00> : vector<64x8xf32>
    %593 = tpu.matmul %591, %592, %cst_87 {dimension_numbers = #tpu.dot_dimension_numbers<[1], [0], [0], [1], [0, 0, 1, 1], [], []>} : vector<64x64xf32>, vector<64x8xf32>, vector<64x8xf32> -> vector<64x8xf32>
    %594 = vector.extract_strided_slice %482 {offsets = [0, 8], sizes = [64, 1], strides = [1, 1]} : vector<64x32xf32> to vector<64x1xf32>
    %595 = vector.extract_strided_slice %483 {offsets = [8, 0], sizes = [1, 64], strides = [1, 1]} : vector<32x64xf32> to vector<1x64xf32>
    %596 = vector.broadcast %594 : vector<64x1xf32> to vector<64x64xf32>
    %597 = vector.broadcast %595 : vector<1x64xf32> to vector<64x64xf32>
    %598 = arith.addf %596, %597 : vector<64x64xf32>
    %cst_88 = arith.constant 2.000000e-01 : f32
    %599 = vector.broadcast %cst_88 : f32 to vector<64x64xf32>
    %600 = arith.mulf %599, %598 : vector<64x64xf32>
    %601 = arith.maximumf %598, %600 : vector<64x64xf32>
    %c8_89 = arith.constant 8 : index
    %602 = memref.load %arg5[%c8_89] : memref<32xf32, #tpu.memory_space<smem>>
    %603 = vector.broadcast %602 : f32 to vector<64x64xf32>
    %604 = arith.mulf %603, %601 : vector<64x64xf32>
    %605 = vector.extract_strided_slice %482 {offsets = [0, 9], sizes = [64, 1], strides = [1, 1]} : vector<64x32xf32> to vector<64x1xf32>
    %606 = vector.extract_strided_slice %483 {offsets = [9, 0], sizes = [1, 64], strides = [1, 1]} : vector<32x64xf32> to vector<1x64xf32>
    %607 = vector.broadcast %605 : vector<64x1xf32> to vector<64x64xf32>
    %608 = vector.broadcast %606 : vector<1x64xf32> to vector<64x64xf32>
    %609 = arith.addf %607, %608 : vector<64x64xf32>
    %cst_90 = arith.constant 2.000000e-01 : f32
    %610 = vector.broadcast %cst_90 : f32 to vector<64x64xf32>
    %611 = arith.mulf %610, %609 : vector<64x64xf32>
    %612 = arith.maximumf %609, %611 : vector<64x64xf32>
    %c9_91 = arith.constant 9 : index
    %613 = memref.load %arg5[%c9_91] : memref<32xf32, #tpu.memory_space<smem>>
    %614 = vector.broadcast %613 : f32 to vector<64x64xf32>
    %615 = arith.mulf %614, %612 : vector<64x64xf32>
    %616 = arith.addf %604, %615 : vector<64x64xf32>
    %617 = vector.extract_strided_slice %482 {offsets = [0, 10], sizes = [64, 1], strides = [1, 1]} : vector<64x32xf32> to vector<64x1xf32>
    %618 = vector.extract_strided_slice %483 {offsets = [10, 0], sizes = [1, 64], strides = [1, 1]} : vector<32x64xf32> to vector<1x64xf32>
    %619 = vector.broadcast %617 : vector<64x1xf32> to vector<64x64xf32>
    %620 = vector.broadcast %618 : vector<1x64xf32> to vector<64x64xf32>
    %621 = arith.addf %619, %620 : vector<64x64xf32>
    %cst_92 = arith.constant 2.000000e-01 : f32
    %622 = vector.broadcast %cst_92 : f32 to vector<64x64xf32>
    %623 = arith.mulf %622, %621 : vector<64x64xf32>
    %624 = arith.maximumf %621, %623 : vector<64x64xf32>
    %c10_93 = arith.constant 10 : index
    %625 = memref.load %arg5[%c10_93] : memref<32xf32, #tpu.memory_space<smem>>
    %626 = vector.broadcast %625 : f32 to vector<64x64xf32>
    %627 = arith.mulf %626, %624 : vector<64x64xf32>
    %628 = arith.addf %616, %627 : vector<64x64xf32>
    %629 = vector.extract_strided_slice %482 {offsets = [0, 11], sizes = [64, 1], strides = [1, 1]} : vector<64x32xf32> to vector<64x1xf32>
    %630 = vector.extract_strided_slice %483 {offsets = [11, 0], sizes = [1, 64], strides = [1, 1]} : vector<32x64xf32> to vector<1x64xf32>
    %631 = vector.broadcast %629 : vector<64x1xf32> to vector<64x64xf32>
    %632 = vector.broadcast %630 : vector<1x64xf32> to vector<64x64xf32>
    %633 = arith.addf %631, %632 : vector<64x64xf32>
    %cst_94 = arith.constant 2.000000e-01 : f32
    %634 = vector.broadcast %cst_94 : f32 to vector<64x64xf32>
    %635 = arith.mulf %634, %633 : vector<64x64xf32>
    %636 = arith.maximumf %633, %635 : vector<64x64xf32>
    %c11_95 = arith.constant 11 : index
    %637 = memref.load %arg5[%c11_95] : memref<32xf32, #tpu.memory_space<smem>>
    %638 = vector.broadcast %637 : f32 to vector<64x64xf32>
    %639 = arith.mulf %638, %636 : vector<64x64xf32>
    %640 = arith.addf %628, %639 : vector<64x64xf32>
    %641 = vector.extract_strided_slice %482 {offsets = [0, 12], sizes = [64, 1], strides = [1, 1]} : vector<64x32xf32> to vector<64x1xf32>
    %642 = vector.extract_strided_slice %483 {offsets = [12, 0], sizes = [1, 64], strides = [1, 1]} : vector<32x64xf32> to vector<1x64xf32>
    %643 = vector.broadcast %641 : vector<64x1xf32> to vector<64x64xf32>
    %644 = vector.broadcast %642 : vector<1x64xf32> to vector<64x64xf32>
    %645 = arith.addf %643, %644 : vector<64x64xf32>
    %cst_96 = arith.constant 2.000000e-01 : f32
    %646 = vector.broadcast %cst_96 : f32 to vector<64x64xf32>
    %647 = arith.mulf %646, %645 : vector<64x64xf32>
    %648 = arith.maximumf %645, %647 : vector<64x64xf32>
    %c12_97 = arith.constant 12 : index
    %649 = memref.load %arg5[%c12_97] : memref<32xf32, #tpu.memory_space<smem>>
    %650 = vector.broadcast %649 : f32 to vector<64x64xf32>
    %651 = arith.mulf %650, %648 : vector<64x64xf32>
    %652 = arith.addf %640, %651 : vector<64x64xf32>
    %653 = vector.extract_strided_slice %482 {offsets = [0, 13], sizes = [64, 1], strides = [1, 1]} : vector<64x32xf32> to vector<64x1xf32>
    %654 = vector.extract_strided_slice %483 {offsets = [13, 0], sizes = [1, 64], strides = [1, 1]} : vector<32x64xf32> to vector<1x64xf32>
    %655 = vector.broadcast %653 : vector<64x1xf32> to vector<64x64xf32>
    %656 = vector.broadcast %654 : vector<1x64xf32> to vector<64x64xf32>
    %657 = arith.addf %655, %656 : vector<64x64xf32>
    %cst_98 = arith.constant 2.000000e-01 : f32
    %658 = vector.broadcast %cst_98 : f32 to vector<64x64xf32>
    %659 = arith.mulf %658, %657 : vector<64x64xf32>
    %660 = arith.maximumf %657, %659 : vector<64x64xf32>
    %c13_99 = arith.constant 13 : index
    %661 = memref.load %arg5[%c13_99] : memref<32xf32, #tpu.memory_space<smem>>
    %662 = vector.broadcast %661 : f32 to vector<64x64xf32>
    %663 = arith.mulf %662, %660 : vector<64x64xf32>
    %664 = arith.addf %652, %663 : vector<64x64xf32>
    %665 = vector.extract_strided_slice %482 {offsets = [0, 14], sizes = [64, 1], strides = [1, 1]} : vector<64x32xf32> to vector<64x1xf32>
    %666 = vector.extract_strided_slice %483 {offsets = [14, 0], sizes = [1, 64], strides = [1, 1]} : vector<32x64xf32> to vector<1x64xf32>
    %667 = vector.broadcast %665 : vector<64x1xf32> to vector<64x64xf32>
    %668 = vector.broadcast %666 : vector<1x64xf32> to vector<64x64xf32>
    %669 = arith.addf %667, %668 : vector<64x64xf32>
    %cst_100 = arith.constant 2.000000e-01 : f32
    %670 = vector.broadcast %cst_100 : f32 to vector<64x64xf32>
    %671 = arith.mulf %670, %669 : vector<64x64xf32>
    %672 = arith.maximumf %669, %671 : vector<64x64xf32>
    %c14_101 = arith.constant 14 : index
    %673 = memref.load %arg5[%c14_101] : memref<32xf32, #tpu.memory_space<smem>>
    %674 = vector.broadcast %673 : f32 to vector<64x64xf32>
    %675 = arith.mulf %674, %672 : vector<64x64xf32>
    %676 = arith.addf %664, %675 : vector<64x64xf32>
    %677 = vector.extract_strided_slice %482 {offsets = [0, 15], sizes = [64, 1], strides = [1, 1]} : vector<64x32xf32> to vector<64x1xf32>
    %678 = vector.extract_strided_slice %483 {offsets = [15, 0], sizes = [1, 64], strides = [1, 1]} : vector<32x64xf32> to vector<1x64xf32>
    %679 = vector.broadcast %677 : vector<64x1xf32> to vector<64x64xf32>
    %680 = vector.broadcast %678 : vector<1x64xf32> to vector<64x64xf32>
    %681 = arith.addf %679, %680 : vector<64x64xf32>
    %cst_102 = arith.constant 2.000000e-01 : f32
    %682 = vector.broadcast %cst_102 : f32 to vector<64x64xf32>
    %683 = arith.mulf %682, %681 : vector<64x64xf32>
    %684 = arith.maximumf %681, %683 : vector<64x64xf32>
    %c15_103 = arith.constant 15 : index
    %685 = memref.load %arg5[%c15_103] : memref<32xf32, #tpu.memory_space<smem>>
    %686 = vector.broadcast %685 : f32 to vector<64x64xf32>
    %687 = arith.mulf %686, %684 : vector<64x64xf32>
    %688 = arith.addf %676, %687 : vector<64x64xf32>
    %689 = arith.addf %688, %1 : vector<64x64xf32>
    %cst_104 = arith.constant dense<0xFF800000> : vector<64xf32>
    %690 = vector.multi_reduction <maximumf>, %689, %cst_104 [1] : vector<64x64xf32> to vector<64xf32>
    %691 = vector.shape_cast %690 : vector<64xf32> to vector<64x1xf32>
    %692 = vector.broadcast %691 : vector<64x1xf32> to vector<64x64xf32>
    %693 = arith.subf %689, %692 : vector<64x64xf32>
    %694 = math.exp %693 : vector<64x64xf32>
    %cst_105 = arith.constant dense<0.000000e+00> : vector<64xf32>
    %695 = vector.multi_reduction <add>, %694, %cst_105 [1] : vector<64x64xf32> to vector<64xf32>
    %696 = vector.shape_cast %695 : vector<64xf32> to vector<64x1xf32>
    %cst_106 = arith.constant 9.99999968E-21 : f32
    %697 = vector.broadcast %cst_106 : f32 to vector<64x1xf32>
    %698 = arith.maximumf %696, %697 : vector<64x1xf32>
    %699 = tpu.reciprocal %698 {approx = true} : vector<64x1xf32> -> vector<64x1xf32>
    %700 = vector.broadcast %699 : vector<64x1xf32> to vector<64x64xf32>
    %701 = arith.mulf %694, %700 : vector<64x64xf32>
    %702 = vector.extract_strided_slice %481 {offsets = [0, 8], sizes = [64, 8], strides = [1, 1]} : vector<64x32xf32> to vector<64x8xf32>
    %cst_107 = arith.constant dense<0.000000e+00> : vector<64x8xf32>
    %703 = tpu.matmul %701, %702, %cst_107 {dimension_numbers = #tpu.dot_dimension_numbers<[1], [0], [0], [1], [0, 0, 1, 1], [], []>} : vector<64x64xf32>, vector<64x8xf32>, vector<64x8xf32> -> vector<64x8xf32>
    %704 = vector.extract_strided_slice %482 {offsets = [0, 16], sizes = [64, 1], strides = [1, 1]} : vector<64x32xf32> to vector<64x1xf32>
    %705 = vector.extract_strided_slice %483 {offsets = [16, 0], sizes = [1, 64], strides = [1, 1]} : vector<32x64xf32> to vector<1x64xf32>
    %706 = vector.broadcast %704 : vector<64x1xf32> to vector<64x64xf32>
    %707 = vector.broadcast %705 : vector<1x64xf32> to vector<64x64xf32>
    %708 = arith.addf %706, %707 : vector<64x64xf32>
    %cst_108 = arith.constant 2.000000e-01 : f32
    %709 = vector.broadcast %cst_108 : f32 to vector<64x64xf32>
    %710 = arith.mulf %709, %708 : vector<64x64xf32>
    %711 = arith.maximumf %708, %710 : vector<64x64xf32>
    %c16_109 = arith.constant 16 : index
    %712 = memref.load %arg5[%c16_109] : memref<32xf32, #tpu.memory_space<smem>>
    %713 = vector.broadcast %712 : f32 to vector<64x64xf32>
    %714 = arith.mulf %713, %711 : vector<64x64xf32>
    %715 = vector.extract_strided_slice %482 {offsets = [0, 17], sizes = [64, 1], strides = [1, 1]} : vector<64x32xf32> to vector<64x1xf32>
    %716 = vector.extract_strided_slice %483 {offsets = [17, 0], sizes = [1, 64], strides = [1, 1]} : vector<32x64xf32> to vector<1x64xf32>
    %717 = vector.broadcast %715 : vector<64x1xf32> to vector<64x64xf32>
    %718 = vector.broadcast %716 : vector<1x64xf32> to vector<64x64xf32>
    %719 = arith.addf %717, %718 : vector<64x64xf32>
    %cst_110 = arith.constant 2.000000e-01 : f32
    %720 = vector.broadcast %cst_110 : f32 to vector<64x64xf32>
    %721 = arith.mulf %720, %719 : vector<64x64xf32>
    %722 = arith.maximumf %719, %721 : vector<64x64xf32>
    %c17_111 = arith.constant 17 : index
    %723 = memref.load %arg5[%c17_111] : memref<32xf32, #tpu.memory_space<smem>>
    %724 = vector.broadcast %723 : f32 to vector<64x64xf32>
    %725 = arith.mulf %724, %722 : vector<64x64xf32>
    %726 = arith.addf %714, %725 : vector<64x64xf32>
    %727 = vector.extract_strided_slice %482 {offsets = [0, 18], sizes = [64, 1], strides = [1, 1]} : vector<64x32xf32> to vector<64x1xf32>
    %728 = vector.extract_strided_slice %483 {offsets = [18, 0], sizes = [1, 64], strides = [1, 1]} : vector<32x64xf32> to vector<1x64xf32>
    %729 = vector.broadcast %727 : vector<64x1xf32> to vector<64x64xf32>
    %730 = vector.broadcast %728 : vector<1x64xf32> to vector<64x64xf32>
    %731 = arith.addf %729, %730 : vector<64x64xf32>
    %cst_112 = arith.constant 2.000000e-01 : f32
    %732 = vector.broadcast %cst_112 : f32 to vector<64x64xf32>
    %733 = arith.mulf %732, %731 : vector<64x64xf32>
    %734 = arith.maximumf %731, %733 : vector<64x64xf32>
    %c18_113 = arith.constant 18 : index
    %735 = memref.load %arg5[%c18_113] : memref<32xf32, #tpu.memory_space<smem>>
    %736 = vector.broadcast %735 : f32 to vector<64x64xf32>
    %737 = arith.mulf %736, %734 : vector<64x64xf32>
    %738 = arith.addf %726, %737 : vector<64x64xf32>
    %739 = vector.extract_strided_slice %482 {offsets = [0, 19], sizes = [64, 1], strides = [1, 1]} : vector<64x32xf32> to vector<64x1xf32>
    %740 = vector.extract_strided_slice %483 {offsets = [19, 0], sizes = [1, 64], strides = [1, 1]} : vector<32x64xf32> to vector<1x64xf32>
    %741 = vector.broadcast %739 : vector<64x1xf32> to vector<64x64xf32>
    %742 = vector.broadcast %740 : vector<1x64xf32> to vector<64x64xf32>
    %743 = arith.addf %741, %742 : vector<64x64xf32>
    %cst_114 = arith.constant 2.000000e-01 : f32
    %744 = vector.broadcast %cst_114 : f32 to vector<64x64xf32>
    %745 = arith.mulf %744, %743 : vector<64x64xf32>
    %746 = arith.maximumf %743, %745 : vector<64x64xf32>
    %c19_115 = arith.constant 19 : index
    %747 = memref.load %arg5[%c19_115] : memref<32xf32, #tpu.memory_space<smem>>
    %748 = vector.broadcast %747 : f32 to vector<64x64xf32>
    %749 = arith.mulf %748, %746 : vector<64x64xf32>
    %750 = arith.addf %738, %749 : vector<64x64xf32>
    %751 = vector.extract_strided_slice %482 {offsets = [0, 20], sizes = [64, 1], strides = [1, 1]} : vector<64x32xf32> to vector<64x1xf32>
    %752 = vector.extract_strided_slice %483 {offsets = [20, 0], sizes = [1, 64], strides = [1, 1]} : vector<32x64xf32> to vector<1x64xf32>
    %753 = vector.broadcast %751 : vector<64x1xf32> to vector<64x64xf32>
    %754 = vector.broadcast %752 : vector<1x64xf32> to vector<64x64xf32>
    %755 = arith.addf %753, %754 : vector<64x64xf32>
    %cst_116 = arith.constant 2.000000e-01 : f32
    %756 = vector.broadcast %cst_116 : f32 to vector<64x64xf32>
    %757 = arith.mulf %756, %755 : vector<64x64xf32>
    %758 = arith.maximumf %755, %757 : vector<64x64xf32>
    %c20_117 = arith.constant 20 : index
    %759 = memref.load %arg5[%c20_117] : memref<32xf32, #tpu.memory_space<smem>>
    %760 = vector.broadcast %759 : f32 to vector<64x64xf32>
    %761 = arith.mulf %760, %758 : vector<64x64xf32>
    %762 = arith.addf %750, %761 : vector<64x64xf32>
    %763 = vector.extract_strided_slice %482 {offsets = [0, 21], sizes = [64, 1], strides = [1, 1]} : vector<64x32xf32> to vector<64x1xf32>
    %764 = vector.extract_strided_slice %483 {offsets = [21, 0], sizes = [1, 64], strides = [1, 1]} : vector<32x64xf32> to vector<1x64xf32>
    %765 = vector.broadcast %763 : vector<64x1xf32> to vector<64x64xf32>
    %766 = vector.broadcast %764 : vector<1x64xf32> to vector<64x64xf32>
    %767 = arith.addf %765, %766 : vector<64x64xf32>
    %cst_118 = arith.constant 2.000000e-01 : f32
    %768 = vector.broadcast %cst_118 : f32 to vector<64x64xf32>
    %769 = arith.mulf %768, %767 : vector<64x64xf32>
    %770 = arith.maximumf %767, %769 : vector<64x64xf32>
    %c21_119 = arith.constant 21 : index
    %771 = memref.load %arg5[%c21_119] : memref<32xf32, #tpu.memory_space<smem>>
    %772 = vector.broadcast %771 : f32 to vector<64x64xf32>
    %773 = arith.mulf %772, %770 : vector<64x64xf32>
    %774 = arith.addf %762, %773 : vector<64x64xf32>
    %775 = vector.extract_strided_slice %482 {offsets = [0, 22], sizes = [64, 1], strides = [1, 1]} : vector<64x32xf32> to vector<64x1xf32>
    %776 = vector.extract_strided_slice %483 {offsets = [22, 0], sizes = [1, 64], strides = [1, 1]} : vector<32x64xf32> to vector<1x64xf32>
    %777 = vector.broadcast %775 : vector<64x1xf32> to vector<64x64xf32>
    %778 = vector.broadcast %776 : vector<1x64xf32> to vector<64x64xf32>
    %779 = arith.addf %777, %778 : vector<64x64xf32>
    %cst_120 = arith.constant 2.000000e-01 : f32
    %780 = vector.broadcast %cst_120 : f32 to vector<64x64xf32>
    %781 = arith.mulf %780, %779 : vector<64x64xf32>
    %782 = arith.maximumf %779, %781 : vector<64x64xf32>
    %c22_121 = arith.constant 22 : index
    %783 = memref.load %arg5[%c22_121] : memref<32xf32, #tpu.memory_space<smem>>
    %784 = vector.broadcast %783 : f32 to vector<64x64xf32>
    %785 = arith.mulf %784, %782 : vector<64x64xf32>
    %786 = arith.addf %774, %785 : vector<64x64xf32>
    %787 = vector.extract_strided_slice %482 {offsets = [0, 23], sizes = [64, 1], strides = [1, 1]} : vector<64x32xf32> to vector<64x1xf32>
    %788 = vector.extract_strided_slice %483 {offsets = [23, 0], sizes = [1, 64], strides = [1, 1]} : vector<32x64xf32> to vector<1x64xf32>
    %789 = vector.broadcast %787 : vector<64x1xf32> to vector<64x64xf32>
    %790 = vector.broadcast %788 : vector<1x64xf32> to vector<64x64xf32>
    %791 = arith.addf %789, %790 : vector<64x64xf32>
    %cst_122 = arith.constant 2.000000e-01 : f32
    %792 = vector.broadcast %cst_122 : f32 to vector<64x64xf32>
    %793 = arith.mulf %792, %791 : vector<64x64xf32>
    %794 = arith.maximumf %791, %793 : vector<64x64xf32>
    %c23_123 = arith.constant 23 : index
    %795 = memref.load %arg5[%c23_123] : memref<32xf32, #tpu.memory_space<smem>>
    %796 = vector.broadcast %795 : f32 to vector<64x64xf32>
    %797 = arith.mulf %796, %794 : vector<64x64xf32>
    %798 = arith.addf %786, %797 : vector<64x64xf32>
    %799 = arith.addf %798, %1 : vector<64x64xf32>
    %cst_124 = arith.constant dense<0xFF800000> : vector<64xf32>
    %800 = vector.multi_reduction <maximumf>, %799, %cst_124 [1] : vector<64x64xf32> to vector<64xf32>
    %801 = vector.shape_cast %800 : vector<64xf32> to vector<64x1xf32>
    %802 = vector.broadcast %801 : vector<64x1xf32> to vector<64x64xf32>
    %803 = arith.subf %799, %802 : vector<64x64xf32>
    %804 = math.exp %803 : vector<64x64xf32>
    %cst_125 = arith.constant dense<0.000000e+00> : vector<64xf32>
    %805 = vector.multi_reduction <add>, %804, %cst_125 [1] : vector<64x64xf32> to vector<64xf32>
    %806 = vector.shape_cast %805 : vector<64xf32> to vector<64x1xf32>
    %cst_126 = arith.constant 9.99999968E-21 : f32
    %807 = vector.broadcast %cst_126 : f32 to vector<64x1xf32>
    %808 = arith.maximumf %806, %807 : vector<64x1xf32>
    %809 = tpu.reciprocal %808 {approx = true} : vector<64x1xf32> -> vector<64x1xf32>
    %810 = vector.broadcast %809 : vector<64x1xf32> to vector<64x64xf32>
    %811 = arith.mulf %804, %810 : vector<64x64xf32>
    %812 = vector.extract_strided_slice %481 {offsets = [0, 16], sizes = [64, 8], strides = [1, 1]} : vector<64x32xf32> to vector<64x8xf32>
    %cst_127 = arith.constant dense<0.000000e+00> : vector<64x8xf32>
    %813 = tpu.matmul %811, %812, %cst_127 {dimension_numbers = #tpu.dot_dimension_numbers<[1], [0], [0], [1], [0, 0, 1, 1], [], []>} : vector<64x64xf32>, vector<64x8xf32>, vector<64x8xf32> -> vector<64x8xf32>
    %814 = vector.extract_strided_slice %482 {offsets = [0, 24], sizes = [64, 1], strides = [1, 1]} : vector<64x32xf32> to vector<64x1xf32>
    %815 = vector.extract_strided_slice %483 {offsets = [24, 0], sizes = [1, 64], strides = [1, 1]} : vector<32x64xf32> to vector<1x64xf32>
    %816 = vector.broadcast %814 : vector<64x1xf32> to vector<64x64xf32>
    %817 = vector.broadcast %815 : vector<1x64xf32> to vector<64x64xf32>
    %818 = arith.addf %816, %817 : vector<64x64xf32>
    %cst_128 = arith.constant 2.000000e-01 : f32
    %819 = vector.broadcast %cst_128 : f32 to vector<64x64xf32>
    %820 = arith.mulf %819, %818 : vector<64x64xf32>
    %821 = arith.maximumf %818, %820 : vector<64x64xf32>
    %c24_129 = arith.constant 24 : index
    %822 = memref.load %arg5[%c24_129] : memref<32xf32, #tpu.memory_space<smem>>
    %823 = vector.broadcast %822 : f32 to vector<64x64xf32>
    %824 = arith.mulf %823, %821 : vector<64x64xf32>
    %825 = vector.extract_strided_slice %482 {offsets = [0, 25], sizes = [64, 1], strides = [1, 1]} : vector<64x32xf32> to vector<64x1xf32>
    %826 = vector.extract_strided_slice %483 {offsets = [25, 0], sizes = [1, 64], strides = [1, 1]} : vector<32x64xf32> to vector<1x64xf32>
    %827 = vector.broadcast %825 : vector<64x1xf32> to vector<64x64xf32>
    %828 = vector.broadcast %826 : vector<1x64xf32> to vector<64x64xf32>
    %829 = arith.addf %827, %828 : vector<64x64xf32>
    %cst_130 = arith.constant 2.000000e-01 : f32
    %830 = vector.broadcast %cst_130 : f32 to vector<64x64xf32>
    %831 = arith.mulf %830, %829 : vector<64x64xf32>
    %832 = arith.maximumf %829, %831 : vector<64x64xf32>
    %c25_131 = arith.constant 25 : index
    %833 = memref.load %arg5[%c25_131] : memref<32xf32, #tpu.memory_space<smem>>
    %834 = vector.broadcast %833 : f32 to vector<64x64xf32>
    %835 = arith.mulf %834, %832 : vector<64x64xf32>
    %836 = arith.addf %824, %835 : vector<64x64xf32>
    %837 = vector.extract_strided_slice %482 {offsets = [0, 26], sizes = [64, 1], strides = [1, 1]} : vector<64x32xf32> to vector<64x1xf32>
    %838 = vector.extract_strided_slice %483 {offsets = [26, 0], sizes = [1, 64], strides = [1, 1]} : vector<32x64xf32> to vector<1x64xf32>
    %839 = vector.broadcast %837 : vector<64x1xf32> to vector<64x64xf32>
    %840 = vector.broadcast %838 : vector<1x64xf32> to vector<64x64xf32>
    %841 = arith.addf %839, %840 : vector<64x64xf32>
    %cst_132 = arith.constant 2.000000e-01 : f32
    %842 = vector.broadcast %cst_132 : f32 to vector<64x64xf32>
    %843 = arith.mulf %842, %841 : vector<64x64xf32>
    %844 = arith.maximumf %841, %843 : vector<64x64xf32>
    %c26_133 = arith.constant 26 : index
    %845 = memref.load %arg5[%c26_133] : memref<32xf32, #tpu.memory_space<smem>>
    %846 = vector.broadcast %845 : f32 to vector<64x64xf32>
    %847 = arith.mulf %846, %844 : vector<64x64xf32>
    %848 = arith.addf %836, %847 : vector<64x64xf32>
    %849 = vector.extract_strided_slice %482 {offsets = [0, 27], sizes = [64, 1], strides = [1, 1]} : vector<64x32xf32> to vector<64x1xf32>
    %850 = vector.extract_strided_slice %483 {offsets = [27, 0], sizes = [1, 64], strides = [1, 1]} : vector<32x64xf32> to vector<1x64xf32>
    %851 = vector.broadcast %849 : vector<64x1xf32> to vector<64x64xf32>
    %852 = vector.broadcast %850 : vector<1x64xf32> to vector<64x64xf32>
    %853 = arith.addf %851, %852 : vector<64x64xf32>
    %cst_134 = arith.constant 2.000000e-01 : f32
    %854 = vector.broadcast %cst_134 : f32 to vector<64x64xf32>
    %855 = arith.mulf %854, %853 : vector<64x64xf32>
    %856 = arith.maximumf %853, %855 : vector<64x64xf32>
    %c27_135 = arith.constant 27 : index
    %857 = memref.load %arg5[%c27_135] : memref<32xf32, #tpu.memory_space<smem>>
    %858 = vector.broadcast %857 : f32 to vector<64x64xf32>
    %859 = arith.mulf %858, %856 : vector<64x64xf32>
    %860 = arith.addf %848, %859 : vector<64x64xf32>
    %861 = vector.extract_strided_slice %482 {offsets = [0, 28], sizes = [64, 1], strides = [1, 1]} : vector<64x32xf32> to vector<64x1xf32>
    %862 = vector.extract_strided_slice %483 {offsets = [28, 0], sizes = [1, 64], strides = [1, 1]} : vector<32x64xf32> to vector<1x64xf32>
    %863 = vector.broadcast %861 : vector<64x1xf32> to vector<64x64xf32>
    %864 = vector.broadcast %862 : vector<1x64xf32> to vector<64x64xf32>
    %865 = arith.addf %863, %864 : vector<64x64xf32>
    %cst_136 = arith.constant 2.000000e-01 : f32
    %866 = vector.broadcast %cst_136 : f32 to vector<64x64xf32>
    %867 = arith.mulf %866, %865 : vector<64x64xf32>
    %868 = arith.maximumf %865, %867 : vector<64x64xf32>
    %c28_137 = arith.constant 28 : index
    %869 = memref.load %arg5[%c28_137] : memref<32xf32, #tpu.memory_space<smem>>
    %870 = vector.broadcast %869 : f32 to vector<64x64xf32>
    %871 = arith.mulf %870, %868 : vector<64x64xf32>
    %872 = arith.addf %860, %871 : vector<64x64xf32>
    %873 = vector.extract_strided_slice %482 {offsets = [0, 29], sizes = [64, 1], strides = [1, 1]} : vector<64x32xf32> to vector<64x1xf32>
    %874 = vector.extract_strided_slice %483 {offsets = [29, 0], sizes = [1, 64], strides = [1, 1]} : vector<32x64xf32> to vector<1x64xf32>
    %875 = vector.broadcast %873 : vector<64x1xf32> to vector<64x64xf32>
    %876 = vector.broadcast %874 : vector<1x64xf32> to vector<64x64xf32>
    %877 = arith.addf %875, %876 : vector<64x64xf32>
    %cst_138 = arith.constant 2.000000e-01 : f32
    %878 = vector.broadcast %cst_138 : f32 to vector<64x64xf32>
    %879 = arith.mulf %878, %877 : vector<64x64xf32>
    %880 = arith.maximumf %877, %879 : vector<64x64xf32>
    %c29_139 = arith.constant 29 : index
    %881 = memref.load %arg5[%c29_139] : memref<32xf32, #tpu.memory_space<smem>>
    %882 = vector.broadcast %881 : f32 to vector<64x64xf32>
    %883 = arith.mulf %882, %880 : vector<64x64xf32>
    %884 = arith.addf %872, %883 : vector<64x64xf32>
    %885 = vector.extract_strided_slice %482 {offsets = [0, 30], sizes = [64, 1], strides = [1, 1]} : vector<64x32xf32> to vector<64x1xf32>
    %886 = vector.extract_strided_slice %483 {offsets = [30, 0], sizes = [1, 64], strides = [1, 1]} : vector<32x64xf32> to vector<1x64xf32>
    %887 = vector.broadcast %885 : vector<64x1xf32> to vector<64x64xf32>
    %888 = vector.broadcast %886 : vector<1x64xf32> to vector<64x64xf32>
    %889 = arith.addf %887, %888 : vector<64x64xf32>
    %cst_140 = arith.constant 2.000000e-01 : f32
    %890 = vector.broadcast %cst_140 : f32 to vector<64x64xf32>
    %891 = arith.mulf %890, %889 : vector<64x64xf32>
    %892 = arith.maximumf %889, %891 : vector<64x64xf32>
    %c30_141 = arith.constant 30 : index
    %893 = memref.load %arg5[%c30_141] : memref<32xf32, #tpu.memory_space<smem>>
    %894 = vector.broadcast %893 : f32 to vector<64x64xf32>
    %895 = arith.mulf %894, %892 : vector<64x64xf32>
    %896 = arith.addf %884, %895 : vector<64x64xf32>
    %897 = vector.extract_strided_slice %482 {offsets = [0, 31], sizes = [64, 1], strides = [1, 1]} : vector<64x32xf32> to vector<64x1xf32>
    %898 = vector.extract_strided_slice %483 {offsets = [31, 0], sizes = [1, 64], strides = [1, 1]} : vector<32x64xf32> to vector<1x64xf32>
    %899 = vector.broadcast %897 : vector<64x1xf32> to vector<64x64xf32>
    %900 = vector.broadcast %898 : vector<1x64xf32> to vector<64x64xf32>
    %901 = arith.addf %899, %900 : vector<64x64xf32>
    %cst_142 = arith.constant 2.000000e-01 : f32
    %902 = vector.broadcast %cst_142 : f32 to vector<64x64xf32>
    %903 = arith.mulf %902, %901 : vector<64x64xf32>
    %904 = arith.maximumf %901, %903 : vector<64x64xf32>
    %c31_143 = arith.constant 31 : index
    %905 = memref.load %arg5[%c31_143] : memref<32xf32, #tpu.memory_space<smem>>
    %906 = vector.broadcast %905 : f32 to vector<64x64xf32>
    %907 = arith.mulf %906, %904 : vector<64x64xf32>
    %908 = arith.addf %896, %907 : vector<64x64xf32>
    %909 = arith.addf %908, %1 : vector<64x64xf32>
    %cst_144 = arith.constant dense<0xFF800000> : vector<64xf32>
    %910 = vector.multi_reduction <maximumf>, %909, %cst_144 [1] : vector<64x64xf32> to vector<64xf32>
    %911 = vector.shape_cast %910 : vector<64xf32> to vector<64x1xf32>
    %912 = vector.broadcast %911 : vector<64x1xf32> to vector<64x64xf32>
    %913 = arith.subf %909, %912 : vector<64x64xf32>
    %914 = math.exp %913 : vector<64x64xf32>
    %cst_145 = arith.constant dense<0.000000e+00> : vector<64xf32>
    %915 = vector.multi_reduction <add>, %914, %cst_145 [1] : vector<64x64xf32> to vector<64xf32>
    %916 = vector.shape_cast %915 : vector<64xf32> to vector<64x1xf32>
    %cst_146 = arith.constant 9.99999968E-21 : f32
    %917 = vector.broadcast %cst_146 : f32 to vector<64x1xf32>
    %918 = arith.maximumf %916, %917 : vector<64x1xf32>
    %919 = tpu.reciprocal %918 {approx = true} : vector<64x1xf32> -> vector<64x1xf32>
    %920 = vector.broadcast %919 : vector<64x1xf32> to vector<64x64xf32>
    %921 = arith.mulf %914, %920 : vector<64x64xf32>
    %922 = vector.extract_strided_slice %481 {offsets = [0, 24], sizes = [64, 8], strides = [1, 1]} : vector<64x32xf32> to vector<64x8xf32>
    %cst_147 = arith.constant dense<0.000000e+00> : vector<64x8xf32>
    %923 = tpu.matmul %921, %922, %cst_147 {dimension_numbers = #tpu.dot_dimension_numbers<[1], [0], [0], [1], [0, 0, 1, 1], [], []>} : vector<64x64xf32>, vector<64x8xf32>, vector<64x8xf32> -> vector<64x8xf32>
    %924 = tpu.concatenate %593, %703, %813, %923 in 1 : vector<64x8xf32>, vector<64x8xf32>, vector<64x8xf32>, vector<64x8xf32> -> vector<64x32xf32>
    %925 = arith.cmpf one, %924, %924 : vector<64x32xf32>
    %cst_148 = arith.constant 0.000000e+00 : f32
    %926 = vector.broadcast %cst_148 : f32 to vector<64x32xf32>
    %927 = arith.select %925, %926, %924 : vector<64x32xi1>, vector<64x32xf32>
    %cst_149 = arith.constant 0x7F800000 : f32
    %928 = vector.broadcast %cst_149 : f32 to vector<64x32xf32>
    %929 = arith.cmpf oeq, %927, %928 : vector<64x32xf32>
    %cst_150 = arith.constant 9.99999974E-6 : f32
    %930 = vector.broadcast %cst_150 : f32 to vector<64x32xf32>
    %931 = arith.select %929, %930, %927 : vector<64x32xi1>, vector<64x32xf32>
    %cst_151 = arith.constant 0xFF800000 : f32
    %932 = vector.broadcast %cst_151 : f32 to vector<64x32xf32>
    %933 = arith.cmpf oeq, %931, %932 : vector<64x32xf32>
    %cst_152 = arith.constant -9.99999974E-6 : f32
    %934 = vector.broadcast %cst_152 : f32 to vector<64x32xf32>
    %935 = arith.select %933, %934, %931 : vector<64x32xi1>, vector<64x32xf32>
    %cst_153 = arith.constant dense<0.000000e+00> : vector<64xf32>
    %936 = vector.multi_reduction <add>, %935, %cst_153 [1] : vector<64x32xf32> to vector<64xf32>
    %937 = vector.shape_cast %936 : vector<64xf32> to vector<64x1xf32>
    %cst_154 = arith.constant 3.200000e+01 : f32
    %938 = vector.broadcast %cst_154 : f32 to vector<64x1xf32>
    %939 = arith.divf %937, %938 : vector<64x1xf32>
    %940 = vector.broadcast %939 : vector<64x1xf32> to vector<64x32xf32>
    %941 = arith.subf %935, %940 : vector<64x32xf32>
    %942 = arith.mulf %941, %941 : vector<64x32xf32>
    %cst_155 = arith.constant dense<0.000000e+00> : vector<64xf32>
    %943 = vector.multi_reduction <add>, %942, %cst_155 [1] : vector<64x32xf32> to vector<64xf32>
    %944 = vector.shape_cast %943 : vector<64xf32> to vector<64x1xf32>
    %cst_156 = arith.constant 3.200000e+01 : f32
    %945 = vector.broadcast %cst_156 : f32 to vector<64x1xf32>
    %946 = arith.divf %944, %945 : vector<64x1xf32>
    %cst_157 = arith.constant 9.99999974E-6 : f32
    %947 = vector.broadcast %cst_157 : f32 to vector<64x1xf32>
    %948 = arith.addf %946, %947 : vector<64x1xf32>
    %949 = math.rsqrt %948 : vector<64x1xf32>
    %950 = vector.broadcast %949 : vector<64x1xf32> to vector<64x32xf32>
    %951 = arith.mulf %941, %950 : vector<64x32xf32>
    %cst_158 = arith.constant 0.000000e+00 : f32
    %952 = vector.broadcast %cst_158 : f32 to vector<64x32xf32>
    %953 = arith.maximumf %951, %952 : vector<64x32xf32>
    %954 = arith.addf %953, %477 : vector<64x32xf32>
    %955 = arith.truncf %954 : vector<64x32xf32> to vector<64x32xbf16>
    %c0_159 = arith.constant 0 : index
    %c0_160 = arith.constant 0 : index
    %956 = vector.load %arg6[%c0_159, %c0_160] : memref<32x16xbf16, #tpu.memory_space<vmem>>, vector<32x16xbf16>
    %cst_161 = arith.constant dense<0.000000e+00> : vector<64x16xf32>
    %957 = tpu.matmul %955, %956, %cst_161 {dimension_numbers = #tpu.dot_dimension_numbers<[1], [0], [0], [1], [0, 0, 1, 1], [], []>} : vector<64x32xbf16>, vector<32x16xbf16>, vector<64x16xf32> -> vector<64x16xf32>
    %958 = vector.extract_strided_slice %957 {offsets = [0, 0], sizes = [64, 8], strides = [1, 1]} : vector<64x16xf32> to vector<64x8xf32>
    %959 = vector.extract_strided_slice %957 {offsets = [0, 8], sizes = [64, 8], strides = [1, 1]} : vector<64x16xf32> to vector<64x8xf32>
    %960 = tpu.transpose %958, [1, 0] : vector<64x8xf32> -> vector<8x64xf32>
    %961 = vector.extract_strided_slice %959 {offsets = [0, 0], sizes = [64, 1], strides = [1, 1]} : vector<64x8xf32> to vector<64x1xf32>
    %962 = vector.extract_strided_slice %960 {offsets = [0, 0], sizes = [1, 64], strides = [1, 1]} : vector<8x64xf32> to vector<1x64xf32>
    %963 = vector.broadcast %961 : vector<64x1xf32> to vector<64x64xf32>
    %964 = vector.broadcast %962 : vector<1x64xf32> to vector<64x64xf32>
    %965 = arith.addf %963, %964 : vector<64x64xf32>
    %cst_162 = arith.constant 2.000000e-01 : f32
    %966 = vector.broadcast %cst_162 : f32 to vector<64x64xf32>
    %967 = arith.mulf %966, %965 : vector<64x64xf32>
    %968 = arith.maximumf %965, %967 : vector<64x64xf32>
    %c0_163 = arith.constant 0 : index
    %969 = memref.load %arg7[%c0_163] : memref<8xf32, #tpu.memory_space<smem>>
    %970 = vector.broadcast %969 : f32 to vector<64x64xf32>
    %971 = arith.mulf %970, %968 : vector<64x64xf32>
    %972 = vector.extract_strided_slice %959 {offsets = [0, 1], sizes = [64, 1], strides = [1, 1]} : vector<64x8xf32> to vector<64x1xf32>
    %973 = vector.extract_strided_slice %960 {offsets = [1, 0], sizes = [1, 64], strides = [1, 1]} : vector<8x64xf32> to vector<1x64xf32>
    %974 = vector.broadcast %972 : vector<64x1xf32> to vector<64x64xf32>
    %975 = vector.broadcast %973 : vector<1x64xf32> to vector<64x64xf32>
    %976 = arith.addf %974, %975 : vector<64x64xf32>
    %cst_164 = arith.constant 2.000000e-01 : f32
    %977 = vector.broadcast %cst_164 : f32 to vector<64x64xf32>
    %978 = arith.mulf %977, %976 : vector<64x64xf32>
    %979 = arith.maximumf %976, %978 : vector<64x64xf32>
    %c1_165 = arith.constant 1 : index
    %980 = memref.load %arg7[%c1_165] : memref<8xf32, #tpu.memory_space<smem>>
    %981 = vector.broadcast %980 : f32 to vector<64x64xf32>
    %982 = arith.mulf %981, %979 : vector<64x64xf32>
    %983 = arith.addf %971, %982 : vector<64x64xf32>
    %984 = vector.extract_strided_slice %959 {offsets = [0, 2], sizes = [64, 1], strides = [1, 1]} : vector<64x8xf32> to vector<64x1xf32>
    %985 = vector.extract_strided_slice %960 {offsets = [2, 0], sizes = [1, 64], strides = [1, 1]} : vector<8x64xf32> to vector<1x64xf32>
    %986 = vector.broadcast %984 : vector<64x1xf32> to vector<64x64xf32>
    %987 = vector.broadcast %985 : vector<1x64xf32> to vector<64x64xf32>
    %988 = arith.addf %986, %987 : vector<64x64xf32>
    %cst_166 = arith.constant 2.000000e-01 : f32
    %989 = vector.broadcast %cst_166 : f32 to vector<64x64xf32>
    %990 = arith.mulf %989, %988 : vector<64x64xf32>
    %991 = arith.maximumf %988, %990 : vector<64x64xf32>
    %c2_167 = arith.constant 2 : index
    %992 = memref.load %arg7[%c2_167] : memref<8xf32, #tpu.memory_space<smem>>
    %993 = vector.broadcast %992 : f32 to vector<64x64xf32>
    %994 = arith.mulf %993, %991 : vector<64x64xf32>
    %995 = arith.addf %983, %994 : vector<64x64xf32>
    %996 = vector.extract_strided_slice %959 {offsets = [0, 3], sizes = [64, 1], strides = [1, 1]} : vector<64x8xf32> to vector<64x1xf32>
    %997 = vector.extract_strided_slice %960 {offsets = [3, 0], sizes = [1, 64], strides = [1, 1]} : vector<8x64xf32> to vector<1x64xf32>
    %998 = vector.broadcast %996 : vector<64x1xf32> to vector<64x64xf32>
    %999 = vector.broadcast %997 : vector<1x64xf32> to vector<64x64xf32>
    %1000 = arith.addf %998, %999 : vector<64x64xf32>
    %cst_168 = arith.constant 2.000000e-01 : f32
    %1001 = vector.broadcast %cst_168 : f32 to vector<64x64xf32>
    %1002 = arith.mulf %1001, %1000 : vector<64x64xf32>
    %1003 = arith.maximumf %1000, %1002 : vector<64x64xf32>
    %c3_169 = arith.constant 3 : index
    %1004 = memref.load %arg7[%c3_169] : memref<8xf32, #tpu.memory_space<smem>>
    %1005 = vector.broadcast %1004 : f32 to vector<64x64xf32>
    %1006 = arith.mulf %1005, %1003 : vector<64x64xf32>
    %1007 = arith.addf %995, %1006 : vector<64x64xf32>
    %1008 = vector.extract_strided_slice %959 {offsets = [0, 4], sizes = [64, 1], strides = [1, 1]} : vector<64x8xf32> to vector<64x1xf32>
    %1009 = vector.extract_strided_slice %960 {offsets = [4, 0], sizes = [1, 64], strides = [1, 1]} : vector<8x64xf32> to vector<1x64xf32>
    %1010 = vector.broadcast %1008 : vector<64x1xf32> to vector<64x64xf32>
    %1011 = vector.broadcast %1009 : vector<1x64xf32> to vector<64x64xf32>
    %1012 = arith.addf %1010, %1011 : vector<64x64xf32>
    %cst_170 = arith.constant 2.000000e-01 : f32
    %1013 = vector.broadcast %cst_170 : f32 to vector<64x64xf32>
    %1014 = arith.mulf %1013, %1012 : vector<64x64xf32>
    %1015 = arith.maximumf %1012, %1014 : vector<64x64xf32>
    %c4_171 = arith.constant 4 : index
    %1016 = memref.load %arg7[%c4_171] : memref<8xf32, #tpu.memory_space<smem>>
    %1017 = vector.broadcast %1016 : f32 to vector<64x64xf32>
    %1018 = arith.mulf %1017, %1015 : vector<64x64xf32>
    %1019 = arith.addf %1007, %1018 : vector<64x64xf32>
    %1020 = vector.extract_strided_slice %959 {offsets = [0, 5], sizes = [64, 1], strides = [1, 1]} : vector<64x8xf32> to vector<64x1xf32>
    %1021 = vector.extract_strided_slice %960 {offsets = [5, 0], sizes = [1, 64], strides = [1, 1]} : vector<8x64xf32> to vector<1x64xf32>
    %1022 = vector.broadcast %1020 : vector<64x1xf32> to vector<64x64xf32>
    %1023 = vector.broadcast %1021 : vector<1x64xf32> to vector<64x64xf32>
    %1024 = arith.addf %1022, %1023 : vector<64x64xf32>
    %cst_172 = arith.constant 2.000000e-01 : f32
    %1025 = vector.broadcast %cst_172 : f32 to vector<64x64xf32>
    %1026 = arith.mulf %1025, %1024 : vector<64x64xf32>
    %1027 = arith.maximumf %1024, %1026 : vector<64x64xf32>
    %c5_173 = arith.constant 5 : index
    %1028 = memref.load %arg7[%c5_173] : memref<8xf32, #tpu.memory_space<smem>>
    %1029 = vector.broadcast %1028 : f32 to vector<64x64xf32>
    %1030 = arith.mulf %1029, %1027 : vector<64x64xf32>
    %1031 = arith.addf %1019, %1030 : vector<64x64xf32>
    %1032 = vector.extract_strided_slice %959 {offsets = [0, 6], sizes = [64, 1], strides = [1, 1]} : vector<64x8xf32> to vector<64x1xf32>
    %1033 = vector.extract_strided_slice %960 {offsets = [6, 0], sizes = [1, 64], strides = [1, 1]} : vector<8x64xf32> to vector<1x64xf32>
    %1034 = vector.broadcast %1032 : vector<64x1xf32> to vector<64x64xf32>
    %1035 = vector.broadcast %1033 : vector<1x64xf32> to vector<64x64xf32>
    %1036 = arith.addf %1034, %1035 : vector<64x64xf32>
    %cst_174 = arith.constant 2.000000e-01 : f32
    %1037 = vector.broadcast %cst_174 : f32 to vector<64x64xf32>
    %1038 = arith.mulf %1037, %1036 : vector<64x64xf32>
    %1039 = arith.maximumf %1036, %1038 : vector<64x64xf32>
    %c6_175 = arith.constant 6 : index
    %1040 = memref.load %arg7[%c6_175] : memref<8xf32, #tpu.memory_space<smem>>
    %1041 = vector.broadcast %1040 : f32 to vector<64x64xf32>
    %1042 = arith.mulf %1041, %1039 : vector<64x64xf32>
    %1043 = arith.addf %1031, %1042 : vector<64x64xf32>
    %1044 = vector.extract_strided_slice %959 {offsets = [0, 7], sizes = [64, 1], strides = [1, 1]} : vector<64x8xf32> to vector<64x1xf32>
    %1045 = vector.extract_strided_slice %960 {offsets = [7, 0], sizes = [1, 64], strides = [1, 1]} : vector<8x64xf32> to vector<1x64xf32>
    %1046 = vector.broadcast %1044 : vector<64x1xf32> to vector<64x64xf32>
    %1047 = vector.broadcast %1045 : vector<1x64xf32> to vector<64x64xf32>
    %1048 = arith.addf %1046, %1047 : vector<64x64xf32>
    %cst_176 = arith.constant 2.000000e-01 : f32
    %1049 = vector.broadcast %cst_176 : f32 to vector<64x64xf32>
    %1050 = arith.mulf %1049, %1048 : vector<64x64xf32>
    %1051 = arith.maximumf %1048, %1050 : vector<64x64xf32>
    %c7_177 = arith.constant 7 : index
    %1052 = memref.load %arg7[%c7_177] : memref<8xf32, #tpu.memory_space<smem>>
    %1053 = vector.broadcast %1052 : f32 to vector<64x64xf32>
    %1054 = arith.mulf %1053, %1051 : vector<64x64xf32>
    %1055 = arith.addf %1043, %1054 : vector<64x64xf32>
    %1056 = arith.addf %1055, %1 : vector<64x64xf32>
    %cst_178 = arith.constant dense<0xFF800000> : vector<64xf32>
    %1057 = vector.multi_reduction <maximumf>, %1056, %cst_178 [1] : vector<64x64xf32> to vector<64xf32>
    %1058 = vector.shape_cast %1057 : vector<64xf32> to vector<64x1xf32>
    %1059 = vector.broadcast %1058 : vector<64x1xf32> to vector<64x64xf32>
    %1060 = arith.subf %1056, %1059 : vector<64x64xf32>
    %1061 = math.exp %1060 : vector<64x64xf32>
    %cst_179 = arith.constant dense<0.000000e+00> : vector<64xf32>
    %1062 = vector.multi_reduction <add>, %1061, %cst_179 [1] : vector<64x64xf32> to vector<64xf32>
    %1063 = vector.shape_cast %1062 : vector<64xf32> to vector<64x1xf32>
    %cst_180 = arith.constant 9.99999968E-21 : f32
    %1064 = vector.broadcast %cst_180 : f32 to vector<64x1xf32>
    %1065 = arith.maximumf %1063, %1064 : vector<64x1xf32>
    %1066 = tpu.reciprocal %1065 {approx = true} : vector<64x1xf32> -> vector<64x1xf32>
    %1067 = vector.broadcast %1066 : vector<64x1xf32> to vector<64x64xf32>
    %1068 = arith.mulf %1061, %1067 : vector<64x64xf32>
    %cst_181 = arith.constant dense<0.000000e+00> : vector<64x8xf32>
    %1069 = tpu.matmul %1068, %958, %cst_181 {dimension_numbers = #tpu.dot_dimension_numbers<[1], [0], [0], [1], [0, 0, 1, 1], [], []>} : vector<64x64xf32>, vector<64x8xf32>, vector<64x8xf32> -> vector<64x8xf32>
    %c0_182 = arith.constant 0 : index
    %c0_183 = arith.constant 0 : index
    %1070 = vector.load %arg8[%c0_182, %c0_183] : memref<64x8xf32, #tpu.memory_space<vmem>>, vector<64x8xf32>
    tpu.vector_store %arg8[%c0_182, %c0_183], %1069 {strides = array<i32>} : memref<64x8xf32, #tpu.memory_space<vmem>>, vector<64x8xf32>,
    return
  }
}

</mosaic_0001>

<llo_original>
// kernel: tpu_custom_call.1
$region0: #{tpu_custom_call.1}
  #allocation0 [shape = 'u32[]', space=smem, size = 0x4, offset = 0x4, fixed_abs, tag = 'smem constant byte address 0x4 - core index']
  #allocation1 [shape = 'u32[72,128]{1,0:T(1,128)}', space=vmem, size = 0x9000, scoped, tag = 'internal scratch']
  %s0 = inlined_call_operand.vmem [shape: f32[64,16], index: 0, kind: input, shape index: {}]
  %s1 = inlined_call_operand.vmem [shape: f32[64,64], index: 1, kind: input, shape index: {}]
  %s2 = inlined_call_operand.vmem [shape: bf16[16,64], index: 2, kind: input, shape index: {}]
  %s3 = inlined_call_operand.vmem [shape: f32[32], index: 3, kind: input, shape index: {}]
  %s4 = inlined_call_operand.vmem [shape: bf16[32,64], index: 4, kind: input, shape index: {}]
  %s5 = inlined_call_operand.vmem [shape: f32[32], index: 5, kind: input, shape index: {}]
  %s6 = inlined_call_operand.vmem [shape: bf16[32,16], index: 6, kind: input, shape index: {}]
  %s7 = inlined_call_operand.vmem [shape: f32[8], index: 7, kind: input, shape index: {}]
  %s8 = inlined_call_operand.vmem [shape: f32[64,8], index: 8, kind: output, shape index: {}]
  %s9 = sld [smem:[#allocation0]]
  $region54: #{tpu_custom_call.1} parent=0
    _
  %s11 = ssub.s32 1, %s9
  %s12 = scalar_select 0, %s11, %s9
  $region1: #{tpu_custom_call.1} parent=0
    #allocation2 [shape = 'u8[512]{0}', space=smem, size = 0x200, scoped, tag = 'input window, operand 3, single buffered']
    #allocation3 [shape = 's32[1]{0}', space=sflag, size = 0x4, scoped, tag = 'scoped memory for tpu_custom_call.1']
    #allocation4 [shape = 'u8[512]{0}', space=smem, size = 0x200, scoped, tag = 'input window, operand 5, single buffered']
    #allocation5 [shape = 's32[1]{0}', space=sflag, size = 0x4, scoped, tag = 'scoped memory for tpu_custom_call.1']
    #allocation6 [shape = 'u8[512]{0}', space=smem, size = 0x200, scoped, tag = 'input window, operand 7, single buffered']
    %13 = vsyncpa [#allocation3], 0
    %14 = vsyncpa [#allocation5], 0
    // Predicated region
    $region2: #{tpu_custom_call.1} parent=1 // pred_check
      _
    $region3: #{tpu_custom_call.1} parent=1 // pred_check_branch
      %16 = sbr.rel (0) target = $region5
    $region4: #{tpu_custom_call.1} parent=1 // pred_region
      _
    $region5: #{tpu_custom_call.1} parent=1 // pred_fallthru
      _
    // Predicated region
    $region6: #{tpu_custom_call.1} parent=1 // pred_check
      _
    $region7: #{tpu_custom_call.1} parent=1 // pred_check_branch
      %18 = sbr.rel (0) target = $region9
    $region8: #{tpu_custom_call.1} parent=1 // pred_region
      _
    $region9: #{tpu_custom_call.1} parent=1 // pred_fallthru
      _
    // Predicated region
    $region10: #{tpu_custom_call.1} parent=1 // pred_check
      _
    $region11: #{tpu_custom_call.1} parent=1 // pred_check_branch
      %20 = sbr.rel (0) target = $region13
    $region12: #{tpu_custom_call.1} parent=1 // pred_region
      _
    $region13: #{tpu_custom_call.1} parent=1 // pred_fallthru
      _
    // Predicated region
    $region14: #{tpu_custom_call.1} parent=1 // pred_check
      _
    $region15: #{tpu_custom_call.1} parent=1 // pred_check_branch
      %22 = sbr.rel (0) target = $region17
    $region16: #{tpu_custom_call.1} parent=1 // pred_region
      %24 = vsyncadd [#allocation3], 0
      %s26 = sshll.u32 %s3, 4
      %s27 = int_to_ptr.vmem [resolvable:$true] %s26
      %29 = dma.vmem_to_smem %s27, 16, [#allocation2], [#allocation3]
    $region17: #{tpu_custom_call.1} parent=1 // pred_fallthru
      _
    // Predicated region
    $region18: #{tpu_custom_call.1} parent=1 // pred_check
      _
    $region19: #{tpu_custom_call.1} parent=1 // pred_check_branch
      %31 = sbr.rel (0) target = $region21
    $region20: #{tpu_custom_call.1} parent=1 // pred_region
      _
    $region21: #{tpu_custom_call.1} parent=1 // pred_fallthru
      _
    // Predicated region
    $region22: #{tpu_custom_call.1} parent=1 // pred_check
      _
    $region23: #{tpu_custom_call.1} parent=1 // pred_check_branch
      %33 = sbr.rel (0) target = $region25
    $region24: #{tpu_custom_call.1} parent=1 // pred_region
      %35 = vsyncadd [#allocation5], 0
      %s37 = sshll.u32 %s5, 4
      %s38 = int_to_ptr.vmem [resolvable:$true] %s37
      %40 = dma.vmem_to_smem %s38, 16, [#allocation4], [#allocation5]
    $region25: #{tpu_custom_call.1} parent=1 // pred_fallthru
      _
    // Predicated region
    $region26: #{tpu_custom_call.1} parent=1 // pred_check
      _
    $region27: #{tpu_custom_call.1} parent=1 // pred_check_branch
      %42 = sbr.rel (0) target = $region29
    $region28: #{tpu_custom_call.1} parent=1 // pred_region
      _
    $region29: #{tpu_custom_call.1} parent=1 // pred_fallthru
      _
    // Predicated region
    $region30: #{tpu_custom_call.1} parent=1 // pred_check
      _
    $region31: #{tpu_custom_call.1} parent=1 // pred_check_branch
      %44 = sbr.rel (0) target = $region33
    $region32: #{tpu_custom_call.1} parent=1 // pred_region
      %46 = vsyncadd [#allocation5], 0
      %s48 = sshll.u32 %s7, 4
      %s49 = int_to_ptr.vmem [resolvable:$true] %s48
      %51 = dma.vmem_to_smem %s49, 16, [#allocation6], [#allocation5]
    $region33: #{tpu_custom_call.1} parent=1 // pred_fallthru
      _
    // Predicated region
    $region34: #{tpu_custom_call.1} parent=1 // pred_check
      _
    $region35: #{tpu_custom_call.1} parent=1 // pred_check_branch
      %53 = sbr.rel (0) target = $region37
    $region36: #{tpu_custom_call.1} parent=1 // pred_region
      %55 = dma.done [#allocation3], 16
    $region37: #{tpu_custom_call.1} parent=1 // pred_fallthru
      _
    // Predicated region
    $region38: #{tpu_custom_call.1} parent=1 // pred_check
      _
    $region39: #{tpu_custom_call.1} parent=1 // pred_check_branch
      %57 = sbr.rel (0) target = $region41
    $region40: #{tpu_custom_call.1} parent=1 // pred_region
      %59 = dma.done [#allocation5], 16
    $region41: #{tpu_custom_call.1} parent=1 // pred_fallthru
      _
    // Predicated region
    $region42: #{tpu_custom_call.1} parent=1 // pred_check
      _
    $region43: #{tpu_custom_call.1} parent=1 // pred_check_branch
      %61 = sbr.rel (0) target = $region45
    $region44: #{tpu_custom_call.1} parent=1 // pred_region
      %63 = dma.done [#allocation5], 16
    $region45: #{tpu_custom_call.1} parent=1 // pred_fallthru
      _
    %64 = sfence
    %v66 = vld [vmem:[%s0] sm:$0xff]
    %v67 = vld [vmem:[%s0 + $0x8] sm:$0xff]
    %v68 = vld [vmem:[%s0 + $0x10] sm:$0xff]
    %v69 = vld [vmem:[%s0 + $0x18] sm:$0xff]
    %v70 = vld [vmem:[%s0 + $0x20] sm:$0xff]
    %v71 = vld [vmem:[%s0 + $0x28] sm:$0xff]
    %v72 = vld [vmem:[%s0 + $0x30] sm:$0xff]
    %v73 = vld [vmem:[%s0 + $0x38] sm:$0xff]
    %v74 = vld [vmem:[%s1] sm:$0xff]
    %v75 = vld [vmem:[%s1 + $0x8] sm:$0xff]
    %v76 = vld [vmem:[%s1 + $0x10] sm:$0xff]
    %v77 = vld [vmem:[%s1 + $0x18] sm:$0xff]
    %v78 = vld [vmem:[%s1 + $0x20] sm:$0xff]
    %v79 = vld [vmem:[%s1 + $0x28] sm:$0xff]
    %v80 = vld [vmem:[%s1 + $0x30] sm:$0xff]
    %v81 = vld [vmem:[%s1 + $0x38] sm:$0xff]
    %v82 = vpack.c.bf16 %v67, %v66
    %v83 = vpack.c.bf16 %v69, %v68
    %v84 = vpack.c.bf16 %v71, %v70
    %v85 = vpack.c.bf16 %v73, %v72
    %v86 = vld [vmem:[%s2] sm:$0xf]
    %v87 = vld [vmem:[%s2 + $0x4] sm:$0xf]
    %v90 = vunpack.c.l.b16 %v86
    %v91 = vunpack.c.l.b16 %v87
    %v92 = vpack.c.b16 %v91, %v90
    %vm94 = vcmask 130048
    %v96 = vsel %vm94, %v82, 0
    %v99 = vsel %vm94, %v83, 0
    %v102 = vsel %vm94, %v84, 0
    %v105 = vsel %vm94, %v85, 0
    %107 = vmatpush.bf16.msra.mxu0 0
    %108 = vmatpush.bf16.msra.mxu0 0
    %109 = vmatpush.bf16.msra.mxu0 0
    %110 = vmatpush.bf16.msra.mxu0 0
    %111 = vmatpush.bf16.msra.mxu0 0
    %112 = vmatpush.bf16.msra.mxu0 0
    %113 = vmatpush.bf16.msra.mxu0 0
    %114 = vmatpush.bf16.msra.mxu0 %v92
    %115 = vmatmul.bf16.gmra.mxu0 %v96
    %v116 = vpop.f32.mrf.mxu0
    %v117 = vadd.f32 0.0, %v116
    %v118 = vpop.f32.mrf.mxu0
    %v119 = vadd.f32 0.0, %v118
    %120 = vmatmul.bf16.gmra.mxu0 %v99
    %v121 = vpop.f32.mrf.mxu0
    %v122 = vadd.f32 0.0, %v121
    %v123 = vpop.f32.mrf.mxu0
    %v124 = vadd.f32 0.0, %v123
    %125 = vmatmul.bf16.gmra.mxu0 %v102
    %v126 = vpop.f32.mrf.mxu0
    %v127 = vadd.f32 0.0, %v126
    %v128 = vpop.f32.mrf.mxu0
    %v129 = vadd.f32 0.0, %v128
    %130 = vmatmul.bf16.gmra.mxu0 %v105
    %v131 = vpop.f32.mrf.mxu0
    %v132 = vadd.f32 0.0, %v131
    %v133 = vpop.f32.mrf.mxu0
    %v134 = vadd.f32 0.0, %v133
    %135 = vdwg.mxu0
    %136 = vxpose.xlu0.b32.start [1/16] %v117, 128
    %137 = vxpose.xlu0.b32.cont [2/16] %v119, 128
    %138 = vxpose.xlu0.b32.cont [3/16] %v122, 128
    %139 = vxpose.xlu0.b32.cont [4/16] %v124, 128
    %140 = vxpose.xlu0.b32.cont [5/16] %v127, 128
    %141 = vxpose.xlu0.b32.cont [6/16] %v129, 128
    %142 = vxpose.xlu0.b32.cont [7/16] %v132, 128
    %143 = vxpose.xlu0.b32.cont [8/16] %v134, 128
    %144 = vxpose.xlu0.b32.cont [9/16] 0.0, 128
    %145 = vxpose.xlu0.b32.cont [10/16] 0.0, 128
    %146 = vxpose.xlu0.b32.cont [11/16] 0.0, 128
    %147 = vxpose.xlu0.b32.cont [12/16] 0.0, 128
    %148 = vxpose.xlu0.b32.cont [13/16] 0.0, 128
    %149 = vxpose.xlu0.b32.cont [14/16] 0.0, 128
    %150 = vxpose.xlu0.b32.cont [15/16] 0.0, 128
    %151 = vxpose.xlu0.b32.end [16/16] 0.0, 128
    %v152 = vpop.trf.xlu0
    %v153 = vpop.trf.xlu0
    %v154 = vpop.trf.xlu0
    %v155 = vpop.trf.xlu0
    %v156 = vpop.trf.xlu0
    %v157 = vpop.trf.xlu0
    %v158 = vpop.trf.xlu0
    %v159 = vpop.trf.xlu0
    %v160 = vpop.trf.xlu0
    %v161 = vpop.trf.xlu0
    %v162 = vpop.trf.xlu0
    %v163 = vpop.trf.xlu0
    %v164 = vpop.trf.xlu0
    %v165 = vpop.trf.xlu0
    %v166 = vpop.trf.xlu0
    %v167 = vpop.trf.xlu0
    %169 = vset.pattern.permute.xlu0 32
    %170 = vperm.xlu0 %169, %v117
    %v171 = vpop.permute.xlu0 %170
    %174 = vset.pattern.permute.xlu0 32
    %175 = vperm.xlu0 %174, %v119
    %v176 = vpop.permute.xlu0 %175
    %179 = vset.pattern.permute.xlu0 32
    %180 = vperm.xlu0 %179, %v122
    %v181 = vpop.permute.xlu0 %180
    %184 = vset.pattern.permute.xlu0 32
    %185 = vperm.xlu0 %184, %v124
    %v186 = vpop.permute.xlu0 %185
    %189 = vset.pattern.permute.xlu0 32
    %190 = vperm.xlu0 %189, %v127
    %v191 = vpop.permute.xlu0 %190
    %194 = vset.pattern.permute.xlu0 32
    %195 = vperm.xlu0 %194, %v129
    %v196 = vpop.permute.xlu0 %195
    %199 = vset.pattern.permute.xlu0 32
    %200 = vperm.xlu0 %199, %v132
    %v201 = vpop.permute.xlu0 %200
    %204 = vset.pattern.permute.xlu0 32
    %205 = vperm.xlu0 %204, %v134
    %v206 = vpop.permute.xlu0 %205
    %v208 = vperm.slane %v152, 0
    %v209 = vadd.f32 %v171, %v208
    %v210 = vadd.f32 %v176, %v208
    %v211 = vadd.f32 %v181, %v208
    %v212 = vadd.f32 %v186, %v208
    %v213 = vadd.f32 %v191, %v208
    %v214 = vadd.f32 %v196, %v208
    %v215 = vadd.f32 %v201, %v208
    %v216 = vadd.f32 %v206, %v208
    %v217 = vmul.f32 %v209, 0.2
    %v218 = vmul.f32 %v210, 0.2
    %v219 = vmul.f32 %v211, 0.2
    %v220 = vmul.f32 %v212, 0.2
    %v221 = vmul.f32 %v213, 0.2
    %v222 = vmul.f32 %v214, 0.2
    %v223 = vmul.f32 %v215, 0.2
    %v224 = vmul.f32 %v216, 0.2
    %v225 = vmax.f32 %v209, %v217
    %v226 = vmax.f32 %v210, %v218
    %v227 = vmax.f32 %v211, %v219
    %v228 = vmax.f32 %v212, %v220
    %v229 = vmax.f32 %v213, %v221
    %v230 = vmax.f32 %v214, %v222
    %v231 = vmax.f32 %v215, %v223
    %v232 = vmax.f32 %v216, %v224
    %s233 = sld [smem:[#allocation2]]
    %v234 = vstv %s233
    %v235 = vmul.f32 %v234, %v225
    %v236 = vmul.f32 %v234, %v226
    %v237 = vmul.f32 %v234, %v227
    %v238 = vmul.f32 %v234, %v228
    %v239 = vmul.f32 %v234, %v229
    %v240 = vmul.f32 %v234, %v230
    %v241 = vmul.f32 %v234, %v231
    %v242 = vmul.f32 %v234, %v232
    %243 = vset.pattern.permute.xlu0 33
    %244 = vperm.xlu0 %243, %v117
    %v245 = vpop.permute.xlu0 %244
    %247 = vset.pattern.permute.xlu0 33
    %248 = vperm.xlu0 %247, %v119
    %v249 = vpop.permute.xlu0 %248
    %251 = vset.pattern.permute.xlu0 33
    %252 = vperm.xlu0 %251, %v122
    %v253 = vpop.permute.xlu0 %252
    %255 = vset.pattern.permute.xlu0 33
    %256 = vperm.xlu0 %255, %v124
    %v257 = vpop.permute.xlu0 %256
    %259 = vset.pattern.permute.xlu0 33
    %260 = vperm.xlu0 %259, %v127
    %v261 = vpop.permute.xlu0 %260
    %263 = vset.pattern.permute.xlu0 33
    %264 = vperm.xlu0 %263, %v129
    %v265 = vpop.permute.xlu0 %264
    %267 = vset.pattern.permute.xlu0 33
    %268 = vperm.xlu0 %267, %v132
    %v269 = vpop.permute.xlu0 %268
    %271 = vset.pattern.permute.xlu0 33
    %272 = vperm.xlu0 %271, %v134
    %v273 = vpop.permute.xlu0 %272
    %v275 = vperm.slane %v152, 1
    %v276 = vadd.f32 %v245, %v275
    %v277 = vadd.f32 %v249, %v275
    %v278 = vadd.f32 %v253, %v275
    %v279 = vadd.f32 %v257, %v275
    %v280 = vadd.f32 %v261, %v275
    %v281 = vadd.f32 %v265, %v275
    %v282 = vadd.f32 %v269, %v275
    %v283 = vadd.f32 %v273, %v275
    %v284 = vmul.f32 %v276, 0.2
    %v285 = vmul.f32 %v277, 0.2
    %v286 = vmul.f32 %v278, 0.2
    %v287 = vmul.f32 %v279, 0.2
    %v288 = vmul.f32 %v280, 0.2
    %v289 = vmul.f32 %v281, 0.2
    %v290 = vmul.f32 %v282, 0.2
    %v291 = vmul.f32 %v283, 0.2
    %v292 = vmax.f32 %v276, %v284
    %v293 = vmax.f32 %v277, %v285
    %v294 = vmax.f32 %v278, %v286
    %v295 = vmax.f32 %v279, %v287
    %v296 = vmax.f32 %v280, %v288
    %v297 = vmax.f32 %v281, %v289
    %v298 = vmax.f32 %v282, %v290
    %v299 = vmax.f32 %v283, %v291
    %s300 = sld [smem:[#allocation2 + $0x1]]
    %v301 = vstv %s300
    %v302 = vmul.f32 %v301, %v292
    %v303 = vmul.f32 %v301, %v293
    %v304 = vmul.f32 %v301, %v294
    %v305 = vmul.f32 %v301, %v295
    %v306 = vmul.f32 %v301, %v296
    %v307 = vmul.f32 %v301, %v297
    %v308 = vmul.f32 %v301, %v298
    %v309 = vmul.f32 %v301, %v299
    %v310 = vadd.f32 %v235, %v302
    %v311 = vadd.f32 %v236, %v303
    %v312 = vadd.f32 %v237, %v304
    %v313 = vadd.f32 %v238, %v305
    %v314 = vadd.f32 %v239, %v306
    %v315 = vadd.f32 %v240, %v307
    %v316 = vadd.f32 %v241, %v308
    %v317 = vadd.f32 %v242, %v309
    %318 = vset.pattern.permute.xlu0 34
    %319 = vperm.xlu0 %318, %v117
    %v320 = vpop.permute.xlu0 %319
    %322 = vset.pattern.permute.xlu0 34
    %323 = vperm.xlu0 %322, %v119
    %v324 = vpop.permute.xlu0 %323
    %326 = vset.pattern.permute.xlu0 34
    %327 = vperm.xlu0 %326, %v122
    %v328 = vpop.permute.xlu0 %327
    %330 = vset.pattern.permute.xlu0 34
    %331 = vperm.xlu0 %330, %v124
    %v332 = vpop.permute.xlu0 %331
    %334 = vset.pattern.permute.xlu0 34
    %335 = vperm.xlu0 %334, %v127
    %v336 = vpop.permute.xlu0 %335
    %338 = vset.pattern.permute.xlu0 34
    %339 = vperm.xlu0 %338, %v129
    %v340 = vpop.permute.xlu0 %339
    %342 = vset.pattern.permute.xlu0 34
    %343 = vperm.xlu0 %342, %v132
    %v344 = vpop.permute.xlu0 %343
    %346 = vset.pattern.permute.xlu0 34
    %347 = vperm.xlu0 %346, %v134
    %v348 = vpop.permute.xlu0 %347
    %v350 = vperm.slane %v152, 2
    %v351 = vadd.f32 %v320, %v350
    %v352 = vadd.f32 %v324, %v350
    %v353 = vadd.f32 %v328, %v350
    %v354 = vadd.f32 %v332, %v350
    %v355 = vadd.f32 %v336, %v350
    %v356 = vadd.f32 %v340, %v350
    %v357 = vadd.f32 %v344, %v350
    %v358 = vadd.f32 %v348, %v350
    %v359 = vmul.f32 %v351, 0.2
    %v360 = vmul.f32 %v352, 0.2
    %v361 = vmul.f32 %v353, 0.2
    %v362 = vmul.f32 %v354, 0.2
    %v363 = vmul.f32 %v355, 0.2
    %v364 = vmul.f32 %v356, 0.2
    %v365 = vmul.f32 %v357, 0.2
    %v366 = vmul.f32 %v358, 0.2
    %v367 = vmax.f32 %v351, %v359
    %v368 = vmax.f32 %v352, %v360
    %v369 = vmax.f32 %v353, %v361
    %v370 = vmax.f32 %v354, %v362
    %v371 = vmax.f32 %v355, %v363
    %v372 = vmax.f32 %v356, %v364
    %v373 = vmax.f32 %v357, %v365
    %v374 = vmax.f32 %v358, %v366
    %s375 = sld [smem:[#allocation2 + $0x2]]
    %v376 = vstv %s375
    %v377 = vmul.f32 %v376, %v367
    %v378 = vmul.f32 %v376, %v368
    %v379 = vmul.f32 %v376, %v369
    %v380 = vmul.f32 %v376, %v370
    %v381 = vmul.f32 %v376, %v371
    %v382 = vmul.f32 %v376, %v372
    %v383 = vmul.f32 %v376, %v373
    %v384 = vmul.f32 %v376, %v374
    %v385 = vadd.f32 %v310, %v377
    %v386 = vadd.f32 %v311, %v378
    %v387 = vadd.f32 %v312, %v379
    %v388 = vadd.f32 %v313, %v380
    %v389 = vadd.f32 %v314, %v381
    %v390 = vadd.f32 %v315, %v382
    %v391 = vadd.f32 %v316, %v383
    %v392 = vadd.f32 %v317, %v384
    %393 = vset.pattern.permute.xlu0 35
    %394 = vperm.xlu0 %393, %v117
    %v395 = vpop.permute.xlu0 %394
    %397 = vset.pattern.permute.xlu0 35
    %398 = vperm.xlu0 %397, %v119
    %v399 = vpop.permute.xlu0 %398
    %401 = vset.pattern.permute.xlu0 35
    %402 = vperm.xlu0 %401, %v122
    %v403 = vpop.permute.xlu0 %402
    %405 = vset.pattern.permute.xlu0 35
    %406 = vperm.xlu0 %405, %v124
    %v407 = vpop.permute.xlu0 %406
    %409 = vset.pattern.permute.xlu0 35
    %410 = vperm.xlu0 %409, %v127
    %v411 = vpop.permute.xlu0 %410
    %413 = vset.pattern.permute.xlu0 35
    %414 = vperm.xlu0 %413, %v129
    %v415 = vpop.permute.xlu0 %414
    %417 = vset.pattern.permute.xlu0 35
    %418 = vperm.xlu0 %417, %v132
    %v419 = vpop.permute.xlu0 %418
    %421 = vset.pattern.permute.xlu0 35
    %422 = vperm.xlu0 %421, %v134
    %v423 = vpop.permute.xlu0 %422
    %v425 = vperm.slane %v152, 3
    %v426 = vadd.f32 %v395, %v425
    %v427 = vadd.f32 %v399, %v425
    %v428 = vadd.f32 %v403, %v425
    %v429 = vadd.f32 %v407, %v425
    %v430 = vadd.f32 %v411, %v425
    %v431 = vadd.f32 %v415, %v425
    %v432 = vadd.f32 %v419, %v425
    %v433 = vadd.f32 %v423, %v425
    %v434 = vmul.f32 %v426, 0.2
    %v435 = vmul.f32 %v427, 0.2
    %v436 = vmul.f32 %v428, 0.2
    %v437 = vmul.f32 %v429, 0.2
    %v438 = vmul.f32 %v430, 0.2
    %v439 = vmul.f32 %v431, 0.2
    %v440 = vmul.f32 %v432, 0.2
    %v441 = vmul.f32 %v433, 0.2
    %v442 = vmax.f32 %v426, %v434
    %v443 = vmax.f32 %v427, %v435
    %v444 = vmax.f32 %v428, %v436
    %v445 = vmax.f32 %v429, %v437
    %v446 = vmax.f32 %v430, %v438
    %v447 = vmax.f32 %v431, %v439
    %v448 = vmax.f32 %v432, %v440
    %v449 = vmax.f32 %v433, %v441
    %s450 = sld [smem:[#allocation2 + $0x3]]
    %v451 = vstv %s450
    %v452 = vmul.f32 %v451, %v442
    %v453 = vmul.f32 %v451, %v443
    %v454 = vmul.f32 %v451, %v444
    %v455 = vmul.f32 %v451, %v445
    %v456 = vmul.f32 %v451, %v446
    %v457 = vmul.f32 %v451, %v447
    %v458 = vmul.f32 %v451, %v448
    %v459 = vmul.f32 %v451, %v449
    %v460 = vadd.f32 %v385, %v452
    %v461 = vadd.f32 %v386, %v453
    %v462 = vadd.f32 %v387, %v454
    %v463 = vadd.f32 %v388, %v455
    %v464 = vadd.f32 %v389, %v456
    %v465 = vadd.f32 %v390, %v457
    %v466 = vadd.f32 %v391, %v458
    %v467 = vadd.f32 %v392, %v459
    %468 = vset.pattern.permute.xlu0 36
    %469 = vperm.xlu0 %468, %v117
    %v470 = vpop.permute.xlu0 %469
    %472 = vset.pattern.permute.xlu0 36
    %473 = vperm.xlu0 %472, %v119
    %v474 = vpop.permute.xlu0 %473
    %476 = vset.pattern.permute.xlu0 36
    %477 = vperm.xlu0 %476, %v122
    %v478 = vpop.permute.xlu0 %477
    %480 = vset.pattern.permute.xlu0 36
    %481 = vperm.xlu0 %480, %v124
    %v482 = vpop.permute.xlu0 %481
    %484 = vset.pattern.permute.xlu0 36
    %485 = vperm.xlu0 %484, %v127
    %v486 = vpop.permute.xlu0 %485
    %488 = vset.pattern.permute.xlu0 36
    %489 = vperm.xlu0 %488, %v129
    %v490 = vpop.permute.xlu0 %489
    %492 = vset.pattern.permute.xlu0 36
    %493 = vperm.xlu0 %492, %v132
    %v494 = vpop.permute.xlu0 %493
    %496 = vset.pattern.permute.xlu0 36
    %497 = vperm.xlu0 %496, %v134
    %v498 = vpop.permute.xlu0 %497
    %v500 = vperm.slane %v152, 4
    %v501 = vadd.f32 %v470, %v500
    %v502 = vadd.f32 %v474, %v500
    %v503 = vadd.f32 %v478, %v500
    %v504 = vadd.f32 %v482, %v500
    %v505 = vadd.f32 %v486, %v500
    %v506 = vadd.f32 %v490, %v500
    %v507 = vadd.f32 %v494, %v500
    %v508 = vadd.f32 %v498, %v500
    %v509 = vmul.f32 %v501, 0.2
    %v510 = vmul.f32 %v502, 0.2
    %v511 = vmul.f32 %v503, 0.2
    %v512 = vmul.f32 %v504, 0.2
    %v513 = vmul.f32 %v505, 0.2
    %v514 = vmul.f32 %v506, 0.2
    %v515 = vmul.f32 %v507, 0.2
    %v516 = vmul.f32 %v508, 0.2
    %v517 = vmax.f32 %v501, %v509
    %v518 = vmax.f32 %v502, %v510
    %v519 = vmax.f32 %v503, %v511
    %v520 = vmax.f32 %v504, %v512
    %v521 = vmax.f32 %v505, %v513
    %v522 = vmax.f32 %v506, %v514
    %v523 = vmax.f32 %v507, %v515
    %v524 = vmax.f32 %v508, %v516
    %s525 = sld [smem:[#allocation2 + $0x4]]
    %v526 = vstv %s525
    %v527 = vmul.f32 %v526, %v517
    %v528 = vmul.f32 %v526, %v518
    %v529 = vmul.f32 %v526, %v519
    %v530 = vmul.f32 %v526, %v520
    %v531 = vmul.f32 %v526, %v521
    %v532 = vmul.f32 %v526, %v522
    %v533 = vmul.f32 %v526, %v523
    %v534 = vmul.f32 %v526, %v524
    %v535 = vadd.f32 %v460, %v527
    %v536 = vadd.f32 %v461, %v528
    %v537 = vadd.f32 %v462, %v529
    %v538 = vadd.f32 %v463, %v530
    %v539 = vadd.f32 %v464, %v531
    %v540 = vadd.f32 %v465, %v532
    %v541 = vadd.f32 %v466, %v533
    %v542 = vadd.f32 %v467, %v534
    %543 = vset.pattern.permute.xlu0 37
    %544 = vperm.xlu0 %543, %v117
    %v545 = vpop.permute.xlu0 %544
    %547 = vset.pattern.permute.xlu0 37
    %548 = vperm.xlu0 %547, %v119
    %v549 = vpop.permute.xlu0 %548
    %551 = vset.pattern.permute.xlu0 37
    %552 = vperm.xlu0 %551, %v122
    %v553 = vpop.permute.xlu0 %552
    %555 = vset.pattern.permute.xlu0 37
    %556 = vperm.xlu0 %555, %v124
    %v557 = vpop.permute.xlu0 %556
    %559 = vset.pattern.permute.xlu0 37
    %560 = vperm.xlu0 %559, %v127
    %v561 = vpop.permute.xlu0 %560
    %563 = vset.pattern.permute.xlu0 37
    %564 = vperm.xlu0 %563, %v129
    %v565 = vpop.permute.xlu0 %564
    %567 = vset.pattern.permute.xlu0 37
    %568 = vperm.xlu0 %567, %v132
    %v569 = vpop.permute.xlu0 %568
    %571 = vset.pattern.permute.xlu0 37
    %572 = vperm.xlu0 %571, %v134
    %v573 = vpop.permute.xlu0 %572
    %v575 = vperm.slane %v152, 5
    %v576 = vadd.f32 %v545, %v575
    %v577 = vadd.f32 %v549, %v575
    %v578 = vadd.f32 %v553, %v575
    %v579 = vadd.f32 %v557, %v575
    %v580 = vadd.f32 %v561, %v575
    %v581 = vadd.f32 %v565, %v575
    %v582 = vadd.f32 %v569, %v575
    %v583 = vadd.f32 %v573, %v575
    %v584 = vmul.f32 %v576, 0.2
    %v585 = vmul.f32 %v577, 0.2
    %v586 = vmul.f32 %v578, 0.2
    %v587 = vmul.f32 %v579, 0.2
    %v588 = vmul.f32 %v580, 0.2
    %v589 = vmul.f32 %v581, 0.2
    %v590 = vmul.f32 %v582, 0.2
    %v591 = vmul.f32 %v583, 0.2
    %v592 = vmax.f32 %v576, %v584
    %v593 = vmax.f32 %v577, %v585
    %v594 = vmax.f32 %v578, %v586
    %v595 = vmax.f32 %v579, %v587
    %v596 = vmax.f32 %v580, %v588
    %v597 = vmax.f32 %v581, %v589
    %v598 = vmax.f32 %v582, %v590
    %v599 = vmax.f32 %v583, %v591
    %s600 = sld [smem:[#allocation2 + $0x5]]
    %v601 = vstv %s600
    %v602 = vmul.f32 %v601, %v592
    %v603 = vmul.f32 %v601, %v593
    %v604 = vmul.f32 %v601, %v594
    %v605 = vmul.f32 %v601, %v595
    %v606 = vmul.f32 %v601, %v596
    %v607 = vmul.f32 %v601, %v597
    %v608 = vmul.f32 %v601, %v598
    %v609 = vmul.f32 %v601, %v599
    %v610 = vadd.f32 %v535, %v602
    %v611 = vadd.f32 %v536, %v603
    %v612 = vadd.f32 %v537, %v604
    %v613 = vadd.f32 %v538, %v605
    %v614 = vadd.f32 %v539, %v606
    %v615 = vadd.f32 %v540, %v607
    %v616 = vadd.f32 %v541, %v608
    %v617 = vadd.f32 %v542, %v609
    %618 = vset.pattern.permute.xlu0 38
    %619 = vperm.xlu0 %618, %v117
    %v620 = vpop.permute.xlu0 %619
    %622 = vset.pattern.permute.xlu0 38
    %623 = vperm.xlu0 %622, %v119
    %v624 = vpop.permute.xlu0 %623
    %626 = vset.pattern.permute.xlu0 38
    %627 = vperm.xlu0 %626, %v122
    %v628 = vpop.permute.xlu0 %627
    %630 = vset.pattern.permute.xlu0 38
    %631 = vperm.xlu0 %630, %v124
    %v632 = vpop.permute.xlu0 %631
    %634 = vset.pattern.permute.xlu0 38
    %635 = vperm.xlu0 %634, %v127
    %v636 = vpop.permute.xlu0 %635
    %638 = vset.pattern.permute.xlu0 38
    %639 = vperm.xlu0 %638, %v129
    %v640 = vpop.permute.xlu0 %639
    %642 = vset.pattern.permute.xlu0 38
    %643 = vperm.xlu0 %642, %v132
    %v644 = vpop.permute.xlu0 %643
    %646 = vset.pattern.permute.xlu0 38
    %647 = vperm.xlu0 %646, %v134
    %v648 = vpop.permute.xlu0 %647
    %v650 = vperm.slane %v152, 6
    %v651 = vadd.f32 %v620, %v650
    %v652 = vadd.f32 %v624, %v650
    %v653 = vadd.f32 %v628, %v650
    %v654 = vadd.f32 %v632, %v650
    %v655 = vadd.f32 %v636, %v650
    %v656 = vadd.f32 %v640, %v650
    %v657 = vadd.f32 %v644, %v650
    %v658 = vadd.f32 %v648, %v650
    %v659 = vmul.f32 %v651, 0.2
    %v660 = vmul.f32 %v652, 0.2
    %v661 = vmul.f32 %v653, 0.2
    %v662 = vmul.f32 %v654, 0.2
    %v663 = vmul.f32 %v655, 0.2
    %v664 = vmul.f32 %v656, 0.2
    %v665 = vmul.f32 %v657, 0.2
    %v666 = vmul.f32 %v658, 0.2
    %v667 = vmax.f32 %v651, %v659
    %v668 = vmax.f32 %v652, %v660
    %v669 = vmax.f32 %v653, %v661
    %v670 = vmax.f32 %v654, %v662
    %v671 = vmax.f32 %v655, %v663
    %v672 = vmax.f32 %v656, %v664
    %v673 = vmax.f32 %v657, %v665
    %v674 = vmax.f32 %v658, %v666
    %s675 = sld [smem:[#allocation2 + $0x6]]
    %v676 = vstv %s675
    %v677 = vmul.f32 %v676, %v667
    %v678 = vmul.f32 %v676, %v668
    %v679 = vmul.f32 %v676, %v669
    %v680 = vmul.f32 %v676, %v670
    %v681 = vmul.f32 %v676, %v671
    %v682 = vmul.f32 %v676, %v672
    %v683 = vmul.f32 %v676, %v673
    %v684 = vmul.f32 %v676, %v674
    %v685 = vadd.f32 %v610, %v677
    %v686 = vadd.f32 %v611, %v678
    %v687 = vadd.f32 %v612, %v679
    %v688 = vadd.f32 %v613, %v680
    %v689 = vadd.f32 %v614, %v681
    %v690 = vadd.f32 %v615, %v682
    %v691 = vadd.f32 %v616, %v683
    %v692 = vadd.f32 %v617, %v684
    %693 = vset.pattern.permute.xlu0 39
    %694 = vperm.xlu0 %693, %v117
    %v695 = vpop.permute.xlu0 %694
    %697 = vset.pattern.permute.xlu0 39
    %698 = vperm.xlu0 %697, %v119
    %v699 = vpop.permute.xlu0 %698
    %701 = vset.pattern.permute.xlu0 39
    %702 = vperm.xlu0 %701, %v122
    %v703 = vpop.permute.xlu0 %702
    %705 = vset.pattern.permute.xlu0 39
    %706 = vperm.xlu0 %705, %v124
    %v707 = vpop.permute.xlu0 %706
    %709 = vset.pattern.permute.xlu0 39
    %710 = vperm.xlu0 %709, %v127
    %v711 = vpop.permute.xlu0 %710
    %713 = vset.pattern.permute.xlu0 39
    %714 = vperm.xlu0 %713, %v129
    %v715 = vpop.permute.xlu0 %714
    %717 = vset.pattern.permute.xlu0 39
    %718 = vperm.xlu0 %717, %v132
    %v719 = vpop.permute.xlu0 %718
    %721 = vset.pattern.permute.xlu0 39
    %722 = vperm.xlu0 %721, %v134
    %v723 = vpop.permute.xlu0 %722
    %v725 = vperm.slane %v152, 7
    %v726 = vadd.f32 %v695, %v725
    %v727 = vadd.f32 %v699, %v725
    %v728 = vadd.f32 %v703, %v725
    %v729 = vadd.f32 %v707, %v725
    %v730 = vadd.f32 %v711, %v725
    %v731 = vadd.f32 %v715, %v725
    %v732 = vadd.f32 %v719, %v725
    %v733 = vadd.f32 %v723, %v725
    %v734 = vmul.f32 %v726, 0.2
    %v735 = vmul.f32 %v727, 0.2
    %v736 = vmul.f32 %v728, 0.2
    %v737 = vmul.f32 %v729, 0.2
    %v738 = vmul.f32 %v730, 0.2
    %v739 = vmul.f32 %v731, 0.2
    %v740 = vmul.f32 %v732, 0.2
    %v741 = vmul.f32 %v733, 0.2
    %v742 = vmax.f32 %v726, %v734
    %v743 = vmax.f32 %v727, %v735
    %v744 = vmax.f32 %v728, %v736
    %v745 = vmax.f32 %v729, %v737
    %v746 = vmax.f32 %v730, %v738
    %v747 = vmax.f32 %v731, %v739
    %v748 = vmax.f32 %v732, %v740
    %v749 = vmax.f32 %v733, %v741
    %s750 = sld [smem:[#allocation2 + $0x7]]
    %v751 = vstv %s750
    %v752 = vmul.f32 %v751, %v742
    %v753 = vmul.f32 %v751, %v743
    %v754 = vmul.f32 %v751, %v744
    %v755 = vmul.f32 %v751, %v745
    %v756 = vmul.f32 %v751, %v746
    %v757 = vmul.f32 %v751, %v747
    %v758 = vmul.f32 %v751, %v748
    %v759 = vmul.f32 %v751, %v749
    %v760 = vadd.f32 %v685, %v752
    %v761 = vadd.f32 %v686, %v753
    %v762 = vadd.f32 %v687, %v754
    %v763 = vadd.f32 %v688, %v755
    %v764 = vadd.f32 %v689, %v756
    %v765 = vadd.f32 %v690, %v757
    %v766 = vadd.f32 %v691, %v758
    %v767 = vadd.f32 %v692, %v759
    %v768 = vadd.f32 %v760, %v74
    %v769 = vadd.f32 %v761, %v75
    %v770 = vadd.f32 %v762, %v76
    %v771 = vadd.f32 %v763, %v77
    %v772 = vadd.f32 %v764, %v78
    %v773 = vadd.f32 %v765, %v79
    %v774 = vadd.f32 %v766, %v80
    %v775 = vadd.f32 %v767, %v81
    %vm776 = vcmask 523264
    %v777 = vsel %vm776, %v768, -inf
    %778 = vmax.xlane.f32.xlu0 %v777
    %v779 = vpop.xlane.xlu0 %778
    %v780 = vsel %vm776, %v769, -inf
    %781 = vmax.xlane.f32.xlu0 %v780
    %v782 = vpop.xlane.xlu0 %781
    %v783 = vsel %vm776, %v770, -inf
    %784 = vmax.xlane.f32.xlu0 %v783
    %v785 = vpop.xlane.xlu0 %784
    %v786 = vsel %vm776, %v771, -inf
    %787 = vmax.xlane.f32.xlu0 %v786
    %v788 = vpop.xlane.xlu0 %787
    %v789 = vsel %vm776, %v772, -inf
    %790 = vmax.xlane.f32.xlu0 %v789
    %v791 = vpop.xlane.xlu0 %790
    %v792 = vsel %vm776, %v773, -inf
    %793 = vmax.xlane.f32.xlu0 %v792
    %v794 = vpop.xlane.xlu0 %793
    %v795 = vsel %vm776, %v774, -inf
    %796 = vmax.xlane.f32.xlu0 %v795
    %v797 = vpop.xlane.xlu0 %796
    %v798 = vsel %vm776, %v775, -inf
    %799 = vmax.xlane.f32.xlu0 %v798
    %v800 = vpop.xlane.xlu0 %799
    %v801 = vsub.f32 %v768, %v779
    %v802 = vsub.f32 %v769, %v782
    %v803 = vsub.f32 %v770, %v785
    %v804 = vsub.f32 %v771, %v788
    %v805 = vsub.f32 %v772, %v791
    %v806 = vsub.f32 %v773, %v794
    %v807 = vsub.f32 %v774, %v797
    %v808 = vsub.f32 %v775, %v800
    %v809 = vmul.f32 %v801, 1.442695
    %v810 = vpow.pop %v809
    %v811 = vmul.f32 %v802, 1.442695
    %v812 = vpow.pop %v811
    %v813 = vmul.f32 %v803, 1.442695
    %v814 = vpow.pop %v813
    %v815 = vmul.f32 %v804, 1.442695
    %v816 = vpow.pop %v815
    %v817 = vmul.f32 %v805, 1.442695
    %v818 = vpow.pop %v817
    %v819 = vmul.f32 %v806, 1.442695
    %v820 = vpow.pop %v819
    %v821 = vmul.f32 %v807, 1.442695
    %v822 = vpow.pop %v821
    %v823 = vmul.f32 %v808, 1.442695
    %v824 = vpow.pop %v823
    %v825 = vsel %vm776, %v810, 0.0
    %826 = vadd.xlane.f32.xlu0 %v825
    %v827 = vpop.xlane.xlu0 %826
    %v828 = vsel %vm776, %v812, 0.0
    %829 = vadd.xlane.f32.xlu0 %v828
    %v830 = vpop.xlane.xlu0 %829
    %v831 = vsel %vm776, %v814, 0.0
    %832 = vadd.xlane.f32.xlu0 %v831
    %v833 = vpop.xlane.xlu0 %832
    %v834 = vsel %vm776, %v816, 0.0
    %835 = vadd.xlane.f32.xlu0 %v834
    %v836 = vpop.xlane.xlu0 %835
    %v837 = vsel %vm776, %v818, 0.0
    %838 = vadd.xlane.f32.xlu0 %v837
    %v839 = vpop.xlane.xlu0 %838
    %v840 = vsel %vm776, %v820, 0.0
    %841 = vadd.xlane.f32.xlu0 %v840
    %v842 = vpop.xlane.xlu0 %841
    %v843 = vsel %vm776, %v822, 0.0
    %844 = vadd.xlane.f32.xlu0 %v843
    %v845 = vpop.xlane.xlu0 %844
    %v846 = vsel %vm776, %v824, 0.0
    %847 = vadd.xlane.f32.xlu0 %v846
    %v848 = vpop.xlane.xlu0 %847
    %v849 = vmax.f32 %v827, 1e-20
    %v850 = vmax.f32 %v830, 1e-20
    %v851 = vmax.f32 %v833, 1e-20
    %v852 = vmax.f32 %v836, 1e-20
    %v853 = vmax.f32 %v839, 1e-20
    %v854 = vmax.f32 %v842, 1e-20
    %v855 = vmax.f32 %v845, 1e-20
    %v856 = vmax.f32 %v848, 1e-20
    %v857 = vrcp.pop %v849
    %v858 = vrcp.pop %v850
    %v859 = vrcp.pop %v851
    %v860 = vrcp.pop %v852
    %v861 = vrcp.pop %v853
    %v862 = vrcp.pop %v854
    %v863 = vrcp.pop %v855
    %v864 = vrcp.pop %v856
    %v865 = vmul.f32 %v810, %v857
    %v866 = vmul.f32 %v812, %v858
    %v867 = vmul.f32 %v814, %v859
    %v868 = vmul.f32 %v816, %v860
    %v869 = vmul.f32 %v818, %v861
    %v870 = vmul.f32 %v820, %v862
    %v871 = vmul.f32 %v822, %v863
    %v872 = vmul.f32 %v824, %v864
    %v874 = vsel %vm776, %v865, 0
    %v877 = vsel %vm776, %v866, 0
    %v880 = vsel %vm776, %v867, 0
    %v883 = vsel %vm776, %v868, 0
    %v886 = vsel %vm776, %v869, 0
    %v889 = vsel %vm776, %v870, 0
    %v892 = vsel %vm776, %v871, 0
    %v895 = vsel %vm776, %v872, 0
    %897 = vmatpush.msra.mxu0 0.0
    %898 = vmatpush.msra.mxu0 0.0
    %899 = vmatpush.msra.mxu0 0.0
    %900 = vmatpush.msra.mxu0 0.0
    %901 = vmatpush.msra.mxu0 0.0
    %902 = vmatpush.msra.mxu0 0.0
    %903 = vmatpush.msra.mxu0 0.0
    %904 = vmatpush.msra.mxu0 0.0
    %905 = vmatpush.msra.mxu0 %v134
    %906 = vmatpush.msra.mxu0 %v132
    %907 = vmatpush.msra.mxu0 %v129
    %908 = vmatpush.msra.mxu0 %v127
    %909 = vmatpush.msra.mxu0 %v124
    %910 = vmatpush.msra.mxu0 %v122
    %911 = vmatpush.msra.mxu0 %v119
    %912 = vmatpush.msra.mxu0 %v117
    %913 = vmatmul.f32.gmra.mxu0 %v874
    %v914 = vpop.f32.mrf.mxu0
    %v915 = vadd.f32 0.0, %v914
    %916 = vmatmul.f32.gmra.mxu0 %v877
    %v917 = vpop.f32.mrf.mxu0
    %v918 = vadd.f32 0.0, %v917
    %919 = vmatmul.f32.gmra.mxu0 %v880
    %v920 = vpop.f32.mrf.mxu0
    %v921 = vadd.f32 0.0, %v920
    %922 = vmatmul.f32.gmra.mxu0 %v883
    %v923 = vpop.f32.mrf.mxu0
    %v924 = vadd.f32 0.0, %v923
    %925 = vmatmul.f32.gmra.mxu0 %v886
    %v926 = vpop.f32.mrf.mxu0
    %v927 = vadd.f32 0.0, %v926
    %928 = vmatmul.f32.gmra.mxu0 %v889
    %v929 = vpop.f32.mrf.mxu0
    %v930 = vadd.f32 0.0, %v929
    %931 = vmatmul.f32.gmra.mxu0 %v892
    %v932 = vpop.f32.mrf.mxu0
    %v933 = vadd.f32 0.0, %v932
    %934 = vmatmul.f32.gmra.mxu0 %v895
    %v935 = vpop.f32.mrf.mxu0
    %v936 = vadd.f32 0.0, %v935
    %937 = vdwg.mxu0
    %938 = vset.pattern.permute.xlu0 40
    %939 = vperm.xlu0 %938, %v117
    %v940 = vpop.permute.xlu0 %939
    %942 = vset.pattern.permute.xlu0 40
    %943 = vperm.xlu0 %942, %v119
    %v944 = vpop.permute.xlu0 %943
    %946 = vset.pattern.permute.xlu0 40
    %947 = vperm.xlu0 %946, %v122
    %v948 = vpop.permute.xlu0 %947
    %950 = vset.pattern.permute.xlu0 40
    %951 = vperm.xlu0 %950, %v124
    %v952 = vpop.permute.xlu0 %951
    %954 = vset.pattern.permute.xlu0 40
    %955 = vperm.xlu0 %954, %v127
    %v956 = vpop.permute.xlu0 %955
    %958 = vset.pattern.permute.xlu0 40
    %959 = vperm.xlu0 %958, %v129
    %v960 = vpop.permute.xlu0 %959
    %962 = vset.pattern.permute.xlu0 40
    %963 = vperm.xlu0 %962, %v132
    %v964 = vpop.permute.xlu0 %963
    %966 = vset.pattern.permute.xlu0 40
    %967 = vperm.xlu0 %966, %v134
    %v968 = vpop.permute.xlu0 %967
    %v970 = vperm.slane %v153, 0
    %v971 = vadd.f32 %v940, %v970
    %v972 = vadd.f32 %v944, %v970
    %v973 = vadd.f32 %v948, %v970
    %v974 = vadd.f32 %v952, %v970
    %v975 = vadd.f32 %v956, %v970
    %v976 = vadd.f32 %v960, %v970
    %v977 = vadd.f32 %v964, %v970
    %v978 = vadd.f32 %v968, %v970
    %v979 = vmul.f32 %v971, 0.2
    %v980 = vmul.f32 %v972, 0.2
    %v981 = vmul.f32 %v973, 0.2
    %v982 = vmul.f32 %v974, 0.2
    %v983 = vmul.f32 %v975, 0.2
    %v984 = vmul.f32 %v976, 0.2
    %v985 = vmul.f32 %v977, 0.2
    %v986 = vmul.f32 %v978, 0.2
    %v987 = vmax.f32 %v971, %v979
    %v988 = vmax.f32 %v972, %v980
    %v989 = vmax.f32 %v973, %v981
    %v990 = vmax.f32 %v974, %v982
    %v991 = vmax.f32 %v975, %v983
    %v992 = vmax.f32 %v976, %v984
    %v993 = vmax.f32 %v977, %v985
    %v994 = vmax.f32 %v978, %v986
    %s995 = sld [smem:[#allocation2 + $0x8]]
    %v996 = vstv %s995
    %v997 = vmul.f32 %v996, %v987
    %v998 = vmul.f32 %v996, %v988
    %v999 = vmul.f32 %v996, %v989
    %v1000 = vmul.f32 %v996, %v990
    %v1001 = vmul.f32 %v996, %v991
    %v1002 = vmul.f32 %v996, %v992
    %v1003 = vmul.f32 %v996, %v993
    %v1004 = vmul.f32 %v996, %v994
    %1005 = vset.pattern.permute.xlu0 41
    %1006 = vperm.xlu0 %1005, %v117
    %v1007 = vpop.permute.xlu0 %1006
    %1009 = vset.pattern.permute.xlu0 41
    %1010 = vperm.xlu0 %1009, %v119
    %v1011 = vpop.permute.xlu0 %1010
    %1013 = vset.pattern.permute.xlu0 41
    %1014 = vperm.xlu0 %1013, %v122
    %v1015 = vpop.permute.xlu0 %1014
    %1017 = vset.pattern.permute.xlu0 41
    %1018 = vperm.xlu0 %1017, %v124
    %v1019 = vpop.permute.xlu0 %1018
    %1021 = vset.pattern.permute.xlu0 41
    %1022 = vperm.xlu0 %1021, %v127
    %v1023 = vpop.permute.xlu0 %1022
    %1025 = vset.pattern.permute.xlu0 41
    %1026 = vperm.xlu0 %1025, %v129
    %v1027 = vpop.permute.xlu0 %1026
    %1029 = vset.pattern.permute.xlu0 41
    %1030 = vperm.xlu0 %1029, %v132
    %v1031 = vpop.permute.xlu0 %1030
    %1033 = vset.pattern.permute.xlu0 41
    %1034 = vperm.xlu0 %1033, %v134
    %v1035 = vpop.permute.xlu0 %1034
    %v1037 = vperm.slane %v153, 1
    %v1038 = vadd.f32 %v1007, %v1037
    %v1039 = vadd.f32 %v1011, %v1037
    %v1040 = vadd.f32 %v1015, %v1037
    %v1041 = vadd.f32 %v1019, %v1037
    %v1042 = vadd.f32 %v1023, %v1037
    %v1043 = vadd.f32 %v1027, %v1037
    %v1044 = vadd.f32 %v1031, %v1037
    %v1045 = vadd.f32 %v1035, %v1037
    %v1046 = vmul.f32 %v1038, 0.2
    %v1047 = vmul.f32 %v1039, 0.2
    %v1048 = vmul.f32 %v1040, 0.2
    %v1049 = vmul.f32 %v1041, 0.2
    %v1050 = vmul.f32 %v1042, 0.2
    %v1051 = vmul.f32 %v1043, 0.2
    %v1052 = vmul.f32 %v1044, 0.2
    %v1053 = vmul.f32 %v1045, 0.2
    %v1054 = vmax.f32 %v1038, %v1046
    %v1055 = vmax.f32 %v1039, %v1047
    %v1056 = vmax.f32 %v1040, %v1048
    %v1057 = vmax.f32 %v1041, %v1049
    %v1058 = vmax.f32 %v1042, %v1050
    %v1059 = vmax.f32 %v1043, %v1051
    %v1060 = vmax.f32 %v1044, %v1052
    %v1061 = vmax.f32 %v1045, %v1053
    %s1062 = sld [smem:[#allocation2 + $0x9]]
    %v1063 = vstv %s1062
    %v1064 = vmul.f32 %v1063, %v1054
    %v1065 = vmul.f32 %v1063, %v1055
    %v1066 = vmul.f32 %v1063, %v1056
    %v1067 = vmul.f32 %v1063, %v1057
    %v1068 = vmul.f32 %v1063, %v1058
    %v1069 = vmul.f32 %v1063, %v1059
    %v1070 = vmul.f32 %v1063, %v1060
    %v1071 = vmul.f32 %v1063, %v1061
    %v1072 = vadd.f32 %v997, %v1064
    %v1073 = vadd.f32 %v998, %v1065
    %v1074 = vadd.f32 %v999, %v1066
    %v1075 = vadd.f32 %v1000, %v1067
    %v1076 = vadd.f32 %v1001, %v1068
    %v1077 = vadd.f32 %v1002, %v1069
    %v1078 = vadd.f32 %v1003, %v1070
    %v1079 = vadd.f32 %v1004, %v1071
    %1080 = vset.pattern.permute.xlu0 42
    %1081 = vperm.xlu0 %1080, %v117
    %v1082 = vpop.permute.xlu0 %1081
    %1084 = vset.pattern.permute.xlu0 42
    %1085 = vperm.xlu0 %1084, %v119
    %v1086 = vpop.permute.xlu0 %1085
    %1088 = vset.pattern.permute.xlu0 42
    %1089 = vperm.xlu0 %1088, %v122
    %v1090 = vpop.permute.xlu0 %1089
    %1092 = vset.pattern.permute.xlu0 42
    %1093 = vperm.xlu0 %1092, %v124
    %v1094 = vpop.permute.xlu0 %1093
    %1096 = vset.pattern.permute.xlu0 42
    %1097 = vperm.xlu0 %1096, %v127
    %v1098 = vpop.permute.xlu0 %1097
    %1100 = vset.pattern.permute.xlu0 42
    %1101 = vperm.xlu0 %1100, %v129
    %v1102 = vpop.permute.xlu0 %1101
    %1104 = vset.pattern.permute.xlu0 42
    %1105 = vperm.xlu0 %1104, %v132
    %v1106 = vpop.permute.xlu0 %1105
    %1108 = vset.pattern.permute.xlu0 42
    %1109 = vperm.xlu0 %1108, %v134
    %v1110 = vpop.permute.xlu0 %1109
    %v1112 = vperm.slane %v153, 2
    %v1113 = vadd.f32 %v1082, %v1112
    %v1114 = vadd.f32 %v1086, %v1112
    %v1115 = vadd.f32 %v1090, %v1112
    %v1116 = vadd.f32 %v1094, %v1112
    %v1117 = vadd.f32 %v1098, %v1112
    %v1118 = vadd.f32 %v1102, %v1112
    %v1119 = vadd.f32 %v1106, %v1112
    %v1120 = vadd.f32 %v1110, %v1112
    %v1121 = vmul.f32 %v1113, 0.2
    %v1122 = vmul.f32 %v1114, 0.2
    %v1123 = vmul.f32 %v1115, 0.2
    %v1124 = vmul.f32 %v1116, 0.2
    %v1125 = vmul.f32 %v1117, 0.2
    %v1126 = vmul.f32 %v1118, 0.2
    %v1127 = vmul.f32 %v1119, 0.2
    %v1128 = vmul.f32 %v1120, 0.2
    %v1129 = vmax.f32 %v1113, %v1121
    %v1130 = vmax.f32 %v1114, %v1122
    %v1131 = vmax.f32 %v1115, %v1123
    %v1132 = vmax.f32 %v1116, %v1124
    %v1133 = vmax.f32 %v1117, %v1125
    %v1134 = vmax.f32 %v1118, %v1126
    %v1135 = vmax.f32 %v1119, %v1127
    %v1136 = vmax.f32 %v1120, %v1128
    %s1137 = sld [smem:[#allocation2 + $0xa]]
    %v1138 = vstv %s1137
    %v1139 = vmul.f32 %v1138, %v1129
    %v1140 = vmul.f32 %v1138, %v1130
    %v1141 = vmul.f32 %v1138, %v1131
    %v1142 = vmul.f32 %v1138, %v1132
    %v1143 = vmul.f32 %v1138, %v1133
    %v1144 = vmul.f32 %v1138, %v1134
    %v1145 = vmul.f32 %v1138, %v1135
    %v1146 = vmul.f32 %v1138, %v1136
    %v1147 = vadd.f32 %v1072, %v1139
    %v1148 = vadd.f32 %v1073, %v1140
    %v1149 = vadd.f32 %v1074, %v1141
    %v1150 = vadd.f32 %v1075, %v1142
    %v1151 = vadd.f32 %v1076, %v1143
    %v1152 = vadd.f32 %v1077, %v1144
    %v1153 = vadd.f32 %v1078, %v1145
    %v1154 = vadd.f32 %v1079, %v1146
    %1155 = vset.pattern.permute.xlu0 43
    %1156 = vperm.xlu0 %1155, %v117
    %v1157 = vpop.permute.xlu0 %1156
    %1159 = vset.pattern.permute.xlu0 43
    %1160 = vperm.xlu0 %1159, %v119
    %v1161 = vpop.permute.xlu0 %1160
    %1163 = vset.pattern.permute.xlu0 43
    %1164 = vperm.xlu0 %1163, %v122
    %v1165 = vpop.permute.xlu0 %1164
    %1167 = vset.pattern.permute.xlu0 43
    %1168 = vperm.xlu0 %1167, %v124
    %v1169 = vpop.permute.xlu0 %1168
    %1171 = vset.pattern.permute.xlu0 43
    %1172 = vperm.xlu0 %1171, %v127
    %v1173 = vpop.permute.xlu0 %1172
    %1175 = vset.pattern.permute.xlu0 43
    %1176 = vperm.xlu0 %1175, %v129
    %v1177 = vpop.permute.xlu0 %1176
    %1179 = vset.pattern.permute.xlu0 43
    %1180 = vperm.xlu0 %1179, %v132
    %v1181 = vpop.permute.xlu0 %1180
    %1183 = vset.pattern.permute.xlu0 43
    %1184 = vperm.xlu0 %1183, %v134
    %v1185 = vpop.permute.xlu0 %1184
    %v1187 = vperm.slane %v153, 3
    %v1188 = vadd.f32 %v1157, %v1187
    %v1189 = vadd.f32 %v1161, %v1187
    %v1190 = vadd.f32 %v1165, %v1187
    %v1191 = vadd.f32 %v1169, %v1187
    %v1192 = vadd.f32 %v1173, %v1187
    %v1193 = vadd.f32 %v1177, %v1187
    %v1194 = vadd.f32 %v1181, %v1187
    %v1195 = vadd.f32 %v1185, %v1187
    %v1196 = vmul.f32 %v1188, 0.2
    %v1197 = vmul.f32 %v1189, 0.2
    %v1198 = vmul.f32 %v1190, 0.2
    %v1199 = vmul.f32 %v1191, 0.2
    %v1200 = vmul.f32 %v1192, 0.2
    %v1201 = vmul.f32 %v1193, 0.2
    %v1202 = vmul.f32 %v1194, 0.2
    %v1203 = vmul.f32 %v1195, 0.2
    %v1204 = vmax.f32 %v1188, %v1196
    %v1205 = vmax.f32 %v1189, %v1197
    %v1206 = vmax.f32 %v1190, %v1198
    %v1207 = vmax.f32 %v1191, %v1199
    %v1208 = vmax.f32 %v1192, %v1200
    %v1209 = vmax.f32 %v1193, %v1201
    %v1210 = vmax.f32 %v1194, %v1202
    %v1211 = vmax.f32 %v1195, %v1203
    %s1212 = sld [smem:[#allocation2 + $0xb]]
    %v1213 = vstv %s1212
    %v1214 = vmul.f32 %v1213, %v1204
    %v1215 = vmul.f32 %v1213, %v1205
    %v1216 = vmul.f32 %v1213, %v1206
    %v1217 = vmul.f32 %v1213, %v1207
    %v1218 = vmul.f32 %v1213, %v1208
    %v1219 = vmul.f32 %v1213, %v1209
    %v1220 = vmul.f32 %v1213, %v1210
    %v1221 = vmul.f32 %v1213, %v1211
    %v1222 = vadd.f32 %v1147, %v1214
    %v1223 = vadd.f32 %v1148, %v1215
    %v1224 = vadd.f32 %v1149, %v1216
    %v1225 = vadd.f32 %v1150, %v1217
    %v1226 = vadd.f32 %v1151, %v1218
    %v1227 = vadd.f32 %v1152, %v1219
    %v1228 = vadd.f32 %v1153, %v1220
    %v1229 = vadd.f32 %v1154, %v1221
    %1230 = vset.pattern.permute.xlu0 44
    %1231 = vperm.xlu0 %1230, %v117
    %v1232 = vpop.permute.xlu0 %1231
    %1234 = vset.pattern.permute.xlu0 44
    %1235 = vperm.xlu0 %1234, %v119
    %v1236 = vpop.permute.xlu0 %1235
    %1238 = vset.pattern.permute.xlu0 44
    %1239 = vperm.xlu0 %1238, %v122
    %v1240 = vpop.permute.xlu0 %1239
    %1242 = vset.pattern.permute.xlu0 44
    %1243 = vperm.xlu0 %1242, %v124
    %v1244 = vpop.permute.xlu0 %1243
    %1246 = vset.pattern.permute.xlu0 44
    %1247 = vperm.xlu0 %1246, %v127
    %v1248 = vpop.permute.xlu0 %1247
    %1250 = vset.pattern.permute.xlu0 44
    %1251 = vperm.xlu0 %1250, %v129
    %v1252 = vpop.permute.xlu0 %1251
    %1254 = vset.pattern.permute.xlu0 44
    %1255 = vperm.xlu0 %1254, %v132
    %v1256 = vpop.permute.xlu0 %1255
    %1258 = vset.pattern.permute.xlu0 44
    %1259 = vperm.xlu0 %1258, %v134
    %v1260 = vpop.permute.xlu0 %1259
    %v1262 = vperm.slane %v153, 4
    %v1263 = vadd.f32 %v1232, %v1262
    %v1264 = vadd.f32 %v1236, %v1262
    %v1265 = vadd.f32 %v1240, %v1262
    %v1266 = vadd.f32 %v1244, %v1262
    %v1267 = vadd.f32 %v1248, %v1262
    %v1268 = vadd.f32 %v1252, %v1262
    %v1269 = vadd.f32 %v1256, %v1262
    %v1270 = vadd.f32 %v1260, %v1262
    %v1271 = vmul.f32 %v1263, 0.2
    %v1272 = vmul.f32 %v1264, 0.2
    %v1273 = vmul.f32 %v1265, 0.2
    %v1274 = vmul.f32 %v1266, 0.2
    %v1275 = vmul.f32 %v1267, 0.2
    %v1276 = vmul.f32 %v1268, 0.2
    %v1277 = vmul.f32 %v1269, 0.2
    %v1278 = vmul.f32 %v1270, 0.2
    %v1279 = vmax.f32 %v1263, %v1271
    %v1280 = vmax.f32 %v1264, %v1272
    %v1281 = vmax.f32 %v1265, %v1273
    %v1282 = vmax.f32 %v1266, %v1274
    %v1283 = vmax.f32 %v1267, %v1275
    %v1284 = vmax.f32 %v1268, %v1276
    %v1285 = vmax.f32 %v1269, %v1277
    %v1286 = vmax.f32 %v1270, %v1278
    %s1287 = sld [smem:[#allocation2 + $0xc]]
    %v1288 = vstv %s1287
    %v1289 = vmul.f32 %v1288, %v1279
    %v1290 = vmul.f32 %v1288, %v1280
    %v1291 = vmul.f32 %v1288, %v1281
    %v1292 = vmul.f32 %v1288, %v1282
    %v1293 = vmul.f32 %v1288, %v1283
    %v1294 = vmul.f32 %v1288, %v1284
    %v1295 = vmul.f32 %v1288, %v1285
    %v1296 = vmul.f32 %v1288, %v1286
    %v1297 = vadd.f32 %v1222, %v1289
    %v1298 = vadd.f32 %v1223, %v1290
    %v1299 = vadd.f32 %v1224, %v1291
    %v1300 = vadd.f32 %v1225, %v1292
    %v1301 = vadd.f32 %v1226, %v1293
    %v1302 = vadd.f32 %v1227, %v1294
    %v1303 = vadd.f32 %v1228, %v1295
    %v1304 = vadd.f32 %v1229, %v1296
    %1305 = vset.pattern.permute.xlu0 45
    %1306 = vperm.xlu0 %1305, %v117
    %v1307 = vpop.permute.xlu0 %1306
    %1309 = vset.pattern.permute.xlu0 45
    %1310 = vperm.xlu0 %1309, %v119
    %v1311 = vpop.permute.xlu0 %1310
    %1313 = vset.pattern.permute.xlu0 45
    %1314 = vperm.xlu0 %1313, %v122
    %v1315 = vpop.permute.xlu0 %1314
    %1317 = vset.pattern.permute.xlu0 45
    %1318 = vperm.xlu0 %1317, %v124
    %v1319 = vpop.permute.xlu0 %1318
    %1321 = vset.pattern.permute.xlu0 45
    %1322 = vperm.xlu0 %1321, %v127
    %v1323 = vpop.permute.xlu0 %1322
    %1325 = vset.pattern.permute.xlu0 45
    %1326 = vperm.xlu0 %1325, %v129
    %v1327 = vpop.permute.xlu0 %1326
    %1329 = vset.pattern.permute.xlu0 45
    %1330 = vperm.xlu0 %1329, %v132
    %v1331 = vpop.permute.xlu0 %1330
    %1333 = vset.pattern.permute.xlu0 45
    %1334 = vperm.xlu0 %1333, %v134
    %v1335 = vpop.permute.xlu0 %1334
    %v1337 = vperm.slane %v153, 5
    %v1338 = vadd.f32 %v1307, %v1337
    %v1339 = vadd.f32 %v1311, %v1337
    %v1340 = vadd.f32 %v1315, %v1337
    %v1341 = vadd.f32 %v1319, %v1337
    %v1342 = vadd.f32 %v1323, %v1337
    %v1343 = vadd.f32 %v1327, %v1337
    %v1344 = vadd.f32 %v1331, %v1337
    %v1345 = vadd.f32 %v1335, %v1337
    %v1346 = vmul.f32 %v1338, 0.2
    %v1347 = vmul.f32 %v1339, 0.2
    %v1348 = vmul.f32 %v1340, 0.2
    %v1349 = vmul.f32 %v1341, 0.2
    %v1350 = vmul.f32 %v1342, 0.2
    %v1351 = vmul.f32 %v1343, 0.2
    %v1352 = vmul.f32 %v1344, 0.2
    %v1353 = vmul.f32 %v1345, 0.2
    %v1354 = vmax.f32 %v1338, %v1346
    %v1355 = vmax.f32 %v1339, %v1347
    %v1356 = vmax.f32 %v1340, %v1348
    %v1357 = vmax.f32 %v1341, %v1349
    %v1358 = vmax.f32 %v1342, %v1350
    %v1359 = vmax.f32 %v1343, %v1351
    %v1360 = vmax.f32 %v1344, %v1352
    %v1361 = vmax.f32 %v1345, %v1353
    %s1362 = sld [smem:[#allocation2 + $0xd]]
    %v1363 = vstv %s1362
    %v1364 = vmul.f32 %v1363, %v1354
    %v1365 = vmul.f32 %v1363, %v1355
    %v1366 = vmul.f32 %v1363, %v1356
    %v1367 = vmul.f32 %v1363, %v1357
    %v1368 = vmul.f32 %v1363, %v1358
    %v1369 = vmul.f32 %v1363, %v1359
    %v1370 = vmul.f32 %v1363, %v1360
    %v1371 = vmul.f32 %v1363, %v1361
    %v1372 = vadd.f32 %v1297, %v1364
    %v1373 = vadd.f32 %v1298, %v1365
    %v1374 = vadd.f32 %v1299, %v1366
    %v1375 = vadd.f32 %v1300, %v1367
    %v1376 = vadd.f32 %v1301, %v1368
    %v1377 = vadd.f32 %v1302, %v1369
    %v1378 = vadd.f32 %v1303, %v1370
    %v1379 = vadd.f32 %v1304, %v1371
    %1380 = vset.pattern.permute.xlu0 46
    %1381 = vperm.xlu0 %1380, %v117
    %v1382 = vpop.permute.xlu0 %1381
    %1384 = vset.pattern.permute.xlu0 46
    %1385 = vperm.xlu0 %1384, %v119
    %v1386 = vpop.permute.xlu0 %1385
    %1388 = vset.pattern.permute.xlu0 46
    %1389 = vperm.xlu0 %1388, %v122
    %v1390 = vpop.permute.xlu0 %1389
    %1392 = vset.pattern.permute.xlu0 46
    %1393 = vperm.xlu0 %1392, %v124
    %v1394 = vpop.permute.xlu0 %1393
    %1396 = vset.pattern.permute.xlu0 46
    %1397 = vperm.xlu0 %1396, %v127
    %v1398 = vpop.permute.xlu0 %1397
    %1400 = vset.pattern.permute.xlu0 46
    %1401 = vperm.xlu0 %1400, %v129
    %v1402 = vpop.permute.xlu0 %1401
    %1404 = vset.pattern.permute.xlu0 46
    %1405 = vperm.xlu0 %1404, %v132
    %v1406 = vpop.permute.xlu0 %1405
    %1408 = vset.pattern.permute.xlu0 46
    %1409 = vperm.xlu0 %1408, %v134
    %v1410 = vpop.permute.xlu0 %1409
    %v1412 = vperm.slane %v153, 6
    %v1413 = vadd.f32 %v1382, %v1412
    %v1414 = vadd.f32 %v1386, %v1412
    %v1415 = vadd.f32 %v1390, %v1412
    %v1416 = vadd.f32 %v1394, %v1412
    %v1417 = vadd.f32 %v1398, %v1412
    %v1418 = vadd.f32 %v1402, %v1412
    %v1419 = vadd.f32 %v1406, %v1412
    %v1420 = vadd.f32 %v1410, %v1412
    %v1421 = vmul.f32 %v1413, 0.2
    %v1422 = vmul.f32 %v1414, 0.2
    %v1423 = vmul.f32 %v1415, 0.2
    %v1424 = vmul.f32 %v1416, 0.2
    %v1425 = vmul.f32 %v1417, 0.2
    %v1426 = vmul.f32 %v1418, 0.2
    %v1427 = vmul.f32 %v1419, 0.2
    %v1428 = vmul.f32 %v1420, 0.2
    %v1429 = vmax.f32 %v1413, %v1421
    %v1430 = vmax.f32 %v1414, %v1422
    %v1431 = vmax.f32 %v1415, %v1423
    %v1432 = vmax.f32 %v1416, %v1424
    %v1433 = vmax.f32 %v1417, %v1425
    %v1434 = vmax.f32 %v1418, %v1426
    %v1435 = vmax.f32 %v1419, %v1427
    %v1436 = vmax.f32 %v1420, %v1428
    %s1437 = sld [smem:[#allocation2 + $0xe]]
    %v1438 = vstv %s1437
    %v1439 = vmul.f32 %v1438, %v1429
    %v1440 = vmul.f32 %v1438, %v1430
    %v1441 = vmul.f32 %v1438, %v1431
    %v1442 = vmul.f32 %v1438, %v1432
    %v1443 = vmul.f32 %v1438, %v1433
    %v1444 = vmul.f32 %v1438, %v1434
    %v1445 = vmul.f32 %v1438, %v1435
    %v1446 = vmul.f32 %v1438, %v1436
    %v1447 = vadd.f32 %v1372, %v1439
    %v1448 = vadd.f32 %v1373, %v1440
    %v1449 = vadd.f32 %v1374, %v1441
    %v1450 = vadd.f32 %v1375, %v1442
    %v1451 = vadd.f32 %v1376, %v1443
    %v1452 = vadd.f32 %v1377, %v1444
    %v1453 = vadd.f32 %v1378, %v1445
    %v1454 = vadd.f32 %v1379, %v1446
    %1455 = vset.pattern.permute.xlu0 47
    %1456 = vperm.xlu0 %1455, %v117
    %v1457 = vpop.permute.xlu0 %1456
    %1459 = vset.pattern.permute.xlu0 47
    %1460 = vperm.xlu0 %1459, %v119
    %v1461 = vpop.permute.xlu0 %1460
    %1463 = vset.pattern.permute.xlu0 47
    %1464 = vperm.xlu0 %1463, %v122
    %v1465 = vpop.permute.xlu0 %1464
    %1467 = vset.pattern.permute.xlu0 47
    %1468 = vperm.xlu0 %1467, %v124
    %v1469 = vpop.permute.xlu0 %1468
    %1471 = vset.pattern.permute.xlu0 47
    %1472 = vperm.xlu0 %1471, %v127
    %v1473 = vpop.permute.xlu0 %1472
    %1475 = vset.pattern.permute.xlu0 47
    %1476 = vperm.xlu0 %1475, %v129
    %v1477 = vpop.permute.xlu0 %1476
    %1479 = vset.pattern.permute.xlu0 47
    %1480 = vperm.xlu0 %1479, %v132
    %v1481 = vpop.permute.xlu0 %1480
    %1483 = vset.pattern.permute.xlu0 47
    %1484 = vperm.xlu0 %1483, %v134
    %v1485 = vpop.permute.xlu0 %1484
    %v1487 = vperm.slane %v153, 7
    %v1488 = vadd.f32 %v1457, %v1487
    %v1489 = vadd.f32 %v1461, %v1487
    %v1490 = vadd.f32 %v1465, %v1487
    %v1491 = vadd.f32 %v1469, %v1487
    %v1492 = vadd.f32 %v1473, %v1487
    %v1493 = vadd.f32 %v1477, %v1487
    %v1494 = vadd.f32 %v1481, %v1487
    %v1495 = vadd.f32 %v1485, %v1487
    %v1496 = vmul.f32 %v1488, 0.2
    %v1497 = vmul.f32 %v1489, 0.2
    %v1498 = vmul.f32 %v1490, 0.2
    %v1499 = vmul.f32 %v1491, 0.2
    %v1500 = vmul.f32 %v1492, 0.2
    %v1501 = vmul.f32 %v1493, 0.2
    %v1502 = vmul.f32 %v1494, 0.2
    %v1503 = vmul.f32 %v1495, 0.2
    %v1504 = vmax.f32 %v1488, %v1496
    %v1505 = vmax.f32 %v1489, %v1497
    %v1506 = vmax.f32 %v1490, %v1498
    %v1507 = vmax.f32 %v1491, %v1499
    %v1508 = vmax.f32 %v1492, %v1500
    %v1509 = vmax.f32 %v1493, %v1501
    %v1510 = vmax.f32 %v1494, %v1502
    %v1511 = vmax.f32 %v1495, %v1503
    %s1512 = sld [smem:[#allocation2 + $0xf]]
    %v1513 = vstv %s1512
    %v1514 = vmul.f32 %v1513, %v1504
    %v1515 = vmul.f32 %v1513, %v1505
    %v1516 = vmul.f32 %v1513, %v1506
    %v1517 = vmul.f32 %v1513, %v1507
    %v1518 = vmul.f32 %v1513, %v1508
    %v1519 = vmul.f32 %v1513, %v1509
    %v1520 = vmul.f32 %v1513, %v1510
    %v1521 = vmul.f32 %v1513, %v1511
    %v1522 = vadd.f32 %v1447, %v1514
    %v1523 = vadd.f32 %v1448, %v1515
    %v1524 = vadd.f32 %v1449, %v1516
    %v1525 = vadd.f32 %v1450, %v1517
    %v1526 = vadd.f32 %v1451, %v1518
    %v1527 = vadd.f32 %v1452, %v1519
    %v1528 = vadd.f32 %v1453, %v1520
    %v1529 = vadd.f32 %v1454, %v1521
    %v1530 = vadd.f32 %v1522, %v74
    %v1531 = vadd.f32 %v1523, %v75
    %v1532 = vadd.f32 %v1524, %v76
    %v1533 = vadd.f32 %v1525, %v77
    %v1534 = vadd.f32 %v1526, %v78
    %v1535 = vadd.f32 %v1527, %v79
    %v1536 = vadd.f32 %v1528, %v80
    %v1537 = vadd.f32 %v1529, %v81
    %v1538 = vsel %vm776, %v1530, -inf
    %1539 = vmax.xlane.f32.xlu0 %v1538
    %v1540 = vpop.xlane.xlu0 %1539
    %v1541 = vsel %vm776, %v1531, -inf
    %1542 = vmax.xlane.f32.xlu0 %v1541
    %v1543 = vpop.xlane.xlu0 %1542
    %v1544 = vsel %vm776, %v1532, -inf
    %1545 = vmax.xlane.f32.xlu0 %v1544
    %v1546 = vpop.xlane.xlu0 %1545
    %v1547 = vsel %vm776, %v1533, -inf
    %1548 = vmax.xlane.f32.xlu0 %v1547
    %v1549 = vpop.xlane.xlu0 %1548
    %v1550 = vsel %vm776, %v1534, -inf
    %1551 = vmax.xlane.f32.xlu0 %v1550
    %v1552 = vpop.xlane.xlu0 %1551
    %v1553 = vsel %vm776, %v1535, -inf
    %1554 = vmax.xlane.f32.xlu0 %v1553
    %v1555 = vpop.xlane.xlu0 %1554
    %v1556 = vsel %vm776, %v1536, -inf
    %1557 = vmax.xlane.f32.xlu0 %v1556
    %v1558 = vpop.xlane.xlu0 %1557
    %v1559 = vsel %vm776, %v1537, -inf
    %1560 = vmax.xlane.f32.xlu0 %v1559
    %v1561 = vpop.xlane.xlu0 %1560
    %v1562 = vsub.f32 %v1530, %v1540
    %v1563 = vsub.f32 %v1531, %v1543
    %v1564 = vsub.f32 %v1532, %v1546
    %v1565 = vsub.f32 %v1533, %v1549
    %v1566 = vsub.f32 %v1534, %v1552
    %v1567 = vsub.f32 %v1535, %v1555
    %v1568 = vsub.f32 %v1536, %v1558
    %v1569 = vsub.f32 %v1537, %v1561
    %v1570 = vmul.f32 %v1562, 1.442695
    %v1571 = vpow.pop %v1570
    %v1572 = vmul.f32 %v1563, 1.442695
    %v1573 = vpow.pop %v1572
    %v1574 = vmul.f32 %v1564, 1.442695
    %v1575 = vpow.pop %v1574
    %v1576 = vmul.f32 %v1565, 1.442695
    %v1577 = vpow.pop %v1576
    %v1578 = vmul.f32 %v1566, 1.442695
    %v1579 = vpow.pop %v1578
    %v1580 = vmul.f32 %v1567, 1.442695
    %v1581 = vpow.pop %v1580
    %v1582 = vmul.f32 %v1568, 1.442695
    %v1583 = vpow.pop %v1582
    %v1584 = vmul.f32 %v1569, 1.442695
    %v1585 = vpow.pop %v1584
    %v1586 = vsel %vm776, %v1571, 0.0
    %1587 = vadd.xlane.f32.xlu0 %v1586
    %v1588 = vpop.xlane.xlu0 %1587
    %v1589 = vsel %vm776, %v1573, 0.0
    %1590 = vadd.xlane.f32.xlu0 %v1589
    %v1591 = vpop.xlane.xlu0 %1590
    %v1592 = vsel %vm776, %v1575, 0.0
    %1593 = vadd.xlane.f32.xlu0 %v1592
    %v1594 = vpop.xlane.xlu0 %1593
    %v1595 = vsel %vm776, %v1577, 0.0
    %1596 = vadd.xlane.f32.xlu0 %v1595
    %v1597 = vpop.xlane.xlu0 %1596
    %v1598 = vsel %vm776, %v1579, 0.0
    %1599 = vadd.xlane.f32.xlu0 %v1598
    %v1600 = vpop.xlane.xlu0 %1599
    %v1601 = vsel %vm776, %v1581, 0.0
    %1602 = vadd.xlane.f32.xlu0 %v1601
    %v1603 = vpop.xlane.xlu0 %1602
    %v1604 = vsel %vm776, %v1583, 0.0
    %1605 = vadd.xlane.f32.xlu0 %v1604
    %v1606 = vpop.xlane.xlu0 %1605
    %v1607 = vsel %vm776, %v1585, 0.0
    %1608 = vadd.xlane.f32.xlu0 %v1607
    %v1609 = vpop.xlane.xlu0 %1608
    %v1610 = vmax.f32 %v1588, 1e-20
    %v1611 = vmax.f32 %v1591, 1e-20
    %v1612 = vmax.f32 %v1594, 1e-20
    %v1613 = vmax.f32 %v1597, 1e-20
    %v1614 = vmax.f32 %v1600, 1e-20
    %v1615 = vmax.f32 %v1603, 1e-20
    %v1616 = vmax.f32 %v1606, 1e-20
    %v1617 = vmax.f32 %v1609, 1e-20
    %v1618 = vrcp.pop %v1610
    %v1619 = vrcp.pop %v1611
    %v1620 = vrcp.pop %v1612
    %v1621 = vrcp.pop %v1613
    %v1622 = vrcp.pop %v1614
    %v1623 = vrcp.pop %v1615
    %v1624 = vrcp.pop %v1616
    %v1625 = vrcp.pop %v1617
    %v1626 = vmul.f32 %v1571, %v1618
    %v1627 = vmul.f32 %v1573, %v1619
    %v1628 = vmul.f32 %v1575, %v1620
    %v1629 = vmul.f32 %v1577, %v1621
    %v1630 = vmul.f32 %v1579, %v1622
    %v1631 = vmul.f32 %v1581, %v1623
    %v1632 = vmul.f32 %v1583, %v1624
    %v1633 = vmul.f32 %v1585, %v1625
    %1634 = vrot.lane.b32.xlu0 %v117, 120
    %v1635 = vpop.permute.xlu0 %1634
    %1636 = vrot.lane.b32.xlu0 %v119, 120
    %v1637 = vpop.permute.xlu0 %1636
    %1638 = vrot.lane.b32.xlu0 %v122, 120
    %v1639 = vpop.permute.xlu0 %1638
    %1640 = vrot.lane.b32.xlu0 %v124, 120
    %v1641 = vpop.permute.xlu0 %1640
    %1642 = vrot.lane.b32.xlu0 %v127, 120
    %v1643 = vpop.permute.xlu0 %1642
    %1644 = vrot.lane.b32.xlu0 %v129, 120
    %v1645 = vpop.permute.xlu0 %1644
    %1646 = vrot.lane.b32.xlu0 %v132, 120
    %v1647 = vpop.permute.xlu0 %1646
    %1648 = vrot.lane.b32.xlu0 %v134, 120
    %v1649 = vpop.permute.xlu0 %1648
    %v1659 = vsel %vm776, %v1626, 0
    %v1662 = vsel %vm776, %v1627, 0
    %v1665 = vsel %vm776, %v1628, 0
    %v1668 = vsel %vm776, %v1629, 0
    %v1671 = vsel %vm776, %v1630, 0
    %v1674 = vsel %vm776, %v1631, 0
    %v1677 = vsel %vm776, %v1632, 0
    %v1680 = vsel %vm776, %v1633, 0
    %1682 = vmatpush.msra.mxu0 0.0
    %1683 = vmatpush.msra.mxu0 0.0
    %1684 = vmatpush.msra.mxu0 0.0
    %1685 = vmatpush.msra.mxu0 0.0
    %1686 = vmatpush.msra.mxu0 0.0
    %1687 = vmatpush.msra.mxu0 0.0
    %1688 = vmatpush.msra.mxu0 0.0
    %1689 = vmatpush.msra.mxu0 0.0
    %1690 = vmatpush.msra.mxu0 %v1649
    %1691 = vmatpush.msra.mxu0 %v1647
    %1692 = vmatpush.msra.mxu0 %v1645
    %1693 = vmatpush.msra.mxu0 %v1643
    %1694 = vmatpush.msra.mxu0 %v1641
    %1695 = vmatpush.msra.mxu0 %v1639
    %1696 = vmatpush.msra.mxu0 %v1637
    %1697 = vmatpush.msra.mxu0 %v1635
    %1698 = vmatmul.f32.gmra.mxu0 %v1659
    %v1699 = vpop.f32.mrf.mxu0
    %v1700 = vadd.f32 0.0, %v1699
    %1701 = vmatmul.f32.gmra.mxu0 %v1662
    %v1702 = vpop.f32.mrf.mxu0
    %v1703 = vadd.f32 0.0, %v1702
    %1704 = vmatmul.f32.gmra.mxu0 %v1665
    %v1705 = vpop.f32.mrf.mxu0
    %v1706 = vadd.f32 0.0, %v1705
    %1707 = vmatmul.f32.gmra.mxu0 %v1668
    %v1708 = vpop.f32.mrf.mxu0
    %v1709 = vadd.f32 0.0, %v1708
    %1710 = vmatmul.f32.gmra.mxu0 %v1671
    %v1711 = vpop.f32.mrf.mxu0
    %v1712 = vadd.f32 0.0, %v1711
    %1713 = vmatmul.f32.gmra.mxu0 %v1674
    %v1714 = vpop.f32.mrf.mxu0
    %v1715 = vadd.f32 0.0, %v1714
    %1716 = vmatmul.f32.gmra.mxu0 %v1677
    %v1717 = vpop.f32.mrf.mxu0
    %v1718 = vadd.f32 0.0, %v1717
    %1719 = vmatmul.f32.gmra.mxu0 %v1680
    %v1720 = vpop.f32.mrf.mxu0
    %v1721 = vadd.f32 0.0, %v1720
    %1722 = vdwg.mxu0
    %1723 = vset.pattern.permute.xlu0 48
    %1724 = vperm.xlu0 %1723, %v117
    %v1725 = vpop.permute.xlu0 %1724
    %1727 = vset.pattern.permute.xlu0 48
    %1728 = vperm.xlu0 %1727, %v119
    %v1729 = vpop.permute.xlu0 %1728
    %1731 = vset.pattern.permute.xlu0 48
    %1732 = vperm.xlu0 %1731, %v122
    %v1733 = vpop.permute.xlu0 %1732
    %1735 = vset.pattern.permute.xlu0 48
    %1736 = vperm.xlu0 %1735, %v124
    %v1737 = vpop.permute.xlu0 %1736
    %1739 = vset.pattern.permute.xlu0 48
    %1740 = vperm.xlu0 %1739, %v127
    %v1741 = vpop.permute.xlu0 %1740
    %1743 = vset.pattern.permute.xlu0 48
    %1744 = vperm.xlu0 %1743, %v129
    %v1745 = vpop.permute.xlu0 %1744
    %1747 = vset.pattern.permute.xlu0 48
    %1748 = vperm.xlu0 %1747, %v132
    %v1749 = vpop.permute.xlu0 %1748
    %1751 = vset.pattern.permute.xlu0 48
    %1752 = vperm.xlu0 %1751, %v134
    %v1753 = vpop.permute.xlu0 %1752
    %v1755 = vperm.slane %v154, 0
    %v1756 = vadd.f32 %v1725, %v1755
    %v1757 = vadd.f32 %v1729, %v1755
    %v1758 = vadd.f32 %v1733, %v1755
    %v1759 = vadd.f32 %v1737, %v1755
    %v1760 = vadd.f32 %v1741, %v1755
    %v1761 = vadd.f32 %v1745, %v1755
    %v1762 = vadd.f32 %v1749, %v1755
    %v1763 = vadd.f32 %v1753, %v1755
    %v1764 = vmul.f32 %v1756, 0.2
    %v1765 = vmul.f32 %v1757, 0.2
    %v1766 = vmul.f32 %v1758, 0.2
    %v1767 = vmul.f32 %v1759, 0.2
    %v1768 = vmul.f32 %v1760, 0.2
    %v1769 = vmul.f32 %v1761, 0.2
    %v1770 = vmul.f32 %v1762, 0.2
    %v1771 = vmul.f32 %v1763, 0.2
    %v1772 = vmax.f32 %v1756, %v1764
    %v1773 = vmax.f32 %v1757, %v1765
    %v1774 = vmax.f32 %v1758, %v1766
    %v1775 = vmax.f32 %v1759, %v1767
    %v1776 = vmax.f32 %v1760, %v1768
    %v1777 = vmax.f32 %v1761, %v1769
    %v1778 = vmax.f32 %v1762, %v1770
    %v1779 = vmax.f32 %v1763, %v1771
    %s1780 = sld [smem:[#allocation2 + $0x10]]
    %v1781 = vstv %s1780
    %v1782 = vmul.f32 %v1781, %v1772
    %v1783 = vmul.f32 %v1781, %v1773
    %v1784 = vmul.f32 %v1781, %v1774
    %v1785 = vmul.f32 %v1781, %v1775
    %v1786 = vmul.f32 %v1781, %v1776
    %v1787 = vmul.f32 %v1781, %v1777
    %v1788 = vmul.f32 %v1781, %v1778
    %v1789 = vmul.f32 %v1781, %v1779
    %1790 = vset.pattern.permute.xlu0 49
    %1791 = vperm.xlu0 %1790, %v117
    %v1792 = vpop.permute.xlu0 %1791
    %1794 = vset.pattern.permute.xlu0 49
    %1795 = vperm.xlu0 %1794, %v119
    %v1796 = vpop.permute.xlu0 %1795
    %1798 = vset.pattern.permute.xlu0 49
    %1799 = vperm.xlu0 %1798, %v122
    %v1800 = vpop.permute.xlu0 %1799
    %1802 = vset.pattern.permute.xlu0 49
    %1803 = vperm.xlu0 %1802, %v124
    %v1804 = vpop.permute.xlu0 %1803
    %1806 = vset.pattern.permute.xlu0 49
    %1807 = vperm.xlu0 %1806, %v127
    %v1808 = vpop.permute.xlu0 %1807
    %1810 = vset.pattern.permute.xlu0 49
    %1811 = vperm.xlu0 %1810, %v129
    %v1812 = vpop.permute.xlu0 %1811
    %1814 = vset.pattern.permute.xlu0 49
    %1815 = vperm.xlu0 %1814, %v132
    %v1816 = vpop.permute.xlu0 %1815
    %1818 = vset.pattern.permute.xlu0 49
    %1819 = vperm.xlu0 %1818, %v134
    %v1820 = vpop.permute.xlu0 %1819
    %v1822 = vperm.slane %v154, 1
    %v1823 = vadd.f32 %v1792, %v1822
    %v1824 = vadd.f32 %v1796, %v1822
    %v1825 = vadd.f32 %v1800, %v1822
    %v1826 = vadd.f32 %v1804, %v1822
    %v1827 = vadd.f32 %v1808, %v1822
    %v1828 = vadd.f32 %v1812, %v1822
    %v1829 = vadd.f32 %v1816, %v1822
    %v1830 = vadd.f32 %v1820, %v1822
    %v1831 = vmul.f32 %v1823, 0.2
    %v1832 = vmul.f32 %v1824, 0.2
    %v1833 = vmul.f32 %v1825, 0.2
    %v1834 = vmul.f32 %v1826, 0.2
    %v1835 = vmul.f32 %v1827, 0.2
    %v1836 = vmul.f32 %v1828, 0.2
    %v1837 = vmul.f32 %v1829, 0.2
    %v1838 = vmul.f32 %v1830, 0.2
    %v1839 = vmax.f32 %v1823, %v1831
    %v1840 = vmax.f32 %v1824, %v1832
    %v1841 = vmax.f32 %v1825, %v1833
    %v1842 = vmax.f32 %v1826, %v1834
    %v1843 = vmax.f32 %v1827, %v1835
    %v1844 = vmax.f32 %v1828, %v1836
    %v1845 = vmax.f32 %v1829, %v1837
    %v1846 = vmax.f32 %v1830, %v1838
    %s1847 = sld [smem:[#allocation2 + $0x11]]
    %v1848 = vstv %s1847
    %v1849 = vmul.f32 %v1848, %v1839
    %v1850 = vmul.f32 %v1848, %v1840
    %v1851 = vmul.f32 %v1848, %v1841
    %v1852 = vmul.f32 %v1848, %v1842
    %v1853 = vmul.f32 %v1848, %v1843
    %v1854 = vmul.f32 %v1848, %v1844
    %v1855 = vmul.f32 %v1848, %v1845
    %v1856 = vmul.f32 %v1848, %v1846
    %v1857 = vadd.f32 %v1782, %v1849
    %v1858 = vadd.f32 %v1783, %v1850
    %v1859 = vadd.f32 %v1784, %v1851
    %v1860 = vadd.f32 %v1785, %v1852
    %v1861 = vadd.f32 %v1786, %v1853
    %v1862 = vadd.f32 %v1787, %v1854
    %v1863 = vadd.f32 %v1788, %v1855
    %v1864 = vadd.f32 %v1789, %v1856
    %1865 = vset.pattern.permute.xlu0 50
    %1866 = vperm.xlu0 %1865, %v117
    %v1867 = vpop.permute.xlu0 %1866
    %1869 = vset.pattern.permute.xlu0 50
    %1870 = vperm.xlu0 %1869, %v119
    %v1871 = vpop.permute.xlu0 %1870
    %1873 = vset.pattern.permute.xlu0 50
    %1874 = vperm.xlu0 %1873, %v122
    %v1875 = vpop.permute.xlu0 %1874
    %1877 = vset.pattern.permute.xlu0 50
    %1878 = vperm.xlu0 %1877, %v124
    %v1879 = vpop.permute.xlu0 %1878
    %1881 = vset.pattern.permute.xlu0 50
    %1882 = vperm.xlu0 %1881, %v127
    %v1883 = vpop.permute.xlu0 %1882
    %1885 = vset.pattern.permute.xlu0 50
    %1886 = vperm.xlu0 %1885, %v129
    %v1887 = vpop.permute.xlu0 %1886
    %1889 = vset.pattern.permute.xlu0 50
    %1890 = vperm.xlu0 %1889, %v132
    %v1891 = vpop.permute.xlu0 %1890
    %1893 = vset.pattern.permute.xlu0 50
    %1894 = vperm.xlu0 %1893, %v134
    %v1895 = vpop.permute.xlu0 %1894
    %v1897 = vperm.slane %v154, 2
    %v1898 = vadd.f32 %v1867, %v1897
    %v1899 = vadd.f32 %v1871, %v1897
    %v1900 = vadd.f32 %v1875, %v1897
    %v1901 = vadd.f32 %v1879, %v1897
    %v1902 = vadd.f32 %v1883, %v1897
    %v1903 = vadd.f32 %v1887, %v1897
    %v1904 = vadd.f32 %v1891, %v1897
    %v1905 = vadd.f32 %v1895, %v1897
    %v1906 = vmul.f32 %v1898, 0.2
    %v1907 = vmul.f32 %v1899, 0.2
    %v1908 = vmul.f32 %v1900, 0.2
    %v1909 = vmul.f32 %v1901, 0.2
    %v1910 = vmul.f32 %v1902, 0.2
    %v1911 = vmul.f32 %v1903, 0.2
    %v1912 = vmul.f32 %v1904, 0.2
    %v1913 = vmul.f32 %v1905, 0.2
    %v1914 = vmax.f32 %v1898, %v1906
    %v1915 = vmax.f32 %v1899, %v1907
    %v1916 = vmax.f32 %v1900, %v1908
    %v1917 = vmax.f32 %v1901, %v1909
    %v1918 = vmax.f32 %v1902, %v1910
    %v1919 = vmax.f32 %v1903, %v1911
    %v1920 = vmax.f32 %v1904, %v1912
    %v1921 = vmax.f32 %v1905, %v1913
    %s1922 = sld [smem:[#allocation2 + $0x12]]
    %v1923 = vstv %s1922
    %v1924 = vmul.f32 %v1923, %v1914
    %v1925 = vmul.f32 %v1923, %v1915
    %v1926 = vmul.f32 %v1923, %v1916
    %v1927 = vmul.f32 %v1923, %v1917
    %v1928 = vmul.f32 %v1923, %v1918
    %v1929 = vmul.f32 %v1923, %v1919
    %v1930 = vmul.f32 %v1923, %v1920
    %v1931 = vmul.f32 %v1923, %v1921
    %v1932 = vadd.f32 %v1857, %v1924
    %v1933 = vadd.f32 %v1858, %v1925
    %v1934 = vadd.f32 %v1859, %v1926
    %v1935 = vadd.f32 %v1860, %v1927
    %v1936 = vadd.f32 %v1861, %v1928
    %v1937 = vadd.f32 %v1862, %v1929
    %v1938 = vadd.f32 %v1863, %v1930
    %v1939 = vadd.f32 %v1864, %v1931
    %1940 = vset.pattern.permute.xlu0 51
    %1941 = vperm.xlu0 %1940, %v117
    %v1942 = vpop.permute.xlu0 %1941
    %1944 = vset.pattern.permute.xlu0 51
    %1945 = vperm.xlu0 %1944, %v119
    %v1946 = vpop.permute.xlu0 %1945
    %1948 = vset.pattern.permute.xlu0 51
    %1949 = vperm.xlu0 %1948, %v122
    %v1950 = vpop.permute.xlu0 %1949
    %1952 = vset.pattern.permute.xlu0 51
    %1953 = vperm.xlu0 %1952, %v124
    %v1954 = vpop.permute.xlu0 %1953
    %1956 = vset.pattern.permute.xlu0 51
    %1957 = vperm.xlu0 %1956, %v127
    %v1958 = vpop.permute.xlu0 %1957
    %1960 = vset.pattern.permute.xlu0 51
    %1961 = vperm.xlu0 %1960, %v129
    %v1962 = vpop.permute.xlu0 %1961
    %1964 = vset.pattern.permute.xlu0 51
    %1965 = vperm.xlu0 %1964, %v132
    %v1966 = vpop.permute.xlu0 %1965
    %1968 = vset.pattern.permute.xlu0 51
    %1969 = vperm.xlu0 %1968, %v134
    %v1970 = vpop.permute.xlu0 %1969
    %v1972 = vperm.slane %v154, 3
    %v1973 = vadd.f32 %v1942, %v1972
    %v1974 = vadd.f32 %v1946, %v1972
    %v1975 = vadd.f32 %v1950, %v1972
    %v1976 = vadd.f32 %v1954, %v1972
    %v1977 = vadd.f32 %v1958, %v1972
    %v1978 = vadd.f32 %v1962, %v1972
    %v1979 = vadd.f32 %v1966, %v1972
    %v1980 = vadd.f32 %v1970, %v1972
    %v1981 = vmul.f32 %v1973, 0.2
    %v1982 = vmul.f32 %v1974, 0.2
    %v1983 = vmul.f32 %v1975, 0.2
    %v1984 = vmul.f32 %v1976, 0.2
    %v1985 = vmul.f32 %v1977, 0.2
    %v1986 = vmul.f32 %v1978, 0.2
    %v1987 = vmul.f32 %v1979, 0.2
    %v1988 = vmul.f32 %v1980, 0.2
    %v1989 = vmax.f32 %v1973, %v1981
    %v1990 = vmax.f32 %v1974, %v1982
    %v1991 = vmax.f32 %v1975, %v1983
    %v1992 = vmax.f32 %v1976, %v1984
    %v1993 = vmax.f32 %v1977, %v1985
    %v1994 = vmax.f32 %v1978, %v1986
    %v1995 = vmax.f32 %v1979, %v1987
    %v1996 = vmax.f32 %v1980, %v1988
    %s1997 = sld [smem:[#allocation2 + $0x13]]
    %v1998 = vstv %s1997
    %v1999 = vmul.f32 %v1998, %v1989
    %v2000 = vmul.f32 %v1998, %v1990
    %v2001 = vmul.f32 %v1998, %v1991
    %v2002 = vmul.f32 %v1998, %v1992
    %v2003 = vmul.f32 %v1998, %v1993
    %v2004 = vmul.f32 %v1998, %v1994
    %v2005 = vmul.f32 %v1998, %v1995
    %v2006 = vmul.f32 %v1998, %v1996
    %v2007 = vadd.f32 %v1932, %v1999
    %v2008 = vadd.f32 %v1933, %v2000
    %v2009 = vadd.f32 %v1934, %v2001
    %v2010 = vadd.f32 %v1935, %v2002
    %v2011 = vadd.f32 %v1936, %v2003
    %v2012 = vadd.f32 %v1937, %v2004
    %v2013 = vadd.f32 %v1938, %v2005
    %v2014 = vadd.f32 %v1939, %v2006
    %2015 = vset.pattern.permute.xlu0 52
    %2016 = vperm.xlu0 %2015, %v117
    %v2017 = vpop.permute.xlu0 %2016
    %2019 = vset.pattern.permute.xlu0 52
    %2020 = vperm.xlu0 %2019, %v119
    %v2021 = vpop.permute.xlu0 %2020
    %2023 = vset.pattern.permute.xlu0 52
    %2024 = vperm.xlu0 %2023, %v122
    %v2025 = vpop.permute.xlu0 %2024
    %2027 = vset.pattern.permute.xlu0 52
    %2028 = vperm.xlu0 %2027, %v124
    %v2029 = vpop.permute.xlu0 %2028
    %2031 = vset.pattern.permute.xlu0 52
    %2032 = vperm.xlu0 %2031, %v127
    %v2033 = vpop.permute.xlu0 %2032
    %2035 = vset.pattern.permute.xlu0 52
    %2036 = vperm.xlu0 %2035, %v129
    %v2037 = vpop.permute.xlu0 %2036
    %2039 = vset.pattern.permute.xlu0 52
    %2040 = vperm.xlu0 %2039, %v132
    %v2041 = vpop.permute.xlu0 %2040
    %2043 = vset.pattern.permute.xlu0 52
    %2044 = vperm.xlu0 %2043, %v134
    %v2045 = vpop.permute.xlu0 %2044
    %v2047 = vperm.slane %v154, 4
    %v2048 = vadd.f32 %v2017, %v2047
    %v2049 = vadd.f32 %v2021, %v2047
    %v2050 = vadd.f32 %v2025, %v2047
    %v2051 = vadd.f32 %v2029, %v2047
    %v2052 = vadd.f32 %v2033, %v2047
    %v2053 = vadd.f32 %v2037, %v2047
    %v2054 = vadd.f32 %v2041, %v2047
    %v2055 = vadd.f32 %v2045, %v2047
    %v2056 = vmul.f32 %v2048, 0.2
    %v2057 = vmul.f32 %v2049, 0.2
    %v2058 = vmul.f32 %v2050, 0.2
    %v2059 = vmul.f32 %v2051, 0.2
    %v2060 = vmul.f32 %v2052, 0.2
    %v2061 = vmul.f32 %v2053, 0.2
    %v2062 = vmul.f32 %v2054, 0.2
    %v2063 = vmul.f32 %v2055, 0.2
    %v2064 = vmax.f32 %v2048, %v2056
    %v2065 = vmax.f32 %v2049, %v2057
    %v2066 = vmax.f32 %v2050, %v2058
    %v2067 = vmax.f32 %v2051, %v2059
    %v2068 = vmax.f32 %v2052, %v2060
    %v2069 = vmax.f32 %v2053, %v2061
    %v2070 = vmax.f32 %v2054, %v2062
    %v2071 = vmax.f32 %v2055, %v2063
    %s2072 = sld [smem:[#allocation2 + $0x14]]
    %v2073 = vstv %s2072
    %v2074 = vmul.f32 %v2073, %v2064
    %v2075 = vmul.f32 %v2073, %v2065
    %v2076 = vmul.f32 %v2073, %v2066
    %v2077 = vmul.f32 %v2073, %v2067
    %v2078 = vmul.f32 %v2073, %v2068
    %v2079 = vmul.f32 %v2073, %v2069
    %v2080 = vmul.f32 %v2073, %v2070
    %v2081 = vmul.f32 %v2073, %v2071
    %v2082 = vadd.f32 %v2007, %v2074
    %v2083 = vadd.f32 %v2008, %v2075
    %v2084 = vadd.f32 %v2009, %v2076
    %v2085 = vadd.f32 %v2010, %v2077
    %v2086 = vadd.f32 %v2011, %v2078
    %v2087 = vadd.f32 %v2012, %v2079
    %v2088 = vadd.f32 %v2013, %v2080
    %v2089 = vadd.f32 %v2014, %v2081
    %2090 = vset.pattern.permute.xlu0 53
    %2091 = vperm.xlu0 %2090, %v117
    %v2092 = vpop.permute.xlu0 %2091
    %2094 = vset.pattern.permute.xlu0 53
    %2095 = vperm.xlu0 %2094, %v119
    %v2096 = vpop.permute.xlu0 %2095
    %2098 = vset.pattern.permute.xlu0 53
    %2099 = vperm.xlu0 %2098, %v122
    %v2100 = vpop.permute.xlu0 %2099
    %2102 = vset.pattern.permute.xlu0 53
    %2103 = vperm.xlu0 %2102, %v124
    %v2104 = vpop.permute.xlu0 %2103
    %2106 = vset.pattern.permute.xlu0 53
    %2107 = vperm.xlu0 %2106, %v127
    %v2108 = vpop.permute.xlu0 %2107
    %2110 = vset.pattern.permute.xlu0 53
    %2111 = vperm.xlu0 %2110, %v129
    %v2112 = vpop.permute.xlu0 %2111
    %2114 = vset.pattern.permute.xlu0 53
    %2115 = vperm.xlu0 %2114, %v132
    %v2116 = vpop.permute.xlu0 %2115
    %2118 = vset.pattern.permute.xlu0 53
    %2119 = vperm.xlu0 %2118, %v134
    %v2120 = vpop.permute.xlu0 %2119
    %v2122 = vperm.slane %v154, 5
    %v2123 = vadd.f32 %v2092, %v2122
    %v2124 = vadd.f32 %v2096, %v2122
    %v2125 = vadd.f32 %v2100, %v2122
    %v2126 = vadd.f32 %v2104, %v2122
    %v2127 = vadd.f32 %v2108, %v2122
    %v2128 = vadd.f32 %v2112, %v2122
    %v2129 = vadd.f32 %v2116, %v2122
    %v2130 = vadd.f32 %v2120, %v2122
    %v2131 = vmul.f32 %v2123, 0.2
    %v2132 = vmul.f32 %v2124, 0.2
    %v2133 = vmul.f32 %v2125, 0.2
    %v2134 = vmul.f32 %v2126, 0.2
    %v2135 = vmul.f32 %v2127, 0.2
    %v2136 = vmul.f32 %v2128, 0.2
    %v2137 = vmul.f32 %v2129, 0.2
    %v2138 = vmul.f32 %v2130, 0.2
    %v2139 = vmax.f32 %v2123, %v2131
    %v2140 = vmax.f32 %v2124, %v2132
    %v2141 = vmax.f32 %v2125, %v2133
    %v2142 = vmax.f32 %v2126, %v2134
    %v2143 = vmax.f32 %v2127, %v2135
    %v2144 = vmax.f32 %v2128, %v2136
    %v2145 = vmax.f32 %v2129, %v2137
    %v2146 = vmax.f32 %v2130, %v2138
    %s2147 = sld [smem:[#allocation2 + $0x15]]
    %v2148 = vstv %s2147
    %v2149 = vmul.f32 %v2148, %v2139
    %v2150 = vmul.f32 %v2148, %v2140
    %v2151 = vmul.f32 %v2148, %v2141
    %v2152 = vmul.f32 %v2148, %v2142
    %v2153 = vmul.f32 %v2148, %v2143
    %v2154 = vmul.f32 %v2148, %v2144
    %v2155 = vmul.f32 %v2148, %v2145
    %v2156 = vmul.f32 %v2148, %v2146
    %v2157 = vadd.f32 %v2082, %v2149
    %v2158 = vadd.f32 %v2083, %v2150
    %v2159 = vadd.f32 %v2084, %v2151
    %v2160 = vadd.f32 %v2085, %v2152
    %v2161 = vadd.f32 %v2086, %v2153
    %v2162 = vadd.f32 %v2087, %v2154
    %v2163 = vadd.f32 %v2088, %v2155
    %v2164 = vadd.f32 %v2089, %v2156
    %2165 = vset.pattern.permute.xlu0 54
    %2166 = vperm.xlu0 %2165, %v117
    %v2167 = vpop.permute.xlu0 %2166
    %2169 = vset.pattern.permute.xlu0 54
    %2170 = vperm.xlu0 %2169, %v119
    %v2171 = vpop.permute.xlu0 %2170
    %2173 = vset.pattern.permute.xlu0 54
    %2174 = vperm.xlu0 %2173, %v122
    %v2175 = vpop.permute.xlu0 %2174
    %2177 = vset.pattern.permute.xlu0 54
    %2178 = vperm.xlu0 %2177, %v124
    %v2179 = vpop.permute.xlu0 %2178
    %2181 = vset.pattern.permute.xlu0 54
    %2182 = vperm.xlu0 %2181, %v127
    %v2183 = vpop.permute.xlu0 %2182
    %2185 = vset.pattern.permute.xlu0 54
    %2186 = vperm.xlu0 %2185, %v129
    %v2187 = vpop.permute.xlu0 %2186
    %2189 = vset.pattern.permute.xlu0 54
    %2190 = vperm.xlu0 %2189, %v132
    %v2191 = vpop.permute.xlu0 %2190
    %2193 = vset.pattern.permute.xlu0 54
    %2194 = vperm.xlu0 %2193, %v134
    %v2195 = vpop.permute.xlu0 %2194
    %v2197 = vperm.slane %v154, 6
    %v2198 = vadd.f32 %v2167, %v2197
    %v2199 = vadd.f32 %v2171, %v2197
    %v2200 = vadd.f32 %v2175, %v2197
    %v2201 = vadd.f32 %v2179, %v2197
    %v2202 = vadd.f32 %v2183, %v2197
    %v2203 = vadd.f32 %v2187, %v2197
    %v2204 = vadd.f32 %v2191, %v2197
    %v2205 = vadd.f32 %v2195, %v2197
    %v2206 = vmul.f32 %v2198, 0.2
    %v2207 = vmul.f32 %v2199, 0.2
    %v2208 = vmul.f32 %v2200, 0.2
    %v2209 = vmul.f32 %v2201, 0.2
    %v2210 = vmul.f32 %v2202, 0.2
    %v2211 = vmul.f32 %v2203, 0.2
    %v2212 = vmul.f32 %v2204, 0.2
    %v2213 = vmul.f32 %v2205, 0.2
    %v2214 = vmax.f32 %v2198, %v2206
    %v2215 = vmax.f32 %v2199, %v2207
    %v2216 = vmax.f32 %v2200, %v2208
    %v2217 = vmax.f32 %v2201, %v2209
    %v2218 = vmax.f32 %v2202, %v2210
    %v2219 = vmax.f32 %v2203, %v2211
    %v2220 = vmax.f32 %v2204, %v2212
    %v2221 = vmax.f32 %v2205, %v2213
    %s2222 = sld [smem:[#allocation2 + $0x16]]
    %v2223 = vstv %s2222
    %v2224 = vmul.f32 %v2223, %v2214
    %v2225 = vmul.f32 %v2223, %v2215
    %v2226 = vmul.f32 %v2223, %v2216
    %v2227 = vmul.f32 %v2223, %v2217
    %v2228 = vmul.f32 %v2223, %v2218
    %v2229 = vmul.f32 %v2223, %v2219
    %v2230 = vmul.f32 %v2223, %v2220
    %v2231 = vmul.f32 %v2223, %v2221
    %v2232 = vadd.f32 %v2157, %v2224
    %v2233 = vadd.f32 %v2158, %v2225
    %v2234 = vadd.f32 %v2159, %v2226
    %v2235 = vadd.f32 %v2160, %v2227
    %v2236 = vadd.f32 %v2161, %v2228
    %v2237 = vadd.f32 %v2162, %v2229
    %v2238 = vadd.f32 %v2163, %v2230
    %v2239 = vadd.f32 %v2164, %v2231
    %2240 = vset.pattern.permute.xlu0 55
    %2241 = vperm.xlu0 %2240, %v117
    %v2242 = vpop.permute.xlu0 %2241
    %2244 = vset.pattern.permute.xlu0 55
    %2245 = vperm.xlu0 %2244, %v119
    %v2246 = vpop.permute.xlu0 %2245
    %2248 = vset.pattern.permute.xlu0 55
    %2249 = vperm.xlu0 %2248, %v122
    %v2250 = vpop.permute.xlu0 %2249
    %2252 = vset.pattern.permute.xlu0 55
    %2253 = vperm.xlu0 %2252, %v124
    %v2254 = vpop.permute.xlu0 %2253
    %2256 = vset.pattern.permute.xlu0 55
    %2257 = vperm.xlu0 %2256, %v127
    %v2258 = vpop.permute.xlu0 %2257
    %2260 = vset.pattern.permute.xlu0 55
    %2261 = vperm.xlu0 %2260, %v129
    %v2262 = vpop.permute.xlu0 %2261
    %2264 = vset.pattern.permute.xlu0 55
    %2265 = vperm.xlu0 %2264, %v132
    %v2266 = vpop.permute.xlu0 %2265
    %2268 = vset.pattern.permute.xlu0 55
    %2269 = vperm.xlu0 %2268, %v134
    %v2270 = vpop.permute.xlu0 %2269
    %v2272 = vperm.slane %v154, 7
    %v2273 = vadd.f32 %v2242, %v2272
    %v2274 = vadd.f32 %v2246, %v2272
    %v2275 = vadd.f32 %v2250, %v2272
    %v2276 = vadd.f32 %v2254, %v2272
    %v2277 = vadd.f32 %v2258, %v2272
    %v2278 = vadd.f32 %v2262, %v2272
    %v2279 = vadd.f32 %v2266, %v2272
    %v2280 = vadd.f32 %v2270, %v2272
    %v2281 = vmul.f32 %v2273, 0.2
    %v2282 = vmul.f32 %v2274, 0.2
    %v2283 = vmul.f32 %v2275, 0.2
    %v2284 = vmul.f32 %v2276, 0.2
    %v2285 = vmul.f32 %v2277, 0.2
    %v2286 = vmul.f32 %v2278, 0.2
    %v2287 = vmul.f32 %v2279, 0.2
    %v2288 = vmul.f32 %v2280, 0.2
    %v2289 = vmax.f32 %v2273, %v2281
    %v2290 = vmax.f32 %v2274, %v2282
    %v2291 = vmax.f32 %v2275, %v2283
    %v2292 = vmax.f32 %v2276, %v2284
    %v2293 = vmax.f32 %v2277, %v2285
    %v2294 = vmax.f32 %v2278, %v2286
    %v2295 = vmax.f32 %v2279, %v2287
    %v2296 = vmax.f32 %v2280, %v2288
    %s2297 = sld [smem:[#allocation2 + $0x17]]
    %v2298 = vstv %s2297
    %v2299 = vmul.f32 %v2298, %v2289
    %v2300 = vmul.f32 %v2298, %v2290
    %v2301 = vmul.f32 %v2298, %v2291
    %v2302 = vmul.f32 %v2298, %v2292
    %v2303 = vmul.f32 %v2298, %v2293
    %v2304 = vmul.f32 %v2298, %v2294
    %v2305 = vmul.f32 %v2298, %v2295
    %v2306 = vmul.f32 %v2298, %v2296
    %v2307 = vadd.f32 %v2232, %v2299
    %v2308 = vadd.f32 %v2233, %v2300
    %v2309 = vadd.f32 %v2234, %v2301
    %v2310 = vadd.f32 %v2235, %v2302
    %v2311 = vadd.f32 %v2236, %v2303
    %v2312 = vadd.f32 %v2237, %v2304
    %v2313 = vadd.f32 %v2238, %v2305
    %v2314 = vadd.f32 %v2239, %v2306
    %v2315 = vadd.f32 %v2307, %v74
    %v2316 = vadd.f32 %v2308, %v75
    %v2317 = vadd.f32 %v2309, %v76
    %v2318 = vadd.f32 %v2310, %v77
    %v2319 = vadd.f32 %v2311, %v78
    %v2320 = vadd.f32 %v2312, %v79
    %v2321 = vadd.f32 %v2313, %v80
    %v2322 = vadd.f32 %v2314, %v81
    %v2323 = vsel %vm776, %v2315, -inf
    %2324 = vmax.xlane.f32.xlu0 %v2323
    %v2325 = vpop.xlane.xlu0 %2324
    %v2326 = vsel %vm776, %v2316, -inf
    %2327 = vmax.xlane.f32.xlu0 %v2326
    %v2328 = vpop.xlane.xlu0 %2327
    %v2329 = vsel %vm776, %v2317, -inf
    %2330 = vmax.xlane.f32.xlu0 %v2329
    %v2331 = vpop.xlane.xlu0 %2330
    %v2332 = vsel %vm776, %v2318, -inf
    %2333 = vmax.xlane.f32.xlu0 %v2332
    %v2334 = vpop.xlane.xlu0 %2333
    %v2335 = vsel %vm776, %v2319, -inf
    %2336 = vmax.xlane.f32.xlu0 %v2335
    %v2337 = vpop.xlane.xlu0 %2336
    %v2338 = vsel %vm776, %v2320, -inf
    %2339 = vmax.xlane.f32.xlu0 %v2338
    %v2340 = vpop.xlane.xlu0 %2339
    %v2341 = vsel %vm776, %v2321, -inf
    %2342 = vmax.xlane.f32.xlu0 %v2341
    %v2343 = vpop.xlane.xlu0 %2342
    %v2344 = vsel %vm776, %v2322, -inf
    %2345 = vmax.xlane.f32.xlu0 %v2344
    %v2346 = vpop.xlane.xlu0 %2345
    %v2347 = vsub.f32 %v2315, %v2325
    %v2348 = vsub.f32 %v2316, %v2328
    %v2349 = vsub.f32 %v2317, %v2331
    %v2350 = vsub.f32 %v2318, %v2334
    %v2351 = vsub.f32 %v2319, %v2337
    %v2352 = vsub.f32 %v2320, %v2340
    %v2353 = vsub.f32 %v2321, %v2343
    %v2354 = vsub.f32 %v2322, %v2346
    %v2355 = vmul.f32 %v2347, 1.442695
    %v2356 = vpow.pop %v2355
    %v2357 = vmul.f32 %v2348, 1.442695
    %v2358 = vpow.pop %v2357
    %v2359 = vmul.f32 %v2349, 1.442695
    %v2360 = vpow.pop %v2359
    %v2361 = vmul.f32 %v2350, 1.442695
    %v2362 = vpow.pop %v2361
    %v2363 = vmul.f32 %v2351, 1.442695
    %v2364 = vpow.pop %v2363
    %v2365 = vmul.f32 %v2352, 1.442695
    %v2366 = vpow.pop %v2365
    %v2367 = vmul.f32 %v2353, 1.442695
    %v2368 = vpow.pop %v2367
    %v2369 = vmul.f32 %v2354, 1.442695
    %v2370 = vpow.pop %v2369
    %v2371 = vsel %vm776, %v2356, 0.0
    %2372 = vadd.xlane.f32.xlu0 %v2371
    %v2373 = vpop.xlane.xlu0 %2372
    %v2374 = vsel %vm776, %v2358, 0.0
    %2375 = vadd.xlane.f32.xlu0 %v2374
    %v2376 = vpop.xlane.xlu0 %2375
    %v2377 = vsel %vm776, %v2360, 0.0
    %2378 = vadd.xlane.f32.xlu0 %v2377
    %v2379 = vpop.xlane.xlu0 %2378
    %v2380 = vsel %vm776, %v2362, 0.0
    %2381 = vadd.xlane.f32.xlu0 %v2380
    %v2382 = vpop.xlane.xlu0 %2381
    %v2383 = vsel %vm776, %v2364, 0.0
    %2384 = vadd.xlane.f32.xlu0 %v2383
    %v2385 = vpop.xlane.xlu0 %2384
    %v2386 = vsel %vm776, %v2366, 0.0
    %2387 = vadd.xlane.f32.xlu0 %v2386
    %v2388 = vpop.xlane.xlu0 %2387
    %v2389 = vsel %vm776, %v2368, 0.0
    %2390 = vadd.xlane.f32.xlu0 %v2389
    %v2391 = vpop.xlane.xlu0 %2390
    %v2392 = vsel %vm776, %v2370, 0.0
    %2393 = vadd.xlane.f32.xlu0 %v2392
    %v2394 = vpop.xlane.xlu0 %2393
    %v2395 = vmax.f32 %v2373, 1e-20
    %v2396 = vmax.f32 %v2376, 1e-20
    %v2397 = vmax.f32 %v2379, 1e-20
    %v2398 = vmax.f32 %v2382, 1e-20
    %v2399 = vmax.f32 %v2385, 1e-20
    %v2400 = vmax.f32 %v2388, 1e-20
    %v2401 = vmax.f32 %v2391, 1e-20
    %v2402 = vmax.f32 %v2394, 1e-20
    %v2403 = vrcp.pop %v2395
    %v2404 = vrcp.pop %v2396
    %v2405 = vrcp.pop %v2397
    %v2406 = vrcp.pop %v2398
    %v2407 = vrcp.pop %v2399
    %v2408 = vrcp.pop %v2400
    %v2409 = vrcp.pop %v2401
    %v2410 = vrcp.pop %v2402
    %v2411 = vmul.f32 %v2356, %v2403
    %v2412 = vmul.f32 %v2358, %v2404
    %v2413 = vmul.f32 %v2360, %v2405
    %v2414 = vmul.f32 %v2362, %v2406
    %v2415 = vmul.f32 %v2364, %v2407
    %v2416 = vmul.f32 %v2366, %v2408
    %v2417 = vmul.f32 %v2368, %v2409
    %v2418 = vmul.f32 %v2370, %v2410
    %2419 = vrot.lane.b32.xlu0 %v117, 112
    %v2420 = vpop.permute.xlu0 %2419
    %2421 = vrot.lane.b32.xlu0 %v119, 112
    %v2422 = vpop.permute.xlu0 %2421
    %2423 = vrot.lane.b32.xlu0 %v122, 112
    %v2424 = vpop.permute.xlu0 %2423
    %2425 = vrot.lane.b32.xlu0 %v124, 112
    %v2426 = vpop.permute.xlu0 %2425
    %2427 = vrot.lane.b32.xlu0 %v127, 112
    %v2428 = vpop.permute.xlu0 %2427
    %2429 = vrot.lane.b32.xlu0 %v129, 112
    %v2430 = vpop.permute.xlu0 %2429
    %2431 = vrot.lane.b32.xlu0 %v132, 112
    %v2432 = vpop.permute.xlu0 %2431
    %2433 = vrot.lane.b32.xlu0 %v134, 112
    %v2434 = vpop.permute.xlu0 %2433
    %v2444 = vsel %vm776, %v2411, 0
    %v2447 = vsel %vm776, %v2412, 0
    %v2450 = vsel %vm776, %v2413, 0
    %v2453 = vsel %vm776, %v2414, 0
    %v2456 = vsel %vm776, %v2415, 0
    %v2459 = vsel %vm776, %v2416, 0
    %v2462 = vsel %vm776, %v2417, 0
    %v2465 = vsel %vm776, %v2418, 0
    %2467 = vmatpush.msra.mxu0 0.0
    %2468 = vmatpush.msra.mxu0 0.0
    %2469 = vmatpush.msra.mxu0 0.0
    %2470 = vmatpush.msra.mxu0 0.0
    %2471 = vmatpush.msra.mxu0 0.0
    %2472 = vmatpush.msra.mxu0 0.0
    %2473 = vmatpush.msra.mxu0 0.0
    %2474 = vmatpush.msra.mxu0 0.0
    %2475 = vmatpush.msra.mxu0 %v2434
    %2476 = vmatpush.msra.mxu0 %v2432
    %2477 = vmatpush.msra.mxu0 %v2430
    %2478 = vmatpush.msra.mxu0 %v2428
    %2479 = vmatpush.msra.mxu0 %v2426
    %2480 = vmatpush.msra.mxu0 %v2424
    %2481 = vmatpush.msra.mxu0 %v2422
    %2482 = vmatpush.msra.mxu0 %v2420
    %2483 = vmatmul.f32.gmra.mxu0 %v2444
    %v2484 = vpop.f32.mrf.mxu0
    %v2485 = vadd.f32 0.0, %v2484
    %2486 = vmatmul.f32.gmra.mxu0 %v2447
    %v2487 = vpop.f32.mrf.mxu0
    %v2488 = vadd.f32 0.0, %v2487
    %2489 = vmatmul.f32.gmra.mxu0 %v2450
    %v2490 = vpop.f32.mrf.mxu0
    %v2491 = vadd.f32 0.0, %v2490
    %2492 = vmatmul.f32.gmra.mxu0 %v2453
    %v2493 = vpop.f32.mrf.mxu0
    %v2494 = vadd.f32 0.0, %v2493
    %2495 = vmatmul.f32.gmra.mxu0 %v2456
    %v2496 = vpop.f32.mrf.mxu0
    %v2497 = vadd.f32 0.0, %v2496
    %2498 = vmatmul.f32.gmra.mxu0 %v2459
    %v2499 = vpop.f32.mrf.mxu0
    %v2500 = vadd.f32 0.0, %v2499
    %2501 = vmatmul.f32.gmra.mxu0 %v2462
    %v2502 = vpop.f32.mrf.mxu0
    %v2503 = vadd.f32 0.0, %v2502
    %2504 = vmatmul.f32.gmra.mxu0 %v2465
    %v2505 = vpop.f32.mrf.mxu0
    %v2506 = vadd.f32 0.0, %v2505
    %2507 = vdwg.mxu0
    %2508 = vset.pattern.permute.xlu0 56
    %2509 = vperm.xlu0 %2508, %v117
    %v2510 = vpop.permute.xlu0 %2509
    %2512 = vset.pattern.permute.xlu0 56
    %2513 = vperm.xlu0 %2512, %v119
    %v2514 = vpop.permute.xlu0 %2513
    %2516 = vset.pattern.permute.xlu0 56
    %2517 = vperm.xlu0 %2516, %v122
    %v2518 = vpop.permute.xlu0 %2517
    %2520 = vset.pattern.permute.xlu0 56
    %2521 = vperm.xlu0 %2520, %v124
    %v2522 = vpop.permute.xlu0 %2521
    %2524 = vset.pattern.permute.xlu0 56
    %2525 = vperm.xlu0 %2524, %v127
    %v2526 = vpop.permute.xlu0 %2525
    %2528 = vset.pattern.permute.xlu0 56
    %2529 = vperm.xlu0 %2528, %v129
    %v2530 = vpop.permute.xlu0 %2529
    %2532 = vset.pattern.permute.xlu0 56
    %2533 = vperm.xlu0 %2532, %v132
    %v2534 = vpop.permute.xlu0 %2533
    %2536 = vset.pattern.permute.xlu0 56
    %2537 = vperm.xlu0 %2536, %v134
    %v2538 = vpop.permute.xlu0 %2537
    %v2540 = vperm.slane %v155, 0
    %v2541 = vadd.f32 %v2510, %v2540
    %v2542 = vadd.f32 %v2514, %v2540
    %v2543 = vadd.f32 %v2518, %v2540
    %v2544 = vadd.f32 %v2522, %v2540
    %v2545 = vadd.f32 %v2526, %v2540
    %v2546 = vadd.f32 %v2530, %v2540
    %v2547 = vadd.f32 %v2534, %v2540
    %v2548 = vadd.f32 %v2538, %v2540
    %v2549 = vmul.f32 %v2541, 0.2
    %v2550 = vmul.f32 %v2542, 0.2
    %v2551 = vmul.f32 %v2543, 0.2
    %v2552 = vmul.f32 %v2544, 0.2
    %v2553 = vmul.f32 %v2545, 0.2
    %v2554 = vmul.f32 %v2546, 0.2
    %v2555 = vmul.f32 %v2547, 0.2
    %v2556 = vmul.f32 %v2548, 0.2
    %v2557 = vmax.f32 %v2541, %v2549
    %v2558 = vmax.f32 %v2542, %v2550
    %v2559 = vmax.f32 %v2543, %v2551
    %v2560 = vmax.f32 %v2544, %v2552
    %v2561 = vmax.f32 %v2545, %v2553
    %v2562 = vmax.f32 %v2546, %v2554
    %v2563 = vmax.f32 %v2547, %v2555
    %v2564 = vmax.f32 %v2548, %v2556
    %s2565 = sld [smem:[#allocation2 + $0x18]]
    %v2566 = vstv %s2565
    %v2567 = vmul.f32 %v2566, %v2557
    %v2568 = vmul.f32 %v2566, %v2558
    %v2569 = vmul.f32 %v2566, %v2559
    %v2570 = vmul.f32 %v2566, %v2560
    %v2571 = vmul.f32 %v2566, %v2561
    %v2572 = vmul.f32 %v2566, %v2562
    %v2573 = vmul.f32 %v2566, %v2563
    %v2574 = vmul.f32 %v2566, %v2564
    %2575 = vset.pattern.permute.xlu0 57
    %2576 = vperm.xlu0 %2575, %v117
    %v2577 = vpop.permute.xlu0 %2576
    %2579 = vset.pattern.permute.xlu0 57
    %2580 = vperm.xlu0 %2579, %v119
    %v2581 = vpop.permute.xlu0 %2580
    %2583 = vset.pattern.permute.xlu0 57
    %2584 = vperm.xlu0 %2583, %v122
    %v2585 = vpop.permute.xlu0 %2584
    %2587 = vset.pattern.permute.xlu0 57
    %2588 = vperm.xlu0 %2587, %v124
    %v2589 = vpop.permute.xlu0 %2588
    %2591 = vset.pattern.permute.xlu0 57
    %2592 = vperm.xlu0 %2591, %v127
    %v2593 = vpop.permute.xlu0 %2592
    %2595 = vset.pattern.permute.xlu0 57
    %2596 = vperm.xlu0 %2595, %v129
    %v2597 = vpop.permute.xlu0 %2596
    %2599 = vset.pattern.permute.xlu0 57
    %2600 = vperm.xlu0 %2599, %v132
    %v2601 = vpop.permute.xlu0 %2600
    %2603 = vset.pattern.permute.xlu0 57
    %2604 = vperm.xlu0 %2603, %v134
    %v2605 = vpop.permute.xlu0 %2604
    %v2607 = vperm.slane %v155, 1
    %v2608 = vadd.f32 %v2577, %v2607
    %v2609 = vadd.f32 %v2581, %v2607
    %v2610 = vadd.f32 %v2585, %v2607
    %v2611 = vadd.f32 %v2589, %v2607
    %v2612 = vadd.f32 %v2593, %v2607
    %v2613 = vadd.f32 %v2597, %v2607
    %v2614 = vadd.f32 %v2601, %v2607
    %v2615 = vadd.f32 %v2605, %v2607
    %v2616 = vmul.f32 %v2608, 0.2
    %v2617 = vmul.f32 %v2609, 0.2
    %v2618 = vmul.f32 %v2610, 0.2
    %v2619 = vmul.f32 %v2611, 0.2
    %v2620 = vmul.f32 %v2612, 0.2
    %v2621 = vmul.f32 %v2613, 0.2
    %v2622 = vmul.f32 %v2614, 0.2
    %v2623 = vmul.f32 %v2615, 0.2
    %v2624 = vmax.f32 %v2608, %v2616
    %v2625 = vmax.f32 %v2609, %v2617
    %v2626 = vmax.f32 %v2610, %v2618
    %v2627 = vmax.f32 %v2611, %v2619
    %v2628 = vmax.f32 %v2612, %v2620
    %v2629 = vmax.f32 %v2613, %v2621
    %v2630 = vmax.f32 %v2614, %v2622
    %v2631 = vmax.f32 %v2615, %v2623
    %s2632 = sld [smem:[#allocation2 + $0x19]]
    %v2633 = vstv %s2632
    %v2634 = vmul.f32 %v2633, %v2624
    %v2635 = vmul.f32 %v2633, %v2625
    %v2636 = vmul.f32 %v2633, %v2626
    %v2637 = vmul.f32 %v2633, %v2627
    %v2638 = vmul.f32 %v2633, %v2628
    %v2639 = vmul.f32 %v2633, %v2629
    %v2640 = vmul.f32 %v2633, %v2630
    %v2641 = vmul.f32 %v2633, %v2631
    %v2642 = vadd.f32 %v2567, %v2634
    %v2643 = vadd.f32 %v2568, %v2635
    %v2644 = vadd.f32 %v2569, %v2636
    %v2645 = vadd.f32 %v2570, %v2637
    %v2646 = vadd.f32 %v2571, %v2638
    %v2647 = vadd.f32 %v2572, %v2639
    %v2648 = vadd.f32 %v2573, %v2640
    %v2649 = vadd.f32 %v2574, %v2641
    %2650 = vset.pattern.permute.xlu0 58
    %2651 = vperm.xlu0 %2650, %v117
    %v2652 = vpop.permute.xlu0 %2651
    %2654 = vset.pattern.permute.xlu0 58
    %2655 = vperm.xlu0 %2654, %v119
    %v2656 = vpop.permute.xlu0 %2655
    %2658 = vset.pattern.permute.xlu0 58
    %2659 = vperm.xlu0 %2658, %v122
    %v2660 = vpop.permute.xlu0 %2659
    %2662 = vset.pattern.permute.xlu0 58
    %2663 = vperm.xlu0 %2662, %v124
    %v2664 = vpop.permute.xlu0 %2663
    %2666 = vset.pattern.permute.xlu0 58
    %2667 = vperm.xlu0 %2666, %v127
    %v2668 = vpop.permute.xlu0 %2667
    %2670 = vset.pattern.permute.xlu0 58
    %2671 = vperm.xlu0 %2670, %v129
    %v2672 = vpop.permute.xlu0 %2671
    %2674 = vset.pattern.permute.xlu0 58
    %2675 = vperm.xlu0 %2674, %v132
    %v2676 = vpop.permute.xlu0 %2675
    %2678 = vset.pattern.permute.xlu0 58
    %2679 = vperm.xlu0 %2678, %v134
    %v2680 = vpop.permute.xlu0 %2679
    %v2682 = vperm.slane %v155, 2
    %v2683 = vadd.f32 %v2652, %v2682
    %v2684 = vadd.f32 %v2656, %v2682
    %v2685 = vadd.f32 %v2660, %v2682
    %v2686 = vadd.f32 %v2664, %v2682
    %v2687 = vadd.f32 %v2668, %v2682
    %v2688 = vadd.f32 %v2672, %v2682
    %v2689 = vadd.f32 %v2676, %v2682
    %v2690 = vadd.f32 %v2680, %v2682
    %v2691 = vmul.f32 %v2683, 0.2
    %v2692 = vmul.f32 %v2684, 0.2
    %v2693 = vmul.f32 %v2685, 0.2
    %v2694 = vmul.f32 %v2686, 0.2
    %v2695 = vmul.f32 %v2687, 0.2
    %v2696 = vmul.f32 %v2688, 0.2
    %v2697 = vmul.f32 %v2689, 0.2
    %v2698 = vmul.f32 %v2690, 0.2
    %v2699 = vmax.f32 %v2683, %v2691
    %v2700 = vmax.f32 %v2684, %v2692
    %v2701 = vmax.f32 %v2685, %v2693
    %v2702 = vmax.f32 %v2686, %v2694
    %v2703 = vmax.f32 %v2687, %v2695
    %v2704 = vmax.f32 %v2688, %v2696
    %v2705 = vmax.f32 %v2689, %v2697
    %v2706 = vmax.f32 %v2690, %v2698
    %s2707 = sld [smem:[#allocation2 + $0x1a]]
    %v2708 = vstv %s2707
    %v2709 = vmul.f32 %v2708, %v2699
    %v2710 = vmul.f32 %v2708, %v2700
    %v2711 = vmul.f32 %v2708, %v2701
    %v2712 = vmul.f32 %v2708, %v2702
    %v2713 = vmul.f32 %v2708, %v2703
    %v2714 = vmul.f32 %v2708, %v2704
    %v2715 = vmul.f32 %v2708, %v2705
    %v2716 = vmul.f32 %v2708, %v2706
    %v2717 = vadd.f32 %v2642, %v2709
    %v2718 = vadd.f32 %v2643, %v2710
    %v2719 = vadd.f32 %v2644, %v2711
    %v2720 = vadd.f32 %v2645, %v2712
    %v2721 = vadd.f32 %v2646, %v2713
    %v2722 = vadd.f32 %v2647, %v2714
    %v2723 = vadd.f32 %v2648, %v2715
    %v2724 = vadd.f32 %v2649, %v2716
    %2725 = vset.pattern.permute.xlu0 59
    %2726 = vperm.xlu0 %2725, %v117
    %v2727 = vpop.permute.xlu0 %2726
    %2729 = vset.pattern.permute.xlu0 59
    %2730 = vperm.xlu0 %2729, %v119
    %v2731 = vpop.permute.xlu0 %2730
    %2733 = vset.pattern.permute.xlu0 59
    %2734 = vperm.xlu0 %2733, %v122
    %v2735 = vpop.permute.xlu0 %2734
    %2737 = vset.pattern.permute.xlu0 59
    %2738 = vperm.xlu0 %2737, %v124
    %v2739 = vpop.permute.xlu0 %2738
    %2741 = vset.pattern.permute.xlu0 59
    %2742 = vperm.xlu0 %2741, %v127
    %v2743 = vpop.permute.xlu0 %2742
    %2745 = vset.pattern.permute.xlu0 59
    %2746 = vperm.xlu0 %2745, %v129
    %v2747 = vpop.permute.xlu0 %2746
    %2749 = vset.pattern.permute.xlu0 59
    %2750 = vperm.xlu0 %2749, %v132
    %v2751 = vpop.permute.xlu0 %2750
    %2753 = vset.pattern.permute.xlu0 59
    %2754 = vperm.xlu0 %2753, %v134
    %v2755 = vpop.permute.xlu0 %2754
    %v2757 = vperm.slane %v155, 3
    %v2758 = vadd.f32 %v2727, %v2757
    %v2759 = vadd.f32 %v2731, %v2757
    %v2760 = vadd.f32 %v2735, %v2757
    %v2761 = vadd.f32 %v2739, %v2757
    %v2762 = vadd.f32 %v2743, %v2757
    %v2763 = vadd.f32 %v2747, %v2757
    %v2764 = vadd.f32 %v2751, %v2757
    %v2765 = vadd.f32 %v2755, %v2757
    %v2766 = vmul.f32 %v2758, 0.2
    %v2767 = vmul.f32 %v2759, 0.2
    %v2768 = vmul.f32 %v2760, 0.2
    %v2769 = vmul.f32 %v2761, 0.2
    %v2770 = vmul.f32 %v2762, 0.2
    %v2771 = vmul.f32 %v2763, 0.2
    %v2772 = vmul.f32 %v2764, 0.2
    %v2773 = vmul.f32 %v2765, 0.2
    %v2774 = vmax.f32 %v2758, %v2766
    %v2775 = vmax.f32 %v2759, %v2767
    %v2776 = vmax.f32 %v2760, %v2768
    %v2777 = vmax.f32 %v2761, %v2769
    %v2778 = vmax.f32 %v2762, %v2770
    %v2779 = vmax.f32 %v2763, %v2771
    %v2780 = vmax.f32 %v2764, %v2772
    %v2781 = vmax.f32 %v2765, %v2773
    %s2782 = sld [smem:[#allocation2 + $0x1b]]
    %v2783 = vstv %s2782
    %v2784 = vmul.f32 %v2783, %v2774
    %v2785 = vmul.f32 %v2783, %v2775
    %v2786 = vmul.f32 %v2783, %v2776
    %v2787 = vmul.f32 %v2783, %v2777
    %v2788 = vmul.f32 %v2783, %v2778
    %v2789 = vmul.f32 %v2783, %v2779
    %v2790 = vmul.f32 %v2783, %v2780
    %v2791 = vmul.f32 %v2783, %v2781
    %v2792 = vadd.f32 %v2717, %v2784
    %v2793 = vadd.f32 %v2718, %v2785
    %v2794 = vadd.f32 %v2719, %v2786
    %v2795 = vadd.f32 %v2720, %v2787
    %v2796 = vadd.f32 %v2721, %v2788
    %v2797 = vadd.f32 %v2722, %v2789
    %v2798 = vadd.f32 %v2723, %v2790
    %v2799 = vadd.f32 %v2724, %v2791
    %2800 = vset.pattern.permute.xlu0 60
    %2801 = vperm.xlu0 %2800, %v117
    %v2802 = vpop.permute.xlu0 %2801
    %2804 = vset.pattern.permute.xlu0 60
    %2805 = vperm.xlu0 %2804, %v119
    %v2806 = vpop.permute.xlu0 %2805
    %2808 = vset.pattern.permute.xlu0 60
    %2809 = vperm.xlu0 %2808, %v122
    %v2810 = vpop.permute.xlu0 %2809
    %2812 = vset.pattern.permute.xlu0 60
    %2813 = vperm.xlu0 %2812, %v124
    %v2814 = vpop.permute.xlu0 %2813
    %2816 = vset.pattern.permute.xlu0 60
    %2817 = vperm.xlu0 %2816, %v127
    %v2818 = vpop.permute.xlu0 %2817
    %2820 = vset.pattern.permute.xlu0 60
    %2821 = vperm.xlu0 %2820, %v129
    %v2822 = vpop.permute.xlu0 %2821
    %2824 = vset.pattern.permute.xlu0 60
    %2825 = vperm.xlu0 %2824, %v132
    %v2826 = vpop.permute.xlu0 %2825
    %2828 = vset.pattern.permute.xlu0 60
    %2829 = vperm.xlu0 %2828, %v134
    %v2830 = vpop.permute.xlu0 %2829
    %v2832 = vperm.slane %v155, 4
    %v2833 = vadd.f32 %v2802, %v2832
    %v2834 = vadd.f32 %v2806, %v2832
    %v2835 = vadd.f32 %v2810, %v2832
    %v2836 = vadd.f32 %v2814, %v2832
    %v2837 = vadd.f32 %v2818, %v2832
    %v2838 = vadd.f32 %v2822, %v2832
    %v2839 = vadd.f32 %v2826, %v2832
    %v2840 = vadd.f32 %v2830, %v2832
    %v2841 = vmul.f32 %v2833, 0.2
    %v2842 = vmul.f32 %v2834, 0.2
    %v2843 = vmul.f32 %v2835, 0.2
    %v2844 = vmul.f32 %v2836, 0.2
    %v2845 = vmul.f32 %v2837, 0.2
    %v2846 = vmul.f32 %v2838, 0.2
    %v2847 = vmul.f32 %v2839, 0.2
    %v2848 = vmul.f32 %v2840, 0.2
    %v2849 = vmax.f32 %v2833, %v2841
    %v2850 = vmax.f32 %v2834, %v2842
    %v2851 = vmax.f32 %v2835, %v2843
    %v2852 = vmax.f32 %v2836, %v2844
    %v2853 = vmax.f32 %v2837, %v2845
    %v2854 = vmax.f32 %v2838, %v2846
    %v2855 = vmax.f32 %v2839, %v2847
    %v2856 = vmax.f32 %v2840, %v2848
    %s2857 = sld [smem:[#allocation2 + $0x1c]]
    %v2858 = vstv %s2857
    %v2859 = vmul.f32 %v2858, %v2849
    %v2860 = vmul.f32 %v2858, %v2850
    %v2861 = vmul.f32 %v2858, %v2851
    %v2862 = vmul.f32 %v2858, %v2852
    %v2863 = vmul.f32 %v2858, %v2853
    %v2864 = vmul.f32 %v2858, %v2854
    %v2865 = vmul.f32 %v2858, %v2855
    %v2866 = vmul.f32 %v2858, %v2856
    %v2867 = vadd.f32 %v2792, %v2859
    %v2868 = vadd.f32 %v2793, %v2860
    %v2869 = vadd.f32 %v2794, %v2861
    %v2870 = vadd.f32 %v2795, %v2862
    %v2871 = vadd.f32 %v2796, %v2863
    %v2872 = vadd.f32 %v2797, %v2864
    %v2873 = vadd.f32 %v2798, %v2865
    %v2874 = vadd.f32 %v2799, %v2866
    %2875 = vset.pattern.permute.xlu0 61
    %2876 = vperm.xlu0 %2875, %v117
    %v2877 = vpop.permute.xlu0 %2876
    %2879 = vset.pattern.permute.xlu0 61
    %2880 = vperm.xlu0 %2879, %v119
    %v2881 = vpop.permute.xlu0 %2880
    %2883 = vset.pattern.permute.xlu0 61
    %2884 = vperm.xlu0 %2883, %v122
    %v2885 = vpop.permute.xlu0 %2884
    %2887 = vset.pattern.permute.xlu0 61
    %2888 = vperm.xlu0 %2887, %v124
    %v2889 = vpop.permute.xlu0 %2888
    %2891 = vset.pattern.permute.xlu0 61
    %2892 = vperm.xlu0 %2891, %v127
    %v2893 = vpop.permute.xlu0 %2892
    %2895 = vset.pattern.permute.xlu0 61
    %2896 = vperm.xlu0 %2895, %v129
    %v2897 = vpop.permute.xlu0 %2896
    %2899 = vset.pattern.permute.xlu0 61
    %2900 = vperm.xlu0 %2899, %v132
    %v2901 = vpop.permute.xlu0 %2900
    %2903 = vset.pattern.permute.xlu0 61
    %2904 = vperm.xlu0 %2903, %v134
    %v2905 = vpop.permute.xlu0 %2904
    %v2907 = vperm.slane %v155, 5
    %v2908 = vadd.f32 %v2877, %v2907
    %v2909 = vadd.f32 %v2881, %v2907
    %v2910 = vadd.f32 %v2885, %v2907
    %v2911 = vadd.f32 %v2889, %v2907
    %v2912 = vadd.f32 %v2893, %v2907
    %v2913 = vadd.f32 %v2897, %v2907
    %v2914 = vadd.f32 %v2901, %v2907
    %v2915 = vadd.f32 %v2905, %v2907
    %v2916 = vmul.f32 %v2908, 0.2
    %v2917 = vmul.f32 %v2909, 0.2
    %v2918 = vmul.f32 %v2910, 0.2
    %v2919 = vmul.f32 %v2911, 0.2
    %v2920 = vmul.f32 %v2912, 0.2
    %v2921 = vmul.f32 %v2913, 0.2
    %v2922 = vmul.f32 %v2914, 0.2
    %v2923 = vmul.f32 %v2915, 0.2
    %v2924 = vmax.f32 %v2908, %v2916
    %v2925 = vmax.f32 %v2909, %v2917
    %v2926 = vmax.f32 %v2910, %v2918
    %v2927 = vmax.f32 %v2911, %v2919
    %v2928 = vmax.f32 %v2912, %v2920
    %v2929 = vmax.f32 %v2913, %v2921
    %v2930 = vmax.f32 %v2914, %v2922
    %v2931 = vmax.f32 %v2915, %v2923
    %s2932 = sld [smem:[#allocation2 + $0x1d]]
    %v2933 = vstv %s2932
    %v2934 = vmul.f32 %v2933, %v2924
    %v2935 = vmul.f32 %v2933, %v2925
    %v2936 = vmul.f32 %v2933, %v2926
    %v2937 = vmul.f32 %v2933, %v2927
    %v2938 = vmul.f32 %v2933, %v2928
    %v2939 = vmul.f32 %v2933, %v2929
    %v2940 = vmul.f32 %v2933, %v2930
    %v2941 = vmul.f32 %v2933, %v2931
    %v2942 = vadd.f32 %v2867, %v2934
    %v2943 = vadd.f32 %v2868, %v2935
    %v2944 = vadd.f32 %v2869, %v2936
    %v2945 = vadd.f32 %v2870, %v2937
    %v2946 = vadd.f32 %v2871, %v2938
    %v2947 = vadd.f32 %v2872, %v2939
    %v2948 = vadd.f32 %v2873, %v2940
    %v2949 = vadd.f32 %v2874, %v2941
    %2950 = vset.pattern.permute.xlu0 62
    %2951 = vperm.xlu0 %2950, %v117
    %v2952 = vpop.permute.xlu0 %2951
    %2954 = vset.pattern.permute.xlu0 62
    %2955 = vperm.xlu0 %2954, %v119
    %v2956 = vpop.permute.xlu0 %2955
    %2958 = vset.pattern.permute.xlu0 62
    %2959 = vperm.xlu0 %2958, %v122
    %v2960 = vpop.permute.xlu0 %2959
    %2962 = vset.pattern.permute.xlu0 62
    %2963 = vperm.xlu0 %2962, %v124
    %v2964 = vpop.permute.xlu0 %2963
    %2966 = vset.pattern.permute.xlu0 62
    %2967 = vperm.xlu0 %2966, %v127
    %v2968 = vpop.permute.xlu0 %2967
    %2970 = vset.pattern.permute.xlu0 62
    %2971 = vperm.xlu0 %2970, %v129
    %v2972 = vpop.permute.xlu0 %2971
    %2974 = vset.pattern.permute.xlu0 62
    %2975 = vperm.xlu0 %2974, %v132
    %v2976 = vpop.permute.xlu0 %2975
    %2978 = vset.pattern.permute.xlu0 62
    %2979 = vperm.xlu0 %2978, %v134
    %v2980 = vpop.permute.xlu0 %2979
    %v2982 = vperm.slane %v155, 6
    %v2983 = vadd.f32 %v2952, %v2982
    %v2984 = vadd.f32 %v2956, %v2982
    %v2985 = vadd.f32 %v2960, %v2982
    %v2986 = vadd.f32 %v2964, %v2982
    %v2987 = vadd.f32 %v2968, %v2982
    %v2988 = vadd.f32 %v2972, %v2982
    %v2989 = vadd.f32 %v2976, %v2982
    %v2990 = vadd.f32 %v2980, %v2982
    %v2991 = vmul.f32 %v2983, 0.2
    %v2992 = vmul.f32 %v2984, 0.2
    %v2993 = vmul.f32 %v2985, 0.2
    %v2994 = vmul.f32 %v2986, 0.2
    %v2995 = vmul.f32 %v2987, 0.2
    %v2996 = vmul.f32 %v2988, 0.2
    %v2997 = vmul.f32 %v2989, 0.2
    %v2998 = vmul.f32 %v2990, 0.2
    %v2999 = vmax.f32 %v2983, %v2991
    %v3000 = vmax.f32 %v2984, %v2992
    %v3001 = vmax.f32 %v2985, %v2993
    %v3002 = vmax.f32 %v2986, %v2994
    %v3003 = vmax.f32 %v2987, %v2995
    %v3004 = vmax.f32 %v2988, %v2996
    %v3005 = vmax.f32 %v2989, %v2997
    %v3006 = vmax.f32 %v2990, %v2998
    %s3007 = sld [smem:[#allocation2 + $0x1e]]
    %v3008 = vstv %s3007
    %v3009 = vmul.f32 %v3008, %v2999
    %v3010 = vmul.f32 %v3008, %v3000
    %v3011 = vmul.f32 %v3008, %v3001
    %v3012 = vmul.f32 %v3008, %v3002
    %v3013 = vmul.f32 %v3008, %v3003
    %v3014 = vmul.f32 %v3008, %v3004
    %v3015 = vmul.f32 %v3008, %v3005
    %v3016 = vmul.f32 %v3008, %v3006
    %v3017 = vadd.f32 %v2942, %v3009
    %v3018 = vadd.f32 %v2943, %v3010
    %v3019 = vadd.f32 %v2944, %v3011
    %v3020 = vadd.f32 %v2945, %v3012
    %v3021 = vadd.f32 %v2946, %v3013
    %v3022 = vadd.f32 %v2947, %v3014
    %v3023 = vadd.f32 %v2948, %v3015
    %v3024 = vadd.f32 %v2949, %v3016
    %3025 = vset.pattern.permute.xlu0 63
    %3026 = vperm.xlu0 %3025, %v117
    %v3027 = vpop.permute.xlu0 %3026
    %3029 = vset.pattern.permute.xlu0 63
    %3030 = vperm.xlu0 %3029, %v119
    %v3031 = vpop.permute.xlu0 %3030
    %3033 = vset.pattern.permute.xlu0 63
    %3034 = vperm.xlu0 %3033, %v122
    %v3035 = vpop.permute.xlu0 %3034
    %3037 = vset.pattern.permute.xlu0 63
    %3038 = vperm.xlu0 %3037, %v124
    %v3039 = vpop.permute.xlu0 %3038
    %3041 = vset.pattern.permute.xlu0 63
    %3042 = vperm.xlu0 %3041, %v127
    %v3043 = vpop.permute.xlu0 %3042
    %3045 = vset.pattern.permute.xlu0 63
    %3046 = vperm.xlu0 %3045, %v129
    %v3047 = vpop.permute.xlu0 %3046
    %3049 = vset.pattern.permute.xlu0 63
    %3050 = vperm.xlu0 %3049, %v132
    %v3051 = vpop.permute.xlu0 %3050
    %3053 = vset.pattern.permute.xlu0 63
    %3054 = vperm.xlu0 %3053, %v134
    %v3055 = vpop.permute.xlu0 %3054
    %v3057 = vperm.slane %v155, 7
    %v3058 = vadd.f32 %v3027, %v3057
    %v3059 = vadd.f32 %v3031, %v3057
    %v3060 = vadd.f32 %v3035, %v3057
    %v3061 = vadd.f32 %v3039, %v3057
    %v3062 = vadd.f32 %v3043, %v3057
    %v3063 = vadd.f32 %v3047, %v3057
    %v3064 = vadd.f32 %v3051, %v3057
    %v3065 = vadd.f32 %v3055, %v3057
    %v3066 = vmul.f32 %v3058, 0.2
    %v3067 = vmul.f32 %v3059, 0.2
    %v3068 = vmul.f32 %v3060, 0.2
    %v3069 = vmul.f32 %v3061, 0.2
    %v3070 = vmul.f32 %v3062, 0.2
    %v3071 = vmul.f32 %v3063, 0.2
    %v3072 = vmul.f32 %v3064, 0.2
    %v3073 = vmul.f32 %v3065, 0.2
    %v3074 = vmax.f32 %v3058, %v3066
    %v3075 = vmax.f32 %v3059, %v3067
    %v3076 = vmax.f32 %v3060, %v3068
    %v3077 = vmax.f32 %v3061, %v3069
    %v3078 = vmax.f32 %v3062, %v3070
    %v3079 = vmax.f32 %v3063, %v3071
    %v3080 = vmax.f32 %v3064, %v3072
    %v3081 = vmax.f32 %v3065, %v3073
    %s3082 = sld [smem:[#allocation2 + $0x1f]]
    %v3083 = vstv %s3082
    %v3084 = vmul.f32 %v3083, %v3074
    %v3085 = vmul.f32 %v3083, %v3075
    %v3086 = vmul.f32 %v3083, %v3076
    %v3087 = vmul.f32 %v3083, %v3077
    %v3088 = vmul.f32 %v3083, %v3078
    %v3089 = vmul.f32 %v3083, %v3079
    %v3090 = vmul.f32 %v3083, %v3080
    %v3091 = vmul.f32 %v3083, %v3081
    %v3092 = vadd.f32 %v3017, %v3084
    %v3093 = vadd.f32 %v3018, %v3085
    %v3094 = vadd.f32 %v3019, %v3086
    %v3095 = vadd.f32 %v3020, %v3087
    %v3096 = vadd.f32 %v3021, %v3088
    %v3097 = vadd.f32 %v3022, %v3089
    %v3098 = vadd.f32 %v3023, %v3090
    %v3099 = vadd.f32 %v3024, %v3091
    %v3100 = vadd.f32 %v3092, %v74
    %v3101 = vadd.f32 %v3093, %v75
    %v3102 = vadd.f32 %v3094, %v76
    %v3103 = vadd.f32 %v3095, %v77
    %v3104 = vadd.f32 %v3096, %v78
    %v3105 = vadd.f32 %v3097, %v79
    %v3106 = vadd.f32 %v3098, %v80
    %v3107 = vadd.f32 %v3099, %v81
    %v3108 = vsel %vm776, %v3100, -inf
    %3109 = vmax.xlane.f32.xlu0 %v3108
    %v3110 = vpop.xlane.xlu0 %3109
    %v3111 = vsel %vm776, %v3101, -inf
    %3112 = vmax.xlane.f32.xlu0 %v3111
    %v3113 = vpop.xlane.xlu0 %3112
    %v3114 = vsel %vm776, %v3102, -inf
    %3115 = vmax.xlane.f32.xlu0 %v3114
    %v3116 = vpop.xlane.xlu0 %3115
    %v3117 = vsel %vm776, %v3103, -inf
    %3118 = vmax.xlane.f32.xlu0 %v3117
    %v3119 = vpop.xlane.xlu0 %3118
    %v3120 = vsel %vm776, %v3104, -inf
    %3121 = vmax.xlane.f32.xlu0 %v3120
    %v3122 = vpop.xlane.xlu0 %3121
    %v3123 = vsel %vm776, %v3105, -inf
    %3124 = vmax.xlane.f32.xlu0 %v3123
    %v3125 = vpop.xlane.xlu0 %3124
    %v3126 = vsel %vm776, %v3106, -inf
    %3127 = vmax.xlane.f32.xlu0 %v3126
    %v3128 = vpop.xlane.xlu0 %3127
    %v3129 = vsel %vm776, %v3107, -inf
    %3130 = vmax.xlane.f32.xlu0 %v3129
    %v3131 = vpop.xlane.xlu0 %3130
    %v3132 = vsub.f32 %v3100, %v3110
    %v3133 = vsub.f32 %v3101, %v3113
    %v3134 = vsub.f32 %v3102, %v3116
    %v3135 = vsub.f32 %v3103, %v3119
    %v3136 = vsub.f32 %v3104, %v3122
    %v3137 = vsub.f32 %v3105, %v3125
    %v3138 = vsub.f32 %v3106, %v3128
    %v3139 = vsub.f32 %v3107, %v3131
    %v3140 = vmul.f32 %v3132, 1.442695
    %v3141 = vpow.pop %v3140
    %v3142 = vmul.f32 %v3133, 1.442695
    %v3143 = vpow.pop %v3142
    %v3144 = vmul.f32 %v3134, 1.442695
    %v3145 = vpow.pop %v3144
    %v3146 = vmul.f32 %v3135, 1.442695
    %v3147 = vpow.pop %v3146
    %v3148 = vmul.f32 %v3136, 1.442695
    %v3149 = vpow.pop %v3148
    %v3150 = vmul.f32 %v3137, 1.442695
    %v3151 = vpow.pop %v3150
    %v3152 = vmul.f32 %v3138, 1.442695
    %v3153 = vpow.pop %v3152
    %v3154 = vmul.f32 %v3139, 1.442695
    %v3155 = vpow.pop %v3154
    %v3156 = vsel %vm776, %v3141, 0.0
    %3157 = vadd.xlane.f32.xlu0 %v3156
    %v3158 = vpop.xlane.xlu0 %3157
    %v3159 = vsel %vm776, %v3143, 0.0
    %3160 = vadd.xlane.f32.xlu0 %v3159
    %v3161 = vpop.xlane.xlu0 %3160
    %v3162 = vsel %vm776, %v3145, 0.0
    %3163 = vadd.xlane.f32.xlu0 %v3162
    %v3164 = vpop.xlane.xlu0 %3163
    %v3165 = vsel %vm776, %v3147, 0.0
    %3166 = vadd.xlane.f32.xlu0 %v3165
    %v3167 = vpop.xlane.xlu0 %3166
    %v3168 = vsel %vm776, %v3149, 0.0
    %3169 = vadd.xlane.f32.xlu0 %v3168
    %v3170 = vpop.xlane.xlu0 %3169
    %v3171 = vsel %vm776, %v3151, 0.0
    %3172 = vadd.xlane.f32.xlu0 %v3171
    %v3173 = vpop.xlane.xlu0 %3172
    %v3174 = vsel %vm776, %v3153, 0.0
    %3175 = vadd.xlane.f32.xlu0 %v3174
    %v3176 = vpop.xlane.xlu0 %3175
    %v3177 = vsel %vm776, %v3155, 0.0
    %3178 = vadd.xlane.f32.xlu0 %v3177
    %v3179 = vpop.xlane.xlu0 %3178
    %v3180 = vmax.f32 %v3158, 1e-20
    %v3181 = vmax.f32 %v3161, 1e-20
    %v3182 = vmax.f32 %v3164, 1e-20
    %v3183 = vmax.f32 %v3167, 1e-20
    %v3184 = vmax.f32 %v3170, 1e-20
    %v3185 = vmax.f32 %v3173, 1e-20
    %v3186 = vmax.f32 %v3176, 1e-20
    %v3187 = vmax.f32 %v3179, 1e-20
    %v3188 = vrcp.pop %v3180
    %v3189 = vrcp.pop %v3181
    %v3190 = vrcp.pop %v3182
    %v3191 = vrcp.pop %v3183
    %v3192 = vrcp.pop %v3184
    %v3193 = vrcp.pop %v3185
    %v3194 = vrcp.pop %v3186
    %v3195 = vrcp.pop %v3187
    %v3196 = vmul.f32 %v3141, %v3188
    %v3197 = vmul.f32 %v3143, %v3189
    %v3198 = vmul.f32 %v3145, %v3190
    %v3199 = vmul.f32 %v3147, %v3191
    %v3200 = vmul.f32 %v3149, %v3192
    %v3201 = vmul.f32 %v3151, %v3193
    %v3202 = vmul.f32 %v3153, %v3194
    %v3203 = vmul.f32 %v3155, %v3195
    %3204 = vrot.lane.b32.xlu0 %v117, 104
    %v3205 = vpop.permute.xlu0 %3204
    %3206 = vrot.lane.b32.xlu0 %v119, 104
    %v3207 = vpop.permute.xlu0 %3206
    %3208 = vrot.lane.b32.xlu0 %v122, 104
    %v3209 = vpop.permute.xlu0 %3208
    %3210 = vrot.lane.b32.xlu0 %v124, 104
    %v3211 = vpop.permute.xlu0 %3210
    %3212 = vrot.lane.b32.xlu0 %v127, 104
    %v3213 = vpop.permute.xlu0 %3212
    %3214 = vrot.lane.b32.xlu0 %v129, 104
    %v3215 = vpop.permute.xlu0 %3214
    %3216 = vrot.lane.b32.xlu0 %v132, 104
    %v3217 = vpop.permute.xlu0 %3216
    %3218 = vrot.lane.b32.xlu0 %v134, 104
    %v3219 = vpop.permute.xlu0 %3218
    %v3229 = vsel %vm776, %v3196, 0
    %v3232 = vsel %vm776, %v3197, 0
    %v3235 = vsel %vm776, %v3198, 0
    %v3238 = vsel %vm776, %v3199, 0
    %v3241 = vsel %vm776, %v3200, 0
    %v3244 = vsel %vm776, %v3201, 0
    %v3247 = vsel %vm776, %v3202, 0
    %v3250 = vsel %vm776, %v3203, 0
    %3252 = vmatpush.msra.mxu0 0.0
    %3253 = vmatpush.msra.mxu0 0.0
    %3254 = vmatpush.msra.mxu0 0.0
    %3255 = vmatpush.msra.mxu0 0.0
    %3256 = vmatpush.msra.mxu0 0.0
    %3257 = vmatpush.msra.mxu0 0.0
    %3258 = vmatpush.msra.mxu0 0.0
    %3259 = vmatpush.msra.mxu0 0.0
    %3260 = vmatpush.msra.mxu0 %v3219
    %3261 = vmatpush.msra.mxu0 %v3217
    %3262 = vmatpush.msra.mxu0 %v3215
    %3263 = vmatpush.msra.mxu0 %v3213
    %3264 = vmatpush.msra.mxu0 %v3211
    %3265 = vmatpush.msra.mxu0 %v3209
    %3266 = vmatpush.msra.mxu0 %v3207
    %3267 = vmatpush.msra.mxu0 %v3205
    %3268 = vmatmul.f32.gmra.mxu0 %v3229
    %v3269 = vpop.f32.mrf.mxu0
    %v3270 = vadd.f32 0.0, %v3269
    %3271 = vmatmul.f32.gmra.mxu0 %v3232
    %v3272 = vpop.f32.mrf.mxu0
    %v3273 = vadd.f32 0.0, %v3272
    %3274 = vmatmul.f32.gmra.mxu0 %v3235
    %v3275 = vpop.f32.mrf.mxu0
    %v3276 = vadd.f32 0.0, %v3275
    %3277 = vmatmul.f32.gmra.mxu0 %v3238
    %v3278 = vpop.f32.mrf.mxu0
    %v3279 = vadd.f32 0.0, %v3278
    %3280 = vmatmul.f32.gmra.mxu0 %v3241
    %v3281 = vpop.f32.mrf.mxu0
    %v3282 = vadd.f32 0.0, %v3281
    %3283 = vmatmul.f32.gmra.mxu0 %v3244
    %v3284 = vpop.f32.mrf.mxu0
    %v3285 = vadd.f32 0.0, %v3284
    %3286 = vmatmul.f32.gmra.mxu0 %v3247
    %v3287 = vpop.f32.mrf.mxu0
    %v3288 = vadd.f32 0.0, %v3287
    %3289 = vmatmul.f32.gmra.mxu0 %v3250
    %v3290 = vpop.f32.mrf.mxu0
    %v3291 = vadd.f32 0.0, %v3290
    %3292 = vdwg.mxu0
    %3301 = vrot.lane.b32.xlu0 %v1700, 8
    %v3302 = vpop.permute.xlu0 %3301
    %3303 = vrot.lane.b32.xlu0 %v1703, 8
    %v3304 = vpop.permute.xlu0 %3303
    %3305 = vrot.lane.b32.xlu0 %v1706, 8
    %v3306 = vpop.permute.xlu0 %3305
    %3307 = vrot.lane.b32.xlu0 %v1709, 8
    %v3308 = vpop.permute.xlu0 %3307
    %3309 = vrot.lane.b32.xlu0 %v1712, 8
    %v3310 = vpop.permute.xlu0 %3309
    %3311 = vrot.lane.b32.xlu0 %v1715, 8
    %v3312 = vpop.permute.xlu0 %3311
    %3313 = vrot.lane.b32.xlu0 %v1718, 8
    %v3314 = vpop.permute.xlu0 %3313
    %3315 = vrot.lane.b32.xlu0 %v1721, 8
    %v3316 = vpop.permute.xlu0 %3315
    %3333 = vrot.lane.b32.xlu0 %v2485, 16
    %v3334 = vpop.permute.xlu0 %3333
    %3335 = vrot.lane.b32.xlu0 %v2488, 16
    %v3336 = vpop.permute.xlu0 %3335
    %3337 = vrot.lane.b32.xlu0 %v2491, 16
    %v3338 = vpop.permute.xlu0 %3337
    %3339 = vrot.lane.b32.xlu0 %v2494, 16
    %v3340 = vpop.permute.xlu0 %3339
    %3341 = vrot.lane.b32.xlu0 %v2497, 16
    %v3342 = vpop.permute.xlu0 %3341
    %3343 = vrot.lane.b32.xlu0 %v2500, 16
    %v3344 = vpop.permute.xlu0 %3343
    %3345 = vrot.lane.b32.xlu0 %v2503, 16
    %v3346 = vpop.permute.xlu0 %3345
    %3347 = vrot.lane.b32.xlu0 %v2506, 16
    %v3348 = vpop.permute.xlu0 %3347
    %3365 = vrot.lane.b32.xlu0 %v3270, 24
    %v3366 = vpop.permute.xlu0 %3365
    %3367 = vrot.lane.b32.xlu0 %v3273, 24
    %v3368 = vpop.permute.xlu0 %3367
    %3369 = vrot.lane.b32.xlu0 %v3276, 24
    %v3370 = vpop.permute.xlu0 %3369
    %3371 = vrot.lane.b32.xlu0 %v3279, 24
    %v3372 = vpop.permute.xlu0 %3371
    %3373 = vrot.lane.b32.xlu0 %v3282, 24
    %v3374 = vpop.permute.xlu0 %3373
    %3375 = vrot.lane.b32.xlu0 %v3285, 24
    %v3376 = vpop.permute.xlu0 %3375
    %3377 = vrot.lane.b32.xlu0 %v3288, 24
    %v3378 = vpop.permute.xlu0 %3377
    %3379 = vrot.lane.b32.xlu0 %v3291, 24
    %v3380 = vpop.permute.xlu0 %3379
    %vm3389 = vcmask 64512
    %v3390 = vsel %vm3389, %v915, %v3302
    %v3391 = vsel %vm3389, %v918, %v3304
    %v3392 = vsel %vm3389, %v921, %v3306
    %v3393 = vsel %vm3389, %v924, %v3308
    %v3394 = vsel %vm3389, %v927, %v3310
    %v3395 = vsel %vm3389, %v930, %v3312
    %v3396 = vsel %vm3389, %v933, %v3314
    %v3397 = vsel %vm3389, %v936, %v3316
    %v3398 = vsel %vm94, %v3390, %v3334
    %v3399 = vsel %vm94, %v3391, %v3336
    %v3400 = vsel %vm94, %v3392, %v3338
    %v3401 = vsel %vm94, %v3393, %v3340
    %v3402 = vsel %vm94, %v3394, %v3342
    %v3403 = vsel %vm94, %v3395, %v3344
    %v3404 = vsel %vm94, %v3396, %v3346
    %v3405 = vsel %vm94, %v3397, %v3348
    %vm3406 = vcmask 195584
    %v3407 = vsel %vm3406, %v3398, %v3366
    %v3408 = vsel %vm3406, %v3399, %v3368
    %v3409 = vsel %vm3406, %v3400, %v3370
    %v3410 = vsel %vm3406, %v3401, %v3372
    %v3411 = vsel %vm3406, %v3402, %v3374
    %v3412 = vsel %vm3406, %v3403, %v3376
    %v3413 = vsel %vm3406, %v3404, %v3378
    %v3414 = vsel %vm3406, %v3405, %v3380
    %vm3415 = vcmp.ne.f32.partialorder %v3407, %v3407
    %vm3416 = vcmp.ne.f32.partialorder %v3408, %v3408
    %vm3417 = vcmp.ne.f32.partialorder %v3409, %v3409
    %vm3418 = vcmp.ne.f32.partialorder %v3410, %v3410
    %vm3419 = vcmp.ne.f32.partialorder %v3411, %v3411
    %vm3420 = vcmp.ne.f32.partialorder %v3412, %v3412
    %vm3421 = vcmp.ne.f32.partialorder %v3413, %v3413
    %vm3422 = vcmp.ne.f32.partialorder %v3414, %v3414
    %v3423 = vsel %vm3415, 0.0, %v3407
    %v3424 = vsel %vm3416, 0.0, %v3408
    %v3425 = vsel %vm3417, 0.0, %v3409
    %v3426 = vsel %vm3418, 0.0, %v3410
    %v3427 = vsel %vm3419, 0.0, %v3411
    %v3428 = vsel %vm3420, 0.0, %v3412
    %v3429 = vsel %vm3421, 0.0, %v3413
    %v3430 = vsel %vm3422, 0.0, %v3414
    %vm3431 = vcmp.eq.f32.partialorder %v3423, inf
    %vm3432 = vcmp.eq.f32.partialorder %v3424, inf
    %vm3433 = vcmp.eq.f32.partialorder %v3425, inf
    %vm3434 = vcmp.eq.f32.partialorder %v3426, inf
    %vm3435 = vcmp.eq.f32.partialorder %v3427, inf
    %vm3436 = vcmp.eq.f32.partialorder %v3428, inf
    %vm3437 = vcmp.eq.f32.partialorder %v3429, inf
    %vm3438 = vcmp.eq.f32.partialorder %v3430, inf
    %v3439 = vsel %vm3431, 1e-05, %v3423
    %v3440 = vsel %vm3432, 1e-05, %v3424
    %v3441 = vsel %vm3433, 1e-05, %v3425
    %v3442 = vsel %vm3434, 1e-05, %v3426
    %v3443 = vsel %vm3435, 1e-05, %v3427
    %v3444 = vsel %vm3436, 1e-05, %v3428
    %v3445 = vsel %vm3437, 1e-05, %v3429
    %v3446 = vsel %vm3438, 1e-05, %v3430
    %vm3447 = vcmp.eq.f32.partialorder %v3439, -inf
    %vm3448 = vcmp.eq.f32.partialorder %v3440, -inf
    %vm3449 = vcmp.eq.f32.partialorder %v3441, -inf
    %vm3450 = vcmp.eq.f32.partialorder %v3442, -inf
    %vm3451 = vcmp.eq.f32.partialorder %v3443, -inf
    %vm3452 = vcmp.eq.f32.partialorder %v3444, -inf
    %vm3453 = vcmp.eq.f32.partialorder %v3445, -inf
    %vm3454 = vcmp.eq.f32.partialorder %v3446, -inf
    %v3455 = vsel %vm3447, -1e-05, %v3439
    %v3456 = vsel %vm3448, -1e-05, %v3440
    %v3457 = vsel %vm3449, -1e-05, %v3441
    %v3458 = vsel %vm3450, -1e-05, %v3442
    %v3459 = vsel %vm3451, -1e-05, %v3443
    %v3460 = vsel %vm3452, -1e-05, %v3444
    %v3461 = vsel %vm3453, -1e-05, %v3445
    %v3462 = vsel %vm3454, -1e-05, %v3446
    %vm3463 = vcmask 261120
    %v3464 = vsel %vm3463, %v3455, 0.0
    %3465 = vadd.xlane.f32.xlu0 %v3464
    %v3466 = vpop.xlane.xlu0 %3465
    %v3467 = vsel %vm3463, %v3456, 0.0
    %3468 = vadd.xlane.f32.xlu0 %v3467
    %v3469 = vpop.xlane.xlu0 %3468
    %v3470 = vsel %vm3463, %v3457, 0.0
    %3471 = vadd.xlane.f32.xlu0 %v3470
    %v3472 = vpop.xlane.xlu0 %3471
    %v3473 = vsel %vm3463, %v3458, 0.0
    %3474 = vadd.xlane.f32.xlu0 %v3473
    %v3475 = vpop.xlane.xlu0 %3474
    %v3476 = vsel %vm3463, %v3459, 0.0
    %3477 = vadd.xlane.f32.xlu0 %v3476
    %v3478 = vpop.xlane.xlu0 %3477
    %v3479 = vsel %vm3463, %v3460, 0.0
    %3480 = vadd.xlane.f32.xlu0 %v3479
    %v3481 = vpop.xlane.xlu0 %3480
    %v3482 = vsel %vm3463, %v3461, 0.0
    %3483 = vadd.xlane.f32.xlu0 %v3482
    %v3484 = vpop.xlane.xlu0 %3483
    %v3485 = vsel %vm3463, %v3462, 0.0
    %3486 = vadd.xlane.f32.xlu0 %v3485
    %v3487 = vpop.xlane.xlu0 %3486
    %v3488 = vrcp.pop 32.0
    %v3489 = vmul.f32 32.0, %v3488
    %v3490 = vsub.f32 1.0, %v3489
    %v3491 = vmul.f32 %v3488, %v3490
    %v3492 = vadd.f32 %v3488, %v3491
    %vm3493 = vweird.f32 %v3488
    %v3494 = vsel %vm3493, %v3488, %v3492
    %v3495 = vmul.f32 %v3466, %v3494
    %v3496 = vmul.f32 %v3469, %v3494
    %v3497 = vmul.f32 %v3472, %v3494
    %v3498 = vmul.f32 %v3475, %v3494
    %v3499 = vmul.f32 %v3478, %v3494
    %v3500 = vmul.f32 %v3481, %v3494
    %v3501 = vmul.f32 %v3484, %v3494
    %v3502 = vmul.f32 %v3487, %v3494
    %v3503 = vsub.f32 %v3455, %v3495
    %v3504 = vsub.f32 %v3456, %v3496
    %v3505 = vsub.f32 %v3457, %v3497
    %v3506 = vsub.f32 %v3458, %v3498
    %v3507 = vsub.f32 %v3459, %v3499
    %v3508 = vsub.f32 %v3460, %v3500
    %v3509 = vsub.f32 %v3461, %v3501
    %v3510 = vsub.f32 %v3462, %v3502
    %v3511 = vmul.f32 %v3503, %v3503
    %v3512 = vmul.f32 %v3504, %v3504
    %v3513 = vmul.f32 %v3505, %v3505
    %v3514 = vmul.f32 %v3506, %v3506
    %v3515 = vmul.f32 %v3507, %v3507
    %v3516 = vmul.f32 %v3508, %v3508
    %v3517 = vmul.f32 %v3509, %v3509
    %v3518 = vmul.f32 %v3510, %v3510
    %v3519 = vsel %vm3463, %v3511, 0.0
    %3520 = vadd.xlane.f32.xlu0 %v3519
    %v3521 = vpop.xlane.xlu0 %3520
    %v3522 = vsel %vm3463, %v3512, 0.0
    %3523 = vadd.xlane.f32.xlu0 %v3522
    %v3524 = vpop.xlane.xlu0 %3523
    %v3525 = vsel %vm3463, %v3513, 0.0
    %3526 = vadd.xlane.f32.xlu0 %v3525
    %v3527 = vpop.xlane.xlu0 %3526
    %v3528 = vsel %vm3463, %v3514, 0.0
    %3529 = vadd.xlane.f32.xlu0 %v3528
    %v3530 = vpop.xlane.xlu0 %3529
    %v3531 = vsel %vm3463, %v3515, 0.0
    %3532 = vadd.xlane.f32.xlu0 %v3531
    %v3533 = vpop.xlane.xlu0 %3532
    %v3534 = vsel %vm3463, %v3516, 0.0
    %3535 = vadd.xlane.f32.xlu0 %v3534
    %v3536 = vpop.xlane.xlu0 %3535
    %v3537 = vsel %vm3463, %v3517, 0.0
    %3538 = vadd.xlane.f32.xlu0 %v3537
    %v3539 = vpop.xlane.xlu0 %3538
    %v3540 = vsel %vm3463, %v3518, 0.0
    %3541 = vadd.xlane.f32.xlu0 %v3540
    %v3542 = vpop.xlane.xlu0 %3541
    %v3543 = vmul.f32 %v3521, %v3494
    %v3544 = vmul.f32 %v3524, %v3494
    %v3545 = vmul.f32 %v3527, %v3494
    %v3546 = vmul.f32 %v3530, %v3494
    %v3547 = vmul.f32 %v3533, %v3494
    %v3548 = vmul.f32 %v3536, %v3494
    %v3549 = vmul.f32 %v3539, %v3494
    %v3550 = vmul.f32 %v3542, %v3494
    %v3551 = vadd.f32 %v3543, 1e-05
    %v3552 = vadd.f32 %v3544, 1e-05
    %v3553 = vadd.f32 %v3545, 1e-05
    %v3554 = vadd.f32 %v3546, 1e-05
    %v3555 = vadd.f32 %v3547, 1e-05
    %v3556 = vadd.f32 %v3548, 1e-05
    %v3557 = vadd.f32 %v3549, 1e-05
    %v3558 = vadd.f32 %v3550, 1e-05
    %v3559 = vrsqrt.pop %v3551
    %v3560 = vmul.f32 %v3559, %v3551
    %v3561 = vmul.f32 %v3560, %v3559
    %v3562 = vmul.f32 0.5, %v3561
    %v3563 = vsub.f32 1.5, %v3562
    %v3564 = vmul.f32 %v3559, %v3563
    %vm3565 = vweird.f32 %v3551
    %vm3566 = vweird.f32 %v3559
    %vm3567 = vmor %vm3565, %vm3566
    %v3568 = vsel %vm3567, %v3559, %v3564
    %v3569 = vrsqrt.pop %v3552
    %v3570 = vmul.f32 %v3569, %v3552
    %v3571 = vmul.f32 %v3570, %v3569
    %v3572 = vmul.f32 0.5, %v3571
    %v3573 = vsub.f32 1.5, %v3572
    %v3574 = vmul.f32 %v3569, %v3573
    %vm3575 = vweird.f32 %v3552
    %vm3576 = vweird.f32 %v3569
    %vm3577 = vmor %vm3575, %vm3576
    %v3578 = vsel %vm3577, %v3569, %v3574
    %v3579 = vrsqrt.pop %v3553
    %v3580 = vmul.f32 %v3579, %v3553
    %v3581 = vmul.f32 %v3580, %v3579
    %v3582 = vmul.f32 0.5, %v3581
    %v3583 = vsub.f32 1.5, %v3582
    %v3584 = vmul.f32 %v3579, %v3583
    %vm3585 = vweird.f32 %v3553
    %vm3586 = vweird.f32 %v3579
    %vm3587 = vmor %vm3585, %vm3586
    %v3588 = vsel %vm3587, %v3579, %v3584
    %v3589 = vrsqrt.pop %v3554
    %v3590 = vmul.f32 %v3589, %v3554
    %v3591 = vmul.f32 %v3590, %v3589
    %v3592 = vmul.f32 0.5, %v3591
    %v3593 = vsub.f32 1.5, %v3592
    %v3594 = vmul.f32 %v3589, %v3593
    %vm3595 = vweird.f32 %v3554
    %vm3596 = vweird.f32 %v3589
    %vm3597 = vmor %vm3595, %vm3596
    %v3598 = vsel %vm3597, %v3589, %v3594
    %v3599 = vrsqrt.pop %v3555
    %v3600 = vmul.f32 %v3599, %v3555
    %v3601 = vmul.f32 %v3600, %v3599
    %v3602 = vmul.f32 0.5, %v3601
    %v3603 = vsub.f32 1.5, %v3602
    %v3604 = vmul.f32 %v3599, %v3603
    %vm3605 = vweird.f32 %v3555
    %vm3606 = vweird.f32 %v3599
    %vm3607 = vmor %vm3605, %vm3606
    %v3608 = vsel %vm3607, %v3599, %v3604
    %v3609 = vrsqrt.pop %v3556
    %v3610 = vmul.f32 %v3609, %v3556
    %v3611 = vmul.f32 %v3610, %v3609
    %v3612 = vmul.f32 0.5, %v3611
    %v3613 = vsub.f32 1.5, %v3612
    %v3614 = vmul.f32 %v3609, %v3613
    %vm3615 = vweird.f32 %v3556
    %vm3616 = vweird.f32 %v3609
    %vm3617 = vmor %vm3615, %vm3616
    %v3618 = vsel %vm3617, %v3609, %v3614
    %v3619 = vrsqrt.pop %v3557
    %v3620 = vmul.f32 %v3619, %v3557
    %v3621 = vmul.f32 %v3620, %v3619
    %v3622 = vmul.f32 0.5, %v3621
    %v3623 = vsub.f32 1.5, %v3622
    %v3624 = vmul.f32 %v3619, %v3623
    %vm3625 = vweird.f32 %v3557
    %vm3626 = vweird.f32 %v3619
    %vm3627 = vmor %vm3625, %vm3626
    %v3628 = vsel %vm3627, %v3619, %v3624
    %v3629 = vrsqrt.pop %v3558
    %v3630 = vmul.f32 %v3629, %v3558
    %v3631 = vmul.f32 %v3630, %v3629
    %v3632 = vmul.f32 0.5, %v3631
    %v3633 = vsub.f32 1.5, %v3632
    %v3634 = vmul.f32 %v3629, %v3633
    %vm3635 = vweird.f32 %v3558
    %vm3636 = vweird.f32 %v3629
    %vm3637 = vmor %vm3635, %vm3636
    %v3638 = vsel %vm3637, %v3629, %v3634
    %v3639 = vmul.f32 %v3503, %v3568
    %v3640 = vmul.f32 %v3504, %v3578
    %v3641 = vmul.f32 %v3505, %v3588
    %v3642 = vmul.f32 %v3506, %v3598
    %v3643 = vmul.f32 %v3507, %v3608
    %v3644 = vmul.f32 %v3508, %v3618
    %v3645 = vmul.f32 %v3509, %v3628
    %v3646 = vmul.f32 %v3510, %v3638
    %v3647 = vmax.f32 %v3639, 0.0
    %v3648 = vmax.f32 %v3640, 0.0
    %v3649 = vmax.f32 %v3641, 0.0
    %v3650 = vmax.f32 %v3642, 0.0
    %v3651 = vmax.f32 %v3643, 0.0
    %v3652 = vmax.f32 %v3644, 0.0
    %v3653 = vmax.f32 %v3645, 0.0
    %v3654 = vmax.f32 %v3646, 0.0
    %v3655 = vpack.c.bf16 %v3648, %v3647
    %v3656 = vpack.c.bf16 %v3650, %v3649
    %v3657 = vpack.c.bf16 %v3652, %v3651
    %v3658 = vpack.c.bf16 %v3654, %v3653
    %v3659 = vld [vmem:[%s4] sm:$0xf]
    %v3660 = vld [vmem:[%s4 + $0x4] sm:$0xf]
    %v3661 = vld [vmem:[%s4 + $0x8] sm:$0xf]
    %v3662 = vld [vmem:[%s4 + $0xc] sm:$0xf]
    %v3667 = vunpack.c.l.b16 %v3659
    %v3668 = vunpack.c.l.b16 %v3660
    %v3669 = vunpack.c.l.b16 %v3661
    %v3670 = vunpack.c.l.b16 %v3662
    %v3671 = vpack.c.b16 %v3668, %v3667
    %v3672 = vpack.c.b16 %v3670, %v3669
    %v3676 = vsel %vm3463, %v3655, 0
    %v3679 = vsel %vm3463, %v3656, 0
    %v3682 = vsel %vm3463, %v3657, 0
    %v3685 = vsel %vm3463, %v3658, 0
    %3687 = vmatpush.bf16.msra.mxu0 0
    %3688 = vmatpush.bf16.msra.mxu0 0
    %3689 = vmatpush.bf16.msra.mxu0 0
    %3690 = vmatpush.bf16.msra.mxu0 0
    %3691 = vmatpush.bf16.msra.mxu0 0
    %3692 = vmatpush.bf16.msra.mxu0 0
    %3693 = vmatpush.bf16.msra.mxu0 %v3672
    %3694 = vmatpush.bf16.msra.mxu0 %v3671
    %3695 = vmatmul.bf16.gmra.mxu0 %v3676
    %v3696 = vpop.f32.mrf.mxu0
    %v3697 = vadd.f32 0.0, %v3696
    %v3698 = vpop.f32.mrf.mxu0
    %v3699 = vadd.f32 0.0, %v3698
    %3700 = vmatmul.bf16.gmra.mxu0 %v3679
    %v3701 = vpop.f32.mrf.mxu0
    %v3702 = vadd.f32 0.0, %v3701
    %v3703 = vpop.f32.mrf.mxu0
    %v3704 = vadd.f32 0.0, %v3703
    %3705 = vmatmul.bf16.gmra.mxu0 %v3682
    %v3706 = vpop.f32.mrf.mxu0
    %v3707 = vadd.f32 0.0, %v3706
    %v3708 = vpop.f32.mrf.mxu0
    %v3709 = vadd.f32 0.0, %v3708
    %3710 = vmatmul.bf16.gmra.mxu0 %v3685
    %v3711 = vpop.f32.mrf.mxu0
    %v3712 = vadd.f32 0.0, %v3711
    %v3713 = vpop.f32.mrf.mxu0
    %v3714 = vadd.f32 0.0, %v3713
    %3715 = vdwg.mxu0
    %3716 = vxpose.xlu0.b32.start [1/16] %v3697, 128
    %3717 = vxpose.xlu0.b32.cont [2/16] %v3699, 128
    %3718 = vxpose.xlu0.b32.cont [3/16] %v3702, 128
    %3719 = vxpose.xlu0.b32.cont [4/16] %v3704, 128
    %3720 = vxpose.xlu0.b32.cont [5/16] %v3707, 128
    %3721 = vxpose.xlu0.b32.cont [6/16] %v3709, 128
    %3722 = vxpose.xlu0.b32.cont [7/16] %v3712, 128
    %3723 = vxpose.xlu0.b32.cont [8/16] %v3714, 128
    %3724 = vxpose.xlu0.b32.cont [9/16] 0.0, 128
    %3725 = vxpose.xlu0.b32.cont [10/16] 0.0, 128
    %3726 = vxpose.xlu0.b32.cont [11/16] 0.0, 128
    %3727 = vxpose.xlu0.b32.cont [12/16] 0.0, 128
    %3728 = vxpose.xlu0.b32.cont [13/16] 0.0, 128
    %3729 = vxpose.xlu0.b32.cont [14/16] 0.0, 128
    %3730 = vxpose.xlu0.b32.cont [15/16] 0.0, 128
    %3731 = vxpose.xlu0.b32.end [16/16] 0.0, 128
    %v3732 = vpop.trf.xlu0
    %v3733 = vpop.trf.xlu0
    %v3734 = vpop.trf.xlu0
    %v3735 = vpop.trf.xlu0
    %v3736 = vpop.trf.xlu0
    %v3737 = vpop.trf.xlu0
    %v3738 = vpop.trf.xlu0
    %v3739 = vpop.trf.xlu0
    %v3740 = vpop.trf.xlu0
    %v3741 = vpop.trf.xlu0
    %v3742 = vpop.trf.xlu0
    %v3743 = vpop.trf.xlu0
    %v3744 = vpop.trf.xlu0
    %v3745 = vpop.trf.xlu0
    %v3746 = vpop.trf.xlu0
    %v3747 = vpop.trf.xlu0
    %3749 = vset.pattern.permute.xlu0 32
    %3750 = vperm.xlu0 %3749, %v3697
    %v3751 = vpop.permute.xlu0 %3750
    %3754 = vset.pattern.permute.xlu0 32
    %3755 = vperm.xlu0 %3754, %v3699
    %v3756 = vpop.permute.xlu0 %3755
    %3759 = vset.pattern.permute.xlu0 32
    %3760 = vperm.xlu0 %3759, %v3702
    %v3761 = vpop.permute.xlu0 %3760
    %3764 = vset.pattern.permute.xlu0 32
    %3765 = vperm.xlu0 %3764, %v3704
    %v3766 = vpop.permute.xlu0 %3765
    %3769 = vset.pattern.permute.xlu0 32
    %3770 = vperm.xlu0 %3769, %v3707
    %v3771 = vpop.permute.xlu0 %3770
    %3774 = vset.pattern.permute.xlu0 32
    %3775 = vperm.xlu0 %3774, %v3709
    %v3776 = vpop.permute.xlu0 %3775
    %3779 = vset.pattern.permute.xlu0 32
    %3780 = vperm.xlu0 %3779, %v3712
    %v3781 = vpop.permute.xlu0 %3780
    %3784 = vset.pattern.permute.xlu0 32
    %3785 = vperm.xlu0 %3784, %v3714
    %v3786 = vpop.permute.xlu0 %3785
    %v3788 = vperm.slane %v3732, 0
    %v3789 = vadd.f32 %v3751, %v3788
    %v3790 = vadd.f32 %v3756, %v3788
    %v3791 = vadd.f32 %v3761, %v3788
    %v3792 = vadd.f32 %v3766, %v3788
    %v3793 = vadd.f32 %v3771, %v3788
    %v3794 = vadd.f32 %v3776, %v3788
    %v3795 = vadd.f32 %v3781, %v3788
    %v3796 = vadd.f32 %v3786, %v3788
    %v3797 = vmul.f32 %v3789, 0.2
    %v3798 = vmul.f32 %v3790, 0.2
    %v3799 = vmul.f32 %v3791, 0.2
    %v3800 = vmul.f32 %v3792, 0.2
    %v3801 = vmul.f32 %v3793, 0.2
    %v3802 = vmul.f32 %v3794, 0.2
    %v3803 = vmul.f32 %v3795, 0.2
    %v3804 = vmul.f32 %v3796, 0.2
    %v3805 = vmax.f32 %v3789, %v3797
    %v3806 = vmax.f32 %v3790, %v3798
    %v3807 = vmax.f32 %v3791, %v3799
    %v3808 = vmax.f32 %v3792, %v3800
    %v3809 = vmax.f32 %v3793, %v3801
    %v3810 = vmax.f32 %v3794, %v3802
    %v3811 = vmax.f32 %v3795, %v3803
    %v3812 = vmax.f32 %v3796, %v3804
    %s3813 = sld [smem:[#allocation4]]
    %v3814 = vstv %s3813
    %v3815 = vmul.f32 %v3814, %v3805
    %v3816 = vmul.f32 %v3814, %v3806
    %v3817 = vmul.f32 %v3814, %v3807
    %v3818 = vmul.f32 %v3814, %v3808
    %v3819 = vmul.f32 %v3814, %v3809
    %v3820 = vmul.f32 %v3814, %v3810
    %v3821 = vmul.f32 %v3814, %v3811
    %v3822 = vmul.f32 %v3814, %v3812
    %3823 = vset.pattern.permute.xlu0 33
    %3824 = vperm.xlu0 %3823, %v3697
    %v3825 = vpop.permute.xlu0 %3824
    %3827 = vset.pattern.permute.xlu0 33
    %3828 = vperm.xlu0 %3827, %v3699
    %v3829 = vpop.permute.xlu0 %3828
    %3831 = vset.pattern.permute.xlu0 33
    %3832 = vperm.xlu0 %3831, %v3702
    %v3833 = vpop.permute.xlu0 %3832
    %3835 = vset.pattern.permute.xlu0 33
    %3836 = vperm.xlu0 %3835, %v3704
    %v3837 = vpop.permute.xlu0 %3836
    %3839 = vset.pattern.permute.xlu0 33
    %3840 = vperm.xlu0 %3839, %v3707
    %v3841 = vpop.permute.xlu0 %3840
    %3843 = vset.pattern.permute.xlu0 33
    %3844 = vperm.xlu0 %3843, %v3709
    %v3845 = vpop.permute.xlu0 %3844
    %3847 = vset.pattern.permute.xlu0 33
    %3848 = vperm.xlu0 %3847, %v3712
    %v3849 = vpop.permute.xlu0 %3848
    %3851 = vset.pattern.permute.xlu0 33
    %3852 = vperm.xlu0 %3851, %v3714
    %v3853 = vpop.permute.xlu0 %3852
    %v3855 = vperm.slane %v3732, 1
    %v3856 = vadd.f32 %v3825, %v3855
    %v3857 = vadd.f32 %v3829, %v3855
    %v3858 = vadd.f32 %v3833, %v3855
    %v3859 = vadd.f32 %v3837, %v3855
    %v3860 = vadd.f32 %v3841, %v3855
    %v3861 = vadd.f32 %v3845, %v3855
    %v3862 = vadd.f32 %v3849, %v3855
    %v3863 = vadd.f32 %v3853, %v3855
    %v3864 = vmul.f32 %v3856, 0.2
    %v3865 = vmul.f32 %v3857, 0.2
    %v3866 = vmul.f32 %v3858, 0.2
    %v3867 = vmul.f32 %v3859, 0.2
    %v3868 = vmul.f32 %v3860, 0.2
    %v3869 = vmul.f32 %v3861, 0.2
    %v3870 = vmul.f32 %v3862, 0.2
    %v3871 = vmul.f32 %v3863, 0.2
    %v3872 = vmax.f32 %v3856, %v3864
    %v3873 = vmax.f32 %v3857, %v3865
    %v3874 = vmax.f32 %v3858, %v3866
    %v3875 = vmax.f32 %v3859, %v3867
    %v3876 = vmax.f32 %v3860, %v3868
    %v3877 = vmax.f32 %v3861, %v3869
    %v3878 = vmax.f32 %v3862, %v3870
    %v3879 = vmax.f32 %v3863, %v3871
    %s3880 = sld [smem:[#allocation4 + $0x1]]
    %v3881 = vstv %s3880
    %v3882 = vmul.f32 %v3881, %v3872
    %v3883 = vmul.f32 %v3881, %v3873
    %v3884 = vmul.f32 %v3881, %v3874
    %v3885 = vmul.f32 %v3881, %v3875
    %v3886 = vmul.f32 %v3881, %v3876
    %v3887 = vmul.f32 %v3881, %v3877
    %v3888 = vmul.f32 %v3881, %v3878
    %v3889 = vmul.f32 %v3881, %v3879
    %v3890 = vadd.f32 %v3815, %v3882
    %v3891 = vadd.f32 %v3816, %v3883
    %v3892 = vadd.f32 %v3817, %v3884
    %v3893 = vadd.f32 %v3818, %v3885
    %v3894 = vadd.f32 %v3819, %v3886
    %v3895 = vadd.f32 %v3820, %v3887
    %v3896 = vadd.f32 %v3821, %v3888
    %v3897 = vadd.f32 %v3822, %v3889
    %3898 = vset.pattern.permute.xlu0 34
    %3899 = vperm.xlu0 %3898, %v3697
    %v3900 = vpop.permute.xlu0 %3899
    %3902 = vset.pattern.permute.xlu0 34
    %3903 = vperm.xlu0 %3902, %v3699
    %v3904 = vpop.permute.xlu0 %3903
    %3906 = vset.pattern.permute.xlu0 34
    %3907 = vperm.xlu0 %3906, %v3702
    %v3908 = vpop.permute.xlu0 %3907
    %3910 = vset.pattern.permute.xlu0 34
    %3911 = vperm.xlu0 %3910, %v3704
    %v3912 = vpop.permute.xlu0 %3911
    %3914 = vset.pattern.permute.xlu0 34
    %3915 = vperm.xlu0 %3914, %v3707
    %v3916 = vpop.permute.xlu0 %3915
    %3918 = vset.pattern.permute.xlu0 34
    %3919 = vperm.xlu0 %3918, %v3709
    %v3920 = vpop.permute.xlu0 %3919
    %3922 = vset.pattern.permute.xlu0 34
    %3923 = vperm.xlu0 %3922, %v3712
    %v3924 = vpop.permute.xlu0 %3923
    %3926 = vset.pattern.permute.xlu0 34
    %3927 = vperm.xlu0 %3926, %v3714
    %v3928 = vpop.permute.xlu0 %3927
    %v3930 = vperm.slane %v3732, 2
    %v3931 = vadd.f32 %v3900, %v3930
    %v3932 = vadd.f32 %v3904, %v3930
    %v3933 = vadd.f32 %v3908, %v3930
    %v3934 = vadd.f32 %v3912, %v3930
    %v3935 = vadd.f32 %v3916, %v3930
    %v3936 = vadd.f32 %v3920, %v3930
    %v3937 = vadd.f32 %v3924, %v3930
    %v3938 = vadd.f32 %v3928, %v3930
    %v3939 = vmul.f32 %v3931, 0.2
    %v3940 = vmul.f32 %v3932, 0.2
    %v3941 = vmul.f32 %v3933, 0.2
    %v3942 = vmul.f32 %v3934, 0.2
    %v3943 = vmul.f32 %v3935, 0.2
    %v3944 = vmul.f32 %v3936, 0.2
    %v3945 = vmul.f32 %v3937, 0.2
    %v3946 = vmul.f32 %v3938, 0.2
    %v3947 = vmax.f32 %v3931, %v3939
    %v3948 = vmax.f32 %v3932, %v3940
    %v3949 = vmax.f32 %v3933, %v3941
    %v3950 = vmax.f32 %v3934, %v3942
    %v3951 = vmax.f32 %v3935, %v3943
    %v3952 = vmax.f32 %v3936, %v3944
    %v3953 = vmax.f32 %v3937, %v3945
    %v3954 = vmax.f32 %v3938, %v3946
    %s3955 = sld [smem:[#allocation4 + $0x2]]
    %v3956 = vstv %s3955
    %v3957 = vmul.f32 %v3956, %v3947
    %v3958 = vmul.f32 %v3956, %v3948
    %v3959 = vmul.f32 %v3956, %v3949
    %v3960 = vmul.f32 %v3956, %v3950
    %v3961 = vmul.f32 %v3956, %v3951
    %v3962 = vmul.f32 %v3956, %v3952
    %v3963 = vmul.f32 %v3956, %v3953
    %v3964 = vmul.f32 %v3956, %v3954
    %v3965 = vadd.f32 %v3890, %v3957
    %v3966 = vadd.f32 %v3891, %v3958
    %v3967 = vadd.f32 %v3892, %v3959
    %v3968 = vadd.f32 %v3893, %v3960
    %v3969 = vadd.f32 %v3894, %v3961
    %v3970 = vadd.f32 %v3895, %v3962
    %v3971 = vadd.f32 %v3896, %v3963
    %v3972 = vadd.f32 %v3897, %v3964
    %3973 = vset.pattern.permute.xlu0 35
    %3974 = vperm.xlu0 %3973, %v3697
    %v3975 = vpop.permute.xlu0 %3974
    %3977 = vset.pattern.permute.xlu0 35
    %3978 = vperm.xlu0 %3977, %v3699
    %v3979 = vpop.permute.xlu0 %3978
    %3981 = vset.pattern.permute.xlu0 35
    %3982 = vperm.xlu0 %3981, %v3702
    %v3983 = vpop.permute.xlu0 %3982
    %3985 = vset.pattern.permute.xlu0 35
    %3986 = vperm.xlu0 %3985, %v3704
    %v3987 = vpop.permute.xlu0 %3986
    %3989 = vset.pattern.permute.xlu0 35
    %3990 = vperm.xlu0 %3989, %v3707
    %v3991 = vpop.permute.xlu0 %3990
    %3993 = vset.pattern.permute.xlu0 35
    %3994 = vperm.xlu0 %3993, %v3709
    %v3995 = vpop.permute.xlu0 %3994
    %3997 = vset.pattern.permute.xlu0 35
    %3998 = vperm.xlu0 %3997, %v3712
    %v3999 = vpop.permute.xlu0 %3998
    %4001 = vset.pattern.permute.xlu0 35
    %4002 = vperm.xlu0 %4001, %v3714
    %v4003 = vpop.permute.xlu0 %4002
    %v4005 = vperm.slane %v3732, 3
    %v4006 = vadd.f32 %v3975, %v4005
    %v4007 = vadd.f32 %v3979, %v4005
    %v4008 = vadd.f32 %v3983, %v4005
    %v4009 = vadd.f32 %v3987, %v4005
    %v4010 = vadd.f32 %v3991, %v4005
    %v4011 = vadd.f32 %v3995, %v4005
    %v4012 = vadd.f32 %v3999, %v4005
    %v4013 = vadd.f32 %v4003, %v4005
    %v4014 = vmul.f32 %v4006, 0.2
    %v4015 = vmul.f32 %v4007, 0.2
    %v4016 = vmul.f32 %v4008, 0.2
    %v4017 = vmul.f32 %v4009, 0.2
    %v4018 = vmul.f32 %v4010, 0.2
    %v4019 = vmul.f32 %v4011, 0.2
    %v4020 = vmul.f32 %v4012, 0.2
    %v4021 = vmul.f32 %v4013, 0.2
    %v4022 = vmax.f32 %v4006, %v4014
    %v4023 = vmax.f32 %v4007, %v4015
    %v4024 = vmax.f32 %v4008, %v4016
    %v4025 = vmax.f32 %v4009, %v4017
    %v4026 = vmax.f32 %v4010, %v4018
    %v4027 = vmax.f32 %v4011, %v4019
    %v4028 = vmax.f32 %v4012, %v4020
    %v4029 = vmax.f32 %v4013, %v4021
    %s4030 = sld [smem:[#allocation4 + $0x3]]
    %v4031 = vstv %s4030
    %v4032 = vmul.f32 %v4031, %v4022
    %v4033 = vmul.f32 %v4031, %v4023
    %v4034 = vmul.f32 %v4031, %v4024
    %v4035 = vmul.f32 %v4031, %v4025
    %v4036 = vmul.f32 %v4031, %v4026
    %v4037 = vmul.f32 %v4031, %v4027
    %v4038 = vmul.f32 %v4031, %v4028
    %v4039 = vmul.f32 %v4031, %v4029
    %v4040 = vadd.f32 %v3965, %v4032
    %v4041 = vadd.f32 %v3966, %v4033
    %v4042 = vadd.f32 %v3967, %v4034
    %v4043 = vadd.f32 %v3968, %v4035
    %v4044 = vadd.f32 %v3969, %v4036
    %v4045 = vadd.f32 %v3970, %v4037
    %v4046 = vadd.f32 %v3971, %v4038
    %v4047 = vadd.f32 %v3972, %v4039
    %4048 = vset.pattern.permute.xlu0 36
    %4049 = vperm.xlu0 %4048, %v3697
    %v4050 = vpop.permute.xlu0 %4049
    %4052 = vset.pattern.permute.xlu0 36
    %4053 = vperm.xlu0 %4052, %v3699
    %v4054 = vpop.permute.xlu0 %4053
    %4056 = vset.pattern.permute.xlu0 36
    %4057 = vperm.xlu0 %4056, %v3702
    %v4058 = vpop.permute.xlu0 %4057
    %4060 = vset.pattern.permute.xlu0 36
    %4061 = vperm.xlu0 %4060, %v3704
    %v4062 = vpop.permute.xlu0 %4061
    %4064 = vset.pattern.permute.xlu0 36
    %4065 = vperm.xlu0 %4064, %v3707
    %v4066 = vpop.permute.xlu0 %4065
    %4068 = vset.pattern.permute.xlu0 36
    %4069 = vperm.xlu0 %4068, %v3709
    %v4070 = vpop.permute.xlu0 %4069
    %4072 = vset.pattern.permute.xlu0 36
    %4073 = vperm.xlu0 %4072, %v3712
    %v4074 = vpop.permute.xlu0 %4073
    %4076 = vset.pattern.permute.xlu0 36
    %4077 = vperm.xlu0 %4076, %v3714
    %v4078 = vpop.permute.xlu0 %4077
    %v4080 = vperm.slane %v3732, 4
    %v4081 = vadd.f32 %v4050, %v4080
    %v4082 = vadd.f32 %v4054, %v4080
    %v4083 = vadd.f32 %v4058, %v4080
    %v4084 = vadd.f32 %v4062, %v4080
    %v4085 = vadd.f32 %v4066, %v4080
    %v4086 = vadd.f32 %v4070, %v4080
    %v4087 = vadd.f32 %v4074, %v4080
    %v4088 = vadd.f32 %v4078, %v4080
    %v4089 = vmul.f32 %v4081, 0.2
    %v4090 = vmul.f32 %v4082, 0.2
    %v4091 = vmul.f32 %v4083, 0.2
    %v4092 = vmul.f32 %v4084, 0.2
    %v4093 = vmul.f32 %v4085, 0.2
    %v4094 = vmul.f32 %v4086, 0.2
    %v4095 = vmul.f32 %v4087, 0.2
    %v4096 = vmul.f32 %v4088, 0.2
    %v4097 = vmax.f32 %v4081, %v4089
    %v4098 = vmax.f32 %v4082, %v4090
    %v4099 = vmax.f32 %v4083, %v4091
    %v4100 = vmax.f32 %v4084, %v4092
    %v4101 = vmax.f32 %v4085, %v4093
    %v4102 = vmax.f32 %v4086, %v4094
    %v4103 = vmax.f32 %v4087, %v4095
    %v4104 = vmax.f32 %v4088, %v4096
    %s4105 = sld [smem:[#allocation4 + $0x4]]
    %v4106 = vstv %s4105
    %v4107 = vmul.f32 %v4106, %v4097
    %v4108 = vmul.f32 %v4106, %v4098
    %v4109 = vmul.f32 %v4106, %v4099
    %v4110 = vmul.f32 %v4106, %v4100
    %v4111 = vmul.f32 %v4106, %v4101
    %v4112 = vmul.f32 %v4106, %v4102
    %v4113 = vmul.f32 %v4106, %v4103
    %v4114 = vmul.f32 %v4106, %v4104
    %v4115 = vadd.f32 %v4040, %v4107
    %v4116 = vadd.f32 %v4041, %v4108
    %v4117 = vadd.f32 %v4042, %v4109
    %v4118 = vadd.f32 %v4043, %v4110
    %v4119 = vadd.f32 %v4044, %v4111
    %v4120 = vadd.f32 %v4045, %v4112
    %v4121 = vadd.f32 %v4046, %v4113
    %v4122 = vadd.f32 %v4047, %v4114
    %4123 = vset.pattern.permute.xlu0 37
    %4124 = vperm.xlu0 %4123, %v3697
    %v4125 = vpop.permute.xlu0 %4124
    %4127 = vset.pattern.permute.xlu0 37
    %4128 = vperm.xlu0 %4127, %v3699
    %v4129 = vpop.permute.xlu0 %4128
    %4131 = vset.pattern.permute.xlu0 37
    %4132 = vperm.xlu0 %4131, %v3702
    %v4133 = vpop.permute.xlu0 %4132
    %4135 = vset.pattern.permute.xlu0 37
    %4136 = vperm.xlu0 %4135, %v3704
    %v4137 = vpop.permute.xlu0 %4136
    %4139 = vset.pattern.permute.xlu0 37
    %4140 = vperm.xlu0 %4139, %v3707
    %v4141 = vpop.permute.xlu0 %4140
    %4143 = vset.pattern.permute.xlu0 37
    %4144 = vperm.xlu0 %4143, %v3709
    %v4145 = vpop.permute.xlu0 %4144
    %4147 = vset.pattern.permute.xlu0 37
    %4148 = vperm.xlu0 %4147, %v3712
    %v4149 = vpop.permute.xlu0 %4148
    %4151 = vset.pattern.permute.xlu0 37
    %4152 = vperm.xlu0 %4151, %v3714
    %v4153 = vpop.permute.xlu0 %4152
    %v4155 = vperm.slane %v3732, 5
    %v4156 = vadd.f32 %v4125, %v4155
    %v4157 = vadd.f32 %v4129, %v4155
    %v4158 = vadd.f32 %v4133, %v4155
    %v4159 = vadd.f32 %v4137, %v4155
    %v4160 = vadd.f32 %v4141, %v4155
    %v4161 = vadd.f32 %v4145, %v4155
    %v4162 = vadd.f32 %v4149, %v4155
    %v4163 = vadd.f32 %v4153, %v4155
    %v4164 = vmul.f32 %v4156, 0.2
    %v4165 = vmul.f32 %v4157, 0.2
    %v4166 = vmul.f32 %v4158, 0.2
    %v4167 = vmul.f32 %v4159, 0.2
    %v4168 = vmul.f32 %v4160, 0.2
    %v4169 = vmul.f32 %v4161, 0.2
    %v4170 = vmul.f32 %v4162, 0.2
    %v4171 = vmul.f32 %v4163, 0.2
    %v4172 = vmax.f32 %v4156, %v4164
    %v4173 = vmax.f32 %v4157, %v4165
    %v4174 = vmax.f32 %v4158, %v4166
    %v4175 = vmax.f32 %v4159, %v4167
    %v4176 = vmax.f32 %v4160, %v4168
    %v4177 = vmax.f32 %v4161, %v4169
    %v4178 = vmax.f32 %v4162, %v4170
    %v4179 = vmax.f32 %v4163, %v4171
    %s4180 = sld [smem:[#allocation4 + $0x5]]
    %v4181 = vstv %s4180
    %v4182 = vmul.f32 %v4181, %v4172
    %v4183 = vmul.f32 %v4181, %v4173
    %v4184 = vmul.f32 %v4181, %v4174
    %v4185 = vmul.f32 %v4181, %v4175
    %v4186 = vmul.f32 %v4181, %v4176
    %v4187 = vmul.f32 %v4181, %v4177
    %v4188 = vmul.f32 %v4181, %v4178
    %v4189 = vmul.f32 %v4181, %v4179
    %v4190 = vadd.f32 %v4115, %v4182
    %v4191 = vadd.f32 %v4116, %v4183
    %v4192 = vadd.f32 %v4117, %v4184
    %v4193 = vadd.f32 %v4118, %v4185
    %v4194 = vadd.f32 %v4119, %v4186
    %v4195 = vadd.f32 %v4120, %v4187
    %v4196 = vadd.f32 %v4121, %v4188
    %v4197 = vadd.f32 %v4122, %v4189
    %4198 = vset.pattern.permute.xlu0 38
    %4199 = vperm.xlu0 %4198, %v3697
    %v4200 = vpop.permute.xlu0 %4199
    %4202 = vset.pattern.permute.xlu0 38
    %4203 = vperm.xlu0 %4202, %v3699
    %v4204 = vpop.permute.xlu0 %4203
    %4206 = vset.pattern.permute.xlu0 38
    %4207 = vperm.xlu0 %4206, %v3702
    %v4208 = vpop.permute.xlu0 %4207
    %4210 = vset.pattern.permute.xlu0 38
    %4211 = vperm.xlu0 %4210, %v3704
    %v4212 = vpop.permute.xlu0 %4211
    %4214 = vset.pattern.permute.xlu0 38
    %4215 = vperm.xlu0 %4214, %v3707
    %v4216 = vpop.permute.xlu0 %4215
    %4218 = vset.pattern.permute.xlu0 38
    %4219 = vperm.xlu0 %4218, %v3709
    %v4220 = vpop.permute.xlu0 %4219
    %4222 = vset.pattern.permute.xlu0 38
    %4223 = vperm.xlu0 %4222, %v3712
    %v4224 = vpop.permute.xlu0 %4223
    %4226 = vset.pattern.permute.xlu0 38
    %4227 = vperm.xlu0 %4226, %v3714
    %v4228 = vpop.permute.xlu0 %4227
    %v4230 = vperm.slane %v3732, 6
    %v4231 = vadd.f32 %v4200, %v4230
    %v4232 = vadd.f32 %v4204, %v4230
    %v4233 = vadd.f32 %v4208, %v4230
    %v4234 = vadd.f32 %v4212, %v4230
    %v4235 = vadd.f32 %v4216, %v4230
    %v4236 = vadd.f32 %v4220, %v4230
    %v4237 = vadd.f32 %v4224, %v4230
    %v4238 = vadd.f32 %v4228, %v4230
    %v4239 = vmul.f32 %v4231, 0.2
    %v4240 = vmul.f32 %v4232, 0.2
    %v4241 = vmul.f32 %v4233, 0.2
    %v4242 = vmul.f32 %v4234, 0.2
    %v4243 = vmul.f32 %v4235, 0.2
    %v4244 = vmul.f32 %v4236, 0.2
    %v4245 = vmul.f32 %v4237, 0.2
    %v4246 = vmul.f32 %v4238, 0.2
    %v4247 = vmax.f32 %v4231, %v4239
    %v4248 = vmax.f32 %v4232, %v4240
    %v4249 = vmax.f32 %v4233, %v4241
    %v4250 = vmax.f32 %v4234, %v4242
    %v4251 = vmax.f32 %v4235, %v4243
    %v4252 = vmax.f32 %v4236, %v4244
    %v4253 = vmax.f32 %v4237, %v4245
    %v4254 = vmax.f32 %v4238, %v4246
    %s4255 = sld [smem:[#allocation4 + $0x6]]
    %v4256 = vstv %s4255
    %v4257 = vmul.f32 %v4256, %v4247
    %v4258 = vmul.f32 %v4256, %v4248
    %v4259 = vmul.f32 %v4256, %v4249
    %v4260 = vmul.f32 %v4256, %v4250
    %v4261 = vmul.f32 %v4256, %v4251
    %v4262 = vmul.f32 %v4256, %v4252
    %v4263 = vmul.f32 %v4256, %v4253
    %v4264 = vmul.f32 %v4256, %v4254
    %v4265 = vadd.f32 %v4190, %v4257
    %v4266 = vadd.f32 %v4191, %v4258
    %v4267 = vadd.f32 %v4192, %v4259
    %v4268 = vadd.f32 %v4193, %v4260
    %v4269 = vadd.f32 %v4194, %v4261
    %v4270 = vadd.f32 %v4195, %v4262
    %v4271 = vadd.f32 %v4196, %v4263
    %v4272 = vadd.f32 %v4197, %v4264
    %4273 = vset.pattern.permute.xlu0 39
    %4274 = vperm.xlu0 %4273, %v3697
    %v4275 = vpop.permute.xlu0 %4274
    %4277 = vset.pattern.permute.xlu0 39
    %4278 = vperm.xlu0 %4277, %v3699
    %v4279 = vpop.permute.xlu0 %4278
    %4281 = vset.pattern.permute.xlu0 39
    %4282 = vperm.xlu0 %4281, %v3702
    %v4283 = vpop.permute.xlu0 %4282
    %4285 = vset.pattern.permute.xlu0 39
    %4286 = vperm.xlu0 %4285, %v3704
    %v4287 = vpop.permute.xlu0 %4286
    %4289 = vset.pattern.permute.xlu0 39
    %4290 = vperm.xlu0 %4289, %v3707
    %v4291 = vpop.permute.xlu0 %4290
    %4293 = vset.pattern.permute.xlu0 39
    %4294 = vperm.xlu0 %4293, %v3709
    %v4295 = vpop.permute.xlu0 %4294
    %4297 = vset.pattern.permute.xlu0 39
    %4298 = vperm.xlu0 %4297, %v3712
    %v4299 = vpop.permute.xlu0 %4298
    %4301 = vset.pattern.permute.xlu0 39
    %4302 = vperm.xlu0 %4301, %v3714
    %v4303 = vpop.permute.xlu0 %4302
    %v4305 = vperm.slane %v3732, 7
    %v4306 = vadd.f32 %v4275, %v4305
    %v4307 = vadd.f32 %v4279, %v4305
    %v4308 = vadd.f32 %v4283, %v4305
    %v4309 = vadd.f32 %v4287, %v4305
    %v4310 = vadd.f32 %v4291, %v4305
    %v4311 = vadd.f32 %v4295, %v4305
    %v4312 = vadd.f32 %v4299, %v4305
    %v4313 = vadd.f32 %v4303, %v4305
    %v4314 = vmul.f32 %v4306, 0.2
    %v4315 = vmul.f32 %v4307, 0.2
    %v4316 = vmul.f32 %v4308, 0.2
    %v4317 = vmul.f32 %v4309, 0.2
    %v4318 = vmul.f32 %v4310, 0.2
    %v4319 = vmul.f32 %v4311, 0.2
    %v4320 = vmul.f32 %v4312, 0.2
    %v4321 = vmul.f32 %v4313, 0.2
    %v4322 = vmax.f32 %v4306, %v4314
    %v4323 = vmax.f32 %v4307, %v4315
    %v4324 = vmax.f32 %v4308, %v4316
    %v4325 = vmax.f32 %v4309, %v4317
    %v4326 = vmax.f32 %v4310, %v4318
    %v4327 = vmax.f32 %v4311, %v4319
    %v4328 = vmax.f32 %v4312, %v4320
    %v4329 = vmax.f32 %v4313, %v4321
    %s4330 = sld [smem:[#allocation4 + $0x7]]
    %v4331 = vstv %s4330
    %v4332 = vmul.f32 %v4331, %v4322
    %v4333 = vmul.f32 %v4331, %v4323
    %v4334 = vmul.f32 %v4331, %v4324
    %v4335 = vmul.f32 %v4331, %v4325
    %v4336 = vmul.f32 %v4331, %v4326
    %v4337 = vmul.f32 %v4331, %v4327
    %v4338 = vmul.f32 %v4331, %v4328
    %v4339 = vmul.f32 %v4331, %v4329
    %v4340 = vadd.f32 %v4265, %v4332
    %v4341 = vadd.f32 %v4266, %v4333
    %v4342 = vadd.f32 %v4267, %v4334
    %v4343 = vadd.f32 %v4268, %v4335
    %v4344 = vadd.f32 %v4269, %v4336
    %v4345 = vadd.f32 %v4270, %v4337
    %v4346 = vadd.f32 %v4271, %v4338
    %v4347 = vadd.f32 %v4272, %v4339
    %v4348 = vadd.f32 %v4340, %v74
    %v4349 = vadd.f32 %v4341, %v75
    %v4350 = vadd.f32 %v4342, %v76
    %v4351 = vadd.f32 %v4343, %v77
    %v4352 = vadd.f32 %v4344, %v78
    %v4353 = vadd.f32 %v4345, %v79
    %v4354 = vadd.f32 %v4346, %v80
    %v4355 = vadd.f32 %v4347, %v81
    %v4356 = vsel %vm776, %v4348, -inf
    %4357 = vmax.xlane.f32.xlu0 %v4356
    %v4358 = vpop.xlane.xlu0 %4357
    %v4359 = vsel %vm776, %v4349, -inf
    %4360 = vmax.xlane.f32.xlu0 %v4359
    %v4361 = vpop.xlane.xlu0 %4360
    %v4362 = vsel %vm776, %v4350, -inf
    %4363 = vmax.xlane.f32.xlu0 %v4362
    %v4364 = vpop.xlane.xlu0 %4363
    %v4365 = vsel %vm776, %v4351, -inf
    %4366 = vmax.xlane.f32.xlu0 %v4365
    %v4367 = vpop.xlane.xlu0 %4366
    %v4368 = vsel %vm776, %v4352, -inf
    %4369 = vmax.xlane.f32.xlu0 %v4368
    %v4370 = vpop.xlane.xlu0 %4369
    %v4371 = vsel %vm776, %v4353, -inf
    %4372 = vmax.xlane.f32.xlu0 %v4371
    %v4373 = vpop.xlane.xlu0 %4372
    %v4374 = vsel %vm776, %v4354, -inf
    %4375 = vmax.xlane.f32.xlu0 %v4374
    %v4376 = vpop.xlane.xlu0 %4375
    %v4377 = vsel %vm776, %v4355, -inf
    %4378 = vmax.xlane.f32.xlu0 %v4377
    %v4379 = vpop.xlane.xlu0 %4378
    %v4380 = vsub.f32 %v4348, %v4358
    %v4381 = vsub.f32 %v4349, %v4361
    %v4382 = vsub.f32 %v4350, %v4364
    %v4383 = vsub.f32 %v4351, %v4367
    %v4384 = vsub.f32 %v4352, %v4370
    %v4385 = vsub.f32 %v4353, %v4373
    %v4386 = vsub.f32 %v4354, %v4376
    %v4387 = vsub.f32 %v4355, %v4379
    %v4388 = vmul.f32 %v4380, 1.442695
    %v4389 = vpow.pop %v4388
    %v4390 = vmul.f32 %v4381, 1.442695
    %v4391 = vpow.pop %v4390
    %v4392 = vmul.f32 %v4382, 1.442695
    %v4393 = vpow.pop %v4392
    %v4394 = vmul.f32 %v4383, 1.442695
    %v4395 = vpow.pop %v4394
    %v4396 = vmul.f32 %v4384, 1.442695
    %v4397 = vpow.pop %v4396
    %v4398 = vmul.f32 %v4385, 1.442695
    %v4399 = vpow.pop %v4398
    %v4400 = vmul.f32 %v4386, 1.442695
    %v4401 = vpow.pop %v4400
    %v4402 = vmul.f32 %v4387, 1.442695
    %v4403 = vpow.pop %v4402
    %v4404 = vsel %vm776, %v4389, 0.0
    %4405 = vadd.xlane.f32.xlu0 %v4404
    %v4406 = vpop.xlane.xlu0 %4405
    %v4407 = vsel %vm776, %v4391, 0.0
    %4408 = vadd.xlane.f32.xlu0 %v4407
    %v4409 = vpop.xlane.xlu0 %4408
    %v4410 = vsel %vm776, %v4393, 0.0
    %4411 = vadd.xlane.f32.xlu0 %v4410
    %v4412 = vpop.xlane.xlu0 %4411
    %v4413 = vsel %vm776, %v4395, 0.0
    %4414 = vadd.xlane.f32.xlu0 %v4413
    %v4415 = vpop.xlane.xlu0 %4414
    %v4416 = vsel %vm776, %v4397, 0.0
    %4417 = vadd.xlane.f32.xlu0 %v4416
    %v4418 = vpop.xlane.xlu0 %4417
    %v4419 = vsel %vm776, %v4399, 0.0
    %4420 = vadd.xlane.f32.xlu0 %v4419
    %v4421 = vpop.xlane.xlu0 %4420
    %v4422 = vsel %vm776, %v4401, 0.0
    %4423 = vadd.xlane.f32.xlu0 %v4422
    %v4424 = vpop.xlane.xlu0 %4423
    %v4425 = vsel %vm776, %v4403, 0.0
    %4426 = vadd.xlane.f32.xlu0 %v4425
    %v4427 = vpop.xlane.xlu0 %4426
    %v4428 = vmax.f32 %v4406, 1e-20
    %v4429 = vmax.f32 %v4409, 1e-20
    %v4430 = vmax.f32 %v4412, 1e-20
    %v4431 = vmax.f32 %v4415, 1e-20
    %v4432 = vmax.f32 %v4418, 1e-20
    %v4433 = vmax.f32 %v4421, 1e-20
    %v4434 = vmax.f32 %v4424, 1e-20
    %v4435 = vmax.f32 %v4427, 1e-20
    %v4436 = vrcp.pop %v4428
    %v4437 = vrcp.pop %v4429
    %v4438 = vrcp.pop %v4430
    %v4439 = vrcp.pop %v4431
    %v4440 = vrcp.pop %v4432
    %v4441 = vrcp.pop %v4433
    %v4442 = vrcp.pop %v4434
    %v4443 = vrcp.pop %v4435
    %v4444 = vmul.f32 %v4389, %v4436
    %v4445 = vmul.f32 %v4391, %v4437
    %v4446 = vmul.f32 %v4393, %v4438
    %v4447 = vmul.f32 %v4395, %v4439
    %v4448 = vmul.f32 %v4397, %v4440
    %v4449 = vmul.f32 %v4399, %v4441
    %v4450 = vmul.f32 %v4401, %v4442
    %v4451 = vmul.f32 %v4403, %v4443
    %v4453 = vsel %vm776, %v4444, 0
    %v4456 = vsel %vm776, %v4445, 0
    %v4459 = vsel %vm776, %v4446, 0
    %v4462 = vsel %vm776, %v4447, 0
    %v4465 = vsel %vm776, %v4448, 0
    %v4468 = vsel %vm776, %v4449, 0
    %v4471 = vsel %vm776, %v4450, 0
    %v4474 = vsel %vm776, %v4451, 0
    %4476 = vmatpush.msra.mxu0 0.0
    %4477 = vmatpush.msra.mxu0 0.0
    %4478 = vmatpush.msra.mxu0 0.0
    %4479 = vmatpush.msra.mxu0 0.0
    %4480 = vmatpush.msra.mxu0 0.0
    %4481 = vmatpush.msra.mxu0 0.0
    %4482 = vmatpush.msra.mxu0 0.0
    %4483 = vmatpush.msra.mxu0 0.0
    %4484 = vmatpush.msra.mxu0 %v3714
    %4485 = vmatpush.msra.mxu0 %v3712
    %4486 = vmatpush.msra.mxu0 %v3709
    %4487 = vmatpush.msra.mxu0 %v3707
    %4488 = vmatpush.msra.mxu0 %v3704
    %4489 = vmatpush.msra.mxu0 %v3702
    %4490 = vmatpush.msra.mxu0 %v3699
    %4491 = vmatpush.msra.mxu0 %v3697
    %4492 = vmatmul.f32.gmra.mxu0 %v4453
    %v4493 = vpop.f32.mrf.mxu0
    %v4494 = vadd.f32 0.0, %v4493
    %4495 = vmatmul.f32.gmra.mxu0 %v4456
    %v4496 = vpop.f32.mrf.mxu0
    %v4497 = vadd.f32 0.0, %v4496
    %4498 = vmatmul.f32.gmra.mxu0 %v4459
    %v4499 = vpop.f32.mrf.mxu0
    %v4500 = vadd.f32 0.0, %v4499
    %4501 = vmatmul.f32.gmra.mxu0 %v4462
    %v4502 = vpop.f32.mrf.mxu0
    %v4503 = vadd.f32 0.0, %v4502
    %4504 = vmatmul.f32.gmra.mxu0 %v4465
    %v4505 = vpop.f32.mrf.mxu0
    %v4506 = vadd.f32 0.0, %v4505
    %4507 = vmatmul.f32.gmra.mxu0 %v4468
    %v4508 = vpop.f32.mrf.mxu0
    %v4509 = vadd.f32 0.0, %v4508
    %4510 = vmatmul.f32.gmra.mxu0 %v4471
    %v4511 = vpop.f32.mrf.mxu0
    %v4512 = vadd.f32 0.0, %v4511
    %4513 = vmatmul.f32.gmra.mxu0 %v4474
    %v4514 = vpop.f32.mrf.mxu0
    %v4515 = vadd.f32 0.0, %v4514
    %4516 = vdwg.mxu0
    %4517 = vset.pattern.permute.xlu0 40
    %4518 = vperm.xlu0 %4517, %v3697
    %v4519 = vpop.permute.xlu0 %4518
    %4521 = vset.pattern.permute.xlu0 40
    %4522 = vperm.xlu0 %4521, %v3699
    %v4523 = vpop.permute.xlu0 %4522
    %4525 = vset.pattern.permute.xlu0 40
    %4526 = vperm.xlu0 %4525, %v3702
    %v4527 = vpop.permute.xlu0 %4526
    %4529 = vset.pattern.permute.xlu0 40
    %4530 = vperm.xlu0 %4529, %v3704
    %v4531 = vpop.permute.xlu0 %4530
    %4533 = vset.pattern.permute.xlu0 40
    %4534 = vperm.xlu0 %4533, %v3707
    %v4535 = vpop.permute.xlu0 %4534
    %4537 = vset.pattern.permute.xlu0 40
    %4538 = vperm.xlu0 %4537, %v3709
    %v4539 = vpop.permute.xlu0 %4538
    %4541 = vset.pattern.permute.xlu0 40
    %4542 = vperm.xlu0 %4541, %v3712
    %v4543 = vpop.permute.xlu0 %4542
    %4545 = vset.pattern.permute.xlu0 40
    %4546 = vperm.xlu0 %4545, %v3714
    %v4547 = vpop.permute.xlu0 %4546
    %v4549 = vperm.slane %v3733, 0
    %v4550 = vadd.f32 %v4519, %v4549
    %v4551 = vadd.f32 %v4523, %v4549
    %v4552 = vadd.f32 %v4527, %v4549
    %v4553 = vadd.f32 %v4531, %v4549
    %v4554 = vadd.f32 %v4535, %v4549
    %v4555 = vadd.f32 %v4539, %v4549
    %v4556 = vadd.f32 %v4543, %v4549
    %v4557 = vadd.f32 %v4547, %v4549
    %v4558 = vmul.f32 %v4550, 0.2
    %v4559 = vmul.f32 %v4551, 0.2
    %v4560 = vmul.f32 %v4552, 0.2
    %v4561 = vmul.f32 %v4553, 0.2
    %v4562 = vmul.f32 %v4554, 0.2
    %v4563 = vmul.f32 %v4555, 0.2
    %v4564 = vmul.f32 %v4556, 0.2
    %v4565 = vmul.f32 %v4557, 0.2
    %v4566 = vmax.f32 %v4550, %v4558
    %v4567 = vmax.f32 %v4551, %v4559
    %v4568 = vmax.f32 %v4552, %v4560
    %v4569 = vmax.f32 %v4553, %v4561
    %v4570 = vmax.f32 %v4554, %v4562
    %v4571 = vmax.f32 %v4555, %v4563
    %v4572 = vmax.f32 %v4556, %v4564
    %v4573 = vmax.f32 %v4557, %v4565
    %s4574 = sld [smem:[#allocation4 + $0x8]]
    %v4575 = vstv %s4574
    %v4576 = vmul.f32 %v4575, %v4566
    %v4577 = vmul.f32 %v4575, %v4567
    %v4578 = vmul.f32 %v4575, %v4568
    %v4579 = vmul.f32 %v4575, %v4569
    %v4580 = vmul.f32 %v4575, %v4570
    %v4581 = vmul.f32 %v4575, %v4571
    %v4582 = vmul.f32 %v4575, %v4572
    %v4583 = vmul.f32 %v4575, %v4573
    %4584 = vset.pattern.permute.xlu0 41
    %4585 = vperm.xlu0 %4584, %v3697
    %v4586 = vpop.permute.xlu0 %4585
    %4588 = vset.pattern.permute.xlu0 41
    %4589 = vperm.xlu0 %4588, %v3699
    %v4590 = vpop.permute.xlu0 %4589
    %4592 = vset.pattern.permute.xlu0 41
    %4593 = vperm.xlu0 %4592, %v3702
    %v4594 = vpop.permute.xlu0 %4593
    %4596 = vset.pattern.permute.xlu0 41
    %4597 = vperm.xlu0 %4596, %v3704
    %v4598 = vpop.permute.xlu0 %4597
    %4600 = vset.pattern.permute.xlu0 41
    %4601 = vperm.xlu0 %4600, %v3707
    %v4602 = vpop.permute.xlu0 %4601
    %4604 = vset.pattern.permute.xlu0 41
    %4605 = vperm.xlu0 %4604, %v3709
    %v4606 = vpop.permute.xlu0 %4605
    %4608 = vset.pattern.permute.xlu0 41
    %4609 = vperm.xlu0 %4608, %v3712
    %v4610 = vpop.permute.xlu0 %4609
    %4612 = vset.pattern.permute.xlu0 41
    %4613 = vperm.xlu0 %4612, %v3714
    %v4614 = vpop.permute.xlu0 %4613
    %v4616 = vperm.slane %v3733, 1
    %v4617 = vadd.f32 %v4586, %v4616
    %v4618 = vadd.f32 %v4590, %v4616
    %v4619 = vadd.f32 %v4594, %v4616
    %v4620 = vadd.f32 %v4598, %v4616
    %v4621 = vadd.f32 %v4602, %v4616
    %v4622 = vadd.f32 %v4606, %v4616
    %v4623 = vadd.f32 %v4610, %v4616
    %v4624 = vadd.f32 %v4614, %v4616
    %v4625 = vmul.f32 %v4617, 0.2
    %v4626 = vmul.f32 %v4618, 0.2
    %v4627 = vmul.f32 %v4619, 0.2
    %v4628 = vmul.f32 %v4620, 0.2
    %v4629 = vmul.f32 %v4621, 0.2
    %v4630 = vmul.f32 %v4622, 0.2
    %v4631 = vmul.f32 %v4623, 0.2
    %v4632 = vmul.f32 %v4624, 0.2
    %v4633 = vmax.f32 %v4617, %v4625
    %v4634 = vmax.f32 %v4618, %v4626
    %v4635 = vmax.f32 %v4619, %v4627
    %v4636 = vmax.f32 %v4620, %v4628
    %v4637 = vmax.f32 %v4621, %v4629
    %v4638 = vmax.f32 %v4622, %v4630
    %v4639 = vmax.f32 %v4623, %v4631
    %v4640 = vmax.f32 %v4624, %v4632
    %s4641 = sld [smem:[#allocation4 + $0x9]]
    %v4642 = vstv %s4641
    %v4643 = vmul.f32 %v4642, %v4633
    %v4644 = vmul.f32 %v4642, %v4634
    %v4645 = vmul.f32 %v4642, %v4635
    %v4646 = vmul.f32 %v4642, %v4636
    %v4647 = vmul.f32 %v4642, %v4637
    %v4648 = vmul.f32 %v4642, %v4638
    %v4649 = vmul.f32 %v4642, %v4639
    %v4650 = vmul.f32 %v4642, %v4640
    %v4651 = vadd.f32 %v4576, %v4643
    %v4652 = vadd.f32 %v4577, %v4644
    %v4653 = vadd.f32 %v4578, %v4645
    %v4654 = vadd.f32 %v4579, %v4646
    %v4655 = vadd.f32 %v4580, %v4647
    %v4656 = vadd.f32 %v4581, %v4648
    %v4657 = vadd.f32 %v4582, %v4649
    %v4658 = vadd.f32 %v4583, %v4650
    %4659 = vset.pattern.permute.xlu0 42
    %4660 = vperm.xlu0 %4659, %v3697
    %v4661 = vpop.permute.xlu0 %4660
    %4663 = vset.pattern.permute.xlu0 42
    %4664 = vperm.xlu0 %4663, %v3699
    %v4665 = vpop.permute.xlu0 %4664
    %4667 = vset.pattern.permute.xlu0 42
    %4668 = vperm.xlu0 %4667, %v3702
    %v4669 = vpop.permute.xlu0 %4668
    %4671 = vset.pattern.permute.xlu0 42
    %4672 = vperm.xlu0 %4671, %v3704
    %v4673 = vpop.permute.xlu0 %4672
    %4675 = vset.pattern.permute.xlu0 42
    %4676 = vperm.xlu0 %4675, %v3707
    %v4677 = vpop.permute.xlu0 %4676
    %4679 = vset.pattern.permute.xlu0 42
    %4680 = vperm.xlu0 %4679, %v3709
    %v4681 = vpop.permute.xlu0 %4680
    %4683 = vset.pattern.permute.xlu0 42
    %4684 = vperm.xlu0 %4683, %v3712
    %v4685 = vpop.permute.xlu0 %4684
    %4687 = vset.pattern.permute.xlu0 42
    %4688 = vperm.xlu0 %4687, %v3714
    %v4689 = vpop.permute.xlu0 %4688
    %v4691 = vperm.slane %v3733, 2
    %v4692 = vadd.f32 %v4661, %v4691
    %v4693 = vadd.f32 %v4665, %v4691
    %v4694 = vadd.f32 %v4669, %v4691
    %v4695 = vadd.f32 %v4673, %v4691
    %v4696 = vadd.f32 %v4677, %v4691
    %v4697 = vadd.f32 %v4681, %v4691
    %v4698 = vadd.f32 %v4685, %v4691
    %v4699 = vadd.f32 %v4689, %v4691
    %v4700 = vmul.f32 %v4692, 0.2
    %v4701 = vmul.f32 %v4693, 0.2
    %v4702 = vmul.f32 %v4694, 0.2
    %v4703 = vmul.f32 %v4695, 0.2
    %v4704 = vmul.f32 %v4696, 0.2
    %v4705 = vmul.f32 %v4697, 0.2
    %v4706 = vmul.f32 %v4698, 0.2
    %v4707 = vmul.f32 %v4699, 0.2
    %v4708 = vmax.f32 %v4692, %v4700
    %v4709 = vmax.f32 %v4693, %v4701
    %v4710 = vmax.f32 %v4694, %v4702
    %v4711 = vmax.f32 %v4695, %v4703
    %v4712 = vmax.f32 %v4696, %v4704
    %v4713 = vmax.f32 %v4697, %v4705
    %v4714 = vmax.f32 %v4698, %v4706
    %v4715 = vmax.f32 %v4699, %v4707
    %s4716 = sld [smem:[#allocation4 + $0xa]]
    %v4717 = vstv %s4716
    %v4718 = vmul.f32 %v4717, %v4708
    %v4719 = vmul.f32 %v4717, %v4709
    %v4720 = vmul.f32 %v4717, %v4710
    %v4721 = vmul.f32 %v4717, %v4711
    %v4722 = vmul.f32 %v4717, %v4712
    %v4723 = vmul.f32 %v4717, %v4713
    %v4724 = vmul.f32 %v4717, %v4714
    %v4725 = vmul.f32 %v4717, %v4715
    %v4726 = vadd.f32 %v4651, %v4718
    %v4727 = vadd.f32 %v4652, %v4719
    %v4728 = vadd.f32 %v4653, %v4720
    %v4729 = vadd.f32 %v4654, %v4721
    %v4730 = vadd.f32 %v4655, %v4722
    %v4731 = vadd.f32 %v4656, %v4723
    %v4732 = vadd.f32 %v4657, %v4724
    %v4733 = vadd.f32 %v4658, %v4725
    %4734 = vset.pattern.permute.xlu0 43
    %4735 = vperm.xlu0 %4734, %v3697
    %v4736 = vpop.permute.xlu0 %4735
    %4738 = vset.pattern.permute.xlu0 43
    %4739 = vperm.xlu0 %4738, %v3699
    %v4740 = vpop.permute.xlu0 %4739
    %4742 = vset.pattern.permute.xlu0 43
    %4743 = vperm.xlu0 %4742, %v3702
    %v4744 = vpop.permute.xlu0 %4743
    %4746 = vset.pattern.permute.xlu0 43
    %4747 = vperm.xlu0 %4746, %v3704
    %v4748 = vpop.permute.xlu0 %4747
    %4750 = vset.pattern.permute.xlu0 43
    %4751 = vperm.xlu0 %4750, %v3707
    %v4752 = vpop.permute.xlu0 %4751
    %4754 = vset.pattern.permute.xlu0 43
    %4755 = vperm.xlu0 %4754, %v3709
    %v4756 = vpop.permute.xlu0 %4755
    %4758 = vset.pattern.permute.xlu0 43
    %4759 = vperm.xlu0 %4758, %v3712
    %v4760 = vpop.permute.xlu0 %4759
    %4762 = vset.pattern.permute.xlu0 43
    %4763 = vperm.xlu0 %4762, %v3714
    %v4764 = vpop.permute.xlu0 %4763
    %v4766 = vperm.slane %v3733, 3
    %v4767 = vadd.f32 %v4736, %v4766
    %v4768 = vadd.f32 %v4740, %v4766
    %v4769 = vadd.f32 %v4744, %v4766
    %v4770 = vadd.f32 %v4748, %v4766
    %v4771 = vadd.f32 %v4752, %v4766
    %v4772 = vadd.f32 %v4756, %v4766
    %v4773 = vadd.f32 %v4760, %v4766
    %v4774 = vadd.f32 %v4764, %v4766
    %v4775 = vmul.f32 %v4767, 0.2
    %v4776 = vmul.f32 %v4768, 0.2
    %v4777 = vmul.f32 %v4769, 0.2
    %v4778 = vmul.f32 %v4770, 0.2
    %v4779 = vmul.f32 %v4771, 0.2
    %v4780 = vmul.f32 %v4772, 0.2
    %v4781 = vmul.f32 %v4773, 0.2
    %v4782 = vmul.f32 %v4774, 0.2
    %v4783 = vmax.f32 %v4767, %v4775
    %v4784 = vmax.f32 %v4768, %v4776
    %v4785 = vmax.f32 %v4769, %v4777
    %v4786 = vmax.f32 %v4770, %v4778
    %v4787 = vmax.f32 %v4771, %v4779
    %v4788 = vmax.f32 %v4772, %v4780
    %v4789 = vmax.f32 %v4773, %v4781
    %v4790 = vmax.f32 %v4774, %v4782
    %s4791 = sld [smem:[#allocation4 + $0xb]]
    %v4792 = vstv %s4791
    %v4793 = vmul.f32 %v4792, %v4783
    %v4794 = vmul.f32 %v4792, %v4784
    %v4795 = vmul.f32 %v4792, %v4785
    %v4796 = vmul.f32 %v4792, %v4786
    %v4797 = vmul.f32 %v4792, %v4787
    %v4798 = vmul.f32 %v4792, %v4788
    %v4799 = vmul.f32 %v4792, %v4789
    %v4800 = vmul.f32 %v4792, %v4790
    %v4801 = vadd.f32 %v4726, %v4793
    %v4802 = vadd.f32 %v4727, %v4794
    %v4803 = vadd.f32 %v4728, %v4795
    %v4804 = vadd.f32 %v4729, %v4796
    %v4805 = vadd.f32 %v4730, %v4797
    %v4806 = vadd.f32 %v4731, %v4798
    %v4807 = vadd.f32 %v4732, %v4799
    %v4808 = vadd.f32 %v4733, %v4800
    %4809 = vset.pattern.permute.xlu0 44
    %4810 = vperm.xlu0 %4809, %v3697
    %v4811 = vpop.permute.xlu0 %4810
    %4813 = vset.pattern.permute.xlu0 44
    %4814 = vperm.xlu0 %4813, %v3699
    %v4815 = vpop.permute.xlu0 %4814
    %4817 = vset.pattern.permute.xlu0 44
    %4818 = vperm.xlu0 %4817, %v3702
    %v4819 = vpop.permute.xlu0 %4818
    %4821 = vset.pattern.permute.xlu0 44
    %4822 = vperm.xlu0 %4821, %v3704
    %v4823 = vpop.permute.xlu0 %4822
    %4825 = vset.pattern.permute.xlu0 44
    %4826 = vperm.xlu0 %4825, %v3707
    %v4827 = vpop.permute.xlu0 %4826
    %4829 = vset.pattern.permute.xlu0 44
    %4830 = vperm.xlu0 %4829, %v3709
    %v4831 = vpop.permute.xlu0 %4830
    %4833 = vset.pattern.permute.xlu0 44
    %4834 = vperm.xlu0 %4833, %v3712
    %v4835 = vpop.permute.xlu0 %4834
    %4837 = vset.pattern.permute.xlu0 44
    %4838 = vperm.xlu0 %4837, %v3714
    %v4839 = vpop.permute.xlu0 %4838
    %v4841 = vperm.slane %v3733, 4
    %v4842 = vadd.f32 %v4811, %v4841
    %v4843 = vadd.f32 %v4815, %v4841
    %v4844 = vadd.f32 %v4819, %v4841
    %v4845 = vadd.f32 %v4823, %v4841
    %v4846 = vadd.f32 %v4827, %v4841
    %v4847 = vadd.f32 %v4831, %v4841
    %v4848 = vadd.f32 %v4835, %v4841
    %v4849 = vadd.f32 %v4839, %v4841
    %v4850 = vmul.f32 %v4842, 0.2
    %v4851 = vmul.f32 %v4843, 0.2
    %v4852 = vmul.f32 %v4844, 0.2
    %v4853 = vmul.f32 %v4845, 0.2
    %v4854 = vmul.f32 %v4846, 0.2
    %v4855 = vmul.f32 %v4847, 0.2
    %v4856 = vmul.f32 %v4848, 0.2
    %v4857 = vmul.f32 %v4849, 0.2
    %v4858 = vmax.f32 %v4842, %v4850
    %v4859 = vmax.f32 %v4843, %v4851
    %v4860 = vmax.f32 %v4844, %v4852
    %v4861 = vmax.f32 %v4845, %v4853
    %v4862 = vmax.f32 %v4846, %v4854
    %v4863 = vmax.f32 %v4847, %v4855
    %v4864 = vmax.f32 %v4848, %v4856
    %v4865 = vmax.f32 %v4849, %v4857
    %s4866 = sld [smem:[#allocation4 + $0xc]]
    %v4867 = vstv %s4866
    %v4868 = vmul.f32 %v4867, %v4858
    %v4869 = vmul.f32 %v4867, %v4859
    %v4870 = vmul.f32 %v4867, %v4860
    %v4871 = vmul.f32 %v4867, %v4861
    %v4872 = vmul.f32 %v4867, %v4862
    %v4873 = vmul.f32 %v4867, %v4863
    %v4874 = vmul.f32 %v4867, %v4864
    %v4875 = vmul.f32 %v4867, %v4865
    %v4876 = vadd.f32 %v4801, %v4868
    %v4877 = vadd.f32 %v4802, %v4869
    %v4878 = vadd.f32 %v4803, %v4870
    %v4879 = vadd.f32 %v4804, %v4871
    %v4880 = vadd.f32 %v4805, %v4872
    %v4881 = vadd.f32 %v4806, %v4873
    %v4882 = vadd.f32 %v4807, %v4874
    %v4883 = vadd.f32 %v4808, %v4875
    %4884 = vset.pattern.permute.xlu0 45
    %4885 = vperm.xlu0 %4884, %v3697
    %v4886 = vpop.permute.xlu0 %4885
    %4888 = vset.pattern.permute.xlu0 45
    %4889 = vperm.xlu0 %4888, %v3699
    %v4890 = vpop.permute.xlu0 %4889
    %4892 = vset.pattern.permute.xlu0 45
    %4893 = vperm.xlu0 %4892, %v3702
    %v4894 = vpop.permute.xlu0 %4893
    %4896 = vset.pattern.permute.xlu0 45
    %4897 = vperm.xlu0 %4896, %v3704
    %v4898 = vpop.permute.xlu0 %4897
    %4900 = vset.pattern.permute.xlu0 45
    %4901 = vperm.xlu0 %4900, %v3707
    %v4902 = vpop.permute.xlu0 %4901
    %4904 = vset.pattern.permute.xlu0 45
    %4905 = vperm.xlu0 %4904, %v3709
    %v4906 = vpop.permute.xlu0 %4905
    %4908 = vset.pattern.permute.xlu0 45
    %4909 = vperm.xlu0 %4908, %v3712
    %v4910 = vpop.permute.xlu0 %4909
    %4912 = vset.pattern.permute.xlu0 45
    %4913 = vperm.xlu0 %4912, %v3714
    %v4914 = vpop.permute.xlu0 %4913
    %v4916 = vperm.slane %v3733, 5
    %v4917 = vadd.f32 %v4886, %v4916
    %v4918 = vadd.f32 %v4890, %v4916
    %v4919 = vadd.f32 %v4894, %v4916
    %v4920 = vadd.f32 %v4898, %v4916
    %v4921 = vadd.f32 %v4902, %v4916
    %v4922 = vadd.f32 %v4906, %v4916
    %v4923 = vadd.f32 %v4910, %v4916
    %v4924 = vadd.f32 %v4914, %v4916
    %v4925 = vmul.f32 %v4917, 0.2
    %v4926 = vmul.f32 %v4918, 0.2
    %v4927 = vmul.f32 %v4919, 0.2
    %v4928 = vmul.f32 %v4920, 0.2
    %v4929 = vmul.f32 %v4921, 0.2
    %v4930 = vmul.f32 %v4922, 0.2
    %v4931 = vmul.f32 %v4923, 0.2
    %v4932 = vmul.f32 %v4924, 0.2
    %v4933 = vmax.f32 %v4917, %v4925
    %v4934 = vmax.f32 %v4918, %v4926
    %v4935 = vmax.f32 %v4919, %v4927
    %v4936 = vmax.f32 %v4920, %v4928
    %v4937 = vmax.f32 %v4921, %v4929
    %v4938 = vmax.f32 %v4922, %v4930
    %v4939 = vmax.f32 %v4923, %v4931
    %v4940 = vmax.f32 %v4924, %v4932
    %s4941 = sld [smem:[#allocation4 + $0xd]]
    %v4942 = vstv %s4941
    %v4943 = vmul.f32 %v4942, %v4933
    %v4944 = vmul.f32 %v4942, %v4934
    %v4945 = vmul.f32 %v4942, %v4935
    %v4946 = vmul.f32 %v4942, %v4936
    %v4947 = vmul.f32 %v4942, %v4937
    %v4948 = vmul.f32 %v4942, %v4938
    %v4949 = vmul.f32 %v4942, %v4939
    %v4950 = vmul.f32 %v4942, %v4940
    %v4951 = vadd.f32 %v4876, %v4943
    %v4952 = vadd.f32 %v4877, %v4944
    %v4953 = vadd.f32 %v4878, %v4945
    %v4954 = vadd.f32 %v4879, %v4946
    %v4955 = vadd.f32 %v4880, %v4947
    %v4956 = vadd.f32 %v4881, %v4948
    %v4957 = vadd.f32 %v4882, %v4949
    %v4958 = vadd.f32 %v4883, %v4950
    %4959 = vset.pattern.permute.xlu0 46
    %4960 = vperm.xlu0 %4959, %v3697
    %v4961 = vpop.permute.xlu0 %4960
    %4963 = vset.pattern.permute.xlu0 46
    %4964 = vperm.xlu0 %4963, %v3699
    %v4965 = vpop.permute.xlu0 %4964
    %4967 = vset.pattern.permute.xlu0 46
    %4968 = vperm.xlu0 %4967, %v3702
    %v4969 = vpop.permute.xlu0 %4968
    %4971 = vset.pattern.permute.xlu0 46
    %4972 = vperm.xlu0 %4971, %v3704
    %v4973 = vpop.permute.xlu0 %4972
    %4975 = vset.pattern.permute.xlu0 46
    %4976 = vperm.xlu0 %4975, %v3707
    %v4977 = vpop.permute.xlu0 %4976
    %4979 = vset.pattern.permute.xlu0 46
    %4980 = vperm.xlu0 %4979, %v3709
    %v4981 = vpop.permute.xlu0 %4980
    %4983 = vset.pattern.permute.xlu0 46
    %4984 = vperm.xlu0 %4983, %v3712
    %v4985 = vpop.permute.xlu0 %4984
    %4987 = vset.pattern.permute.xlu0 46
    %4988 = vperm.xlu0 %4987, %v3714
    %v4989 = vpop.permute.xlu0 %4988
    %v4991 = vperm.slane %v3733, 6
    %v4992 = vadd.f32 %v4961, %v4991
    %v4993 = vadd.f32 %v4965, %v4991
    %v4994 = vadd.f32 %v4969, %v4991
    %v4995 = vadd.f32 %v4973, %v4991
    %v4996 = vadd.f32 %v4977, %v4991
    %v4997 = vadd.f32 %v4981, %v4991
    %v4998 = vadd.f32 %v4985, %v4991
    %v4999 = vadd.f32 %v4989, %v4991
    %v5000 = vmul.f32 %v4992, 0.2
    %v5001 = vmul.f32 %v4993, 0.2
    %v5002 = vmul.f32 %v4994, 0.2
    %v5003 = vmul.f32 %v4995, 0.2
    %v5004 = vmul.f32 %v4996, 0.2
    %v5005 = vmul.f32 %v4997, 0.2
    %v5006 = vmul.f32 %v4998, 0.2
    %v5007 = vmul.f32 %v4999, 0.2
    %v5008 = vmax.f32 %v4992, %v5000
    %v5009 = vmax.f32 %v4993, %v5001
    %v5010 = vmax.f32 %v4994, %v5002
    %v5011 = vmax.f32 %v4995, %v5003
    %v5012 = vmax.f32 %v4996, %v5004
    %v5013 = vmax.f32 %v4997, %v5005
    %v5014 = vmax.f32 %v4998, %v5006
    %v5015 = vmax.f32 %v4999, %v5007
    %s5016 = sld [smem:[#allocation4 + $0xe]]
    %v5017 = vstv %s5016
    %v5018 = vmul.f32 %v5017, %v5008
    %v5019 = vmul.f32 %v5017, %v5009
    %v5020 = vmul.f32 %v5017, %v5010
    %v5021 = vmul.f32 %v5017, %v5011
    %v5022 = vmul.f32 %v5017, %v5012
    %v5023 = vmul.f32 %v5017, %v5013
    %v5024 = vmul.f32 %v5017, %v5014
    %v5025 = vmul.f32 %v5017, %v5015
    %v5026 = vadd.f32 %v4951, %v5018
    %v5027 = vadd.f32 %v4952, %v5019
    %v5028 = vadd.f32 %v4953, %v5020
    %v5029 = vadd.f32 %v4954, %v5021
    %v5030 = vadd.f32 %v4955, %v5022
    %v5031 = vadd.f32 %v4956, %v5023
    %v5032 = vadd.f32 %v4957, %v5024
    %v5033 = vadd.f32 %v4958, %v5025
    %5034 = vset.pattern.permute.xlu0 47
    %5035 = vperm.xlu0 %5034, %v3697
    %v5036 = vpop.permute.xlu0 %5035
    %5038 = vset.pattern.permute.xlu0 47
    %5039 = vperm.xlu0 %5038, %v3699
    %v5040 = vpop.permute.xlu0 %5039
    %5042 = vset.pattern.permute.xlu0 47
    %5043 = vperm.xlu0 %5042, %v3702
    %v5044 = vpop.permute.xlu0 %5043
    %5046 = vset.pattern.permute.xlu0 47
    %5047 = vperm.xlu0 %5046, %v3704
    %v5048 = vpop.permute.xlu0 %5047
    %5050 = vset.pattern.permute.xlu0 47
    %5051 = vperm.xlu0 %5050, %v3707
    %v5052 = vpop.permute.xlu0 %5051
    %5054 = vset.pattern.permute.xlu0 47
    %5055 = vperm.xlu0 %5054, %v3709
    %v5056 = vpop.permute.xlu0 %5055
    %5058 = vset.pattern.permute.xlu0 47
    %5059 = vperm.xlu0 %5058, %v3712
    %v5060 = vpop.permute.xlu0 %5059
    %5062 = vset.pattern.permute.xlu0 47
    %5063 = vperm.xlu0 %5062, %v3714
    %v5064 = vpop.permute.xlu0 %5063
    %v5066 = vperm.slane %v3733, 7
    %v5067 = vadd.f32 %v5036, %v5066
    %v5068 = vadd.f32 %v5040, %v5066
    %v5069 = vadd.f32 %v5044, %v5066
    %v5070 = vadd.f32 %v5048, %v5066
    %v5071 = vadd.f32 %v5052, %v5066
    %v5072 = vadd.f32 %v5056, %v5066
    %v5073 = vadd.f32 %v5060, %v5066
    %v5074 = vadd.f32 %v5064, %v5066
    %v5075 = vmul.f32 %v5067, 0.2
    %v5076 = vmul.f32 %v5068, 0.2
    %v5077 = vmul.f32 %v5069, 0.2
    %v5078 = vmul.f32 %v5070, 0.2
    %v5079 = vmul.f32 %v5071, 0.2
    %v5080 = vmul.f32 %v5072, 0.2
    %v5081 = vmul.f32 %v5073, 0.2
    %v5082 = vmul.f32 %v5074, 0.2
    %v5083 = vmax.f32 %v5067, %v5075
    %v5084 = vmax.f32 %v5068, %v5076
    %v5085 = vmax.f32 %v5069, %v5077
    %v5086 = vmax.f32 %v5070, %v5078
    %v5087 = vmax.f32 %v5071, %v5079
    %v5088 = vmax.f32 %v5072, %v5080
    %v5089 = vmax.f32 %v5073, %v5081
    %v5090 = vmax.f32 %v5074, %v5082
    %s5091 = sld [smem:[#allocation4 + $0xf]]
    %v5092 = vstv %s5091
    %v5093 = vmul.f32 %v5092, %v5083
    %v5094 = vmul.f32 %v5092, %v5084
    %v5095 = vmul.f32 %v5092, %v5085
    %v5096 = vmul.f32 %v5092, %v5086
    %v5097 = vmul.f32 %v5092, %v5087
    %v5098 = vmul.f32 %v5092, %v5088
    %v5099 = vmul.f32 %v5092, %v5089
    %v5100 = vmul.f32 %v5092, %v5090
    %v5101 = vadd.f32 %v5026, %v5093
    %v5102 = vadd.f32 %v5027, %v5094
    %v5103 = vadd.f32 %v5028, %v5095
    %v5104 = vadd.f32 %v5029, %v5096
    %v5105 = vadd.f32 %v5030, %v5097
    %v5106 = vadd.f32 %v5031, %v5098
    %v5107 = vadd.f32 %v5032, %v5099
    %v5108 = vadd.f32 %v5033, %v5100
    %v5109 = vadd.f32 %v5101, %v74
    %v5110 = vadd.f32 %v5102, %v75
    %v5111 = vadd.f32 %v5103, %v76
    %v5112 = vadd.f32 %v5104, %v77
    %v5113 = vadd.f32 %v5105, %v78
    %v5114 = vadd.f32 %v5106, %v79
    %v5115 = vadd.f32 %v5107, %v80
    %v5116 = vadd.f32 %v5108, %v81
    %v5117 = vsel %vm776, %v5109, -inf
    %5118 = vmax.xlane.f32.xlu0 %v5117
    %v5119 = vpop.xlane.xlu0 %5118
    %v5120 = vsel %vm776, %v5110, -inf
    %5121 = vmax.xlane.f32.xlu0 %v5120
    %v5122 = vpop.xlane.xlu0 %5121
    %v5123 = vsel %vm776, %v5111, -inf
    %5124 = vmax.xlane.f32.xlu0 %v5123
    %v5125 = vpop.xlane.xlu0 %5124
    %v5126 = vsel %vm776, %v5112, -inf
    %5127 = vmax.xlane.f32.xlu0 %v5126
    %v5128 = vpop.xlane.xlu0 %5127
    %v5129 = vsel %vm776, %v5113, -inf
    %5130 = vmax.xlane.f32.xlu0 %v5129
    %v5131 = vpop.xlane.xlu0 %5130
    %v5132 = vsel %vm776, %v5114, -inf
    %5133 = vmax.xlane.f32.xlu0 %v5132
    %v5134 = vpop.xlane.xlu0 %5133
    %v5135 = vsel %vm776, %v5115, -inf
    %5136 = vmax.xlane.f32.xlu0 %v5135
    %v5137 = vpop.xlane.xlu0 %5136
    %v5138 = vsel %vm776, %v5116, -inf
    %5139 = vmax.xlane.f32.xlu0 %v5138
    %v5140 = vpop.xlane.xlu0 %5139
    %v5141 = vsub.f32 %v5109, %v5119
    %v5142 = vsub.f32 %v5110, %v5122
    %v5143 = vsub.f32 %v5111, %v5125
    %v5144 = vsub.f32 %v5112, %v5128
    %v5145 = vsub.f32 %v5113, %v5131
    %v5146 = vsub.f32 %v5114, %v5134
    %v5147 = vsub.f32 %v5115, %v5137
    %v5148 = vsub.f32 %v5116, %v5140
    %v5149 = vmul.f32 %v5141, 1.442695
    %v5150 = vpow.pop %v5149
    %v5151 = vmul.f32 %v5142, 1.442695
    %v5152 = vpow.pop %v5151
    %v5153 = vmul.f32 %v5143, 1.442695
    %v5154 = vpow.pop %v5153
    %v5155 = vmul.f32 %v5144, 1.442695
    %v5156 = vpow.pop %v5155
    %v5157 = vmul.f32 %v5145, 1.442695
    %v5158 = vpow.pop %v5157
    %v5159 = vmul.f32 %v5146, 1.442695
    %v5160 = vpow.pop %v5159
    %v5161 = vmul.f32 %v5147, 1.442695
    %v5162 = vpow.pop %v5161
    %v5163 = vmul.f32 %v5148, 1.442695
    %v5164 = vpow.pop %v5163
    %v5165 = vsel %vm776, %v5150, 0.0
    %5166 = vadd.xlane.f32.xlu0 %v5165
    %v5167 = vpop.xlane.xlu0 %5166
    %v5168 = vsel %vm776, %v5152, 0.0
    %5169 = vadd.xlane.f32.xlu0 %v5168
    %v5170 = vpop.xlane.xlu0 %5169
    %v5171 = vsel %vm776, %v5154, 0.0
    %5172 = vadd.xlane.f32.xlu0 %v5171
    %v5173 = vpop.xlane.xlu0 %5172
    %v5174 = vsel %vm776, %v5156, 0.0
    %5175 = vadd.xlane.f32.xlu0 %v5174
    %v5176 = vpop.xlane.xlu0 %5175
    %v5177 = vsel %vm776, %v5158, 0.0
    %5178 = vadd.xlane.f32.xlu0 %v5177
    %v5179 = vpop.xlane.xlu0 %5178
    %v5180 = vsel %vm776, %v5160, 0.0
    %5181 = vadd.xlane.f32.xlu0 %v5180
    %v5182 = vpop.xlane.xlu0 %5181
    %v5183 = vsel %vm776, %v5162, 0.0
    %5184 = vadd.xlane.f32.xlu0 %v5183
    %v5185 = vpop.xlane.xlu0 %5184
    %v5186 = vsel %vm776, %v5164, 0.0
    %5187 = vadd.xlane.f32.xlu0 %v5186
    %v5188 = vpop.xlane.xlu0 %5187
    %v5189 = vmax.f32 %v5167, 1e-20
    %v5190 = vmax.f32 %v5170, 1e-20
    %v5191 = vmax.f32 %v5173, 1e-20
    %v5192 = vmax.f32 %v5176, 1e-20
    %v5193 = vmax.f32 %v5179, 1e-20
    %v5194 = vmax.f32 %v5182, 1e-20
    %v5195 = vmax.f32 %v5185, 1e-20
    %v5196 = vmax.f32 %v5188, 1e-20
    %v5197 = vrcp.pop %v5189
    %v5198 = vrcp.pop %v5190
    %v5199 = vrcp.pop %v5191
    %v5200 = vrcp.pop %v5192
    %v5201 = vrcp.pop %v5193
    %v5202 = vrcp.pop %v5194
    %v5203 = vrcp.pop %v5195
    %v5204 = vrcp.pop %v5196
    %v5205 = vmul.f32 %v5150, %v5197
    %v5206 = vmul.f32 %v5152, %v5198
    %v5207 = vmul.f32 %v5154, %v5199
    %v5208 = vmul.f32 %v5156, %v5200
    %v5209 = vmul.f32 %v5158, %v5201
    %v5210 = vmul.f32 %v5160, %v5202
    %v5211 = vmul.f32 %v5162, %v5203
    %v5212 = vmul.f32 %v5164, %v5204
    %5213 = vrot.lane.b32.xlu0 %v3697, 120
    %v5214 = vpop.permute.xlu0 %5213
    %5215 = vrot.lane.b32.xlu0 %v3699, 120
    %v5216 = vpop.permute.xlu0 %5215
    %5217 = vrot.lane.b32.xlu0 %v3702, 120
    %v5218 = vpop.permute.xlu0 %5217
    %5219 = vrot.lane.b32.xlu0 %v3704, 120
    %v5220 = vpop.permute.xlu0 %5219
    %5221 = vrot.lane.b32.xlu0 %v3707, 120
    %v5222 = vpop.permute.xlu0 %5221
    %5223 = vrot.lane.b32.xlu0 %v3709, 120
    %v5224 = vpop.permute.xlu0 %5223
    %5225 = vrot.lane.b32.xlu0 %v3712, 120
    %v5226 = vpop.permute.xlu0 %5225
    %5227 = vrot.lane.b32.xlu0 %v3714, 120
    %v5228 = vpop.permute.xlu0 %5227
    %v5238 = vsel %vm776, %v5205, 0
    %v5241 = vsel %vm776, %v5206, 0
    %v5244 = vsel %vm776, %v5207, 0
    %v5247 = vsel %vm776, %v5208, 0
    %v5250 = vsel %vm776, %v5209, 0
    %v5253 = vsel %vm776, %v5210, 0
    %v5256 = vsel %vm776, %v5211, 0
    %v5259 = vsel %vm776, %v5212, 0
    %5261 = vmatpush.msra.mxu0 0.0
    %5262 = vmatpush.msra.mxu0 0.0
    %5263 = vmatpush.msra.mxu0 0.0
    %5264 = vmatpush.msra.mxu0 0.0
    %5265 = vmatpush.msra.mxu0 0.0
    %5266 = vmatpush.msra.mxu0 0.0
    %5267 = vmatpush.msra.mxu0 0.0
    %5268 = vmatpush.msra.mxu0 0.0
    %5269 = vmatpush.msra.mxu0 %v5228
    %5270 = vmatpush.msra.mxu0 %v5226
    %5271 = vmatpush.msra.mxu0 %v5224
    %5272 = vmatpush.msra.mxu0 %v5222
    %5273 = vmatpush.msra.mxu0 %v5220
    %5274 = vmatpush.msra.mxu0 %v5218
    %5275 = vmatpush.msra.mxu0 %v5216
    %5276 = vmatpush.msra.mxu0 %v5214
    %5277 = vmatmul.f32.gmra.mxu0 %v5238
    %v5278 = vpop.f32.mrf.mxu0
    %v5279 = vadd.f32 0.0, %v5278
    %5280 = vmatmul.f32.gmra.mxu0 %v5241
    %v5281 = vpop.f32.mrf.mxu0
    %v5282 = vadd.f32 0.0, %v5281
    %5283 = vmatmul.f32.gmra.mxu0 %v5244
    %v5284 = vpop.f32.mrf.mxu0
    %v5285 = vadd.f32 0.0, %v5284
    %5286 = vmatmul.f32.gmra.mxu0 %v5247
    %v5287 = vpop.f32.mrf.mxu0
    %v5288 = vadd.f32 0.0, %v5287
    %5289 = vmatmul.f32.gmra.mxu0 %v5250
    %v5290 = vpop.f32.mrf.mxu0
    %v5291 = vadd.f32 0.0, %v5290
    %5292 = vmatmul.f32.gmra.mxu0 %v5253
    %v5293 = vpop.f32.mrf.mxu0
    %v5294 = vadd.f32 0.0, %v5293
    %5295 = vmatmul.f32.gmra.mxu0 %v5256
    %v5296 = vpop.f32.mrf.mxu0
    %v5297 = vadd.f32 0.0, %v5296
    %5298 = vmatmul.f32.gmra.mxu0 %v5259
    %v5299 = vpop.f32.mrf.mxu0
    %v5300 = vadd.f32 0.0, %v5299
    %5301 = vdwg.mxu0
    %5302 = vset.pattern.permute.xlu0 48
    %5303 = vperm.xlu0 %5302, %v3697
    %v5304 = vpop.permute.xlu0 %5303
    %5306 = vset.pattern.permute.xlu0 48
    %5307 = vperm.xlu0 %5306, %v3699
    %v5308 = vpop.permute.xlu0 %5307
    %5310 = vset.pattern.permute.xlu0 48
    %5311 = vperm.xlu0 %5310, %v3702
    %v5312 = vpop.permute.xlu0 %5311
    %5314 = vset.pattern.permute.xlu0 48
    %5315 = vperm.xlu0 %5314, %v3704
    %v5316 = vpop.permute.xlu0 %5315
    %5318 = vset.pattern.permute.xlu0 48
    %5319 = vperm.xlu0 %5318, %v3707
    %v5320 = vpop.permute.xlu0 %5319
    %5322 = vset.pattern.permute.xlu0 48
    %5323 = vperm.xlu0 %5322, %v3709
    %v5324 = vpop.permute.xlu0 %5323
    %5326 = vset.pattern.permute.xlu0 48
    %5327 = vperm.xlu0 %5326, %v3712
    %v5328 = vpop.permute.xlu0 %5327
    %5330 = vset.pattern.permute.xlu0 48
    %5331 = vperm.xlu0 %5330, %v3714
    %v5332 = vpop.permute.xlu0 %5331
    %v5334 = vperm.slane %v3734, 0
    %v5335 = vadd.f32 %v5304, %v5334
    %v5336 = vadd.f32 %v5308, %v5334
    %v5337 = vadd.f32 %v5312, %v5334
    %v5338 = vadd.f32 %v5316, %v5334
    %v5339 = vadd.f32 %v5320, %v5334
    %v5340 = vadd.f32 %v5324, %v5334
    %v5341 = vadd.f32 %v5328, %v5334
    %v5342 = vadd.f32 %v5332, %v5334
    %v5343 = vmul.f32 %v5335, 0.2
    %v5344 = vmul.f32 %v5336, 0.2
    %v5345 = vmul.f32 %v5337, 0.2
    %v5346 = vmul.f32 %v5338, 0.2
    %v5347 = vmul.f32 %v5339, 0.2
    %v5348 = vmul.f32 %v5340, 0.2
    %v5349 = vmul.f32 %v5341, 0.2
    %v5350 = vmul.f32 %v5342, 0.2
    %v5351 = vmax.f32 %v5335, %v5343
    %v5352 = vmax.f32 %v5336, %v5344
    %v5353 = vmax.f32 %v5337, %v5345
    %v5354 = vmax.f32 %v5338, %v5346
    %v5355 = vmax.f32 %v5339, %v5347
    %v5356 = vmax.f32 %v5340, %v5348
    %v5357 = vmax.f32 %v5341, %v5349
    %v5358 = vmax.f32 %v5342, %v5350
    %s5359 = sld [smem:[#allocation4 + $0x10]]
    %v5360 = vstv %s5359
    %v5361 = vmul.f32 %v5360, %v5351
    %v5362 = vmul.f32 %v5360, %v5352
    %v5363 = vmul.f32 %v5360, %v5353
    %v5364 = vmul.f32 %v5360, %v5354
    %v5365 = vmul.f32 %v5360, %v5355
    %v5366 = vmul.f32 %v5360, %v5356
    %v5367 = vmul.f32 %v5360, %v5357
    %v5368 = vmul.f32 %v5360, %v5358
    %5369 = vset.pattern.permute.xlu0 49
    %5370 = vperm.xlu0 %5369, %v3697
    %v5371 = vpop.permute.xlu0 %5370
    %5373 = vset.pattern.permute.xlu0 49
    %5374 = vperm.xlu0 %5373, %v3699
    %v5375 = vpop.permute.xlu0 %5374
    %5377 = vset.pattern.permute.xlu0 49
    %5378 = vperm.xlu0 %5377, %v3702
    %v5379 = vpop.permute.xlu0 %5378
    %5381 = vset.pattern.permute.xlu0 49
    %5382 = vperm.xlu0 %5381, %v3704
    %v5383 = vpop.permute.xlu0 %5382
    %5385 = vset.pattern.permute.xlu0 49
    %5386 = vperm.xlu0 %5385, %v3707
    %v5387 = vpop.permute.xlu0 %5386
    %5389 = vset.pattern.permute.xlu0 49
    %5390 = vperm.xlu0 %5389, %v3709
    %v5391 = vpop.permute.xlu0 %5390
    %5393 = vset.pattern.permute.xlu0 49
    %5394 = vperm.xlu0 %5393, %v3712
    %v5395 = vpop.permute.xlu0 %5394
    %5397 = vset.pattern.permute.xlu0 49
    %5398 = vperm.xlu0 %5397, %v3714
    %v5399 = vpop.permute.xlu0 %5398
    %v5401 = vperm.slane %v3734, 1
    %v5402 = vadd.f32 %v5371, %v5401
    %v5403 = vadd.f32 %v5375, %v5401
    %v5404 = vadd.f32 %v5379, %v5401
    %v5405 = vadd.f32 %v5383, %v5401
    %v5406 = vadd.f32 %v5387, %v5401
    %v5407 = vadd.f32 %v5391, %v5401
    %v5408 = vadd.f32 %v5395, %v5401
    %v5409 = vadd.f32 %v5399, %v5401
    %v5410 = vmul.f32 %v5402, 0.2
    %v5411 = vmul.f32 %v5403, 0.2
    %v5412 = vmul.f32 %v5404, 0.2
    %v5413 = vmul.f32 %v5405, 0.2
    %v5414 = vmul.f32 %v5406, 0.2
    %v5415 = vmul.f32 %v5407, 0.2
    %v5416 = vmul.f32 %v5408, 0.2
    %v5417 = vmul.f32 %v5409, 0.2
    %v5418 = vmax.f32 %v5402, %v5410
    %v5419 = vmax.f32 %v5403, %v5411
    %v5420 = vmax.f32 %v5404, %v5412
    %v5421 = vmax.f32 %v5405, %v5413
    %v5422 = vmax.f32 %v5406, %v5414
    %v5423 = vmax.f32 %v5407, %v5415
    %v5424 = vmax.f32 %v5408, %v5416
    %v5425 = vmax.f32 %v5409, %v5417
    %s5426 = sld [smem:[#allocation4 + $0x11]]
    %v5427 = vstv %s5426
    %v5428 = vmul.f32 %v5427, %v5418
    %v5429 = vmul.f32 %v5427, %v5419
    %v5430 = vmul.f32 %v5427, %v5420
    %v5431 = vmul.f32 %v5427, %v5421
    %v5432 = vmul.f32 %v5427, %v5422
    %v5433 = vmul.f32 %v5427, %v5423
    %v5434 = vmul.f32 %v5427, %v5424
    %v5435 = vmul.f32 %v5427, %v5425
    %v5436 = vadd.f32 %v5361, %v5428
    %v5437 = vadd.f32 %v5362, %v5429
    %v5438 = vadd.f32 %v5363, %v5430
    %v5439 = vadd.f32 %v5364, %v5431
    %v5440 = vadd.f32 %v5365, %v5432
    %v5441 = vadd.f32 %v5366, %v5433
    %v5442 = vadd.f32 %v5367, %v5434
    %v5443 = vadd.f32 %v5368, %v5435
    %5444 = vset.pattern.permute.xlu0 50
    %5445 = vperm.xlu0 %5444, %v3697
    %v5446 = vpop.permute.xlu0 %5445
    %5448 = vset.pattern.permute.xlu0 50
    %5449 = vperm.xlu0 %5448, %v3699
    %v5450 = vpop.permute.xlu0 %5449
    %5452 = vset.pattern.permute.xlu0 50
    %5453 = vperm.xlu0 %5452, %v3702
    %v5454 = vpop.permute.xlu0 %5453
    %5456 = vset.pattern.permute.xlu0 50
    %5457 = vperm.xlu0 %5456, %v3704
    %v5458 = vpop.permute.xlu0 %5457
    %5460 = vset.pattern.permute.xlu0 50
    %5461 = vperm.xlu0 %5460, %v3707
    %v5462 = vpop.permute.xlu0 %5461
    %5464 = vset.pattern.permute.xlu0 50
    %5465 = vperm.xlu0 %5464, %v3709
    %v5466 = vpop.permute.xlu0 %5465
    %5468 = vset.pattern.permute.xlu0 50
    %5469 = vperm.xlu0 %5468, %v3712
    %v5470 = vpop.permute.xlu0 %5469
    %5472 = vset.pattern.permute.xlu0 50
    %5473 = vperm.xlu0 %5472, %v3714
    %v5474 = vpop.permute.xlu0 %5473
    %v5476 = vperm.slane %v3734, 2
    %v5477 = vadd.f32 %v5446, %v5476
    %v5478 = vadd.f32 %v5450, %v5476
    %v5479 = vadd.f32 %v5454, %v5476
    %v5480 = vadd.f32 %v5458, %v5476
    %v5481 = vadd.f32 %v5462, %v5476
    %v5482 = vadd.f32 %v5466, %v5476
    %v5483 = vadd.f32 %v5470, %v5476
    %v5484 = vadd.f32 %v5474, %v5476
    %v5485 = vmul.f32 %v5477, 0.2
    %v5486 = vmul.f32 %v5478, 0.2
    %v5487 = vmul.f32 %v5479, 0.2
    %v5488 = vmul.f32 %v5480, 0.2
    %v5489 = vmul.f32 %v5481, 0.2
    %v5490 = vmul.f32 %v5482, 0.2
    %v5491 = vmul.f32 %v5483, 0.2
    %v5492 = vmul.f32 %v5484, 0.2
    %v5493 = vmax.f32 %v5477, %v5485
    %v5494 = vmax.f32 %v5478, %v5486
    %v5495 = vmax.f32 %v5479, %v5487
    %v5496 = vmax.f32 %v5480, %v5488
    %v5497 = vmax.f32 %v5481, %v5489
    %v5498 = vmax.f32 %v5482, %v5490
    %v5499 = vmax.f32 %v5483, %v5491
    %v5500 = vmax.f32 %v5484, %v5492
    %s5501 = sld [smem:[#allocation4 + $0x12]]
    %v5502 = vstv %s5501
    %v5503 = vmul.f32 %v5502, %v5493
    %v5504 = vmul.f32 %v5502, %v5494
    %v5505 = vmul.f32 %v5502, %v5495
    %v5506 = vmul.f32 %v5502, %v5496
    %v5507 = vmul.f32 %v5502, %v5497
    %v5508 = vmul.f32 %v5502, %v5498
    %v5509 = vmul.f32 %v5502, %v5499
    %v5510 = vmul.f32 %v5502, %v5500
    %v5511 = vadd.f32 %v5436, %v5503
    %v5512 = vadd.f32 %v5437, %v5504
    %v5513 = vadd.f32 %v5438, %v5505
    %v5514 = vadd.f32 %v5439, %v5506
    %v5515 = vadd.f32 %v5440, %v5507
    %v5516 = vadd.f32 %v5441, %v5508
    %v5517 = vadd.f32 %v5442, %v5509
    %v5518 = vadd.f32 %v5443, %v5510
    %5519 = vset.pattern.permute.xlu0 51
    %5520 = vperm.xlu0 %5519, %v3697
    %v5521 = vpop.permute.xlu0 %5520
    %5523 = vset.pattern.permute.xlu0 51
    %5524 = vperm.xlu0 %5523, %v3699
    %v5525 = vpop.permute.xlu0 %5524
    %5527 = vset.pattern.permute.xlu0 51
    %5528 = vperm.xlu0 %5527, %v3702
    %v5529 = vpop.permute.xlu0 %5528
    %5531 = vset.pattern.permute.xlu0 51
    %5532 = vperm.xlu0 %5531, %v3704
    %v5533 = vpop.permute.xlu0 %5532
    %5535 = vset.pattern.permute.xlu0 51
    %5536 = vperm.xlu0 %5535, %v3707
    %v5537 = vpop.permute.xlu0 %5536
    %5539 = vset.pattern.permute.xlu0 51
    %5540 = vperm.xlu0 %5539, %v3709
    %v5541 = vpop.permute.xlu0 %5540
    %5543 = vset.pattern.permute.xlu0 51
    %5544 = vperm.xlu0 %5543, %v3712
    %v5545 = vpop.permute.xlu0 %5544
    %5547 = vset.pattern.permute.xlu0 51
    %5548 = vperm.xlu0 %5547, %v3714
    %v5549 = vpop.permute.xlu0 %5548
    %v5551 = vperm.slane %v3734, 3
    %v5552 = vadd.f32 %v5521, %v5551
    %v5553 = vadd.f32 %v5525, %v5551
    %v5554 = vadd.f32 %v5529, %v5551
    %v5555 = vadd.f32 %v5533, %v5551
    %v5556 = vadd.f32 %v5537, %v5551
    %v5557 = vadd.f32 %v5541, %v5551
    %v5558 = vadd.f32 %v5545, %v5551
    %v5559 = vadd.f32 %v5549, %v5551
    %v5560 = vmul.f32 %v5552, 0.2
    %v5561 = vmul.f32 %v5553, 0.2
    %v5562 = vmul.f32 %v5554, 0.2
    %v5563 = vmul.f32 %v5555, 0.2
    %v5564 = vmul.f32 %v5556, 0.2
    %v5565 = vmul.f32 %v5557, 0.2
    %v5566 = vmul.f32 %v5558, 0.2
    %v5567 = vmul.f32 %v5559, 0.2
    %v5568 = vmax.f32 %v5552, %v5560
    %v5569 = vmax.f32 %v5553, %v5561
    %v5570 = vmax.f32 %v5554, %v5562
    %v5571 = vmax.f32 %v5555, %v5563
    %v5572 = vmax.f32 %v5556, %v5564
    %v5573 = vmax.f32 %v5557, %v5565
    %v5574 = vmax.f32 %v5558, %v5566
    %v5575 = vmax.f32 %v5559, %v5567
    %s5576 = sld [smem:[#allocation4 + $0x13]]
    %v5577 = vstv %s5576
    %v5578 = vmul.f32 %v5577, %v5568
    %v5579 = vmul.f32 %v5577, %v5569
    %v5580 = vmul.f32 %v5577, %v5570
    %v5581 = vmul.f32 %v5577, %v5571
    %v5582 = vmul.f32 %v5577, %v5572
    %v5583 = vmul.f32 %v5577, %v5573
    %v5584 = vmul.f32 %v5577, %v5574
    %v5585 = vmul.f32 %v5577, %v5575
    %v5586 = vadd.f32 %v5511, %v5578
    %v5587 = vadd.f32 %v5512, %v5579
    %v5588 = vadd.f32 %v5513, %v5580
    %v5589 = vadd.f32 %v5514, %v5581
    %v5590 = vadd.f32 %v5515, %v5582
    %v5591 = vadd.f32 %v5516, %v5583
    %v5592 = vadd.f32 %v5517, %v5584
    %v5593 = vadd.f32 %v5518, %v5585
    %5594 = vset.pattern.permute.xlu0 52
    %5595 = vperm.xlu0 %5594, %v3697
    %v5596 = vpop.permute.xlu0 %5595
    %5598 = vset.pattern.permute.xlu0 52
    %5599 = vperm.xlu0 %5598, %v3699
    %v5600 = vpop.permute.xlu0 %5599
    %5602 = vset.pattern.permute.xlu0 52
    %5603 = vperm.xlu0 %5602, %v3702
    %v5604 = vpop.permute.xlu0 %5603
    %5606 = vset.pattern.permute.xlu0 52
    %5607 = vperm.xlu0 %5606, %v3704
    %v5608 = vpop.permute.xlu0 %5607
    %5610 = vset.pattern.permute.xlu0 52
    %5611 = vperm.xlu0 %5610, %v3707
    %v5612 = vpop.permute.xlu0 %5611
    %5614 = vset.pattern.permute.xlu0 52
    %5615 = vperm.xlu0 %5614, %v3709
    %v5616 = vpop.permute.xlu0 %5615
    %5618 = vset.pattern.permute.xlu0 52
    %5619 = vperm.xlu0 %5618, %v3712
    %v5620 = vpop.permute.xlu0 %5619
    %5622 = vset.pattern.permute.xlu0 52
    %5623 = vperm.xlu0 %5622, %v3714
    %v5624 = vpop.permute.xlu0 %5623
    %v5626 = vperm.slane %v3734, 4
    %v5627 = vadd.f32 %v5596, %v5626
    %v5628 = vadd.f32 %v5600, %v5626
    %v5629 = vadd.f32 %v5604, %v5626
    %v5630 = vadd.f32 %v5608, %v5626
    %v5631 = vadd.f32 %v5612, %v5626
    %v5632 = vadd.f32 %v5616, %v5626
    %v5633 = vadd.f32 %v5620, %v5626
    %v5634 = vadd.f32 %v5624, %v5626
    %v5635 = vmul.f32 %v5627, 0.2
    %v5636 = vmul.f32 %v5628, 0.2
    %v5637 = vmul.f32 %v5629, 0.2
    %v5638 = vmul.f32 %v5630, 0.2
    %v5639 = vmul.f32 %v5631, 0.2
    %v5640 = vmul.f32 %v5632, 0.2
    %v5641 = vmul.f32 %v5633, 0.2
    %v5642 = vmul.f32 %v5634, 0.2
    %v5643 = vmax.f32 %v5627, %v5635
    %v5644 = vmax.f32 %v5628, %v5636
    %v5645 = vmax.f32 %v5629, %v5637
    %v5646 = vmax.f32 %v5630, %v5638
    %v5647 = vmax.f32 %v5631, %v5639
    %v5648 = vmax.f32 %v5632, %v5640
    %v5649 = vmax.f32 %v5633, %v5641
    %v5650 = vmax.f32 %v5634, %v5642
    %s5651 = sld [smem:[#allocation4 + $0x14]]
    %v5652 = vstv %s5651
    %v5653 = vmul.f32 %v5652, %v5643
    %v5654 = vmul.f32 %v5652, %v5644
    %v5655 = vmul.f32 %v5652, %v5645
    %v5656 = vmul.f32 %v5652, %v5646
    %v5657 = vmul.f32 %v5652, %v5647
    %v5658 = vmul.f32 %v5652, %v5648
    %v5659 = vmul.f32 %v5652, %v5649
    %v5660 = vmul.f32 %v5652, %v5650
    %v5661 = vadd.f32 %v5586, %v5653
    %v5662 = vadd.f32 %v5587, %v5654
    %v5663 = vadd.f32 %v5588, %v5655
    %v5664 = vadd.f32 %v5589, %v5656
    %v5665 = vadd.f32 %v5590, %v5657
    %v5666 = vadd.f32 %v5591, %v5658
    %v5667 = vadd.f32 %v5592, %v5659
    %v5668 = vadd.f32 %v5593, %v5660
    %5669 = vset.pattern.permute.xlu0 53
    %5670 = vperm.xlu0 %5669, %v3697
    %v5671 = vpop.permute.xlu0 %5670
    %5673 = vset.pattern.permute.xlu0 53
    %5674 = vperm.xlu0 %5673, %v3699
    %v5675 = vpop.permute.xlu0 %5674
    %5677 = vset.pattern.permute.xlu0 53
    %5678 = vperm.xlu0 %5677, %v3702
    %v5679 = vpop.permute.xlu0 %5678
    %5681 = vset.pattern.permute.xlu0 53
    %5682 = vperm.xlu0 %5681, %v3704
    %v5683 = vpop.permute.xlu0 %5682
    %5685 = vset.pattern.permute.xlu0 53
    %5686 = vperm.xlu0 %5685, %v3707
    %v5687 = vpop.permute.xlu0 %5686
    %5689 = vset.pattern.permute.xlu0 53
    %5690 = vperm.xlu0 %5689, %v3709
    %v5691 = vpop.permute.xlu0 %5690
    %5693 = vset.pattern.permute.xlu0 53
    %5694 = vperm.xlu0 %5693, %v3712
    %v5695 = vpop.permute.xlu0 %5694
    %5697 = vset.pattern.permute.xlu0 53
    %5698 = vperm.xlu0 %5697, %v3714
    %v5699 = vpop.permute.xlu0 %5698
    %v5701 = vperm.slane %v3734, 5
    %v5702 = vadd.f32 %v5671, %v5701
    %v5703 = vadd.f32 %v5675, %v5701
    %v5704 = vadd.f32 %v5679, %v5701
    %v5705 = vadd.f32 %v5683, %v5701
    %v5706 = vadd.f32 %v5687, %v5701
    %v5707 = vadd.f32 %v5691, %v5701
    %v5708 = vadd.f32 %v5695, %v5701
    %v5709 = vadd.f32 %v5699, %v5701
    %v5710 = vmul.f32 %v5702, 0.2
    %v5711 = vmul.f32 %v5703, 0.2
    %v5712 = vmul.f32 %v5704, 0.2
    %v5713 = vmul.f32 %v5705, 0.2
    %v5714 = vmul.f32 %v5706, 0.2
    %v5715 = vmul.f32 %v5707, 0.2
    %v5716 = vmul.f32 %v5708, 0.2
    %v5717 = vmul.f32 %v5709, 0.2
    %v5718 = vmax.f32 %v5702, %v5710
    %v5719 = vmax.f32 %v5703, %v5711
    %v5720 = vmax.f32 %v5704, %v5712
    %v5721 = vmax.f32 %v5705, %v5713
    %v5722 = vmax.f32 %v5706, %v5714
    %v5723 = vmax.f32 %v5707, %v5715
    %v5724 = vmax.f32 %v5708, %v5716
    %v5725 = vmax.f32 %v5709, %v5717
    %s5726 = sld [smem:[#allocation4 + $0x15]]
    %v5727 = vstv %s5726
    %v5728 = vmul.f32 %v5727, %v5718
    %v5729 = vmul.f32 %v5727, %v5719
    %v5730 = vmul.f32 %v5727, %v5720
    %v5731 = vmul.f32 %v5727, %v5721
    %v5732 = vmul.f32 %v5727, %v5722
    %v5733 = vmul.f32 %v5727, %v5723
    %v5734 = vmul.f32 %v5727, %v5724
    %v5735 = vmul.f32 %v5727, %v5725
    %v5736 = vadd.f32 %v5661, %v5728
    %v5737 = vadd.f32 %v5662, %v5729
    %v5738 = vadd.f32 %v5663, %v5730
    %v5739 = vadd.f32 %v5664, %v5731
    %v5740 = vadd.f32 %v5665, %v5732
    %v5741 = vadd.f32 %v5666, %v5733
    %v5742 = vadd.f32 %v5667, %v5734
    %v5743 = vadd.f32 %v5668, %v5735
    %5744 = vset.pattern.permute.xlu0 54
    %5745 = vperm.xlu0 %5744, %v3697
    %v5746 = vpop.permute.xlu0 %5745
    %5748 = vset.pattern.permute.xlu0 54
    %5749 = vperm.xlu0 %5748, %v3699
    %v5750 = vpop.permute.xlu0 %5749
    %5752 = vset.pattern.permute.xlu0 54
    %5753 = vperm.xlu0 %5752, %v3702
    %v5754 = vpop.permute.xlu0 %5753
    %5756 = vset.pattern.permute.xlu0 54
    %5757 = vperm.xlu0 %5756, %v3704
    %v5758 = vpop.permute.xlu0 %5757
    %5760 = vset.pattern.permute.xlu0 54
    %5761 = vperm.xlu0 %5760, %v3707
    %v5762 = vpop.permute.xlu0 %5761
    %5764 = vset.pattern.permute.xlu0 54
    %5765 = vperm.xlu0 %5764, %v3709
    %v5766 = vpop.permute.xlu0 %5765
    %5768 = vset.pattern.permute.xlu0 54
    %5769 = vperm.xlu0 %5768, %v3712
    %v5770 = vpop.permute.xlu0 %5769
    %5772 = vset.pattern.permute.xlu0 54
    %5773 = vperm.xlu0 %5772, %v3714
    %v5774 = vpop.permute.xlu0 %5773
    %v5776 = vperm.slane %v3734, 6
    %v5777 = vadd.f32 %v5746, %v5776
    %v5778 = vadd.f32 %v5750, %v5776
    %v5779 = vadd.f32 %v5754, %v5776
    %v5780 = vadd.f32 %v5758, %v5776
    %v5781 = vadd.f32 %v5762, %v5776
    %v5782 = vadd.f32 %v5766, %v5776
    %v5783 = vadd.f32 %v5770, %v5776
    %v5784 = vadd.f32 %v5774, %v5776
    %v5785 = vmul.f32 %v5777, 0.2
    %v5786 = vmul.f32 %v5778, 0.2
    %v5787 = vmul.f32 %v5779, 0.2
    %v5788 = vmul.f32 %v5780, 0.2
    %v5789 = vmul.f32 %v5781, 0.2
    %v5790 = vmul.f32 %v5782, 0.2
    %v5791 = vmul.f32 %v5783, 0.2
    %v5792 = vmul.f32 %v5784, 0.2
    %v5793 = vmax.f32 %v5777, %v5785
    %v5794 = vmax.f32 %v5778, %v5786
    %v5795 = vmax.f32 %v5779, %v5787
    %v5796 = vmax.f32 %v5780, %v5788
    %v5797 = vmax.f32 %v5781, %v5789
    %v5798 = vmax.f32 %v5782, %v5790
    %v5799 = vmax.f32 %v5783, %v5791
    %v5800 = vmax.f32 %v5784, %v5792
    %s5801 = sld [smem:[#allocation4 + $0x16]]
    %v5802 = vstv %s5801
    %v5803 = vmul.f32 %v5802, %v5793
    %v5804 = vmul.f32 %v5802, %v5794
    %v5805 = vmul.f32 %v5802, %v5795
    %v5806 = vmul.f32 %v5802, %v5796
    %v5807 = vmul.f32 %v5802, %v5797
    %v5808 = vmul.f32 %v5802, %v5798
    %v5809 = vmul.f32 %v5802, %v5799
    %v5810 = vmul.f32 %v5802, %v5800
    %v5811 = vadd.f32 %v5736, %v5803
    %v5812 = vadd.f32 %v5737, %v5804
    %v5813 = vadd.f32 %v5738, %v5805
    %v5814 = vadd.f32 %v5739, %v5806
    %v5815 = vadd.f32 %v5740, %v5807
    %v5816 = vadd.f32 %v5741, %v5808
    %v5817 = vadd.f32 %v5742, %v5809
    %v5818 = vadd.f32 %v5743, %v5810
    %5819 = vset.pattern.permute.xlu0 55
    %5820 = vperm.xlu0 %5819, %v3697
    %v5821 = vpop.permute.xlu0 %5820
    %5823 = vset.pattern.permute.xlu0 55
    %5824 = vperm.xlu0 %5823, %v3699
    %v5825 = vpop.permute.xlu0 %5824
    %5827 = vset.pattern.permute.xlu0 55
    %5828 = vperm.xlu0 %5827, %v3702
    %v5829 = vpop.permute.xlu0 %5828
    %5831 = vset.pattern.permute.xlu0 55
    %5832 = vperm.xlu0 %5831, %v3704
    %v5833 = vpop.permute.xlu0 %5832
    %5835 = vset.pattern.permute.xlu0 55
    %5836 = vperm.xlu0 %5835, %v3707
    %v5837 = vpop.permute.xlu0 %5836
    %5839 = vset.pattern.permute.xlu0 55
    %5840 = vperm.xlu0 %5839, %v3709
    %v5841 = vpop.permute.xlu0 %5840
    %5843 = vset.pattern.permute.xlu0 55
    %5844 = vperm.xlu0 %5843, %v3712
    %v5845 = vpop.permute.xlu0 %5844
    %5847 = vset.pattern.permute.xlu0 55
    %5848 = vperm.xlu0 %5847, %v3714
    %v5849 = vpop.permute.xlu0 %5848
    %v5851 = vperm.slane %v3734, 7
    %v5852 = vadd.f32 %v5821, %v5851
    %v5853 = vadd.f32 %v5825, %v5851
    %v5854 = vadd.f32 %v5829, %v5851
    %v5855 = vadd.f32 %v5833, %v5851
    %v5856 = vadd.f32 %v5837, %v5851
    %v5857 = vadd.f32 %v5841, %v5851
    %v5858 = vadd.f32 %v5845, %v5851
    %v5859 = vadd.f32 %v5849, %v5851
    %v5860 = vmul.f32 %v5852, 0.2
    %v5861 = vmul.f32 %v5853, 0.2
    %v5862 = vmul.f32 %v5854, 0.2
    %v5863 = vmul.f32 %v5855, 0.2
    %v5864 = vmul.f32 %v5856, 0.2
    %v5865 = vmul.f32 %v5857, 0.2
    %v5866 = vmul.f32 %v5858, 0.2
    %v5867 = vmul.f32 %v5859, 0.2
    %v5868 = vmax.f32 %v5852, %v5860
    %v5869 = vmax.f32 %v5853, %v5861
    %v5870 = vmax.f32 %v5854, %v5862
    %v5871 = vmax.f32 %v5855, %v5863
    %v5872 = vmax.f32 %v5856, %v5864
    %v5873 = vmax.f32 %v5857, %v5865
    %v5874 = vmax.f32 %v5858, %v5866
    %v5875 = vmax.f32 %v5859, %v5867
    %s5876 = sld [smem:[#allocation4 + $0x17]]
    %v5877 = vstv %s5876
    %v5878 = vmul.f32 %v5877, %v5868
    %v5879 = vmul.f32 %v5877, %v5869
    %v5880 = vmul.f32 %v5877, %v5870
    %v5881 = vmul.f32 %v5877, %v5871
    %v5882 = vmul.f32 %v5877, %v5872
    %v5883 = vmul.f32 %v5877, %v5873
    %v5884 = vmul.f32 %v5877, %v5874
    %v5885 = vmul.f32 %v5877, %v5875
    %v5886 = vadd.f32 %v5811, %v5878
    %v5887 = vadd.f32 %v5812, %v5879
    %v5888 = vadd.f32 %v5813, %v5880
    %v5889 = vadd.f32 %v5814, %v5881
    %v5890 = vadd.f32 %v5815, %v5882
    %v5891 = vadd.f32 %v5816, %v5883
    %v5892 = vadd.f32 %v5817, %v5884
    %v5893 = vadd.f32 %v5818, %v5885
    %v5894 = vadd.f32 %v5886, %v74
    %v5895 = vadd.f32 %v5887, %v75
    %v5896 = vadd.f32 %v5888, %v76
    %v5897 = vadd.f32 %v5889, %v77
    %v5898 = vadd.f32 %v5890, %v78
    %v5899 = vadd.f32 %v5891, %v79
    %v5900 = vadd.f32 %v5892, %v80
    %v5901 = vadd.f32 %v5893, %v81
    %v5902 = vsel %vm776, %v5894, -inf
    %5903 = vmax.xlane.f32.xlu0 %v5902
    %v5904 = vpop.xlane.xlu0 %5903
    %v5905 = vsel %vm776, %v5895, -inf
    %5906 = vmax.xlane.f32.xlu0 %v5905
    %v5907 = vpop.xlane.xlu0 %5906
    %v5908 = vsel %vm776, %v5896, -inf
    %5909 = vmax.xlane.f32.xlu0 %v5908
    %v5910 = vpop.xlane.xlu0 %5909
    %v5911 = vsel %vm776, %v5897, -inf
    %5912 = vmax.xlane.f32.xlu0 %v5911
    %v5913 = vpop.xlane.xlu0 %5912
    %v5914 = vsel %vm776, %v5898, -inf
    %5915 = vmax.xlane.f32.xlu0 %v5914
    %v5916 = vpop.xlane.xlu0 %5915
    %v5917 = vsel %vm776, %v5899, -inf
    %5918 = vmax.xlane.f32.xlu0 %v5917
    %v5919 = vpop.xlane.xlu0 %5918
    %v5920 = vsel %vm776, %v5900, -inf
    %5921 = vmax.xlane.f32.xlu0 %v5920
    %v5922 = vpop.xlane.xlu0 %5921
    %v5923 = vsel %vm776, %v5901, -inf
    %5924 = vmax.xlane.f32.xlu0 %v5923
    %v5925 = vpop.xlane.xlu0 %5924
    %v5926 = vsub.f32 %v5894, %v5904
    %v5927 = vsub.f32 %v5895, %v5907
    %v5928 = vsub.f32 %v5896, %v5910
    %v5929 = vsub.f32 %v5897, %v5913
    %v5930 = vsub.f32 %v5898, %v5916
    %v5931 = vsub.f32 %v5899, %v5919
    %v5932 = vsub.f32 %v5900, %v5922
    %v5933 = vsub.f32 %v5901, %v5925
    %v5934 = vmul.f32 %v5926, 1.442695
    %v5935 = vpow.pop %v5934
    %v5936 = vmul.f32 %v5927, 1.442695
    %v5937 = vpow.pop %v5936
    %v5938 = vmul.f32 %v5928, 1.442695
    %v5939 = vpow.pop %v5938
    %v5940 = vmul.f32 %v5929, 1.442695
    %v5941 = vpow.pop %v5940
    %v5942 = vmul.f32 %v5930, 1.442695
    %v5943 = vpow.pop %v5942
    %v5944 = vmul.f32 %v5931, 1.442695
    %v5945 = vpow.pop %v5944
    %v5946 = vmul.f32 %v5932, 1.442695
    %v5947 = vpow.pop %v5946
    %v5948 = vmul.f32 %v5933, 1.442695
    %v5949 = vpow.pop %v5948
    %v5950 = vsel %vm776, %v5935, 0.0
    %5951 = vadd.xlane.f32.xlu0 %v5950
    %v5952 = vpop.xlane.xlu0 %5951
    %v5953 = vsel %vm776, %v5937, 0.0
    %5954 = vadd.xlane.f32.xlu0 %v5953
    %v5955 = vpop.xlane.xlu0 %5954
    %v5956 = vsel %vm776, %v5939, 0.0
    %5957 = vadd.xlane.f32.xlu0 %v5956
    %v5958 = vpop.xlane.xlu0 %5957
    %v5959 = vsel %vm776, %v5941, 0.0
    %5960 = vadd.xlane.f32.xlu0 %v5959
    %v5961 = vpop.xlane.xlu0 %5960
    %v5962 = vsel %vm776, %v5943, 0.0
    %5963 = vadd.xlane.f32.xlu0 %v5962
    %v5964 = vpop.xlane.xlu0 %5963
    %v5965 = vsel %vm776, %v5945, 0.0
    %5966 = vadd.xlane.f32.xlu0 %v5965
    %v5967 = vpop.xlane.xlu0 %5966
    %v5968 = vsel %vm776, %v5947, 0.0
    %5969 = vadd.xlane.f32.xlu0 %v5968
    %v5970 = vpop.xlane.xlu0 %5969
    %v5971 = vsel %vm776, %v5949, 0.0
    %5972 = vadd.xlane.f32.xlu0 %v5971
    %v5973 = vpop.xlane.xlu0 %5972
    %v5974 = vmax.f32 %v5952, 1e-20
    %v5975 = vmax.f32 %v5955, 1e-20
    %v5976 = vmax.f32 %v5958, 1e-20
    %v5977 = vmax.f32 %v5961, 1e-20
    %v5978 = vmax.f32 %v5964, 1e-20
    %v5979 = vmax.f32 %v5967, 1e-20
    %v5980 = vmax.f32 %v5970, 1e-20
    %v5981 = vmax.f32 %v5973, 1e-20
    %v5982 = vrcp.pop %v5974
    %v5983 = vrcp.pop %v5975
    %v5984 = vrcp.pop %v5976
    %v5985 = vrcp.pop %v5977
    %v5986 = vrcp.pop %v5978
    %v5987 = vrcp.pop %v5979
    %v5988 = vrcp.pop %v5980
    %v5989 = vrcp.pop %v5981
    %v5990 = vmul.f32 %v5935, %v5982
    %v5991 = vmul.f32 %v5937, %v5983
    %v5992 = vmul.f32 %v5939, %v5984
    %v5993 = vmul.f32 %v5941, %v5985
    %v5994 = vmul.f32 %v5943, %v5986
    %v5995 = vmul.f32 %v5945, %v5987
    %v5996 = vmul.f32 %v5947, %v5988
    %v5997 = vmul.f32 %v5949, %v5989
    %5998 = vrot.lane.b32.xlu0 %v3697, 112
    %v5999 = vpop.permute.xlu0 %5998
    %6000 = vrot.lane.b32.xlu0 %v3699, 112
    %v6001 = vpop.permute.xlu0 %6000
    %6002 = vrot.lane.b32.xlu0 %v3702, 112
    %v6003 = vpop.permute.xlu0 %6002
    %6004 = vrot.lane.b32.xlu0 %v3704, 112
    %v6005 = vpop.permute.xlu0 %6004
    %6006 = vrot.lane.b32.xlu0 %v3707, 112
    %v6007 = vpop.permute.xlu0 %6006
    %6008 = vrot.lane.b32.xlu0 %v3709, 112
    %v6009 = vpop.permute.xlu0 %6008
    %6010 = vrot.lane.b32.xlu0 %v3712, 112
    %v6011 = vpop.permute.xlu0 %6010
    %6012 = vrot.lane.b32.xlu0 %v3714, 112
    %v6013 = vpop.permute.xlu0 %6012
    %v6023 = vsel %vm776, %v5990, 0
    %v6026 = vsel %vm776, %v5991, 0
    %v6029 = vsel %vm776, %v5992, 0
    %v6032 = vsel %vm776, %v5993, 0
    %v6035 = vsel %vm776, %v5994, 0
    %v6038 = vsel %vm776, %v5995, 0
    %v6041 = vsel %vm776, %v5996, 0
    %v6044 = vsel %vm776, %v5997, 0
    %6046 = vmatpush.msra.mxu0 0.0
    %6047 = vmatpush.msra.mxu0 0.0
    %6048 = vmatpush.msra.mxu0 0.0
    %6049 = vmatpush.msra.mxu0 0.0
    %6050 = vmatpush.msra.mxu0 0.0
    %6051 = vmatpush.msra.mxu0 0.0
    %6052 = vmatpush.msra.mxu0 0.0
    %6053 = vmatpush.msra.mxu0 0.0
    %6054 = vmatpush.msra.mxu0 %v6013
    %6055 = vmatpush.msra.mxu0 %v6011
    %6056 = vmatpush.msra.mxu0 %v6009
    %6057 = vmatpush.msra.mxu0 %v6007
    %6058 = vmatpush.msra.mxu0 %v6005
    %6059 = vmatpush.msra.mxu0 %v6003
    %6060 = vmatpush.msra.mxu0 %v6001
    %6061 = vmatpush.msra.mxu0 %v5999
    %6062 = vmatmul.f32.gmra.mxu0 %v6023
    %v6063 = vpop.f32.mrf.mxu0
    %v6064 = vadd.f32 0.0, %v6063
    %6065 = vmatmul.f32.gmra.mxu0 %v6026
    %v6066 = vpop.f32.mrf.mxu0
    %v6067 = vadd.f32 0.0, %v6066
    %6068 = vmatmul.f32.gmra.mxu0 %v6029
    %v6069 = vpop.f32.mrf.mxu0
    %v6070 = vadd.f32 0.0, %v6069
    %6071 = vmatmul.f32.gmra.mxu0 %v6032
    %v6072 = vpop.f32.mrf.mxu0
    %v6073 = vadd.f32 0.0, %v6072
    %6074 = vmatmul.f32.gmra.mxu0 %v6035
    %v6075 = vpop.f32.mrf.mxu0
    %v6076 = vadd.f32 0.0, %v6075
    %6077 = vmatmul.f32.gmra.mxu0 %v6038
    %v6078 = vpop.f32.mrf.mxu0
    %v6079 = vadd.f32 0.0, %v6078
    %6080 = vmatmul.f32.gmra.mxu0 %v6041
    %v6081 = vpop.f32.mrf.mxu0
    %v6082 = vadd.f32 0.0, %v6081
    %6083 = vmatmul.f32.gmra.mxu0 %v6044
    %v6084 = vpop.f32.mrf.mxu0
    %v6085 = vadd.f32 0.0, %v6084
    %6086 = vdwg.mxu0
    %6087 = vset.pattern.permute.xlu0 56
    %6088 = vperm.xlu0 %6087, %v3697
    %v6089 = vpop.permute.xlu0 %6088
    %6091 = vset.pattern.permute.xlu0 56
    %6092 = vperm.xlu0 %6091, %v3699
    %v6093 = vpop.permute.xlu0 %6092
    %6095 = vset.pattern.permute.xlu0 56
    %6096 = vperm.xlu0 %6095, %v3702
    %v6097 = vpop.permute.xlu0 %6096
    %6099 = vset.pattern.permute.xlu0 56
    %6100 = vperm.xlu0 %6099, %v3704
    %v6101 = vpop.permute.xlu0 %6100
    %6103 = vset.pattern.permute.xlu0 56
    %6104 = vperm.xlu0 %6103, %v3707
    %v6105 = vpop.permute.xlu0 %6104
    %6107 = vset.pattern.permute.xlu0 56
    %6108 = vperm.xlu0 %6107, %v3709
    %v6109 = vpop.permute.xlu0 %6108
    %6111 = vset.pattern.permute.xlu0 56
    %6112 = vperm.xlu0 %6111, %v3712
    %v6113 = vpop.permute.xlu0 %6112
    %6115 = vset.pattern.permute.xlu0 56
    %6116 = vperm.xlu0 %6115, %v3714
    %v6117 = vpop.permute.xlu0 %6116
    %v6119 = vperm.slane %v3735, 0
    %v6120 = vadd.f32 %v6089, %v6119
    %v6121 = vadd.f32 %v6093, %v6119
    %v6122 = vadd.f32 %v6097, %v6119
    %v6123 = vadd.f32 %v6101, %v6119
    %v6124 = vadd.f32 %v6105, %v6119
    %v6125 = vadd.f32 %v6109, %v6119
    %v6126 = vadd.f32 %v6113, %v6119
    %v6127 = vadd.f32 %v6117, %v6119
    %v6128 = vmul.f32 %v6120, 0.2
    %v6129 = vmul.f32 %v6121, 0.2
    %v6130 = vmul.f32 %v6122, 0.2
    %v6131 = vmul.f32 %v6123, 0.2
    %v6132 = vmul.f32 %v6124, 0.2
    %v6133 = vmul.f32 %v6125, 0.2
    %v6134 = vmul.f32 %v6126, 0.2
    %v6135 = vmul.f32 %v6127, 0.2
    %v6136 = vmax.f32 %v6120, %v6128
    %v6137 = vmax.f32 %v6121, %v6129
    %v6138 = vmax.f32 %v6122, %v6130
    %v6139 = vmax.f32 %v6123, %v6131
    %v6140 = vmax.f32 %v6124, %v6132
    %v6141 = vmax.f32 %v6125, %v6133
    %v6142 = vmax.f32 %v6126, %v6134
    %v6143 = vmax.f32 %v6127, %v6135
    %s6144 = sld [smem:[#allocation4 + $0x18]]
    %v6145 = vstv %s6144
    %v6146 = vmul.f32 %v6145, %v6136
    %v6147 = vmul.f32 %v6145, %v6137
    %v6148 = vmul.f32 %v6145, %v6138
    %v6149 = vmul.f32 %v6145, %v6139
    %v6150 = vmul.f32 %v6145, %v6140
    %v6151 = vmul.f32 %v6145, %v6141
    %v6152 = vmul.f32 %v6145, %v6142
    %v6153 = vmul.f32 %v6145, %v6143
    %6154 = vset.pattern.permute.xlu0 57
    %6155 = vperm.xlu0 %6154, %v3697
    %v6156 = vpop.permute.xlu0 %6155
    %6158 = vset.pattern.permute.xlu0 57
    %6159 = vperm.xlu0 %6158, %v3699
    %v6160 = vpop.permute.xlu0 %6159
    %6162 = vset.pattern.permute.xlu0 57
    %6163 = vperm.xlu0 %6162, %v3702
    %v6164 = vpop.permute.xlu0 %6163
    %6166 = vset.pattern.permute.xlu0 57
    %6167 = vperm.xlu0 %6166, %v3704
    %v6168 = vpop.permute.xlu0 %6167
    %6170 = vset.pattern.permute.xlu0 57
    %6171 = vperm.xlu0 %6170, %v3707
    %v6172 = vpop.permute.xlu0 %6171
    %6174 = vset.pattern.permute.xlu0 57
    %6175 = vperm.xlu0 %6174, %v3709
    %v6176 = vpop.permute.xlu0 %6175
    %6178 = vset.pattern.permute.xlu0 57
    %6179 = vperm.xlu0 %6178, %v3712
    %v6180 = vpop.permute.xlu0 %6179
    %6182 = vset.pattern.permute.xlu0 57
    %6183 = vperm.xlu0 %6182, %v3714
    %v6184 = vpop.permute.xlu0 %6183
    %v6186 = vperm.slane %v3735, 1
    %v6187 = vadd.f32 %v6156, %v6186
    %v6188 = vadd.f32 %v6160, %v6186
    %v6189 = vadd.f32 %v6164, %v6186
    %v6190 = vadd.f32 %v6168, %v6186
    %v6191 = vadd.f32 %v6172, %v6186
    %v6192 = vadd.f32 %v6176, %v6186
    %v6193 = vadd.f32 %v6180, %v6186
    %v6194 = vadd.f32 %v6184, %v6186
    %v6195 = vmul.f32 %v6187, 0.2
    %v6196 = vmul.f32 %v6188, 0.2
    %v6197 = vmul.f32 %v6189, 0.2
    %v6198 = vmul.f32 %v6190, 0.2
    %v6199 = vmul.f32 %v6191, 0.2
    %v6200 = vmul.f32 %v6192, 0.2
    %v6201 = vmul.f32 %v6193, 0.2
    %v6202 = vmul.f32 %v6194, 0.2
    %v6203 = vmax.f32 %v6187, %v6195
    %v6204 = vmax.f32 %v6188, %v6196
    %v6205 = vmax.f32 %v6189, %v6197
    %v6206 = vmax.f32 %v6190, %v6198
    %v6207 = vmax.f32 %v6191, %v6199
    %v6208 = vmax.f32 %v6192, %v6200
    %v6209 = vmax.f32 %v6193, %v6201
    %v6210 = vmax.f32 %v6194, %v6202
    %s6211 = sld [smem:[#allocation4 + $0x19]]
    %v6212 = vstv %s6211
    %v6213 = vmul.f32 %v6212, %v6203
    %v6214 = vmul.f32 %v6212, %v6204
    %v6215 = vmul.f32 %v6212, %v6205
    %v6216 = vmul.f32 %v6212, %v6206
    %v6217 = vmul.f32 %v6212, %v6207
    %v6218 = vmul.f32 %v6212, %v6208
    %v6219 = vmul.f32 %v6212, %v6209
    %v6220 = vmul.f32 %v6212, %v6210
    %v6221 = vadd.f32 %v6146, %v6213
    %v6222 = vadd.f32 %v6147, %v6214
    %v6223 = vadd.f32 %v6148, %v6215
    %v6224 = vadd.f32 %v6149, %v6216
    %v6225 = vadd.f32 %v6150, %v6217
    %v6226 = vadd.f32 %v6151, %v6218
    %v6227 = vadd.f32 %v6152, %v6219
    %v6228 = vadd.f32 %v6153, %v6220
    %6229 = vset.pattern.permute.xlu0 58
    %6230 = vperm.xlu0 %6229, %v3697
    %v6231 = vpop.permute.xlu0 %6230
    %6233 = vset.pattern.permute.xlu0 58
    %6234 = vperm.xlu0 %6233, %v3699
    %v6235 = vpop.permute.xlu0 %6234
    %6237 = vset.pattern.permute.xlu0 58
    %6238 = vperm.xlu0 %6237, %v3702
    %v6239 = vpop.permute.xlu0 %6238
    %6241 = vset.pattern.permute.xlu0 58
    %6242 = vperm.xlu0 %6241, %v3704
    %v6243 = vpop.permute.xlu0 %6242
    %6245 = vset.pattern.permute.xlu0 58
    %6246 = vperm.xlu0 %6245, %v3707
    %v6247 = vpop.permute.xlu0 %6246
    %6249 = vset.pattern.permute.xlu0 58
    %6250 = vperm.xlu0 %6249, %v3709
    %v6251 = vpop.permute.xlu0 %6250
    %6253 = vset.pattern.permute.xlu0 58
    %6254 = vperm.xlu0 %6253, %v3712
    %v6255 = vpop.permute.xlu0 %6254
    %6257 = vset.pattern.permute.xlu0 58
    %6258 = vperm.xlu0 %6257, %v3714
    %v6259 = vpop.permute.xlu0 %6258
    %v6261 = vperm.slane %v3735, 2
    %v6262 = vadd.f32 %v6231, %v6261
    %v6263 = vadd.f32 %v6235, %v6261
    %v6264 = vadd.f32 %v6239, %v6261
    %v6265 = vadd.f32 %v6243, %v6261
    %v6266 = vadd.f32 %v6247, %v6261
    %v6267 = vadd.f32 %v6251, %v6261
    %v6268 = vadd.f32 %v6255, %v6261
    %v6269 = vadd.f32 %v6259, %v6261
    %v6270 = vmul.f32 %v6262, 0.2
    %v6271 = vmul.f32 %v6263, 0.2
    %v6272 = vmul.f32 %v6264, 0.2
    %v6273 = vmul.f32 %v6265, 0.2
    %v6274 = vmul.f32 %v6266, 0.2
    %v6275 = vmul.f32 %v6267, 0.2
    %v6276 = vmul.f32 %v6268, 0.2
    %v6277 = vmul.f32 %v6269, 0.2
    %v6278 = vmax.f32 %v6262, %v6270
    %v6279 = vmax.f32 %v6263, %v6271
    %v6280 = vmax.f32 %v6264, %v6272
    %v6281 = vmax.f32 %v6265, %v6273
    %v6282 = vmax.f32 %v6266, %v6274
    %v6283 = vmax.f32 %v6267, %v6275
    %v6284 = vmax.f32 %v6268, %v6276
    %v6285 = vmax.f32 %v6269, %v6277
    %s6286 = sld [smem:[#allocation4 + $0x1a]]
    %v6287 = vstv %s6286
    %v6288 = vmul.f32 %v6287, %v6278
    %v6289 = vmul.f32 %v6287, %v6279
    %v6290 = vmul.f32 %v6287, %v6280
    %v6291 = vmul.f32 %v6287, %v6281
    %v6292 = vmul.f32 %v6287, %v6282
    %v6293 = vmul.f32 %v6287, %v6283
    %v6294 = vmul.f32 %v6287, %v6284
    %v6295 = vmul.f32 %v6287, %v6285
    %v6296 = vadd.f32 %v6221, %v6288
    %v6297 = vadd.f32 %v6222, %v6289
    %v6298 = vadd.f32 %v6223, %v6290
    %v6299 = vadd.f32 %v6224, %v6291
    %v6300 = vadd.f32 %v6225, %v6292
    %v6301 = vadd.f32 %v6226, %v6293
    %v6302 = vadd.f32 %v6227, %v6294
    %v6303 = vadd.f32 %v6228, %v6295
    %6304 = vset.pattern.permute.xlu0 59
    %6305 = vperm.xlu0 %6304, %v3697
    %v6306 = vpop.permute.xlu0 %6305
    %6308 = vset.pattern.permute.xlu0 59
    %6309 = vperm.xlu0 %6308, %v3699
    %v6310 = vpop.permute.xlu0 %6309
    %6312 = vset.pattern.permute.xlu0 59
    %6313 = vperm.xlu0 %6312, %v3702
    %v6314 = vpop.permute.xlu0 %6313
    %6316 = vset.pattern.permute.xlu0 59
    %6317 = vperm.xlu0 %6316, %v3704
    %v6318 = vpop.permute.xlu0 %6317
    %6320 = vset.pattern.permute.xlu0 59
    %6321 = vperm.xlu0 %6320, %v3707
    %v6322 = vpop.permute.xlu0 %6321
    %6324 = vset.pattern.permute.xlu0 59
    %6325 = vperm.xlu0 %6324, %v3709
    %v6326 = vpop.permute.xlu0 %6325
    %6328 = vset.pattern.permute.xlu0 59
    %6329 = vperm.xlu0 %6328, %v3712
    %v6330 = vpop.permute.xlu0 %6329
    %6332 = vset.pattern.permute.xlu0 59
    %6333 = vperm.xlu0 %6332, %v3714
    %v6334 = vpop.permute.xlu0 %6333
    %v6336 = vperm.slane %v3735, 3
    %v6337 = vadd.f32 %v6306, %v6336
    %v6338 = vadd.f32 %v6310, %v6336
    %v6339 = vadd.f32 %v6314, %v6336
    %v6340 = vadd.f32 %v6318, %v6336
    %v6341 = vadd.f32 %v6322, %v6336
    %v6342 = vadd.f32 %v6326, %v6336
    %v6343 = vadd.f32 %v6330, %v6336
    %v6344 = vadd.f32 %v6334, %v6336
    %v6345 = vmul.f32 %v6337, 0.2
    %v6346 = vmul.f32 %v6338, 0.2
    %v6347 = vmul.f32 %v6339, 0.2
    %v6348 = vmul.f32 %v6340, 0.2
    %v6349 = vmul.f32 %v6341, 0.2
    %v6350 = vmul.f32 %v6342, 0.2
    %v6351 = vmul.f32 %v6343, 0.2
    %v6352 = vmul.f32 %v6344, 0.2
    %v6353 = vmax.f32 %v6337, %v6345
    %v6354 = vmax.f32 %v6338, %v6346
    %v6355 = vmax.f32 %v6339, %v6347
    %v6356 = vmax.f32 %v6340, %v6348
    %v6357 = vmax.f32 %v6341, %v6349
    %v6358 = vmax.f32 %v6342, %v6350
    %v6359 = vmax.f32 %v6343, %v6351
    %v6360 = vmax.f32 %v6344, %v6352
    %s6361 = sld [smem:[#allocation4 + $0x1b]]
    %v6362 = vstv %s6361
    %v6363 = vmul.f32 %v6362, %v6353
    %v6364 = vmul.f32 %v6362, %v6354
    %v6365 = vmul.f32 %v6362, %v6355
    %v6366 = vmul.f32 %v6362, %v6356
    %v6367 = vmul.f32 %v6362, %v6357
    %v6368 = vmul.f32 %v6362, %v6358
    %v6369 = vmul.f32 %v6362, %v6359
    %v6370 = vmul.f32 %v6362, %v6360
    %v6371 = vadd.f32 %v6296, %v6363
    %v6372 = vadd.f32 %v6297, %v6364
    %v6373 = vadd.f32 %v6298, %v6365
    %v6374 = vadd.f32 %v6299, %v6366
    %v6375 = vadd.f32 %v6300, %v6367
    %v6376 = vadd.f32 %v6301, %v6368
    %v6377 = vadd.f32 %v6302, %v6369
    %v6378 = vadd.f32 %v6303, %v6370
    %6379 = vset.pattern.permute.xlu0 60
    %6380 = vperm.xlu0 %6379, %v3697
    %v6381 = vpop.permute.xlu0 %6380
    %6383 = vset.pattern.permute.xlu0 60
    %6384 = vperm.xlu0 %6383, %v3699
    %v6385 = vpop.permute.xlu0 %6384
    %6387 = vset.pattern.permute.xlu0 60
    %6388 = vperm.xlu0 %6387, %v3702
    %v6389 = vpop.permute.xlu0 %6388
    %6391 = vset.pattern.permute.xlu0 60
    %6392 = vperm.xlu0 %6391, %v3704
    %v6393 = vpop.permute.xlu0 %6392
    %6395 = vset.pattern.permute.xlu0 60
    %6396 = vperm.xlu0 %6395, %v3707
    %v6397 = vpop.permute.xlu0 %6396
    %6399 = vset.pattern.permute.xlu0 60
    %6400 = vperm.xlu0 %6399, %v3709
    %v6401 = vpop.permute.xlu0 %6400
    %6403 = vset.pattern.permute.xlu0 60
    %6404 = vperm.xlu0 %6403, %v3712
    %v6405 = vpop.permute.xlu0 %6404
    %6407 = vset.pattern.permute.xlu0 60
    %6408 = vperm.xlu0 %6407, %v3714
    %v6409 = vpop.permute.xlu0 %6408
    %v6411 = vperm.slane %v3735, 4
    %v6412 = vadd.f32 %v6381, %v6411
    %v6413 = vadd.f32 %v6385, %v6411
    %v6414 = vadd.f32 %v6389, %v6411
    %v6415 = vadd.f32 %v6393, %v6411
    %v6416 = vadd.f32 %v6397, %v6411
    %v6417 = vadd.f32 %v6401, %v6411
    %v6418 = vadd.f32 %v6405, %v6411
    %v6419 = vadd.f32 %v6409, %v6411
    %v6420 = vmul.f32 %v6412, 0.2
    %v6421 = vmul.f32 %v6413, 0.2
    %v6422 = vmul.f32 %v6414, 0.2
    %v6423 = vmul.f32 %v6415, 0.2
    %v6424 = vmul.f32 %v6416, 0.2
    %v6425 = vmul.f32 %v6417, 0.2
    %v6426 = vmul.f32 %v6418, 0.2
    %v6427 = vmul.f32 %v6419, 0.2
    %v6428 = vmax.f32 %v6412, %v6420
    %v6429 = vmax.f32 %v6413, %v6421
    %v6430 = vmax.f32 %v6414, %v6422
    %v6431 = vmax.f32 %v6415, %v6423
    %v6432 = vmax.f32 %v6416, %v6424
    %v6433 = vmax.f32 %v6417, %v6425
    %v6434 = vmax.f32 %v6418, %v6426
    %v6435 = vmax.f32 %v6419, %v6427
    %s6436 = sld [smem:[#allocation4 + $0x1c]]
    %v6437 = vstv %s6436
    %v6438 = vmul.f32 %v6437, %v6428
    %v6439 = vmul.f32 %v6437, %v6429
    %v6440 = vmul.f32 %v6437, %v6430
    %v6441 = vmul.f32 %v6437, %v6431
    %v6442 = vmul.f32 %v6437, %v6432
    %v6443 = vmul.f32 %v6437, %v6433
    %v6444 = vmul.f32 %v6437, %v6434
    %v6445 = vmul.f32 %v6437, %v6435
    %v6446 = vadd.f32 %v6371, %v6438
    %v6447 = vadd.f32 %v6372, %v6439
    %v6448 = vadd.f32 %v6373, %v6440
    %v6449 = vadd.f32 %v6374, %v6441
    %v6450 = vadd.f32 %v6375, %v6442
    %v6451 = vadd.f32 %v6376, %v6443
    %v6452 = vadd.f32 %v6377, %v6444
    %v6453 = vadd.f32 %v6378, %v6445
    %6454 = vset.pattern.permute.xlu0 61
    %6455 = vperm.xlu0 %6454, %v3697
    %v6456 = vpop.permute.xlu0 %6455
    %6458 = vset.pattern.permute.xlu0 61
    %6459 = vperm.xlu0 %6458, %v3699
    %v6460 = vpop.permute.xlu0 %6459
    %6462 = vset.pattern.permute.xlu0 61
    %6463 = vperm.xlu0 %6462, %v3702
    %v6464 = vpop.permute.xlu0 %6463
    %6466 = vset.pattern.permute.xlu0 61
    %6467 = vperm.xlu0 %6466, %v3704
    %v6468 = vpop.permute.xlu0 %6467
    %6470 = vset.pattern.permute.xlu0 61
    %6471 = vperm.xlu0 %6470, %v3707
    %v6472 = vpop.permute.xlu0 %6471
    %6474 = vset.pattern.permute.xlu0 61
    %6475 = vperm.xlu0 %6474, %v3709
    %v6476 = vpop.permute.xlu0 %6475
    %6478 = vset.pattern.permute.xlu0 61
    %6479 = vperm.xlu0 %6478, %v3712
    %v6480 = vpop.permute.xlu0 %6479
    %6482 = vset.pattern.permute.xlu0 61
    %6483 = vperm.xlu0 %6482, %v3714
    %v6484 = vpop.permute.xlu0 %6483
    %v6486 = vperm.slane %v3735, 5
    %v6487 = vadd.f32 %v6456, %v6486
    %v6488 = vadd.f32 %v6460, %v6486
    %v6489 = vadd.f32 %v6464, %v6486
    %v6490 = vadd.f32 %v6468, %v6486
    %v6491 = vadd.f32 %v6472, %v6486
    %v6492 = vadd.f32 %v6476, %v6486
    %v6493 = vadd.f32 %v6480, %v6486
    %v6494 = vadd.f32 %v6484, %v6486
    %v6495 = vmul.f32 %v6487, 0.2
    %v6496 = vmul.f32 %v6488, 0.2
    %v6497 = vmul.f32 %v6489, 0.2
    %v6498 = vmul.f32 %v6490, 0.2
    %v6499 = vmul.f32 %v6491, 0.2
    %v6500 = vmul.f32 %v6492, 0.2
    %v6501 = vmul.f32 %v6493, 0.2
    %v6502 = vmul.f32 %v6494, 0.2
    %v6503 = vmax.f32 %v6487, %v6495
    %v6504 = vmax.f32 %v6488, %v6496
    %v6505 = vmax.f32 %v6489, %v6497
    %v6506 = vmax.f32 %v6490, %v6498
    %v6507 = vmax.f32 %v6491, %v6499
    %v6508 = vmax.f32 %v6492, %v6500
    %v6509 = vmax.f32 %v6493, %v6501
    %v6510 = vmax.f32 %v6494, %v6502
    %s6511 = sld [smem:[#allocation4 + $0x1d]]
    %v6512 = vstv %s6511
    %v6513 = vmul.f32 %v6512, %v6503
    %v6514 = vmul.f32 %v6512, %v6504
    %v6515 = vmul.f32 %v6512, %v6505
    %v6516 = vmul.f32 %v6512, %v6506
    %v6517 = vmul.f32 %v6512, %v6507
    %v6518 = vmul.f32 %v6512, %v6508
    %v6519 = vmul.f32 %v6512, %v6509
    %v6520 = vmul.f32 %v6512, %v6510
    %v6521 = vadd.f32 %v6446, %v6513
    %v6522 = vadd.f32 %v6447, %v6514
    %v6523 = vadd.f32 %v6448, %v6515
    %v6524 = vadd.f32 %v6449, %v6516
    %v6525 = vadd.f32 %v6450, %v6517
    %v6526 = vadd.f32 %v6451, %v6518
    %v6527 = vadd.f32 %v6452, %v6519
    %v6528 = vadd.f32 %v6453, %v6520
    %6529 = vset.pattern.permute.xlu0 62
    %6530 = vperm.xlu0 %6529, %v3697
    %v6531 = vpop.permute.xlu0 %6530
    %6533 = vset.pattern.permute.xlu0 62
    %6534 = vperm.xlu0 %6533, %v3699
    %v6535 = vpop.permute.xlu0 %6534
    %6537 = vset.pattern.permute.xlu0 62
    %6538 = vperm.xlu0 %6537, %v3702
    %v6539 = vpop.permute.xlu0 %6538
    %6541 = vset.pattern.permute.xlu0 62
    %6542 = vperm.xlu0 %6541, %v3704
    %v6543 = vpop.permute.xlu0 %6542
    %6545 = vset.pattern.permute.xlu0 62
    %6546 = vperm.xlu0 %6545, %v3707
    %v6547 = vpop.permute.xlu0 %6546
    %6549 = vset.pattern.permute.xlu0 62
    %6550 = vperm.xlu0 %6549, %v3709
    %v6551 = vpop.permute.xlu0 %6550
    %6553 = vset.pattern.permute.xlu0 62
    %6554 = vperm.xlu0 %6553, %v3712
    %v6555 = vpop.permute.xlu0 %6554
    %6557 = vset.pattern.permute.xlu0 62
    %6558 = vperm.xlu0 %6557, %v3714
    %v6559 = vpop.permute.xlu0 %6558
    %v6561 = vperm.slane %v3735, 6
    %v6562 = vadd.f32 %v6531, %v6561
    %v6563 = vadd.f32 %v6535, %v6561
    %v6564 = vadd.f32 %v6539, %v6561
    %v6565 = vadd.f32 %v6543, %v6561
    %v6566 = vadd.f32 %v6547, %v6561
    %v6567 = vadd.f32 %v6551, %v6561
    %v6568 = vadd.f32 %v6555, %v6561
    %v6569 = vadd.f32 %v6559, %v6561
    %v6570 = vmul.f32 %v6562, 0.2
    %v6571 = vmul.f32 %v6563, 0.2
    %v6572 = vmul.f32 %v6564, 0.2
    %v6573 = vmul.f32 %v6565, 0.2
    %v6574 = vmul.f32 %v6566, 0.2
    %v6575 = vmul.f32 %v6567, 0.2
    %v6576 = vmul.f32 %v6568, 0.2
    %v6577 = vmul.f32 %v6569, 0.2
    %v6578 = vmax.f32 %v6562, %v6570
    %v6579 = vmax.f32 %v6563, %v6571
    %v6580 = vmax.f32 %v6564, %v6572
    %v6581 = vmax.f32 %v6565, %v6573
    %v6582 = vmax.f32 %v6566, %v6574
    %v6583 = vmax.f32 %v6567, %v6575
    %v6584 = vmax.f32 %v6568, %v6576
    %v6585 = vmax.f32 %v6569, %v6577
    %s6586 = sld [smem:[#allocation4 + $0x1e]]
    %v6587 = vstv %s6586
    %v6588 = vmul.f32 %v6587, %v6578
    %v6589 = vmul.f32 %v6587, %v6579
    %v6590 = vmul.f32 %v6587, %v6580
    %v6591 = vmul.f32 %v6587, %v6581
    %v6592 = vmul.f32 %v6587, %v6582
    %v6593 = vmul.f32 %v6587, %v6583
    %v6594 = vmul.f32 %v6587, %v6584
    %v6595 = vmul.f32 %v6587, %v6585
    %v6596 = vadd.f32 %v6521, %v6588
    %v6597 = vadd.f32 %v6522, %v6589
    %v6598 = vadd.f32 %v6523, %v6590
    %v6599 = vadd.f32 %v6524, %v6591
    %v6600 = vadd.f32 %v6525, %v6592
    %v6601 = vadd.f32 %v6526, %v6593
    %v6602 = vadd.f32 %v6527, %v6594
    %v6603 = vadd.f32 %v6528, %v6595
    %6604 = vset.pattern.permute.xlu0 63
    %6605 = vperm.xlu0 %6604, %v3697
    %v6606 = vpop.permute.xlu0 %6605
    %6608 = vset.pattern.permute.xlu0 63
    %6609 = vperm.xlu0 %6608, %v3699
    %v6610 = vpop.permute.xlu0 %6609
    %6612 = vset.pattern.permute.xlu0 63
    %6613 = vperm.xlu0 %6612, %v3702
    %v6614 = vpop.permute.xlu0 %6613
    %6616 = vset.pattern.permute.xlu0 63
    %6617 = vperm.xlu0 %6616, %v3704
    %v6618 = vpop.permute.xlu0 %6617
    %6620 = vset.pattern.permute.xlu0 63
    %6621 = vperm.xlu0 %6620, %v3707
    %v6622 = vpop.permute.xlu0 %6621
    %6624 = vset.pattern.permute.xlu0 63
    %6625 = vperm.xlu0 %6624, %v3709
    %v6626 = vpop.permute.xlu0 %6625
    %6628 = vset.pattern.permute.xlu0 63
    %6629 = vperm.xlu0 %6628, %v3712
    %v6630 = vpop.permute.xlu0 %6629
    %6632 = vset.pattern.permute.xlu0 63
    %6633 = vperm.xlu0 %6632, %v3714
    %v6634 = vpop.permute.xlu0 %6633
    %v6636 = vperm.slane %v3735, 7
    %v6637 = vadd.f32 %v6606, %v6636
    %v6638 = vadd.f32 %v6610, %v6636
    %v6639 = vadd.f32 %v6614, %v6636
    %v6640 = vadd.f32 %v6618, %v6636
    %v6641 = vadd.f32 %v6622, %v6636
    %v6642 = vadd.f32 %v6626, %v6636
    %v6643 = vadd.f32 %v6630, %v6636
    %v6644 = vadd.f32 %v6634, %v6636
    %v6645 = vmul.f32 %v6637, 0.2
    %v6646 = vmul.f32 %v6638, 0.2
    %v6647 = vmul.f32 %v6639, 0.2
    %v6648 = vmul.f32 %v6640, 0.2
    %v6649 = vmul.f32 %v6641, 0.2
    %v6650 = vmul.f32 %v6642, 0.2
    %v6651 = vmul.f32 %v6643, 0.2
    %v6652 = vmul.f32 %v6644, 0.2
    %v6653 = vmax.f32 %v6637, %v6645
    %v6654 = vmax.f32 %v6638, %v6646
    %v6655 = vmax.f32 %v6639, %v6647
    %v6656 = vmax.f32 %v6640, %v6648
    %v6657 = vmax.f32 %v6641, %v6649
    %v6658 = vmax.f32 %v6642, %v6650
    %v6659 = vmax.f32 %v6643, %v6651
    %v6660 = vmax.f32 %v6644, %v6652
    %s6661 = sld [smem:[#allocation4 + $0x1f]]
    %v6662 = vstv %s6661
    %v6663 = vmul.f32 %v6662, %v6653
    %v6664 = vmul.f32 %v6662, %v6654
    %v6665 = vmul.f32 %v6662, %v6655
    %v6666 = vmul.f32 %v6662, %v6656
    %v6667 = vmul.f32 %v6662, %v6657
    %v6668 = vmul.f32 %v6662, %v6658
    %v6669 = vmul.f32 %v6662, %v6659
    %v6670 = vmul.f32 %v6662, %v6660
    %v6671 = vadd.f32 %v6596, %v6663
    %v6672 = vadd.f32 %v6597, %v6664
    %v6673 = vadd.f32 %v6598, %v6665
    %v6674 = vadd.f32 %v6599, %v6666
    %v6675 = vadd.f32 %v6600, %v6667
    %v6676 = vadd.f32 %v6601, %v6668
    %v6677 = vadd.f32 %v6602, %v6669
    %v6678 = vadd.f32 %v6603, %v6670
    %v6679 = vadd.f32 %v6671, %v74
    %v6680 = vadd.f32 %v6672, %v75
    %v6681 = vadd.f32 %v6673, %v76
    %v6682 = vadd.f32 %v6674, %v77
    %v6683 = vadd.f32 %v6675, %v78
    %v6684 = vadd.f32 %v6676, %v79
    %v6685 = vadd.f32 %v6677, %v80
    %v6686 = vadd.f32 %v6678, %v81
    %v6687 = vsel %vm776, %v6679, -inf
    %6688 = vmax.xlane.f32.xlu0 %v6687
    %v6689 = vpop.xlane.xlu0 %6688
    %v6690 = vsel %vm776, %v6680, -inf
    %6691 = vmax.xlane.f32.xlu0 %v6690
    %v6692 = vpop.xlane.xlu0 %6691
    %v6693 = vsel %vm776, %v6681, -inf
    %6694 = vmax.xlane.f32.xlu0 %v6693
    %v6695 = vpop.xlane.xlu0 %6694
    %v6696 = vsel %vm776, %v6682, -inf
    %6697 = vmax.xlane.f32.xlu0 %v6696
    %v6698 = vpop.xlane.xlu0 %6697
    %v6699 = vsel %vm776, %v6683, -inf
    %6700 = vmax.xlane.f32.xlu0 %v6699
    %v6701 = vpop.xlane.xlu0 %6700
    %v6702 = vsel %vm776, %v6684, -inf
    %6703 = vmax.xlane.f32.xlu0 %v6702
    %v6704 = vpop.xlane.xlu0 %6703
    %v6705 = vsel %vm776, %v6685, -inf
    %6706 = vmax.xlane.f32.xlu0 %v6705
    %v6707 = vpop.xlane.xlu0 %6706
    %v6708 = vsel %vm776, %v6686, -inf
    %6709 = vmax.xlane.f32.xlu0 %v6708
    %v6710 = vpop.xlane.xlu0 %6709
    %v6711 = vsub.f32 %v6679, %v6689
    %v6712 = vsub.f32 %v6680, %v6692
    %v6713 = vsub.f32 %v6681, %v6695
    %v6714 = vsub.f32 %v6682, %v6698
    %v6715 = vsub.f32 %v6683, %v6701
    %v6716 = vsub.f32 %v6684, %v6704
    %v6717 = vsub.f32 %v6685, %v6707
    %v6718 = vsub.f32 %v6686, %v6710
    %v6719 = vmul.f32 %v6711, 1.442695
    %v6720 = vpow.pop %v6719
    %v6721 = vmul.f32 %v6712, 1.442695
    %v6722 = vpow.pop %v6721
    %v6723 = vmul.f32 %v6713, 1.442695
    %v6724 = vpow.pop %v6723
    %v6725 = vmul.f32 %v6714, 1.442695
    %v6726 = vpow.pop %v6725
    %v6727 = vmul.f32 %v6715, 1.442695
    %v6728 = vpow.pop %v6727
    %v6729 = vmul.f32 %v6716, 1.442695
    %v6730 = vpow.pop %v6729
    %v6731 = vmul.f32 %v6717, 1.442695
    %v6732 = vpow.pop %v6731
    %v6733 = vmul.f32 %v6718, 1.442695
    %v6734 = vpow.pop %v6733
    %v6735 = vsel %vm776, %v6720, 0.0
    %6736 = vadd.xlane.f32.xlu0 %v6735
    %v6737 = vpop.xlane.xlu0 %6736
    %v6738 = vsel %vm776, %v6722, 0.0
    %6739 = vadd.xlane.f32.xlu0 %v6738
    %v6740 = vpop.xlane.xlu0 %6739
    %v6741 = vsel %vm776, %v6724, 0.0
    %6742 = vadd.xlane.f32.xlu0 %v6741
    %v6743 = vpop.xlane.xlu0 %6742
    %v6744 = vsel %vm776, %v6726, 0.0
    %6745 = vadd.xlane.f32.xlu0 %v6744
    %v6746 = vpop.xlane.xlu0 %6745
    %v6747 = vsel %vm776, %v6728, 0.0
    %6748 = vadd.xlane.f32.xlu0 %v6747
    %v6749 = vpop.xlane.xlu0 %6748
    %v6750 = vsel %vm776, %v6730, 0.0
    %6751 = vadd.xlane.f32.xlu0 %v6750
    %v6752 = vpop.xlane.xlu0 %6751
    %v6753 = vsel %vm776, %v6732, 0.0
    %6754 = vadd.xlane.f32.xlu0 %v6753
    %v6755 = vpop.xlane.xlu0 %6754
    %v6756 = vsel %vm776, %v6734, 0.0
    %6757 = vadd.xlane.f32.xlu0 %v6756
    %v6758 = vpop.xlane.xlu0 %6757
    %v6759 = vmax.f32 %v6737, 1e-20
    %v6760 = vmax.f32 %v6740, 1e-20
    %v6761 = vmax.f32 %v6743, 1e-20
    %v6762 = vmax.f32 %v6746, 1e-20
    %v6763 = vmax.f32 %v6749, 1e-20
    %v6764 = vmax.f32 %v6752, 1e-20
    %v6765 = vmax.f32 %v6755, 1e-20
    %v6766 = vmax.f32 %v6758, 1e-20
    %v6767 = vrcp.pop %v6759
    %v6768 = vrcp.pop %v6760
    %v6769 = vrcp.pop %v6761
    %v6770 = vrcp.pop %v6762
    %v6771 = vrcp.pop %v6763
    %v6772 = vrcp.pop %v6764
    %v6773 = vrcp.pop %v6765
    %v6774 = vrcp.pop %v6766
    %v6775 = vmul.f32 %v6720, %v6767
    %v6776 = vmul.f32 %v6722, %v6768
    %v6777 = vmul.f32 %v6724, %v6769
    %v6778 = vmul.f32 %v6726, %v6770
    %v6779 = vmul.f32 %v6728, %v6771
    %v6780 = vmul.f32 %v6730, %v6772
    %v6781 = vmul.f32 %v6732, %v6773
    %v6782 = vmul.f32 %v6734, %v6774
    %6783 = vrot.lane.b32.xlu0 %v3697, 104
    %v6784 = vpop.permute.xlu0 %6783
    %6785 = vrot.lane.b32.xlu0 %v3699, 104
    %v6786 = vpop.permute.xlu0 %6785
    %6787 = vrot.lane.b32.xlu0 %v3702, 104
    %v6788 = vpop.permute.xlu0 %6787
    %6789 = vrot.lane.b32.xlu0 %v3704, 104
    %v6790 = vpop.permute.xlu0 %6789
    %6791 = vrot.lane.b32.xlu0 %v3707, 104
    %v6792 = vpop.permute.xlu0 %6791
    %6793 = vrot.lane.b32.xlu0 %v3709, 104
    %v6794 = vpop.permute.xlu0 %6793
    %6795 = vrot.lane.b32.xlu0 %v3712, 104
    %v6796 = vpop.permute.xlu0 %6795
    %6797 = vrot.lane.b32.xlu0 %v3714, 104
    %v6798 = vpop.permute.xlu0 %6797
    %v6808 = vsel %vm776, %v6775, 0
    %v6811 = vsel %vm776, %v6776, 0
    %v6814 = vsel %vm776, %v6777, 0
    %v6817 = vsel %vm776, %v6778, 0
    %v6820 = vsel %vm776, %v6779, 0
    %v6823 = vsel %vm776, %v6780, 0
    %v6826 = vsel %vm776, %v6781, 0
    %v6829 = vsel %vm776, %v6782, 0
    %6831 = vmatpush.msra.mxu0 0.0
    %6832 = vmatpush.msra.mxu0 0.0
    %6833 = vmatpush.msra.mxu0 0.0
    %6834 = vmatpush.msra.mxu0 0.0
    %6835 = vmatpush.msra.mxu0 0.0
    %6836 = vmatpush.msra.mxu0 0.0
    %6837 = vmatpush.msra.mxu0 0.0
    %6838 = vmatpush.msra.mxu0 0.0
    %6839 = vmatpush.msra.mxu0 %v6798
    %6840 = vmatpush.msra.mxu0 %v6796
    %6841 = vmatpush.msra.mxu0 %v6794
    %6842 = vmatpush.msra.mxu0 %v6792
    %6843 = vmatpush.msra.mxu0 %v6790
    %6844 = vmatpush.msra.mxu0 %v6788
    %6845 = vmatpush.msra.mxu0 %v6786
    %6846 = vmatpush.msra.mxu0 %v6784
    %6847 = vmatmul.f32.gmra.mxu0 %v6808
    %v6848 = vpop.f32.mrf.mxu0
    %v6849 = vadd.f32 0.0, %v6848
    %6850 = vmatmul.f32.gmra.mxu0 %v6811
    %v6851 = vpop.f32.mrf.mxu0
    %v6852 = vadd.f32 0.0, %v6851
    %6853 = vmatmul.f32.gmra.mxu0 %v6814
    %v6854 = vpop.f32.mrf.mxu0
    %v6855 = vadd.f32 0.0, %v6854
    %6856 = vmatmul.f32.gmra.mxu0 %v6817
    %v6857 = vpop.f32.mrf.mxu0
    %v6858 = vadd.f32 0.0, %v6857
    %6859 = vmatmul.f32.gmra.mxu0 %v6820
    %v6860 = vpop.f32.mrf.mxu0
    %v6861 = vadd.f32 0.0, %v6860
    %6862 = vmatmul.f32.gmra.mxu0 %v6823
    %v6863 = vpop.f32.mrf.mxu0
    %v6864 = vadd.f32 0.0, %v6863
    %6865 = vmatmul.f32.gmra.mxu0 %v6826
    %v6866 = vpop.f32.mrf.mxu0
    %v6867 = vadd.f32 0.0, %v6866
    %6868 = vmatmul.f32.gmra.mxu0 %v6829
    %v6869 = vpop.f32.mrf.mxu0
    %v6870 = vadd.f32 0.0, %v6869
    %6871 = vdwg.mxu0
    %6880 = vrot.lane.b32.xlu0 %v5279, 8
    %v6881 = vpop.permute.xlu0 %6880
    %6882 = vrot.lane.b32.xlu0 %v5282, 8
    %v6883 = vpop.permute.xlu0 %6882
    %6884 = vrot.lane.b32.xlu0 %v5285, 8
    %v6885 = vpop.permute.xlu0 %6884
    %6886 = vrot.lane.b32.xlu0 %v5288, 8
    %v6887 = vpop.permute.xlu0 %6886
    %6888 = vrot.lane.b32.xlu0 %v5291, 8
    %v6889 = vpop.permute.xlu0 %6888
    %6890 = vrot.lane.b32.xlu0 %v5294, 8
    %v6891 = vpop.permute.xlu0 %6890
    %6892 = vrot.lane.b32.xlu0 %v5297, 8
    %v6893 = vpop.permute.xlu0 %6892
    %6894 = vrot.lane.b32.xlu0 %v5300, 8
    %v6895 = vpop.permute.xlu0 %6894
    %6912 = vrot.lane.b32.xlu0 %v6064, 16
    %v6913 = vpop.permute.xlu0 %6912
    %6914 = vrot.lane.b32.xlu0 %v6067, 16
    %v6915 = vpop.permute.xlu0 %6914
    %6916 = vrot.lane.b32.xlu0 %v6070, 16
    %v6917 = vpop.permute.xlu0 %6916
    %6918 = vrot.lane.b32.xlu0 %v6073, 16
    %v6919 = vpop.permute.xlu0 %6918
    %6920 = vrot.lane.b32.xlu0 %v6076, 16
    %v6921 = vpop.permute.xlu0 %6920
    %6922 = vrot.lane.b32.xlu0 %v6079, 16
    %v6923 = vpop.permute.xlu0 %6922
    %6924 = vrot.lane.b32.xlu0 %v6082, 16
    %v6925 = vpop.permute.xlu0 %6924
    %6926 = vrot.lane.b32.xlu0 %v6085, 16
    %v6927 = vpop.permute.xlu0 %6926
    %6944 = vrot.lane.b32.xlu0 %v6849, 24
    %v6945 = vpop.permute.xlu0 %6944
    %6946 = vrot.lane.b32.xlu0 %v6852, 24
    %v6947 = vpop.permute.xlu0 %6946
    %6948 = vrot.lane.b32.xlu0 %v6855, 24
    %v6949 = vpop.permute.xlu0 %6948
    %6950 = vrot.lane.b32.xlu0 %v6858, 24
    %v6951 = vpop.permute.xlu0 %6950
    %6952 = vrot.lane.b32.xlu0 %v6861, 24
    %v6953 = vpop.permute.xlu0 %6952
    %6954 = vrot.lane.b32.xlu0 %v6864, 24
    %v6955 = vpop.permute.xlu0 %6954
    %6956 = vrot.lane.b32.xlu0 %v6867, 24
    %v6957 = vpop.permute.xlu0 %6956
    %6958 = vrot.lane.b32.xlu0 %v6870, 24
    %v6959 = vpop.permute.xlu0 %6958
    %v6968 = vsel %vm3389, %v4494, %v6881
    %v6969 = vsel %vm3389, %v4497, %v6883
    %v6970 = vsel %vm3389, %v4500, %v6885
    %v6971 = vsel %vm3389, %v4503, %v6887
    %v6972 = vsel %vm3389, %v4506, %v6889
    %v6973 = vsel %vm3389, %v4509, %v6891
    %v6974 = vsel %vm3389, %v4512, %v6893
    %v6975 = vsel %vm3389, %v4515, %v6895
    %v6976 = vsel %vm94, %v6968, %v6913
    %v6977 = vsel %vm94, %v6969, %v6915
    %v6978 = vsel %vm94, %v6970, %v6917
    %v6979 = vsel %vm94, %v6971, %v6919
    %v6980 = vsel %vm94, %v6972, %v6921
    %v6981 = vsel %vm94, %v6973, %v6923
    %v6982 = vsel %vm94, %v6974, %v6925
    %v6983 = vsel %vm94, %v6975, %v6927
    %v6984 = vsel %vm3406, %v6976, %v6945
    %v6985 = vsel %vm3406, %v6977, %v6947
    %v6986 = vsel %vm3406, %v6978, %v6949
    %v6987 = vsel %vm3406, %v6979, %v6951
    %v6988 = vsel %vm3406, %v6980, %v6953
    %v6989 = vsel %vm3406, %v6981, %v6955
    %v6990 = vsel %vm3406, %v6982, %v6957
    %v6991 = vsel %vm3406, %v6983, %v6959
    %vm6992 = vcmp.ne.f32.partialorder %v6984, %v6984
    %vm6993 = vcmp.ne.f32.partialorder %v6985, %v6985
    %vm6994 = vcmp.ne.f32.partialorder %v6986, %v6986
    %vm6995 = vcmp.ne.f32.partialorder %v6987, %v6987
    %vm6996 = vcmp.ne.f32.partialorder %v6988, %v6988
    %vm6997 = vcmp.ne.f32.partialorder %v6989, %v6989
    %vm6998 = vcmp.ne.f32.partialorder %v6990, %v6990
    %vm6999 = vcmp.ne.f32.partialorder %v6991, %v6991
    %v7000 = vsel %vm6992, 0.0, %v6984
    %v7001 = vsel %vm6993, 0.0, %v6985
    %v7002 = vsel %vm6994, 0.0, %v6986
    %v7003 = vsel %vm6995, 0.0, %v6987
    %v7004 = vsel %vm6996, 0.0, %v6988
    %v7005 = vsel %vm6997, 0.0, %v6989
    %v7006 = vsel %vm6998, 0.0, %v6990
    %v7007 = vsel %vm6999, 0.0, %v6991
    %vm7008 = vcmp.eq.f32.partialorder %v7000, inf
    %vm7009 = vcmp.eq.f32.partialorder %v7001, inf
    %vm7010 = vcmp.eq.f32.partialorder %v7002, inf
    %vm7011 = vcmp.eq.f32.partialorder %v7003, inf
    %vm7012 = vcmp.eq.f32.partialorder %v7004, inf
    %vm7013 = vcmp.eq.f32.partialorder %v7005, inf
    %vm7014 = vcmp.eq.f32.partialorder %v7006, inf
    %vm7015 = vcmp.eq.f32.partialorder %v7007, inf
    %v7016 = vsel %vm7008, 1e-05, %v7000
    %v7017 = vsel %vm7009, 1e-05, %v7001
    %v7018 = vsel %vm7010, 1e-05, %v7002
    %v7019 = vsel %vm7011, 1e-05, %v7003
    %v7020 = vsel %vm7012, 1e-05, %v7004
    %v7021 = vsel %vm7013, 1e-05, %v7005
    %v7022 = vsel %vm7014, 1e-05, %v7006
    %v7023 = vsel %vm7015, 1e-05, %v7007
    %vm7024 = vcmp.eq.f32.partialorder %v7016, -inf
    %vm7025 = vcmp.eq.f32.partialorder %v7017, -inf
    %vm7026 = vcmp.eq.f32.partialorder %v7018, -inf
    %vm7027 = vcmp.eq.f32.partialorder %v7019, -inf
    %vm7028 = vcmp.eq.f32.partialorder %v7020, -inf
    %vm7029 = vcmp.eq.f32.partialorder %v7021, -inf
    %vm7030 = vcmp.eq.f32.partialorder %v7022, -inf
    %vm7031 = vcmp.eq.f32.partialorder %v7023, -inf
    %v7032 = vsel %vm7024, -1e-05, %v7016
    %v7033 = vsel %vm7025, -1e-05, %v7017
    %v7034 = vsel %vm7026, -1e-05, %v7018
    %v7035 = vsel %vm7027, -1e-05, %v7019
    %v7036 = vsel %vm7028, -1e-05, %v7020
    %v7037 = vsel %vm7029, -1e-05, %v7021
    %v7038 = vsel %vm7030, -1e-05, %v7022
    %v7039 = vsel %vm7031, -1e-05, %v7023
    %v7040 = vsel %vm3463, %v7032, 0.0
    %7041 = vadd.xlane.f32.xlu0 %v7040
    %v7042 = vpop.xlane.xlu0 %7041
    %v7043 = vsel %vm3463, %v7033, 0.0
    %7044 = vadd.xlane.f32.xlu0 %v7043
    %v7045 = vpop.xlane.xlu0 %7044
    %v7046 = vsel %vm3463, %v7034, 0.0
    %7047 = vadd.xlane.f32.xlu0 %v7046
    %v7048 = vpop.xlane.xlu0 %7047
    %v7049 = vsel %vm3463, %v7035, 0.0
    %7050 = vadd.xlane.f32.xlu0 %v7049
    %v7051 = vpop.xlane.xlu0 %7050
    %v7052 = vsel %vm3463, %v7036, 0.0
    %7053 = vadd.xlane.f32.xlu0 %v7052
    %v7054 = vpop.xlane.xlu0 %7053
    %v7055 = vsel %vm3463, %v7037, 0.0
    %7056 = vadd.xlane.f32.xlu0 %v7055
    %v7057 = vpop.xlane.xlu0 %7056
    %v7058 = vsel %vm3463, %v7038, 0.0
    %7059 = vadd.xlane.f32.xlu0 %v7058
    %v7060 = vpop.xlane.xlu0 %7059
    %v7061 = vsel %vm3463, %v7039, 0.0
    %7062 = vadd.xlane.f32.xlu0 %v7061
    %v7063 = vpop.xlane.xlu0 %7062
    %v7064 = vmul.f32 %v7042, %v3494
    %v7065 = vmul.f32 %v7045, %v3494
    %v7066 = vmul.f32 %v7048, %v3494
    %v7067 = vmul.f32 %v7051, %v3494
    %v7068 = vmul.f32 %v7054, %v3494
    %v7069 = vmul.f32 %v7057, %v3494
    %v7070 = vmul.f32 %v7060, %v3494
    %v7071 = vmul.f32 %v7063, %v3494
    %v7072 = vsub.f32 %v7032, %v7064
    %v7073 = vsub.f32 %v7033, %v7065
    %v7074 = vsub.f32 %v7034, %v7066
    %v7075 = vsub.f32 %v7035, %v7067
    %v7076 = vsub.f32 %v7036, %v7068
    %v7077 = vsub.f32 %v7037, %v7069
    %v7078 = vsub.f32 %v7038, %v7070
    %v7079 = vsub.f32 %v7039, %v7071
    %v7080 = vmul.f32 %v7072, %v7072
    %v7081 = vmul.f32 %v7073, %v7073
    %v7082 = vmul.f32 %v7074, %v7074
    %v7083 = vmul.f32 %v7075, %v7075
    %v7084 = vmul.f32 %v7076, %v7076
    %v7085 = vmul.f32 %v7077, %v7077
    %v7086 = vmul.f32 %v7078, %v7078
    %v7087 = vmul.f32 %v7079, %v7079
    %v7088 = vsel %vm3463, %v7080, 0.0
    %7089 = vadd.xlane.f32.xlu0 %v7088
    %v7090 = vpop.xlane.xlu0 %7089
    %v7091 = vsel %vm3463, %v7081, 0.0
    %7092 = vadd.xlane.f32.xlu0 %v7091
    %v7093 = vpop.xlane.xlu0 %7092
    %v7094 = vsel %vm3463, %v7082, 0.0
    %7095 = vadd.xlane.f32.xlu0 %v7094
    %v7096 = vpop.xlane.xlu0 %7095
    %v7097 = vsel %vm3463, %v7083, 0.0
    %7098 = vadd.xlane.f32.xlu0 %v7097
    %v7099 = vpop.xlane.xlu0 %7098
    %v7100 = vsel %vm3463, %v7084, 0.0
    %7101 = vadd.xlane.f32.xlu0 %v7100
    %v7102 = vpop.xlane.xlu0 %7101
    %v7103 = vsel %vm3463, %v7085, 0.0
    %7104 = vadd.xlane.f32.xlu0 %v7103
    %v7105 = vpop.xlane.xlu0 %7104
    %v7106 = vsel %vm3463, %v7086, 0.0
    %7107 = vadd.xlane.f32.xlu0 %v7106
    %v7108 = vpop.xlane.xlu0 %7107
    %v7109 = vsel %vm3463, %v7087, 0.0
    %7110 = vadd.xlane.f32.xlu0 %v7109
    %v7111 = vpop.xlane.xlu0 %7110
    %v7112 = vmul.f32 %v7090, %v3494
    %v7113 = vmul.f32 %v7093, %v3494
    %v7114 = vmul.f32 %v7096, %v3494
    %v7115 = vmul.f32 %v7099, %v3494
    %v7116 = vmul.f32 %v7102, %v3494
    %v7117 = vmul.f32 %v7105, %v3494
    %v7118 = vmul.f32 %v7108, %v3494
    %v7119 = vmul.f32 %v7111, %v3494
    %v7120 = vadd.f32 %v7112, 1e-05
    %v7121 = vadd.f32 %v7113, 1e-05
    %v7122 = vadd.f32 %v7114, 1e-05
    %v7123 = vadd.f32 %v7115, 1e-05
    %v7124 = vadd.f32 %v7116, 1e-05
    %v7125 = vadd.f32 %v7117, 1e-05
    %v7126 = vadd.f32 %v7118, 1e-05
    %v7127 = vadd.f32 %v7119, 1e-05
    %v7128 = vrsqrt.pop %v7120
    %v7129 = vmul.f32 %v7128, %v7120
    %v7130 = vmul.f32 %v7129, %v7128
    %v7131 = vmul.f32 0.5, %v7130
    %v7132 = vsub.f32 1.5, %v7131
    %v7133 = vmul.f32 %v7128, %v7132
    %vm7134 = vweird.f32 %v7120
    %vm7135 = vweird.f32 %v7128
    %vm7136 = vmor %vm7134, %vm7135
    %v7137 = vsel %vm7136, %v7128, %v7133
    %v7138 = vrsqrt.pop %v7121
    %v7139 = vmul.f32 %v7138, %v7121
    %v7140 = vmul.f32 %v7139, %v7138
    %v7141 = vmul.f32 0.5, %v7140
    %v7142 = vsub.f32 1.5, %v7141
    %v7143 = vmul.f32 %v7138, %v7142
    %vm7144 = vweird.f32 %v7121
    %vm7145 = vweird.f32 %v7138
    %vm7146 = vmor %vm7144, %vm7145
    %v7147 = vsel %vm7146, %v7138, %v7143
    %v7148 = vrsqrt.pop %v7122
    %v7149 = vmul.f32 %v7148, %v7122
    %v7150 = vmul.f32 %v7149, %v7148
    %v7151 = vmul.f32 0.5, %v7150
    %v7152 = vsub.f32 1.5, %v7151
    %v7153 = vmul.f32 %v7148, %v7152
    %vm7154 = vweird.f32 %v7122
    %vm7155 = vweird.f32 %v7148
    %vm7156 = vmor %vm7154, %vm7155
    %v7157 = vsel %vm7156, %v7148, %v7153
    %v7158 = vrsqrt.pop %v7123
    %v7159 = vmul.f32 %v7158, %v7123
    %v7160 = vmul.f32 %v7159, %v7158
    %v7161 = vmul.f32 0.5, %v7160
    %v7162 = vsub.f32 1.5, %v7161
    %v7163 = vmul.f32 %v7158, %v7162
    %vm7164 = vweird.f32 %v7123
    %vm7165 = vweird.f32 %v7158
    %vm7166 = vmor %vm7164, %vm7165
    %v7167 = vsel %vm7166, %v7158, %v7163
    %v7168 = vrsqrt.pop %v7124
    %v7169 = vmul.f32 %v7168, %v7124
    %v7170 = vmul.f32 %v7169, %v7168
    %v7171 = vmul.f32 0.5, %v7170
    %v7172 = vsub.f32 1.5, %v7171
    %v7173 = vmul.f32 %v7168, %v7172
    %vm7174 = vweird.f32 %v7124
    %vm7175 = vweird.f32 %v7168
    %vm7176 = vmor %vm7174, %vm7175
    %v7177 = vsel %vm7176, %v7168, %v7173
    %v7178 = vrsqrt.pop %v7125
    %v7179 = vmul.f32 %v7178, %v7125
    %v7180 = vmul.f32 %v7179, %v7178
    %v7181 = vmul.f32 0.5, %v7180
    %v7182 = vsub.f32 1.5, %v7181
    %v7183 = vmul.f32 %v7178, %v7182
    %vm7184 = vweird.f32 %v7125
    %vm7185 = vweird.f32 %v7178
    %vm7186 = vmor %vm7184, %vm7185
    %v7187 = vsel %vm7186, %v7178, %v7183
    %v7188 = vrsqrt.pop %v7126
    %v7189 = vmul.f32 %v7188, %v7126
    %v7190 = vmul.f32 %v7189, %v7188
    %v7191 = vmul.f32 0.5, %v7190
    %v7192 = vsub.f32 1.5, %v7191
    %v7193 = vmul.f32 %v7188, %v7192
    %vm7194 = vweird.f32 %v7126
    %vm7195 = vweird.f32 %v7188
    %vm7196 = vmor %vm7194, %vm7195
    %v7197 = vsel %vm7196, %v7188, %v7193
    %v7198 = vrsqrt.pop %v7127
    %v7199 = vmul.f32 %v7198, %v7127
    %v7200 = vmul.f32 %v7199, %v7198
    %v7201 = vmul.f32 0.5, %v7200
    %v7202 = vsub.f32 1.5, %v7201
    %v7203 = vmul.f32 %v7198, %v7202
    %vm7204 = vweird.f32 %v7127
    %vm7205 = vweird.f32 %v7198
    %vm7206 = vmor %vm7204, %vm7205
    %v7207 = vsel %vm7206, %v7198, %v7203
    %v7208 = vmul.f32 %v7072, %v7137
    %v7209 = vmul.f32 %v7073, %v7147
    %v7210 = vmul.f32 %v7074, %v7157
    %v7211 = vmul.f32 %v7075, %v7167
    %v7212 = vmul.f32 %v7076, %v7177
    %v7213 = vmul.f32 %v7077, %v7187
    %v7214 = vmul.f32 %v7078, %v7197
    %v7215 = vmul.f32 %v7079, %v7207
    %v7216 = vmax.f32 %v7208, 0.0
    %v7217 = vmax.f32 %v7209, 0.0
    %v7218 = vmax.f32 %v7210, 0.0
    %v7219 = vmax.f32 %v7211, 0.0
    %v7220 = vmax.f32 %v7212, 0.0
    %v7221 = vmax.f32 %v7213, 0.0
    %v7222 = vmax.f32 %v7214, 0.0
    %v7223 = vmax.f32 %v7215, 0.0
    %v7224 = vadd.f32 %v7216, %v3647
    %v7225 = vadd.f32 %v7217, %v3648
    %v7226 = vadd.f32 %v7218, %v3649
    %v7227 = vadd.f32 %v7219, %v3650
    %v7228 = vadd.f32 %v7220, %v3651
    %v7229 = vadd.f32 %v7221, %v3652
    %v7230 = vadd.f32 %v7222, %v3653
    %v7231 = vadd.f32 %v7223, %v3654
    %v7232 = vpack.c.bf16 %v7225, %v7224
    %v7233 = vpack.c.bf16 %v7227, %v7226
    %v7234 = vpack.c.bf16 %v7229, %v7228
    %v7235 = vpack.c.bf16 %v7231, %v7230
    %v7236 = vld [vmem:[%s6] sm:$0xf]
    %v7237 = vld [vmem:[%s6 + $0x4] sm:$0xf]
    %v7238 = vld [vmem:[%s6 + $0x8] sm:$0xf]
    %v7239 = vld [vmem:[%s6 + $0xc] sm:$0xf]
    %v7244 = vunpack.c.l.b16 %v7236
    %v7245 = vunpack.c.l.b16 %v7237
    %v7246 = vunpack.c.l.b16 %v7238
    %v7247 = vunpack.c.l.b16 %v7239
    %v7248 = vpack.c.b16 %v7245, %v7244
    %v7249 = vpack.c.b16 %v7247, %v7246
    %v7253 = vsel %vm3463, %v7232, 0
    %v7256 = vsel %vm3463, %v7233, 0
    %v7259 = vsel %vm3463, %v7234, 0
    %v7262 = vsel %vm3463, %v7235, 0
    %7264 = vmatpush.bf16.msra.mxu0 0
    %7265 = vmatpush.bf16.msra.mxu0 0
    %7266 = vmatpush.bf16.msra.mxu0 0
    %7267 = vmatpush.bf16.msra.mxu0 0
    %7268 = vmatpush.bf16.msra.mxu0 0
    %7269 = vmatpush.bf16.msra.mxu0 0
    %7270 = vmatpush.bf16.msra.mxu0 %v7249
    %7271 = vmatpush.bf16.msra.mxu0 %v7248
    %7272 = vmatmul.bf16.gmra.mxu0 %v7253
    %v7273 = vpop.f32.mrf.mxu0
    %v7274 = vadd.f32 0.0, %v7273
    %v7275 = vpop.f32.mrf.mxu0
    %v7276 = vadd.f32 0.0, %v7275
    %7277 = vmatmul.bf16.gmra.mxu0 %v7256
    %v7278 = vpop.f32.mrf.mxu0
    %v7279 = vadd.f32 0.0, %v7278
    %v7280 = vpop.f32.mrf.mxu0
    %v7281 = vadd.f32 0.0, %v7280
    %7282 = vmatmul.bf16.gmra.mxu0 %v7259
    %v7283 = vpop.f32.mrf.mxu0
    %v7284 = vadd.f32 0.0, %v7283
    %v7285 = vpop.f32.mrf.mxu0
    %v7286 = vadd.f32 0.0, %v7285
    %7287 = vmatmul.bf16.gmra.mxu0 %v7262
    %v7288 = vpop.f32.mrf.mxu0
    %v7289 = vadd.f32 0.0, %v7288
    %v7290 = vpop.f32.mrf.mxu0
    %v7291 = vadd.f32 0.0, %v7290
    %7292 = vdwg.mxu0
    %7293 = vxpose.xlu0.b32.start [1/16] %v7274, 128
    %7294 = vxpose.xlu0.b32.cont [2/16] %v7276, 128
    %7295 = vxpose.xlu0.b32.cont [3/16] %v7279, 128
    %7296 = vxpose.xlu0.b32.cont [4/16] %v7281, 128
    %7297 = vxpose.xlu0.b32.cont [5/16] %v7284, 128
    %7298 = vxpose.xlu0.b32.cont [6/16] %v7286, 128
    %7299 = vxpose.xlu0.b32.cont [7/16] %v7289, 128
    %7300 = vxpose.xlu0.b32.cont [8/16] %v7291, 128
    %7301 = vxpose.xlu0.b32.cont [9/16] 0.0, 128
    %7302 = vxpose.xlu0.b32.cont [10/16] 0.0, 128
    %7303 = vxpose.xlu0.b32.cont [11/16] 0.0, 128
    %7304 = vxpose.xlu0.b32.cont [12/16] 0.0, 128
    %7305 = vxpose.xlu0.b32.cont [13/16] 0.0, 128
    %7306 = vxpose.xlu0.b32.cont [14/16] 0.0, 128
    %7307 = vxpose.xlu0.b32.cont [15/16] 0.0, 128
    %7308 = vxpose.xlu0.b32.end [16/16] 0.0, 128
    %v7309 = vpop.trf.xlu0
    %v7310 = vpop.trf.xlu0
    %v7311 = vpop.trf.xlu0
    %v7312 = vpop.trf.xlu0
    %v7313 = vpop.trf.xlu0
    %v7314 = vpop.trf.xlu0
    %v7315 = vpop.trf.xlu0
    %v7316 = vpop.trf.xlu0
    %v7317 = vpop.trf.xlu0
    %v7318 = vpop.trf.xlu0
    %v7319 = vpop.trf.xlu0
    %v7320 = vpop.trf.xlu0
    %v7321 = vpop.trf.xlu0
    %v7322 = vpop.trf.xlu0
    %v7323 = vpop.trf.xlu0
    %v7324 = vpop.trf.xlu0
    %7326 = vset.pattern.permute.xlu0 8
    %7327 = vperm.xlu0 %7326, %v7274
    %v7328 = vpop.permute.xlu0 %7327
    %7331 = vset.pattern.permute.xlu0 8
    %7332 = vperm.xlu0 %7331, %v7276
    %v7333 = vpop.permute.xlu0 %7332
    %7336 = vset.pattern.permute.xlu0 8
    %7337 = vperm.xlu0 %7336, %v7279
    %v7338 = vpop.permute.xlu0 %7337
    %7341 = vset.pattern.permute.xlu0 8
    %7342 = vperm.xlu0 %7341, %v7281
    %v7343 = vpop.permute.xlu0 %7342
    %7346 = vset.pattern.permute.xlu0 8
    %7347 = vperm.xlu0 %7346, %v7284
    %v7348 = vpop.permute.xlu0 %7347
    %7351 = vset.pattern.permute.xlu0 8
    %7352 = vperm.xlu0 %7351, %v7286
    %v7353 = vpop.permute.xlu0 %7352
    %7356 = vset.pattern.permute.xlu0 8
    %7357 = vperm.xlu0 %7356, %v7289
    %v7358 = vpop.permute.xlu0 %7357
    %7361 = vset.pattern.permute.xlu0 8
    %7362 = vperm.xlu0 %7361, %v7291
    %v7363 = vpop.permute.xlu0 %7362
    %v7365 = vperm.slane %v7309, 0
    %v7366 = vadd.f32 %v7328, %v7365
    %v7367 = vadd.f32 %v7333, %v7365
    %v7368 = vadd.f32 %v7338, %v7365
    %v7369 = vadd.f32 %v7343, %v7365
    %v7370 = vadd.f32 %v7348, %v7365
    %v7371 = vadd.f32 %v7353, %v7365
    %v7372 = vadd.f32 %v7358, %v7365
    %v7373 = vadd.f32 %v7363, %v7365
    %v7374 = vmul.f32 %v7366, 0.2
    %v7375 = vmul.f32 %v7367, 0.2
    %v7376 = vmul.f32 %v7368, 0.2
    %v7377 = vmul.f32 %v7369, 0.2
    %v7378 = vmul.f32 %v7370, 0.2
    %v7379 = vmul.f32 %v7371, 0.2
    %v7380 = vmul.f32 %v7372, 0.2
    %v7381 = vmul.f32 %v7373, 0.2
    %v7382 = vmax.f32 %v7366, %v7374
    %v7383 = vmax.f32 %v7367, %v7375
    %v7384 = vmax.f32 %v7368, %v7376
    %v7385 = vmax.f32 %v7369, %v7377
    %v7386 = vmax.f32 %v7370, %v7378
    %v7387 = vmax.f32 %v7371, %v7379
    %v7388 = vmax.f32 %v7372, %v7380
    %v7389 = vmax.f32 %v7373, %v7381
    %s7390 = sld [smem:[#allocation6]]
    %v7391 = vstv %s7390
    %v7392 = vmul.f32 %v7391, %v7382
    %v7393 = vmul.f32 %v7391, %v7383
    %v7394 = vmul.f32 %v7391, %v7384
    %v7395 = vmul.f32 %v7391, %v7385
    %v7396 = vmul.f32 %v7391, %v7386
    %v7397 = vmul.f32 %v7391, %v7387
    %v7398 = vmul.f32 %v7391, %v7388
    %v7399 = vmul.f32 %v7391, %v7389
    %7400 = vset.pattern.permute.xlu0 9
    %7401 = vperm.xlu0 %7400, %v7274
    %v7402 = vpop.permute.xlu0 %7401
    %7404 = vset.pattern.permute.xlu0 9
    %7405 = vperm.xlu0 %7404, %v7276
    %v7406 = vpop.permute.xlu0 %7405
    %7408 = vset.pattern.permute.xlu0 9
    %7409 = vperm.xlu0 %7408, %v7279
    %v7410 = vpop.permute.xlu0 %7409
    %7412 = vset.pattern.permute.xlu0 9
    %7413 = vperm.xlu0 %7412, %v7281
    %v7414 = vpop.permute.xlu0 %7413
    %7416 = vset.pattern.permute.xlu0 9
    %7417 = vperm.xlu0 %7416, %v7284
    %v7418 = vpop.permute.xlu0 %7417
    %7420 = vset.pattern.permute.xlu0 9
    %7421 = vperm.xlu0 %7420, %v7286
    %v7422 = vpop.permute.xlu0 %7421
    %7424 = vset.pattern.permute.xlu0 9
    %7425 = vperm.xlu0 %7424, %v7289
    %v7426 = vpop.permute.xlu0 %7425
    %7428 = vset.pattern.permute.xlu0 9
    %7429 = vperm.xlu0 %7428, %v7291
    %v7430 = vpop.permute.xlu0 %7429
    %v7432 = vperm.slane %v7309, 1
    %v7433 = vadd.f32 %v7402, %v7432
    %v7434 = vadd.f32 %v7406, %v7432
    %v7435 = vadd.f32 %v7410, %v7432
    %v7436 = vadd.f32 %v7414, %v7432
    %v7437 = vadd.f32 %v7418, %v7432
    %v7438 = vadd.f32 %v7422, %v7432
    %v7439 = vadd.f32 %v7426, %v7432
    %v7440 = vadd.f32 %v7430, %v7432
    %v7441 = vmul.f32 %v7433, 0.2
    %v7442 = vmul.f32 %v7434, 0.2
    %v7443 = vmul.f32 %v7435, 0.2
    %v7444 = vmul.f32 %v7436, 0.2
    %v7445 = vmul.f32 %v7437, 0.2
    %v7446 = vmul.f32 %v7438, 0.2
    %v7447 = vmul.f32 %v7439, 0.2
    %v7448 = vmul.f32 %v7440, 0.2
    %v7449 = vmax.f32 %v7433, %v7441
    %v7450 = vmax.f32 %v7434, %v7442
    %v7451 = vmax.f32 %v7435, %v7443
    %v7452 = vmax.f32 %v7436, %v7444
    %v7453 = vmax.f32 %v7437, %v7445
    %v7454 = vmax.f32 %v7438, %v7446
    %v7455 = vmax.f32 %v7439, %v7447
    %v7456 = vmax.f32 %v7440, %v7448
    %s7457 = sld [smem:[#allocation6 + $0x1]]
    %v7458 = vstv %s7457
    %v7459 = vmul.f32 %v7458, %v7449
    %v7460 = vmul.f32 %v7458, %v7450
    %v7461 = vmul.f32 %v7458, %v7451
    %v7462 = vmul.f32 %v7458, %v7452
    %v7463 = vmul.f32 %v7458, %v7453
    %v7464 = vmul.f32 %v7458, %v7454
    %v7465 = vmul.f32 %v7458, %v7455
    %v7466 = vmul.f32 %v7458, %v7456
    %v7467 = vadd.f32 %v7392, %v7459
    %v7468 = vadd.f32 %v7393, %v7460
    %v7469 = vadd.f32 %v7394, %v7461
    %v7470 = vadd.f32 %v7395, %v7462
    %v7471 = vadd.f32 %v7396, %v7463
    %v7472 = vadd.f32 %v7397, %v7464
    %v7473 = vadd.f32 %v7398, %v7465
    %v7474 = vadd.f32 %v7399, %v7466
    %7475 = vset.pattern.permute.xlu0 10
    %7476 = vperm.xlu0 %7475, %v7274
    %v7477 = vpop.permute.xlu0 %7476
    %7479 = vset.pattern.permute.xlu0 10
    %7480 = vperm.xlu0 %7479, %v7276
    %v7481 = vpop.permute.xlu0 %7480
    %7483 = vset.pattern.permute.xlu0 10
    %7484 = vperm.xlu0 %7483, %v7279
    %v7485 = vpop.permute.xlu0 %7484
    %7487 = vset.pattern.permute.xlu0 10
    %7488 = vperm.xlu0 %7487, %v7281
    %v7489 = vpop.permute.xlu0 %7488
    %7491 = vset.pattern.permute.xlu0 10
    %7492 = vperm.xlu0 %7491, %v7284
    %v7493 = vpop.permute.xlu0 %7492
    %7495 = vset.pattern.permute.xlu0 10
    %7496 = vperm.xlu0 %7495, %v7286
    %v7497 = vpop.permute.xlu0 %7496
    %7499 = vset.pattern.permute.xlu0 10
    %7500 = vperm.xlu0 %7499, %v7289
    %v7501 = vpop.permute.xlu0 %7500
    %7503 = vset.pattern.permute.xlu0 10
    %7504 = vperm.xlu0 %7503, %v7291
    %v7505 = vpop.permute.xlu0 %7504
    %v7507 = vperm.slane %v7309, 2
    %v7508 = vadd.f32 %v7477, %v7507
    %v7509 = vadd.f32 %v7481, %v7507
    %v7510 = vadd.f32 %v7485, %v7507
    %v7511 = vadd.f32 %v7489, %v7507
    %v7512 = vadd.f32 %v7493, %v7507
    %v7513 = vadd.f32 %v7497, %v7507
    %v7514 = vadd.f32 %v7501, %v7507
    %v7515 = vadd.f32 %v7505, %v7507
    %v7516 = vmul.f32 %v7508, 0.2
    %v7517 = vmul.f32 %v7509, 0.2
    %v7518 = vmul.f32 %v7510, 0.2
    %v7519 = vmul.f32 %v7511, 0.2
    %v7520 = vmul.f32 %v7512, 0.2
    %v7521 = vmul.f32 %v7513, 0.2
    %v7522 = vmul.f32 %v7514, 0.2
    %v7523 = vmul.f32 %v7515, 0.2
    %v7524 = vmax.f32 %v7508, %v7516
    %v7525 = vmax.f32 %v7509, %v7517
    %v7526 = vmax.f32 %v7510, %v7518
    %v7527 = vmax.f32 %v7511, %v7519
    %v7528 = vmax.f32 %v7512, %v7520
    %v7529 = vmax.f32 %v7513, %v7521
    %v7530 = vmax.f32 %v7514, %v7522
    %v7531 = vmax.f32 %v7515, %v7523
    %s7532 = sld [smem:[#allocation6 + $0x2]]
    %v7533 = vstv %s7532
    %v7534 = vmul.f32 %v7533, %v7524
    %v7535 = vmul.f32 %v7533, %v7525
    %v7536 = vmul.f32 %v7533, %v7526
    %v7537 = vmul.f32 %v7533, %v7527
    %v7538 = vmul.f32 %v7533, %v7528
    %v7539 = vmul.f32 %v7533, %v7529
    %v7540 = vmul.f32 %v7533, %v7530
    %v7541 = vmul.f32 %v7533, %v7531
    %v7542 = vadd.f32 %v7467, %v7534
    %v7543 = vadd.f32 %v7468, %v7535
    %v7544 = vadd.f32 %v7469, %v7536
    %v7545 = vadd.f32 %v7470, %v7537
    %v7546 = vadd.f32 %v7471, %v7538
    %v7547 = vadd.f32 %v7472, %v7539
    %v7548 = vadd.f32 %v7473, %v7540
    %v7549 = vadd.f32 %v7474, %v7541
    %7550 = vset.pattern.permute.xlu0 11
    %7551 = vperm.xlu0 %7550, %v7274
    %v7552 = vpop.permute.xlu0 %7551
    %7554 = vset.pattern.permute.xlu0 11
    %7555 = vperm.xlu0 %7554, %v7276
    %v7556 = vpop.permute.xlu0 %7555
    %7558 = vset.pattern.permute.xlu0 11
    %7559 = vperm.xlu0 %7558, %v7279
    %v7560 = vpop.permute.xlu0 %7559
    %7562 = vset.pattern.permute.xlu0 11
    %7563 = vperm.xlu0 %7562, %v7281
    %v7564 = vpop.permute.xlu0 %7563
    %7566 = vset.pattern.permute.xlu0 11
    %7567 = vperm.xlu0 %7566, %v7284
    %v7568 = vpop.permute.xlu0 %7567
    %7570 = vset.pattern.permute.xlu0 11
    %7571 = vperm.xlu0 %7570, %v7286
    %v7572 = vpop.permute.xlu0 %7571
    %7574 = vset.pattern.permute.xlu0 11
    %7575 = vperm.xlu0 %7574, %v7289
    %v7576 = vpop.permute.xlu0 %7575
    %7578 = vset.pattern.permute.xlu0 11
    %7579 = vperm.xlu0 %7578, %v7291
    %v7580 = vpop.permute.xlu0 %7579
    %v7582 = vperm.slane %v7309, 3
    %v7583 = vadd.f32 %v7552, %v7582
    %v7584 = vadd.f32 %v7556, %v7582
    %v7585 = vadd.f32 %v7560, %v7582
    %v7586 = vadd.f32 %v7564, %v7582
    %v7587 = vadd.f32 %v7568, %v7582
    %v7588 = vadd.f32 %v7572, %v7582
    %v7589 = vadd.f32 %v7576, %v7582
    %v7590 = vadd.f32 %v7580, %v7582
    %v7591 = vmul.f32 %v7583, 0.2
    %v7592 = vmul.f32 %v7584, 0.2
    %v7593 = vmul.f32 %v7585, 0.2
    %v7594 = vmul.f32 %v7586, 0.2
    %v7595 = vmul.f32 %v7587, 0.2
    %v7596 = vmul.f32 %v7588, 0.2
    %v7597 = vmul.f32 %v7589, 0.2
    %v7598 = vmul.f32 %v7590, 0.2
    %v7599 = vmax.f32 %v7583, %v7591
    %v7600 = vmax.f32 %v7584, %v7592
    %v7601 = vmax.f32 %v7585, %v7593
    %v7602 = vmax.f32 %v7586, %v7594
    %v7603 = vmax.f32 %v7587, %v7595
    %v7604 = vmax.f32 %v7588, %v7596
    %v7605 = vmax.f32 %v7589, %v7597
    %v7606 = vmax.f32 %v7590, %v7598
    %s7607 = sld [smem:[#allocation6 + $0x3]]
    %v7608 = vstv %s7607
    %v7609 = vmul.f32 %v7608, %v7599
    %v7610 = vmul.f32 %v7608, %v7600
    %v7611 = vmul.f32 %v7608, %v7601
    %v7612 = vmul.f32 %v7608, %v7602
    %v7613 = vmul.f32 %v7608, %v7603
    %v7614 = vmul.f32 %v7608, %v7604
    %v7615 = vmul.f32 %v7608, %v7605
    %v7616 = vmul.f32 %v7608, %v7606
    %v7617 = vadd.f32 %v7542, %v7609
    %v7618 = vadd.f32 %v7543, %v7610
    %v7619 = vadd.f32 %v7544, %v7611
    %v7620 = vadd.f32 %v7545, %v7612
    %v7621 = vadd.f32 %v7546, %v7613
    %v7622 = vadd.f32 %v7547, %v7614
    %v7623 = vadd.f32 %v7548, %v7615
    %v7624 = vadd.f32 %v7549, %v7616
    %7625 = vset.pattern.permute.xlu0 12
    %7626 = vperm.xlu0 %7625, %v7274
    %v7627 = vpop.permute.xlu0 %7626
    %7629 = vset.pattern.permute.xlu0 12
    %7630 = vperm.xlu0 %7629, %v7276
    %v7631 = vpop.permute.xlu0 %7630
    %7633 = vset.pattern.permute.xlu0 12
    %7634 = vperm.xlu0 %7633, %v7279
    %v7635 = vpop.permute.xlu0 %7634
    %7637 = vset.pattern.permute.xlu0 12
    %7638 = vperm.xlu0 %7637, %v7281
    %v7639 = vpop.permute.xlu0 %7638
    %7641 = vset.pattern.permute.xlu0 12
    %7642 = vperm.xlu0 %7641, %v7284
    %v7643 = vpop.permute.xlu0 %7642
    %7645 = vset.pattern.permute.xlu0 12
    %7646 = vperm.xlu0 %7645, %v7286
    %v7647 = vpop.permute.xlu0 %7646
    %7649 = vset.pattern.permute.xlu0 12
    %7650 = vperm.xlu0 %7649, %v7289
    %v7651 = vpop.permute.xlu0 %7650
    %7653 = vset.pattern.permute.xlu0 12
    %7654 = vperm.xlu0 %7653, %v7291
    %v7655 = vpop.permute.xlu0 %7654
    %v7657 = vperm.slane %v7309, 4
    %v7658 = vadd.f32 %v7627, %v7657
    %v7659 = vadd.f32 %v7631, %v7657
    %v7660 = vadd.f32 %v7635, %v7657
    %v7661 = vadd.f32 %v7639, %v7657
    %v7662 = vadd.f32 %v7643, %v7657
    %v7663 = vadd.f32 %v7647, %v7657
    %v7664 = vadd.f32 %v7651, %v7657
    %v7665 = vadd.f32 %v7655, %v7657
    %v7666 = vmul.f32 %v7658, 0.2
    %v7667 = vmul.f32 %v7659, 0.2
    %v7668 = vmul.f32 %v7660, 0.2
    %v7669 = vmul.f32 %v7661, 0.2
    %v7670 = vmul.f32 %v7662, 0.2
    %v7671 = vmul.f32 %v7663, 0.2
    %v7672 = vmul.f32 %v7664, 0.2
    %v7673 = vmul.f32 %v7665, 0.2
    %v7674 = vmax.f32 %v7658, %v7666
    %v7675 = vmax.f32 %v7659, %v7667
    %v7676 = vmax.f32 %v7660, %v7668
    %v7677 = vmax.f32 %v7661, %v7669
    %v7678 = vmax.f32 %v7662, %v7670
    %v7679 = vmax.f32 %v7663, %v7671
    %v7680 = vmax.f32 %v7664, %v7672
    %v7681 = vmax.f32 %v7665, %v7673
    %s7682 = sld [smem:[#allocation6 + $0x4]]
    %v7683 = vstv %s7682
    %v7684 = vmul.f32 %v7683, %v7674
    %v7685 = vmul.f32 %v7683, %v7675
    %v7686 = vmul.f32 %v7683, %v7676
    %v7687 = vmul.f32 %v7683, %v7677
    %v7688 = vmul.f32 %v7683, %v7678
    %v7689 = vmul.f32 %v7683, %v7679
    %v7690 = vmul.f32 %v7683, %v7680
    %v7691 = vmul.f32 %v7683, %v7681
    %v7692 = vadd.f32 %v7617, %v7684
    %v7693 = vadd.f32 %v7618, %v7685
    %v7694 = vadd.f32 %v7619, %v7686
    %v7695 = vadd.f32 %v7620, %v7687
    %v7696 = vadd.f32 %v7621, %v7688
    %v7697 = vadd.f32 %v7622, %v7689
    %v7698 = vadd.f32 %v7623, %v7690
    %v7699 = vadd.f32 %v7624, %v7691
    %7700 = vset.pattern.permute.xlu0 13
    %7701 = vperm.xlu0 %7700, %v7274
    %v7702 = vpop.permute.xlu0 %7701
    %7704 = vset.pattern.permute.xlu0 13
    %7705 = vperm.xlu0 %7704, %v7276
    %v7706 = vpop.permute.xlu0 %7705
    %7708 = vset.pattern.permute.xlu0 13
    %7709 = vperm.xlu0 %7708, %v7279
    %v7710 = vpop.permute.xlu0 %7709
    %7712 = vset.pattern.permute.xlu0 13
    %7713 = vperm.xlu0 %7712, %v7281
    %v7714 = vpop.permute.xlu0 %7713
    %7716 = vset.pattern.permute.xlu0 13
    %7717 = vperm.xlu0 %7716, %v7284
    %v7718 = vpop.permute.xlu0 %7717
    %7720 = vset.pattern.permute.xlu0 13
    %7721 = vperm.xlu0 %7720, %v7286
    %v7722 = vpop.permute.xlu0 %7721
    %7724 = vset.pattern.permute.xlu0 13
    %7725 = vperm.xlu0 %7724, %v7289
    %v7726 = vpop.permute.xlu0 %7725
    %7728 = vset.pattern.permute.xlu0 13
    %7729 = vperm.xlu0 %7728, %v7291
    %v7730 = vpop.permute.xlu0 %7729
    %v7732 = vperm.slane %v7309, 5
    %v7733 = vadd.f32 %v7702, %v7732
    %v7734 = vadd.f32 %v7706, %v7732
    %v7735 = vadd.f32 %v7710, %v7732
    %v7736 = vadd.f32 %v7714, %v7732
    %v7737 = vadd.f32 %v7718, %v7732
    %v7738 = vadd.f32 %v7722, %v7732
    %v7739 = vadd.f32 %v7726, %v7732
    %v7740 = vadd.f32 %v7730, %v7732
    %v7741 = vmul.f32 %v7733, 0.2
    %v7742 = vmul.f32 %v7734, 0.2
    %v7743 = vmul.f32 %v7735, 0.2
    %v7744 = vmul.f32 %v7736, 0.2
    %v7745 = vmul.f32 %v7737, 0.2
    %v7746 = vmul.f32 %v7738, 0.2
    %v7747 = vmul.f32 %v7739, 0.2
    %v7748 = vmul.f32 %v7740, 0.2
    %v7749 = vmax.f32 %v7733, %v7741
    %v7750 = vmax.f32 %v7734, %v7742
    %v7751 = vmax.f32 %v7735, %v7743
    %v7752 = vmax.f32 %v7736, %v7744
    %v7753 = vmax.f32 %v7737, %v7745
    %v7754 = vmax.f32 %v7738, %v7746
    %v7755 = vmax.f32 %v7739, %v7747
    %v7756 = vmax.f32 %v7740, %v7748
    %s7757 = sld [smem:[#allocation6 + $0x5]]
    %v7758 = vstv %s7757
    %v7759 = vmul.f32 %v7758, %v7749
    %v7760 = vmul.f32 %v7758, %v7750
    %v7761 = vmul.f32 %v7758, %v7751
    %v7762 = vmul.f32 %v7758, %v7752
    %v7763 = vmul.f32 %v7758, %v7753
    %v7764 = vmul.f32 %v7758, %v7754
    %v7765 = vmul.f32 %v7758, %v7755
    %v7766 = vmul.f32 %v7758, %v7756
    %v7767 = vadd.f32 %v7692, %v7759
    %v7768 = vadd.f32 %v7693, %v7760
    %v7769 = vadd.f32 %v7694, %v7761
    %v7770 = vadd.f32 %v7695, %v7762
    %v7771 = vadd.f32 %v7696, %v7763
    %v7772 = vadd.f32 %v7697, %v7764
    %v7773 = vadd.f32 %v7698, %v7765
    %v7774 = vadd.f32 %v7699, %v7766
    %7775 = vset.pattern.permute.xlu0 14
    %7776 = vperm.xlu0 %7775, %v7274
    %v7777 = vpop.permute.xlu0 %7776
    %7779 = vset.pattern.permute.xlu0 14
    %7780 = vperm.xlu0 %7779, %v7276
    %v7781 = vpop.permute.xlu0 %7780
    %7783 = vset.pattern.permute.xlu0 14
    %7784 = vperm.xlu0 %7783, %v7279
    %v7785 = vpop.permute.xlu0 %7784
    %7787 = vset.pattern.permute.xlu0 14
    %7788 = vperm.xlu0 %7787, %v7281
    %v7789 = vpop.permute.xlu0 %7788
    %7791 = vset.pattern.permute.xlu0 14
    %7792 = vperm.xlu0 %7791, %v7284
    %v7793 = vpop.permute.xlu0 %7792
    %7795 = vset.pattern.permute.xlu0 14
    %7796 = vperm.xlu0 %7795, %v7286
    %v7797 = vpop.permute.xlu0 %7796
    %7799 = vset.pattern.permute.xlu0 14
    %7800 = vperm.xlu0 %7799, %v7289
    %v7801 = vpop.permute.xlu0 %7800
    %7803 = vset.pattern.permute.xlu0 14
    %7804 = vperm.xlu0 %7803, %v7291
    %v7805 = vpop.permute.xlu0 %7804
    %v7807 = vperm.slane %v7309, 6
    %v7808 = vadd.f32 %v7777, %v7807
    %v7809 = vadd.f32 %v7781, %v7807
    %v7810 = vadd.f32 %v7785, %v7807
    %v7811 = vadd.f32 %v7789, %v7807
    %v7812 = vadd.f32 %v7793, %v7807
    %v7813 = vadd.f32 %v7797, %v7807
    %v7814 = vadd.f32 %v7801, %v7807
    %v7815 = vadd.f32 %v7805, %v7807
    %v7816 = vmul.f32 %v7808, 0.2
    %v7817 = vmul.f32 %v7809, 0.2
    %v7818 = vmul.f32 %v7810, 0.2
    %v7819 = vmul.f32 %v7811, 0.2
    %v7820 = vmul.f32 %v7812, 0.2
    %v7821 = vmul.f32 %v7813, 0.2
    %v7822 = vmul.f32 %v7814, 0.2
    %v7823 = vmul.f32 %v7815, 0.2
    %v7824 = vmax.f32 %v7808, %v7816
    %v7825 = vmax.f32 %v7809, %v7817
    %v7826 = vmax.f32 %v7810, %v7818
    %v7827 = vmax.f32 %v7811, %v7819
    %v7828 = vmax.f32 %v7812, %v7820
    %v7829 = vmax.f32 %v7813, %v7821
    %v7830 = vmax.f32 %v7814, %v7822
    %v7831 = vmax.f32 %v7815, %v7823
    %s7832 = sld [smem:[#allocation6 + $0x6]]
    %v7833 = vstv %s7832
    %v7834 = vmul.f32 %v7833, %v7824
    %v7835 = vmul.f32 %v7833, %v7825
    %v7836 = vmul.f32 %v7833, %v7826
    %v7837 = vmul.f32 %v7833, %v7827
    %v7838 = vmul.f32 %v7833, %v7828
    %v7839 = vmul.f32 %v7833, %v7829
    %v7840 = vmul.f32 %v7833, %v7830
    %v7841 = vmul.f32 %v7833, %v7831
    %v7842 = vadd.f32 %v7767, %v7834
    %v7843 = vadd.f32 %v7768, %v7835
    %v7844 = vadd.f32 %v7769, %v7836
    %v7845 = vadd.f32 %v7770, %v7837
    %v7846 = vadd.f32 %v7771, %v7838
    %v7847 = vadd.f32 %v7772, %v7839
    %v7848 = vadd.f32 %v7773, %v7840
    %v7849 = vadd.f32 %v7774, %v7841
    %7850 = vset.pattern.permute.xlu0 15
    %7851 = vperm.xlu0 %7850, %v7274
    %v7852 = vpop.permute.xlu0 %7851
    %7854 = vset.pattern.permute.xlu0 15
    %7855 = vperm.xlu0 %7854, %v7276
    %v7856 = vpop.permute.xlu0 %7855
    %7858 = vset.pattern.permute.xlu0 15
    %7859 = vperm.xlu0 %7858, %v7279
    %v7860 = vpop.permute.xlu0 %7859
    %7862 = vset.pattern.permute.xlu0 15
    %7863 = vperm.xlu0 %7862, %v7281
    %v7864 = vpop.permute.xlu0 %7863
    %7866 = vset.pattern.permute.xlu0 15
    %7867 = vperm.xlu0 %7866, %v7284
    %v7868 = vpop.permute.xlu0 %7867
    %7870 = vset.pattern.permute.xlu0 15
    %7871 = vperm.xlu0 %7870, %v7286
    %v7872 = vpop.permute.xlu0 %7871
    %7874 = vset.pattern.permute.xlu0 15
    %7875 = vperm.xlu0 %7874, %v7289
    %v7876 = vpop.permute.xlu0 %7875
    %7878 = vset.pattern.permute.xlu0 15
    %7879 = vperm.xlu0 %7878, %v7291
    %v7880 = vpop.permute.xlu0 %7879
    %v7882 = vperm.slane %v7309, 7
    %v7883 = vadd.f32 %v7852, %v7882
    %v7884 = vadd.f32 %v7856, %v7882
    %v7885 = vadd.f32 %v7860, %v7882
    %v7886 = vadd.f32 %v7864, %v7882
    %v7887 = vadd.f32 %v7868, %v7882
    %v7888 = vadd.f32 %v7872, %v7882
    %v7889 = vadd.f32 %v7876, %v7882
    %v7890 = vadd.f32 %v7880, %v7882
    %v7891 = vmul.f32 %v7883, 0.2
    %v7892 = vmul.f32 %v7884, 0.2
    %v7893 = vmul.f32 %v7885, 0.2
    %v7894 = vmul.f32 %v7886, 0.2
    %v7895 = vmul.f32 %v7887, 0.2
    %v7896 = vmul.f32 %v7888, 0.2
    %v7897 = vmul.f32 %v7889, 0.2
    %v7898 = vmul.f32 %v7890, 0.2
    %v7899 = vmax.f32 %v7883, %v7891
    %v7900 = vmax.f32 %v7884, %v7892
    %v7901 = vmax.f32 %v7885, %v7893
    %v7902 = vmax.f32 %v7886, %v7894
    %v7903 = vmax.f32 %v7887, %v7895
    %v7904 = vmax.f32 %v7888, %v7896
    %v7905 = vmax.f32 %v7889, %v7897
    %v7906 = vmax.f32 %v7890, %v7898
    %s7907 = sld [smem:[#allocation6 + $0x7]]
    %v7908 = vstv %s7907
    %v7909 = vmul.f32 %v7908, %v7899
    %v7910 = vmul.f32 %v7908, %v7900
    %v7911 = vmul.f32 %v7908, %v7901
    %v7912 = vmul.f32 %v7908, %v7902
    %v7913 = vmul.f32 %v7908, %v7903
    %v7914 = vmul.f32 %v7908, %v7904
    %v7915 = vmul.f32 %v7908, %v7905
    %v7916 = vmul.f32 %v7908, %v7906
    %v7917 = vadd.f32 %v7842, %v7909
    %v7918 = vadd.f32 %v7843, %v7910
    %v7919 = vadd.f32 %v7844, %v7911
    %v7920 = vadd.f32 %v7845, %v7912
    %v7921 = vadd.f32 %v7846, %v7913
    %v7922 = vadd.f32 %v7847, %v7914
    %v7923 = vadd.f32 %v7848, %v7915
    %v7924 = vadd.f32 %v7849, %v7916
    %v7925 = vadd.f32 %v7917, %v74
    %v7926 = vadd.f32 %v7918, %v75
    %v7927 = vadd.f32 %v7919, %v76
    %v7928 = vadd.f32 %v7920, %v77
    %v7929 = vadd.f32 %v7921, %v78
    %v7930 = vadd.f32 %v7922, %v79
    %v7931 = vadd.f32 %v7923, %v80
    %v7932 = vadd.f32 %v7924, %v81
    %v7933 = vsel %vm776, %v7925, -inf
    %7934 = vmax.xlane.f32.xlu0 %v7933
    %v7935 = vpop.xlane.xlu0 %7934
    %v7936 = vsel %vm776, %v7926, -inf
    %7937 = vmax.xlane.f32.xlu0 %v7936
    %v7938 = vpop.xlane.xlu0 %7937
    %v7939 = vsel %vm776, %v7927, -inf
    %7940 = vmax.xlane.f32.xlu0 %v7939
    %v7941 = vpop.xlane.xlu0 %7940
    %v7942 = vsel %vm776, %v7928, -inf
    %7943 = vmax.xlane.f32.xlu0 %v7942
    %v7944 = vpop.xlane.xlu0 %7943
    %v7945 = vsel %vm776, %v7929, -inf
    %7946 = vmax.xlane.f32.xlu0 %v7945
    %v7947 = vpop.xlane.xlu0 %7946
    %v7948 = vsel %vm776, %v7930, -inf
    %7949 = vmax.xlane.f32.xlu0 %v7948
    %v7950 = vpop.xlane.xlu0 %7949
    %v7951 = vsel %vm776, %v7931, -inf
    %7952 = vmax.xlane.f32.xlu0 %v7951
    %v7953 = vpop.xlane.xlu0 %7952
    %v7954 = vsel %vm776, %v7932, -inf
    %7955 = vmax.xlane.f32.xlu0 %v7954
    %v7956 = vpop.xlane.xlu0 %7955
    %v7957 = vsub.f32 %v7925, %v7935
    %v7958 = vsub.f32 %v7926, %v7938
    %v7959 = vsub.f32 %v7927, %v7941
    %v7960 = vsub.f32 %v7928, %v7944
    %v7961 = vsub.f32 %v7929, %v7947
    %v7962 = vsub.f32 %v7930, %v7950
    %v7963 = vsub.f32 %v7931, %v7953
    %v7964 = vsub.f32 %v7932, %v7956
    %v7965 = vmul.f32 %v7957, 1.442695
    %v7966 = vpow.pop %v7965
    %v7967 = vmul.f32 %v7958, 1.442695
    %v7968 = vpow.pop %v7967
    %v7969 = vmul.f32 %v7959, 1.442695
    %v7970 = vpow.pop %v7969
    %v7971 = vmul.f32 %v7960, 1.442695
    %v7972 = vpow.pop %v7971
    %v7973 = vmul.f32 %v7961, 1.442695
    %v7974 = vpow.pop %v7973
    %v7975 = vmul.f32 %v7962, 1.442695
    %v7976 = vpow.pop %v7975
    %v7977 = vmul.f32 %v7963, 1.442695
    %v7978 = vpow.pop %v7977
    %v7979 = vmul.f32 %v7964, 1.442695
    %v7980 = vpow.pop %v7979
    %v7981 = vsel %vm776, %v7966, 0.0
    %7982 = vadd.xlane.f32.xlu0 %v7981
    %v7983 = vpop.xlane.xlu0 %7982
    %v7984 = vsel %vm776, %v7968, 0.0
    %7985 = vadd.xlane.f32.xlu0 %v7984
    %v7986 = vpop.xlane.xlu0 %7985
    %v7987 = vsel %vm776, %v7970, 0.0
    %7988 = vadd.xlane.f32.xlu0 %v7987
    %v7989 = vpop.xlane.xlu0 %7988
    %v7990 = vsel %vm776, %v7972, 0.0
    %7991 = vadd.xlane.f32.xlu0 %v7990
    %v7992 = vpop.xlane.xlu0 %7991
    %v7993 = vsel %vm776, %v7974, 0.0
    %7994 = vadd.xlane.f32.xlu0 %v7993
    %v7995 = vpop.xlane.xlu0 %7994
    %v7996 = vsel %vm776, %v7976, 0.0
    %7997 = vadd.xlane.f32.xlu0 %v7996
    %v7998 = vpop.xlane.xlu0 %7997
    %v7999 = vsel %vm776, %v7978, 0.0
    %8000 = vadd.xlane.f32.xlu0 %v7999
    %v8001 = vpop.xlane.xlu0 %8000
    %v8002 = vsel %vm776, %v7980, 0.0
    %8003 = vadd.xlane.f32.xlu0 %v8002
    %v8004 = vpop.xlane.xlu0 %8003
    %v8005 = vmax.f32 %v7983, 1e-20
    %v8006 = vmax.f32 %v7986, 1e-20
    %v8007 = vmax.f32 %v7989, 1e-20
    %v8008 = vmax.f32 %v7992, 1e-20
    %v8009 = vmax.f32 %v7995, 1e-20
    %v8010 = vmax.f32 %v7998, 1e-20
    %v8011 = vmax.f32 %v8001, 1e-20
    %v8012 = vmax.f32 %v8004, 1e-20
    %v8013 = vrcp.pop %v8005
    %v8014 = vrcp.pop %v8006
    %v8015 = vrcp.pop %v8007
    %v8016 = vrcp.pop %v8008
    %v8017 = vrcp.pop %v8009
    %v8018 = vrcp.pop %v8010
    %v8019 = vrcp.pop %v8011
    %v8020 = vrcp.pop %v8012
    %v8021 = vmul.f32 %v7966, %v8013
    %v8022 = vmul.f32 %v7968, %v8014
    %v8023 = vmul.f32 %v7970, %v8015
    %v8024 = vmul.f32 %v7972, %v8016
    %v8025 = vmul.f32 %v7974, %v8017
    %v8026 = vmul.f32 %v7976, %v8018
    %v8027 = vmul.f32 %v7978, %v8019
    %v8028 = vmul.f32 %v7980, %v8020
    %v8030 = vsel %vm776, %v8021, 0
    %v8033 = vsel %vm776, %v8022, 0
    %v8036 = vsel %vm776, %v8023, 0
    %v8039 = vsel %vm776, %v8024, 0
    %v8042 = vsel %vm776, %v8025, 0
    %v8045 = vsel %vm776, %v8026, 0
    %v8048 = vsel %vm776, %v8027, 0
    %v8051 = vsel %vm776, %v8028, 0
    %8053 = vmatpush.msra.mxu0 0.0
    %8054 = vmatpush.msra.mxu0 0.0
    %8055 = vmatpush.msra.mxu0 0.0
    %8056 = vmatpush.msra.mxu0 0.0
    %8057 = vmatpush.msra.mxu0 0.0
    %8058 = vmatpush.msra.mxu0 0.0
    %8059 = vmatpush.msra.mxu0 0.0
    %8060 = vmatpush.msra.mxu0 0.0
    %8061 = vmatpush.msra.mxu0 %v7291
    %8062 = vmatpush.msra.mxu0 %v7289
    %8063 = vmatpush.msra.mxu0 %v7286
    %8064 = vmatpush.msra.mxu0 %v7284
    %8065 = vmatpush.msra.mxu0 %v7281
    %8066 = vmatpush.msra.mxu0 %v7279
    %8067 = vmatpush.msra.mxu0 %v7276
    %8068 = vmatpush.msra.mxu0 %v7274
    %8069 = vmatmul.f32.gmra.mxu0 %v8030
    %v8070 = vpop.f32.mrf.mxu0
    %v8071 = vadd.f32 0.0, %v8070
    %8072 = vmatmul.f32.gmra.mxu0 %v8033
    %v8073 = vpop.f32.mrf.mxu0
    %v8074 = vadd.f32 0.0, %v8073
    %8075 = vmatmul.f32.gmra.mxu0 %v8036
    %v8076 = vpop.f32.mrf.mxu0
    %v8077 = vadd.f32 0.0, %v8076
    %8078 = vmatmul.f32.gmra.mxu0 %v8039
    %v8079 = vpop.f32.mrf.mxu0
    %v8080 = vadd.f32 0.0, %v8079
    %8081 = vmatmul.f32.gmra.mxu0 %v8042
    %v8082 = vpop.f32.mrf.mxu0
    %v8083 = vadd.f32 0.0, %v8082
    %8084 = vmatmul.f32.gmra.mxu0 %v8045
    %v8085 = vpop.f32.mrf.mxu0
    %v8086 = vadd.f32 0.0, %v8085
    %8087 = vmatmul.f32.gmra.mxu0 %v8048
    %v8088 = vpop.f32.mrf.mxu0
    %v8089 = vadd.f32 0.0, %v8088
    %8090 = vmatmul.f32.gmra.mxu0 %v8051
    %v8091 = vpop.f32.mrf.mxu0
    %v8092 = vadd.f32 0.0, %v8091
    %8093 = vdwg.mxu0
    %8094 = vst.msk [vmem:[%s8] sm:$0xff] %vm3389, %v8071
    %8095 = vst.msk [vmem:[%s8 + $0x8] sm:$0xff] %vm3389, %v8074
    %8096 = vst.msk [vmem:[%s8 + $0x10] sm:$0xff] %vm3389, %v8077
    %8097 = vst.msk [vmem:[%s8 + $0x18] sm:$0xff] %vm3389, %v8080
    %8098 = vst.msk [vmem:[%s8 + $0x20] sm:$0xff] %vm3389, %v8083
    %8099 = vst.msk [vmem:[%s8 + $0x28] sm:$0xff] %vm3389, %v8086
    %8100 = vst.msk [vmem:[%s8 + $0x30] sm:$0xff] %vm3389, %v8089
    %8101 = vst.msk [vmem:[%s8 + $0x38] sm:$0xff] %vm3389, %v8092
    // Predicated region
    $region46: #{tpu_custom_call.1} parent=1 // pred_check
      _
    $region47: #{tpu_custom_call.1} parent=1 // pred_check_branch
      %8103 = sbr.rel (0) target = $region49
    $region48: #{tpu_custom_call.1} parent=1 // pred_region
      _
    $region49: #{tpu_custom_call.1} parent=1 // pred_fallthru
      _
    // Predicated region
    $region50: #{tpu_custom_call.1} parent=1 // pred_check
      _
    $region51: #{tpu_custom_call.1} parent=1 // pred_check_branch
      %8105 = sbr.rel (0) target = $region53
    $region52: #{tpu_custom_call.1} parent=1 // pred_region
      _
    $region53: #{tpu_custom_call.1} parent=1 // pred_fallthru
      _
    %8106 = vsyncpa [#allocation3], 1
    %8107 = vsyncpa [#allocation5], 1

</llo_original>
